<compile_context>
chip_gen: v7x
topology: tpu7x:2x2x1
jax: 0.10.0
libtpu: 0.0.40
codegen_flags: <defaults>
</compile_context>

<pallas_src>
import functools

import jax
import jax.numpy as jnp
import numpy as np
from jax.experimental import pallas as pl
from jax.experimental.pallas import tpu as pltpu


def _store_padded_rows(pad_ref, act_hwc):
    """Write an (H, W, C) activation into rows 1..H of an (H+2, W+2, C) scratch.

    A zero column is glued on each side before the store so the store spans the
    full minor dims (tile-aligned); only the outer (row) offset is 1.
    """
    H, W, C = act_hwc.shape
    zcol = jnp.zeros((H, 1, C), act_hwc.dtype)
    padded = jnp.concatenate([zcol, act_hwc, zcol], axis=1)       # (H, W+2, C)
    pad_ref[1:H + 1, :, :] = padded.astype(pad_ref.dtype)


def _conv3x3(pad_ref, w, b, *, H, W, wide_k):
    """3x3 "same" conv for one image, reading from a zero-bordered pad buffer.

    pad_ref: (H+2, W+2, Cin) scratch ref.  Rows 0 / H+1 and columns 0 / W+1
             are zero; rows 1..H hold the current activation.
    w:       (3, 3*Cin, Cout) bf16 value; row ky holds the kx-concatenated taps.
    b:       (1, Cout) f32 value.
    Returns (H*W, Cout) f32 (bias added, no activation applied).
    """
    Cin = pad_ref.shape[-1]
    acc = None
    for ky in range(3):                                    # 3 aligned row loads
        rows = pad_ref[ky:ky + H, :, :]                    # (H, W+2, Cin)
        if wide_k:
            # Small-Cin path: widen K by concatenating the three kx-shifted
            # windows along channels -> one K = 3*Cin MXU dot per ky.
            patch = jnp.concatenate(
                [rows[:, kx:kx + W, :] for kx in range(3)], axis=-1,
            ).reshape(H * W, 3 * Cin)
            d = jnp.dot(patch.astype(jnp.bfloat16), w[ky],
                        preferred_element_type=jnp.float32)
            acc = d if acc is None else acc + d
        else:
            # Large-Cin path (Cin >= 128): K = Cin already fills the MXU, so
            # skip the concat (no 3x-wide temporary) and accumulate 3 K=Cin
            # dots straight from the shifted windows.
            for kx in range(3):
                view = rows[:, kx:kx + W, :].reshape(H * W, Cin)
                d = jnp.dot(view.astype(jnp.bfloat16),
                            w[ky, kx * Cin:(kx + 1) * Cin, :],
                            preferred_element_type=jnp.float32)
                acc = d if acc is None else acc + d
    return acc + b                                         # (1, Cout) broadcast


def fused_level_attention_kernel(
    x_ref, w1_ref, b1_ref, wm_ref, bm_ref, w5_ref, b5_ref, o_ref,
    pad_in, pad_buf, *, H, W, F,
):
    """Whole LevelAttentionModel forward for one batch element, fully fused."""
    wide_mid = F < 128   # kx-concat only pays off when K=F under-fills the MXU

    # Zero the top/bottom halo rows of both pad buffers every grid step (the
    # left/right halo columns are re-written by every interior store).  Doing
    # it per step keeps the kernel correct under megacore "parallel" sharding
    # of the batch axis (each core has its own scratch).
    for ref in (pad_in, pad_buf):
        zrow = jnp.zeros((1,) + tuple(ref.shape[1:]), ref.dtype)
        ref[0:1, :, :] = zrow
        ref[ref.shape[0] - 1:ref.shape[0], :, :] = zrow

    # conv1 + ReLU: narrow K = 3*Cin (no channel padding of the input).
    _store_padded_rows(pad_in, x_ref[0])
    z = _conv3x3(pad_in, w1_ref[...], b1_ref[...], H=H, W=W, wide_k=True)
    act = jnp.maximum(z, 0.0)                              # (H*W, F) f32

    # conv2..conv4 + ReLU: identical shapes -> stacked weights + fori_loop.
    def mid_layer(l, act):
        _store_padded_rows(pad_buf, act.reshape(H, W, F))
        z = _conv3x3(pad_buf, wm_ref[l], bm_ref[l], H=H, W=W, wide_k=wide_mid)
        return jnp.maximum(z, 0.0)

    act = jax.lax.fori_loop(0, 3, mid_layer, act)

    # conv5 -> sigmoid.  Only the (H, W, 1) attention map goes back to HBM.
    _store_padded_rows(pad_buf, act.reshape(H, W, F))
    z5 = _conv3x3(pad_buf, w5_ref[...], b5_ref[...], H=H, W=W, wide_k=wide_mid)
    o_ref[0] = jax.nn.sigmoid(z5).reshape(H, W, 1).astype(o_ref.dtype)


def _prep_w(w):
    """HWIO (3, 3, Cin, Cout) -> (3, 3*Cin, Cout) bf16 (kx-major K layout)."""
    return w.reshape(3, 3 * w.shape[2], w.shape[3]).astype(jnp.bfloat16)


def _prep_b(b):
    return b.reshape(1, -1).astype(jnp.float32)


def _pick_vmem_limit():
    """~75% of physical VMEM: leaves headroom for Mosaic internal scratch."""
    try:
        cap = pltpu.get_tpu_info().vmem_capacity_bytes
    except Exception:
        cap = 64 * 1024 * 1024
    return int(min(cap * 3 // 4, 112 * 1024 * 1024))


def level_attention_forward(x_nhwc, params):
    """Fused Pallas implementation of LevelAttentionModel.forward (NHWC)."""
    N, H, W, Cin = x_nhwc.shape
    F = params[0][0].shape[-1]                             # feature_size

    w1, b1 = _prep_w(params[0][0]), _prep_b(params[0][1])
    wm = jnp.stack([_prep_w(params[i][0]) for i in (1, 2, 3)])   # (3, 3, 3F, F)
    bm = jnp.stack([_prep_b(params[i][1]) for i in (1, 2, 3)])   # (3, 1, F)
    w5, b5 = _prep_w(params[4][0]), _prep_b(params[4][1])

    x_in = x_nhwc.astype(jnp.float32)

    kernel = functools.partial(fused_level_attention_kernel, H=H, W=W, F=F)

    in_specs = [
        pl.BlockSpec((1, H, W, Cin), lambda n: (n, 0, 0, 0)),
        pl.BlockSpec(w1.shape, lambda n: (0, 0, 0)),
        pl.BlockSpec(b1.shape, lambda n: (0, 0)),
        pl.BlockSpec(wm.shape, lambda n: (0, 0, 0, 0)),
        pl.BlockSpec(bm.shape, lambda n: (0, 0, 0)),
        pl.BlockSpec(w5.shape, lambda n: (0, 0, 0)),
        pl.BlockSpec(b5.shape, lambda n: (0, 0)),
    ]

    return pl.pallas_call(
        kernel,
        out_shape=jax.ShapeDtypeStruct((N, H, W, 1), jnp.float32),
        grid_spec=pltpu.PrefetchScalarGridSpec(
            num_scalar_prefetch=0,
            grid=(N,),
            in_specs=in_specs,
            out_specs=pl.BlockSpec((1, H, W, 1), lambda n: (n, 0, 0, 0)),
            scratch_shapes=[
                pltpu.VMEM((H + 2, W + 2, Cin), jnp.float32),    # conv1 pad
                pltpu.VMEM((H + 2, W + 2, F), jnp.bfloat16),     # conv2..5 pad
            ],
        ),
        compiler_params=pltpu.CompilerParams(
            dimension_semantics=("parallel",),
            vmem_limit_bytes=_pick_vmem_limit(),
        ),
    )(x_in, w1, b1, wm, bm, w5, b5)


def init_params(key, num_features_in, feature_size):
    """Deterministic synthetic parameters matching LevelAttentionModel shapes."""
    dims = [
        (num_features_in, feature_size),  # conv1
        (feature_size, feature_size),     # conv2
        (feature_size, feature_size),     # conv3
        (feature_size, feature_size),     # conv4
        (feature_size, 1),                # conv5
    ]
    params = []
    for (cin, cout) in dims:
        key, kw, kb = jax.random.split(key, 3)
        fan_in = cin * 9
        w = jax.random.normal(kw, (3, 3, cin, cout), jnp.float32) / np.sqrt(fan_in)
        b = jax.random.normal(kb, (cout,), jnp.float32) * 0.01
        params.append((w, b))
    return params


def reference_forward(x_nhwc, params):
    """Pure-JAX f32 reference (lax conv) for correctness check."""
    dn = jax.lax.conv_dimension_numbers(
        x_nhwc.shape, params[0][0].shape, ("NHWC", "HWIO", "NHWC")
    )
    out = x_nhwc
    for i, (w, b) in enumerate(params):
        out = jax.lax.conv_general_dilated(
            out, w, window_strides=(1, 1), padding="SAME", dimension_numbers=dn
        ) + b[None, None, None, :]
        if i < 4:
            out = jnp.maximum(out, 0.0)
        else:
            out = jax.nn.sigmoid(out)
    return out


if __name__ == "__main__":
    # Small shapes consistent with the module: NCHW input (2, 4, 16, 16),
    # feature_size=32 (module default is 256; reduced for a small demo).
    N, C, H, W = 2, 4, 16, 16
    feature_size = 32

    key = jax.random.PRNGKey(0)
    key, kx = jax.random.split(key)
    x_nchw = jax.random.normal(kx, (N, C, H, W), jnp.float32)

    params = init_params(key, num_features_in=C, feature_size=feature_size)

    # Convert PyTorch-style NCHW input to the kernel's NHWC layout.
    x_nhwc = jnp.transpose(x_nchw, (0, 2, 3, 1))

    out = level_attention_forward(x_nhwc, params)
    out = jax.block_until_ready(out)

    ref = jax.block_until_ready(reference_forward(x_nhwc, params))

    assert out.shape == (N, H, W, 1), out.shape
    # bf16 MXU operands vs f32 reference -> loosened tolerance.
    np.testing.assert_allclose(np.asarray(out), np.asarray(ref), rtol=3e-2, atol=3e-2)

    print("KERNEL_OK")
</pallas_src>

<mosaic_0001>
module attributes {stable_mosaic.version = 11 : i64} {
  func.func @fused_level_attention_kernel(%arg0: i32, %arg1: memref<1x16x16x4xf32, #tpu.memory_space<vmem>>, %arg2: memref<3x12x32xbf16, #tpu.memory_space<vmem>>, %arg3: memref<1x32xf32, #tpu.memory_space<vmem>>, %arg4: memref<3x3x96x32xbf16, #tpu.memory_space<vmem>>, %arg5: memref<3x1x32xf32, #tpu.memory_space<vmem>>, %arg6: memref<3x96x1xbf16, #tpu.memory_space<vmem>>, %arg7: memref<1x1xf32, #tpu.memory_space<vmem>>, %arg8: memref<1x16x16x1xf32, #tpu.memory_space<vmem>>, %arg9: memref<18x18x4xf32, #tpu.memory_space<vmem>>, %arg10: memref<18x18x32xbf16, #tpu.memory_space<vmem>>) attributes {dimension_semantics = [#tpu.dimension_semantics<parallel>], iteration_bounds = array<i64: 2>, scalar_prefetch = 0 : i64, scratch_operands = 2 : i64, tpu.core_type = #tpu.core_type<tc>, window_params = [{transform_indices = @transform_0, window_bounds = array<i64: 1, 16, 16, 4>}, {pipeline_mode = #tpu.pipeline_mode<synchronous>, transform_indices = @transform_1, window_bounds = array<i64: 3, 12, 32>}, {pipeline_mode = #tpu.pipeline_mode<synchronous>, transform_indices = @transform_2, window_bounds = array<i64: 1, 32>}, {pipeline_mode = #tpu.pipeline_mode<synchronous>, transform_indices = @transform_3, window_bounds = array<i64: 3, 3, 96, 32>}, {pipeline_mode = #tpu.pipeline_mode<synchronous>, transform_indices = @transform_4, window_bounds = array<i64: 3, 1, 32>}, {pipeline_mode = #tpu.pipeline_mode<synchronous>, transform_indices = @transform_5, window_bounds = array<i64: 3, 96, 1>}, {pipeline_mode = #tpu.pipeline_mode<synchronous>, transform_indices = @transform_6, window_bounds = array<i64: 1, 1>}, {transform_indices = @transform_7, window_bounds = array<i64: 1, 16, 16, 1>}]} {
    %cst = arith.constant 0.000000e+00 : f32
    %0 = vector.broadcast %cst : f32 to vector<1x18x4xf32>
    %c0 = arith.constant 0 : index
    %c0_0 = arith.constant 0 : index
    %c0_1 = arith.constant 0 : index
    %1 = vector.load %arg9[%c0, %c0_0, %c0_1] : memref<18x18x4xf32, #tpu.memory_space<vmem>>, vector<1x18x4xf32>
    tpu.vector_store %arg9[%c0, %c0_0, %c0_1], %0 {strides = array<i32>} : memref<18x18x4xf32, #tpu.memory_space<vmem>>, vector<1x18x4xf32>,
    %c17 = arith.constant 17 : index
    %c0_2 = arith.constant 0 : index
    %c0_3 = arith.constant 0 : index
    %2 = vector.load %arg9[%c17, %c0_2, %c0_3] : memref<18x18x4xf32, #tpu.memory_space<vmem>>, vector<1x18x4xf32>
    tpu.vector_store %arg9[%c17, %c0_2, %c0_3], %0 {strides = array<i32>} : memref<18x18x4xf32, #tpu.memory_space<vmem>>, vector<1x18x4xf32>,
    %cst_4 = arith.constant 0.000000e+00 : bf16
    %3 = vector.broadcast %cst_4 : bf16 to vector<1x18x32xbf16>
    %c0_5 = arith.constant 0 : index
    %c0_6 = arith.constant 0 : index
    %c0_7 = arith.constant 0 : index
    %4 = vector.load %arg10[%c0_5, %c0_6, %c0_7] : memref<18x18x32xbf16, #tpu.memory_space<vmem>>, vector<1x18x32xbf16>
    tpu.vector_store %arg10[%c0_5, %c0_6, %c0_7], %3 {strides = array<i32>} : memref<18x18x32xbf16, #tpu.memory_space<vmem>>, vector<1x18x32xbf16>,
    %c17_8 = arith.constant 17 : index
    %c0_9 = arith.constant 0 : index
    %c0_10 = arith.constant 0 : index
    %5 = vector.load %arg10[%c17_8, %c0_9, %c0_10] : memref<18x18x32xbf16, #tpu.memory_space<vmem>>, vector<1x18x32xbf16>
    tpu.vector_store %arg10[%c17_8, %c0_9, %c0_10], %3 {strides = array<i32>} : memref<18x18x32xbf16, #tpu.memory_space<vmem>>, vector<1x18x32xbf16>,
    %c0_11 = arith.constant 0 : index
    %c0_12 = arith.constant 0 : index
    %c0_13 = arith.constant 0 : index
    %c0_14 = arith.constant 0 : index
    %6 = vector.load %arg1[%c0_11, %c0_12, %c0_13, %c0_14] : memref<1x16x16x4xf32, #tpu.memory_space<vmem>>, vector<1x16x16x4xf32>
    %7 = vector.shape_cast %6 : vector<1x16x16x4xf32> to vector<16x16x4xf32>
    %cst_15 = arith.constant 0.000000e+00 : f32
    %8 = vector.broadcast %cst_15 : f32 to vector<16x1x4xf32>
    %9 = tpu.concatenate %8, %7, %8 in 1 : vector<16x1x4xf32>, vector<16x16x4xf32>, vector<16x1x4xf32> -> vector<16x18x4xf32>
    %c1 = arith.constant 1 : index
    %c0_16 = arith.constant 0 : index
    %c0_17 = arith.constant 0 : index
    %10 = vector.load %arg9[%c1, %c0_16, %c0_17] : memref<18x18x4xf32, #tpu.memory_space<vmem>>, vector<16x18x4xf32>
    tpu.vector_store %arg9[%c1, %c0_16, %c0_17], %9 {strides = array<i32>} : memref<18x18x4xf32, #tpu.memory_space<vmem>>, vector<16x18x4xf32>,
    %c0_18 = arith.constant 0 : index
    %c0_19 = arith.constant 0 : index
    %c0_20 = arith.constant 0 : index
    %11 = vector.load %arg2[%c0_18, %c0_19, %c0_20] : memref<3x12x32xbf16, #tpu.memory_space<vmem>>, vector<3x12x32xbf16>
    %c0_21 = arith.constant 0 : index
    %c0_22 = arith.constant 0 : index
    %12 = vector.load %arg3[%c0_21, %c0_22] : memref<1x32xf32, #tpu.memory_space<vmem>>, vector<1x32xf32>
    %c0_23 = arith.constant 0 : index
    %c0_24 = arith.constant 0 : index
    %c0_25 = arith.constant 0 : index
    %13 = vector.load %arg9[%c0_23, %c0_24, %c0_25] : memref<18x18x4xf32, #tpu.memory_space<vmem>>, vector<16x18x4xf32>
    %14 = vector.extract_strided_slice %13 {offsets = [0, 0, 0], sizes = [16, 16, 4], strides = [1, 1, 1]} : vector<16x18x4xf32> to vector<16x16x4xf32>
    %15 = vector.extract_strided_slice %13 {offsets = [0, 1, 0], sizes = [16, 16, 4], strides = [1, 1, 1]} : vector<16x18x4xf32> to vector<16x16x4xf32>
    %16 = vector.extract_strided_slice %13 {offsets = [0, 2, 0], sizes = [16, 16, 4], strides = [1, 1, 1]} : vector<16x18x4xf32> to vector<16x16x4xf32>
    %17 = tpu.concatenate %14, %15, %16 in 2 : vector<16x16x4xf32>, vector<16x16x4xf32>, vector<16x16x4xf32> -> vector<16x16x12xf32>
    %18 = vector.shape_cast %17 : vector<16x16x12xf32> to vector<256x12xf32>
    %19 = arith.truncf %18 : vector<256x12xf32> to vector<256x12xbf16>
    %20 = vector.extract_strided_slice %11 {offsets = [0, 0, 0], sizes = [1, 12, 32], strides = [1, 1, 1]} : vector<3x12x32xbf16> to vector<1x12x32xbf16>
    %21 = vector.shape_cast %20 : vector<1x12x32xbf16> to vector<12x32xbf16>
    %cst_26 = arith.constant dense<0.000000e+00> : vector<256x32xf32>
    %22 = tpu.matmul %19, %21, %cst_26 {dimension_numbers = #tpu.dot_dimension_numbers<[1], [0], [0], [1], [0, 0, 1, 1], [], []>} : vector<256x12xbf16>, vector<12x32xbf16>, vector<256x32xf32> -> vector<256x32xf32>
    %c1_27 = arith.constant 1 : index
    %c0_28 = arith.constant 0 : index
    %c0_29 = arith.constant 0 : index
    %23 = vector.load %arg9[%c1_27, %c0_28, %c0_29] : memref<18x18x4xf32, #tpu.memory_space<vmem>>, vector<16x18x4xf32>
    %24 = vector.extract_strided_slice %23 {offsets = [0, 0, 0], sizes = [16, 16, 4], strides = [1, 1, 1]} : vector<16x18x4xf32> to vector<16x16x4xf32>
    %25 = vector.extract_strided_slice %23 {offsets = [0, 1, 0], sizes = [16, 16, 4], strides = [1, 1, 1]} : vector<16x18x4xf32> to vector<16x16x4xf32>
    %26 = vector.extract_strided_slice %23 {offsets = [0, 2, 0], sizes = [16, 16, 4], strides = [1, 1, 1]} : vector<16x18x4xf32> to vector<16x16x4xf32>
    %27 = tpu.concatenate %24, %25, %26 in 2 : vector<16x16x4xf32>, vector<16x16x4xf32>, vector<16x16x4xf32> -> vector<16x16x12xf32>
    %28 = vector.shape_cast %27 : vector<16x16x12xf32> to vector<256x12xf32>
    %29 = arith.truncf %28 : vector<256x12xf32> to vector<256x12xbf16>
    %30 = vector.extract_strided_slice %11 {offsets = [1, 0, 0], sizes = [1, 12, 32], strides = [1, 1, 1]} : vector<3x12x32xbf16> to vector<1x12x32xbf16>
    %31 = vector.shape_cast %30 : vector<1x12x32xbf16> to vector<12x32xbf16>
    %cst_30 = arith.constant dense<0.000000e+00> : vector<256x32xf32>
    %32 = tpu.matmul %29, %31, %cst_30 {dimension_numbers = #tpu.dot_dimension_numbers<[1], [0], [0], [1], [0, 0, 1, 1], [], []>} : vector<256x12xbf16>, vector<12x32xbf16>, vector<256x32xf32> -> vector<256x32xf32>
    %33 = arith.addf %22, %32 : vector<256x32xf32>
    %c2 = arith.constant 2 : index
    %c0_31 = arith.constant 0 : index
    %c0_32 = arith.constant 0 : index
    %34 = vector.load %arg9[%c2, %c0_31, %c0_32] : memref<18x18x4xf32, #tpu.memory_space<vmem>>, vector<16x18x4xf32>
    %35 = vector.extract_strided_slice %34 {offsets = [0, 0, 0], sizes = [16, 16, 4], strides = [1, 1, 1]} : vector<16x18x4xf32> to vector<16x16x4xf32>
    %36 = vector.extract_strided_slice %34 {offsets = [0, 1, 0], sizes = [16, 16, 4], strides = [1, 1, 1]} : vector<16x18x4xf32> to vector<16x16x4xf32>
    %37 = vector.extract_strided_slice %34 {offsets = [0, 2, 0], sizes = [16, 16, 4], strides = [1, 1, 1]} : vector<16x18x4xf32> to vector<16x16x4xf32>
    %38 = tpu.concatenate %35, %36, %37 in 2 : vector<16x16x4xf32>, vector<16x16x4xf32>, vector<16x16x4xf32> -> vector<16x16x12xf32>
    %39 = vector.shape_cast %38 : vector<16x16x12xf32> to vector<256x12xf32>
    %40 = arith.truncf %39 : vector<256x12xf32> to vector<256x12xbf16>
    %41 = vector.extract_strided_slice %11 {offsets = [2, 0, 0], sizes = [1, 12, 32], strides = [1, 1, 1]} : vector<3x12x32xbf16> to vector<1x12x32xbf16>
    %42 = vector.shape_cast %41 : vector<1x12x32xbf16> to vector<12x32xbf16>
    %cst_33 = arith.constant dense<0.000000e+00> : vector<256x32xf32>
    %43 = tpu.matmul %40, %42, %cst_33 {dimension_numbers = #tpu.dot_dimension_numbers<[1], [0], [0], [1], [0, 0, 1, 1], [], []>} : vector<256x12xbf16>, vector<12x32xbf16>, vector<256x32xf32> -> vector<256x32xf32>
    %44 = arith.addf %33, %43 : vector<256x32xf32>
    %45 = vector.broadcast %12 : vector<1x32xf32> to vector<256x32xf32>
    %46 = arith.addf %44, %45 : vector<256x32xf32>
    %cst_34 = arith.constant 0.000000e+00 : f32
    %47 = vector.broadcast %cst_34 : f32 to vector<256x32xf32>
    %48 = arith.maximumf %46, %47 : vector<256x32xf32>
    %c0_i32 = arith.constant 0 : i32
    %c3_i32 = arith.constant 3 : i32
    %49 = arith.addi %c0_i32, %c3_i32 : i32
    %c1_i32 = arith.constant 1 : i32
    %50 = scf.for %arg11 = %c0_i32 to %49 step %c1_i32 iter_args(%arg12 = %48) -> (vector<256x32xf32>)  : i32 {
      %98 = vector.shape_cast %arg12 : vector<256x32xf32> to vector<16x16x32xf32>
      %cst_62 = arith.constant 0.000000e+00 : f32
      %99 = vector.broadcast %cst_62 : f32 to vector<16x1x32xf32>
      %100 = tpu.concatenate %99, %98, %99 in 1 : vector<16x1x32xf32>, vector<16x16x32xf32>, vector<16x1x32xf32> -> vector<16x18x32xf32>
      %101 = arith.truncf %100 : vector<16x18x32xf32> to vector<16x18x32xbf16>
      %c1_63 = arith.constant 1 : index
      %c0_64 = arith.constant 0 : index
      %c0_65 = arith.constant 0 : index
      %102 = vector.load %arg10[%c1_63, %c0_64, %c0_65] : memref<18x18x32xbf16, #tpu.memory_space<vmem>>, vector<16x18x32xbf16>
      tpu.vector_store %arg10[%c1_63, %c0_64, %c0_65], %101 {strides = array<i32>} : memref<18x18x32xbf16, #tpu.memory_space<vmem>>, vector<16x18x32xbf16>,
      %103 = arith.index_cast %arg11 : i32 to index
      %c0_66 = arith.constant 0 : index
      %c0_67 = arith.constant 0 : index
      %c0_68 = arith.constant 0 : index
      %104 = vector.load %arg4[%103, %c0_66, %c0_67, %c0_68] : memref<3x3x96x32xbf16, #tpu.memory_space<vmem>>, vector<1x3x96x32xbf16>
      %105 = vector.shape_cast %104 : vector<1x3x96x32xbf16> to vector<3x96x32xbf16>
      %106 = arith.index_cast %arg11 : i32 to index
      %c0_69 = arith.constant 0 : index
      %c0_70 = arith.constant 0 : index
      %107 = vector.load %arg5[%106, %c0_69, %c0_70] : memref<3x1x32xf32, #tpu.memory_space<vmem>>, vector<1x1x32xf32>
      %108 = vector.shape_cast %107 : vector<1x1x32xf32> to vector<1x32xf32>
      %c0_71 = arith.constant 0 : index
      %c0_72 = arith.constant 0 : index
      %c0_73 = arith.constant 0 : index
      %109 = vector.load %arg10[%c0_71, %c0_72, %c0_73] : memref<18x18x32xbf16, #tpu.memory_space<vmem>>, vector<16x18x32xbf16>
      %110 = vector.extract_strided_slice %109 {offsets = [0, 0, 0], sizes = [16, 16, 32], strides = [1, 1, 1]} : vector<16x18x32xbf16> to vector<16x16x32xbf16>
      %111 = vector.extract_strided_slice %109 {offsets = [0, 1, 0], sizes = [16, 16, 32], strides = [1, 1, 1]} : vector<16x18x32xbf16> to vector<16x16x32xbf16>
      %112 = vector.extract_strided_slice %109 {offsets = [0, 2, 0], sizes = [16, 16, 32], strides = [1, 1, 1]} : vector<16x18x32xbf16> to vector<16x16x32xbf16>
      %113 = tpu.concatenate %110, %111, %112 in 2 : vector<16x16x32xbf16>, vector<16x16x32xbf16>, vector<16x16x32xbf16> -> vector<16x16x96xbf16>
      %114 = vector.shape_cast %113 : vector<16x16x96xbf16> to vector<256x96xbf16>
      %115 = vector.extract_strided_slice %105 {offsets = [0, 0, 0], sizes = [1, 96, 32], strides = [1, 1, 1]} : vector<3x96x32xbf16> to vector<1x96x32xbf16>
      %116 = vector.shape_cast %115 : vector<1x96x32xbf16> to vector<96x32xbf16>
      %cst_74 = arith.constant dense<0.000000e+00> : vector<256x32xf32>
      %117 = tpu.matmul %114, %116, %cst_74 {dimension_numbers = #tpu.dot_dimension_numbers<[1], [0], [0], [1], [0, 0, 1, 1], [], []>} : vector<256x96xbf16>, vector<96x32xbf16>, vector<256x32xf32> -> vector<256x32xf32>
      %c1_75 = arith.constant 1 : index
      %c0_76 = arith.constant 0 : index
      %c0_77 = arith.constant 0 : index
      %118 = vector.load %arg10[%c1_75, %c0_76, %c0_77] : memref<18x18x32xbf16, #tpu.memory_space<vmem>>, vector<16x18x32xbf16>
      %119 = vector.extract_strided_slice %118 {offsets = [0, 0, 0], sizes = [16, 16, 32], strides = [1, 1, 1]} : vector<16x18x32xbf16> to vector<16x16x32xbf16>
      %120 = vector.extract_strided_slice %118 {offsets = [0, 1, 0], sizes = [16, 16, 32], strides = [1, 1, 1]} : vector<16x18x32xbf16> to vector<16x16x32xbf16>
      %121 = vector.extract_strided_slice %118 {offsets = [0, 2, 0], sizes = [16, 16, 32], strides = [1, 1, 1]} : vector<16x18x32xbf16> to vector<16x16x32xbf16>
      %122 = tpu.concatenate %119, %120, %121 in 2 : vector<16x16x32xbf16>, vector<16x16x32xbf16>, vector<16x16x32xbf16> -> vector<16x16x96xbf16>
      %123 = vector.shape_cast %122 : vector<16x16x96xbf16> to vector<256x96xbf16>
      %124 = vector.extract_strided_slice %105 {offsets = [1, 0, 0], sizes = [1, 96, 32], strides = [1, 1, 1]} : vector<3x96x32xbf16> to vector<1x96x32xbf16>
      %125 = vector.shape_cast %124 : vector<1x96x32xbf16> to vector<96x32xbf16>
      %cst_78 = arith.constant dense<0.000000e+00> : vector<256x32xf32>
      %126 = tpu.matmul %123, %125, %cst_78 {dimension_numbers = #tpu.dot_dimension_numbers<[1], [0], [0], [1], [0, 0, 1, 1], [], []>} : vector<256x96xbf16>, vector<96x32xbf16>, vector<256x32xf32> -> vector<256x32xf32>
      %127 = arith.addf %117, %126 : vector<256x32xf32>
      %c2_79 = arith.constant 2 : index
      %c0_80 = arith.constant 0 : index
      %c0_81 = arith.constant 0 : index
      %128 = vector.load %arg10[%c2_79, %c0_80, %c0_81] : memref<18x18x32xbf16, #tpu.memory_space<vmem>>, vector<16x18x32xbf16>
      %129 = vector.extract_strided_slice %128 {offsets = [0, 0, 0], sizes = [16, 16, 32], strides = [1, 1, 1]} : vector<16x18x32xbf16> to vector<16x16x32xbf16>
      %130 = vector.extract_strided_slice %128 {offsets = [0, 1, 0], sizes = [16, 16, 32], strides = [1, 1, 1]} : vector<16x18x32xbf16> to vector<16x16x32xbf16>
      %131 = vector.extract_strided_slice %128 {offsets = [0, 2, 0], sizes = [16, 16, 32], strides = [1, 1, 1]} : vector<16x18x32xbf16> to vector<16x16x32xbf16>
      %132 = tpu.concatenate %129, %130, %131 in 2 : vector<16x16x32xbf16>, vector<16x16x32xbf16>, vector<16x16x32xbf16> -> vector<16x16x96xbf16>
      %133 = vector.shape_cast %132 : vector<16x16x96xbf16> to vector<256x96xbf16>
      %134 = vector.extract_strided_slice %105 {offsets = [2, 0, 0], sizes = [1, 96, 32], strides = [1, 1, 1]} : vector<3x96x32xbf16> to vector<1x96x32xbf16>
      %135 = vector.shape_cast %134 : vector<1x96x32xbf16> to vector<96x32xbf16>
      %cst_82 = arith.constant dense<0.000000e+00> : vector<256x32xf32>
      %136 = tpu.matmul %133, %135, %cst_82 {dimension_numbers = #tpu.dot_dimension_numbers<[1], [0], [0], [1], [0, 0, 1, 1], [], []>} : vector<256x96xbf16>, vector<96x32xbf16>, vector<256x32xf32> -> vector<256x32xf32>
      %137 = arith.addf %127, %136 : vector<256x32xf32>
      %138 = vector.broadcast %108 : vector<1x32xf32> to vector<256x32xf32>
      %139 = arith.addf %137, %138 : vector<256x32xf32>
      %cst_83 = arith.constant 0.000000e+00 : f32
      %140 = vector.broadcast %cst_83 : f32 to vector<256x32xf32>
      %141 = arith.maximumf %139, %140 : vector<256x32xf32>
      scf.yield %141 : vector<256x32xf32>
    }
    %c3_i32_35 = arith.constant 3 : i32
    %51 = vector.shape_cast %50 : vector<256x32xf32> to vector<16x16x32xf32>
    %cst_36 = arith.constant 0.000000e+00 : f32
    %52 = vector.broadcast %cst_36 : f32 to vector<16x1x32xf32>
    %53 = tpu.concatenate %52, %51, %52 in 1 : vector<16x1x32xf32>, vector<16x16x32xf32>, vector<16x1x32xf32> -> vector<16x18x32xf32>
    %54 = arith.truncf %53 : vector<16x18x32xf32> to vector<16x18x32xbf16>
    %c1_37 = arith.constant 1 : index
    %c0_38 = arith.constant 0 : index
    %c0_39 = arith.constant 0 : index
    %55 = vector.load %arg10[%c1_37, %c0_38, %c0_39] : memref<18x18x32xbf16, #tpu.memory_space<vmem>>, vector<16x18x32xbf16>
    tpu.vector_store %arg10[%c1_37, %c0_38, %c0_39], %54 {strides = array<i32>} : memref<18x18x32xbf16, #tpu.memory_space<vmem>>, vector<16x18x32xbf16>,
    %c0_40 = arith.constant 0 : index
    %c0_41 = arith.constant 0 : index
    %c0_42 = arith.constant 0 : index
    %56 = vector.load %arg6[%c0_40, %c0_41, %c0_42] : memref<3x96x1xbf16, #tpu.memory_space<vmem>>, vector<3x96x1xbf16>
    %c0_43 = arith.constant 0 : index
    %c0_44 = arith.constant 0 : index
    %57 = vector.load %arg7[%c0_43, %c0_44] : memref<1x1xf32, #tpu.memory_space<vmem>>, vector<1x1xf32>
    %c0_45 = arith.constant 0 : index
    %c0_46 = arith.constant 0 : index
    %c0_47 = arith.constant 0 : index
    %58 = vector.load %arg10[%c0_45, %c0_46, %c0_47] : memref<18x18x32xbf16, #tpu.memory_space<vmem>>, vector<16x18x32xbf16>
    %59 = vector.extract_strided_slice %58 {offsets = [0, 0, 0], sizes = [16, 16, 32], strides = [1, 1, 1]} : vector<16x18x32xbf16> to vector<16x16x32xbf16>
    %60 = vector.extract_strided_slice %58 {offsets = [0, 1, 0], sizes = [16, 16, 32], strides = [1, 1, 1]} : vector<16x18x32xbf16> to vector<16x16x32xbf16>
    %61 = vector.extract_strided_slice %58 {offsets = [0, 2, 0], sizes = [16, 16, 32], strides = [1, 1, 1]} : vector<16x18x32xbf16> to vector<16x16x32xbf16>
    %62 = tpu.concatenate %59, %60, %61 in 2 : vector<16x16x32xbf16>, vector<16x16x32xbf16>, vector<16x16x32xbf16> -> vector<16x16x96xbf16>
    %63 = vector.shape_cast %62 : vector<16x16x96xbf16> to vector<256x96xbf16>
    %64 = vector.extract_strided_slice %56 {offsets = [0, 0, 0], sizes = [1, 96, 1], strides = [1, 1, 1]} : vector<3x96x1xbf16> to vector<1x96x1xbf16>
    %65 = vector.shape_cast %64 : vector<1x96x1xbf16> to vector<96x1xbf16>
    %cst_48 = arith.constant dense<0.000000e+00> : vector<256x1xf32>
    %66 = tpu.matmul %63, %65, %cst_48 {dimension_numbers = #tpu.dot_dimension_numbers<[1], [0], [0], [1], [0, 0, 1, 1], [], []>} : vector<256x96xbf16>, vector<96x1xbf16>, vector<256x1xf32> -> vector<256x1xf32>
    %c1_49 = arith.constant 1 : index
    %c0_50 = arith.constant 0 : index
    %c0_51 = arith.constant 0 : index
    %67 = vector.load %arg10[%c1_49, %c0_50, %c0_51] : memref<18x18x32xbf16, #tpu.memory_space<vmem>>, vector<16x18x32xbf16>
    %68 = vector.extract_strided_slice %67 {offsets = [0, 0, 0], sizes = [16, 16, 32], strides = [1, 1, 1]} : vector<16x18x32xbf16> to vector<16x16x32xbf16>
    %69 = vector.extract_strided_slice %67 {offsets = [0, 1, 0], sizes = [16, 16, 32], strides = [1, 1, 1]} : vector<16x18x32xbf16> to vector<16x16x32xbf16>
    %70 = vector.extract_strided_slice %67 {offsets = [0, 2, 0], sizes = [16, 16, 32], strides = [1, 1, 1]} : vector<16x18x32xbf16> to vector<16x16x32xbf16>
    %71 = tpu.concatenate %68, %69, %70 in 2 : vector<16x16x32xbf16>, vector<16x16x32xbf16>, vector<16x16x32xbf16> -> vector<16x16x96xbf16>
    %72 = vector.shape_cast %71 : vector<16x16x96xbf16> to vector<256x96xbf16>
    %73 = vector.extract_strided_slice %56 {offsets = [1, 0, 0], sizes = [1, 96, 1], strides = [1, 1, 1]} : vector<3x96x1xbf16> to vector<1x96x1xbf16>
    %74 = vector.shape_cast %73 : vector<1x96x1xbf16> to vector<96x1xbf16>
    %cst_52 = arith.constant dense<0.000000e+00> : vector<256x1xf32>
    %75 = tpu.matmul %72, %74, %cst_52 {dimension_numbers = #tpu.dot_dimension_numbers<[1], [0], [0], [1], [0, 0, 1, 1], [], []>} : vector<256x96xbf16>, vector<96x1xbf16>, vector<256x1xf32> -> vector<256x1xf32>
    %76 = arith.addf %66, %75 : vector<256x1xf32>
    %c2_53 = arith.constant 2 : index
    %c0_54 = arith.constant 0 : index
    %c0_55 = arith.constant 0 : index
    %77 = vector.load %arg10[%c2_53, %c0_54, %c0_55] : memref<18x18x32xbf16, #tpu.memory_space<vmem>>, vector<16x18x32xbf16>
    %78 = vector.extract_strided_slice %77 {offsets = [0, 0, 0], sizes = [16, 16, 32], strides = [1, 1, 1]} : vector<16x18x32xbf16> to vector<16x16x32xbf16>
    %79 = vector.extract_strided_slice %77 {offsets = [0, 1, 0], sizes = [16, 16, 32], strides = [1, 1, 1]} : vector<16x18x32xbf16> to vector<16x16x32xbf16>
    %80 = vector.extract_strided_slice %77 {offsets = [0, 2, 0], sizes = [16, 16, 32], strides = [1, 1, 1]} : vector<16x18x32xbf16> to vector<16x16x32xbf16>
    %81 = tpu.concatenate %78, %79, %80 in 2 : vector<16x16x32xbf16>, vector<16x16x32xbf16>, vector<16x16x32xbf16> -> vector<16x16x96xbf16>
    %82 = vector.shape_cast %81 : vector<16x16x96xbf16> to vector<256x96xbf16>
    %83 = vector.extract_strided_slice %56 {offsets = [2, 0, 0], sizes = [1, 96, 1], strides = [1, 1, 1]} : vector<3x96x1xbf16> to vector<1x96x1xbf16>
    %84 = vector.shape_cast %83 : vector<1x96x1xbf16> to vector<96x1xbf16>
    %cst_56 = arith.constant dense<0.000000e+00> : vector<256x1xf32>
    %85 = tpu.matmul %82, %84, %cst_56 {dimension_numbers = #tpu.dot_dimension_numbers<[1], [0], [0], [1], [0, 0, 1, 1], [], []>} : vector<256x96xbf16>, vector<96x1xbf16>, vector<256x1xf32> -> vector<256x1xf32>
    %86 = arith.addf %76, %85 : vector<256x1xf32>
    %87 = vector.broadcast %57 : vector<1x1xf32> to vector<256x1xf32>
    %88 = arith.addf %86, %87 : vector<256x1xf32>
    %89 = arith.negf %88 : vector<256x1xf32>
    %90 = math.exp %89 : vector<256x1xf32>
    %cst_57 = arith.constant 1.000000e+00 : f32
    %91 = vector.broadcast %cst_57 : f32 to vector<256x1xf32>
    %92 = arith.addf %91, %90 : vector<256x1xf32>
    %93 = arith.divf %91, %92 : vector<256x1xf32>
    %94 = vector.shape_cast %93 : vector<256x1xf32> to vector<16x16x1xf32>
    %c0_58 = arith.constant 0 : index
    %c0_59 = arith.constant 0 : index
    %c0_60 = arith.constant 0 : index
    %c0_61 = arith.constant 0 : index
    %95 = vector.load %arg8[%c0_58, %c0_59, %c0_60, %c0_61] : memref<1x16x16x1xf32, #tpu.memory_space<vmem>>, vector<1x16x16x1xf32>
    %96 = vector.shape_cast %95 : vector<1x16x16x1xf32> to vector<16x16x1xf32>
    %97 = vector.shape_cast %94 : vector<16x16x1xf32> to vector<1x16x16x1xf32>
    tpu.vector_store %arg8[%c0_58, %c0_59, %c0_60, %c0_61], %97 {strides = array<i32>} : memref<1x16x16x1xf32, #tpu.memory_space<vmem>>, vector<1x16x16x1xf32>,
    return
  }
  func.func @transform_0(%arg0: i32) -> (i32, i32, i32, i32) {
    %c0_i32 = arith.constant 0 : i32
    %c0_i32_0 = arith.constant 0 : i32
    %c0_i32_1 = arith.constant 0 : i32
    %c0_i32_2 = arith.constant 0 : i32
    return %arg0, %c0_i32, %c0_i32_0, %c0_i32_1 : i32, i32, i32, i32
  }
  func.func @transform_1(%arg0: i32) -> (i32, i32, i32) {
    %c0_i32 = arith.constant 0 : i32
    %c0_i32_0 = arith.constant 0 : i32
    %c0_i32_1 = arith.constant 0 : i32
    %c0_i32_2 = arith.constant 0 : i32
    return %c0_i32, %c0_i32_0, %c0_i32_1 : i32, i32, i32
  }
  func.func @transform_2(%arg0: i32) -> (i32, i32) {
    %c0_i32 = arith.constant 0 : i32
    %c0_i32_0 = arith.constant 0 : i32
    %c0_i32_1 = arith.constant 0 : i32
    return %c0_i32, %c0_i32_0 : i32, i32
  }
  func.func @transform_3(%arg0: i32) -> (i32, i32, i32, i32) {
    %c0_i32 = arith.constant 0 : i32
    %c0_i32_0 = arith.constant 0 : i32
    %c0_i32_1 = arith.constant 0 : i32
    %c0_i32_2 = arith.constant 0 : i32
    %c0_i32_3 = arith.constant 0 : i32
    return %c0_i32, %c0_i32_0, %c0_i32_1, %c0_i32_2 : i32, i32, i32, i32
  }
  func.func @transform_4(%arg0: i32) -> (i32, i32, i32) {
    %c0_i32 = arith.constant 0 : i32
    %c0_i32_0 = arith.constant 0 : i32
    %c0_i32_1 = arith.constant 0 : i32
    %c0_i32_2 = arith.constant 0 : i32
    return %c0_i32, %c0_i32_0, %c0_i32_1 : i32, i32, i32
  }
  func.func @transform_5(%arg0: i32) -> (i32, i32, i32) {
    %c0_i32 = arith.constant 0 : i32
    %c0_i32_0 = arith.constant 0 : i32
    %c0_i32_1 = arith.constant 0 : i32
    %c0_i32_2 = arith.constant 0 : i32
    return %c0_i32, %c0_i32_0, %c0_i32_1 : i32, i32, i32
  }
  func.func @transform_6(%arg0: i32) -> (i32, i32) {
    %c0_i32 = arith.constant 0 : i32
    %c0_i32_0 = arith.constant 0 : i32
    %c0_i32_1 = arith.constant 0 : i32
    return %c0_i32, %c0_i32_0 : i32, i32
  }
  func.func @transform_7(%arg0: i32) -> (i32, i32, i32, i32) {
    %c0_i32 = arith.constant 0 : i32
    %c0_i32_0 = arith.constant 0 : i32
    %c0_i32_1 = arith.constant 0 : i32
    %c0_i32_2 = arith.constant 0 : i32
    return %arg0, %c0_i32, %c0_i32_0, %c0_i32_1 : i32, i32, i32, i32
  }
}

</mosaic_0001>

<llo_original>
// kernel: tpu_custom_call.1
$region0: #{tpu_custom_call.1}
  #allocation0 [shape = 'u32[]', space=smem, size = 0x4, offset = 0x4, fixed_abs, tag = 'smem constant byte address 0x4 - core index']
  #allocation1 [shape = 'u32[144,128]{1,0:T(1,128)}', space=vmem, size = 0x12000, scoped, tag = 'internal scratch']
  #allocation2 [shape = 'f32[18,18,4]{2,1,0:T(8,128)}', space=vmem, size = 0x36000, scoped, tag = 'scratch operand']
  #allocation3 [shape = 'bf16[18,18,32]{2,1,0:T(8,128)(2,1)}', space=vmem, size = 0x1b000, scoped, tag = 'scratch operand']
  #allocation4 [shape = 'f32[1,1]{1,0:T(1,128)S(1)}', space=vmem, size = 0x200, scoped, tag = 'scoped memory for tpu_custom_call.1']
  %s0 = inlined_call_operand.vmem [shape: f32[2,16,16,4], index: 0, kind: input, shape index: {}]
  %s1 = inlined_call_operand.vmem [shape: bf16[3,12,32], index: 1, kind: input, shape index: {}]
  %s2 = inlined_call_operand.vmem [shape: f32[1,32], index: 2, kind: input, shape index: {}]
  %s3 = inlined_call_operand.vmem [shape: bf16[3,3,96,32], index: 3, kind: input, shape index: {}]
  %s4 = inlined_call_operand.vmem [shape: f32[3,1,32], index: 4, kind: input, shape index: {}]
  %s5 = inlined_call_operand.vmem [shape: bf16[3,96,1], index: 5, kind: input, shape index: {}]
  %s6 = inlined_call_operand.<no memory space> [shape: f32[1,1], index: 6, kind: input, shape index: {}]
  %s7 = inlined_call_operand.vmem [shape: f32[2,16,16,1], index: 7, kind: output, shape index: {}]
  %s8 = sld [smem:[#allocation0]]
  $region68: #{tpu_custom_call.1} parent=0
    _
  %s10 = ssub.s32 1, %s8
  %s11 = scalar_select 0, %s10, %s8
  %v12 = vstv %s6
  %13 = vst [vmem:[#allocation4] sm:$0x1] %v12
  loop: start=0, step=1, limit=4
  $region2: #{tpu_custom_call.1} parent=0 // loop_pre_header
    _
  $region3: #{tpu_custom_call.1} parent=0 // loop_header
    %s15 = sphi 0, %s19
    %p16 = scmp.ge.s32.totalorder %s15, 4
    %s25 = sphi 0, %s27
    %s28 = sphi 0, %s25
    %s29 = sphi 0, %s28
    %s45 = sphi 0, %s29
    %s49 = sphi 0, %s49
    %s51 = sphi 0, %s49
    %s52 = sphi 0, %s51
    %s66 = sphi 0, %s52
    %s70 = sphi 0, %s70
    %s72 = sphi 0, %s70
    %s73 = sphi 0, %s72
    %s87 = sphi 0, %s73
    %s91 = sphi 0, %s91
    %s93 = sphi 0, %s91
    %s94 = sphi 0, %s93
    %s108 = sphi 0, %s94
    %s112 = sphi 0, %s112
    %s114 = sphi 0, %s112
    %s115 = sphi 0, %s114
    %s129 = sphi 0, %s115
    %s133 = sphi 0, %s133
    %s135 = sphi 0, %s133
    %s136 = sphi 0, %s135
    %s150 = sphi 0, %s136
    %s154 = sphi 0, %s154
    %s156 = sphi 0, %s154
    %s157 = sphi 0, %s156
    %s171 = sphi 0, %s157
    %s177 = sphi 0, %s179
    %s180 = sphi 0, %s177
    %s181 = sphi 0, %s180
    %s197 = sphi 0, %s181
  $region4: #{tpu_custom_call.1} parent=0 // loop_header_branch
    %18 = sbr.rel (%p16) target = $region8
  $region5: #{tpu_custom_call.1} parent=0 // loop_body
    %s20 = ssub.s32 %s15, 1
    %s21 = ssub.s32 %s15, 2
    %s22 = sadd.s32 %s15, 1
    %s23 = ssub.s32 %s15, %s22
    %p24 = scmp.eq.s32.totalorder %s23, 0
    %s26 = sadd.s32 %s25, 1
    %s27 = scalar_select %p24, %s25, %s26
    %p30 = pneg %p24
    %p31 = scmp.eq.s32.totalorder %s15, 1
    %p32 = por %p30, %p31
    %p33 = scmp.ne.s32.totalorder %s25, %s28
    %p34 = scmp.eq.s32.totalorder %s15, 0
    %p35 = por %p33, %p34
    %p36 = scmp.ne.s32.totalorder %s25, %s28
    %p37 = scmp.eq.s32.totalorder %s20, 1
    %p38 = por %p36, %p37
    %p39 = scmp.ne.s32.totalorder %s28, %s29
    %p40 = scmp.eq.s32.totalorder %s20, 0
    %p41 = por %p39, %p40
    %p42 = scmp.ne.s32.totalorder %s28, %s29
    %p43 = scmp.eq.s32.totalorder %s21, 1
    %p44 = por %p42, %p43
    %p46 = scmp.ne.s32.totalorder %s29, %s45
    %p47 = scmp.eq.s32.totalorder %s21, 0
    %p48 = por %p46, %p47
    %s50 = sadd.s32 %s49, 1
    %p53 = scmp.eq.s32.totalorder %s15, 1
    %p54 = scmp.ne.s32.totalorder %s49, %s51
    %p55 = scmp.eq.s32.totalorder %s15, 0
    %p56 = por %p54, %p55
    %p57 = scmp.ne.s32.totalorder %s49, %s51
    %p58 = scmp.eq.s32.totalorder %s20, 1
    %p59 = por %p57, %p58
    %p60 = scmp.ne.s32.totalorder %s51, %s52
    %p61 = scmp.eq.s32.totalorder %s20, 0
    %p62 = por %p60, %p61
    %p63 = scmp.ne.s32.totalorder %s51, %s52
    %p64 = scmp.eq.s32.totalorder %s21, 1
    %p65 = por %p63, %p64
    %p67 = scmp.ne.s32.totalorder %s52, %s66
    %p68 = scmp.eq.s32.totalorder %s21, 0
    %p69 = por %p67, %p68
    %s71 = sadd.s32 %s70, 1
    %p74 = scmp.eq.s32.totalorder %s15, 1
    %p75 = scmp.ne.s32.totalorder %s70, %s72
    %p76 = scmp.eq.s32.totalorder %s15, 0
    %p77 = por %p75, %p76
    %p78 = scmp.ne.s32.totalorder %s70, %s72
    %p79 = scmp.eq.s32.totalorder %s20, 1
    %p80 = por %p78, %p79
    %p81 = scmp.ne.s32.totalorder %s72, %s73
    %p82 = scmp.eq.s32.totalorder %s20, 0
    %p83 = por %p81, %p82
    %p84 = scmp.ne.s32.totalorder %s72, %s73
    %p85 = scmp.eq.s32.totalorder %s21, 1
    %p86 = por %p84, %p85
    %p88 = scmp.ne.s32.totalorder %s73, %s87
    %p89 = scmp.eq.s32.totalorder %s21, 0
    %p90 = por %p88, %p89
    %s92 = sadd.s32 %s91, 1
    %p95 = scmp.eq.s32.totalorder %s15, 1
    %p96 = scmp.ne.s32.totalorder %s91, %s93
    %p97 = scmp.eq.s32.totalorder %s15, 0
    %p98 = por %p96, %p97
    %p99 = scmp.ne.s32.totalorder %s91, %s93
    %p100 = scmp.eq.s32.totalorder %s20, 1
    %p101 = por %p99, %p100
    %p102 = scmp.ne.s32.totalorder %s93, %s94
    %p103 = scmp.eq.s32.totalorder %s20, 0
    %p104 = por %p102, %p103
    %p105 = scmp.ne.s32.totalorder %s93, %s94
    %p106 = scmp.eq.s32.totalorder %s21, 1
    %p107 = por %p105, %p106
    %p109 = scmp.ne.s32.totalorder %s94, %s108
    %p110 = scmp.eq.s32.totalorder %s21, 0
    %p111 = por %p109, %p110
    %s113 = sadd.s32 %s112, 1
    %p116 = scmp.eq.s32.totalorder %s15, 1
    %p117 = scmp.ne.s32.totalorder %s112, %s114
    %p118 = scmp.eq.s32.totalorder %s15, 0
    %p119 = por %p117, %p118
    %p120 = scmp.ne.s32.totalorder %s112, %s114
    %p121 = scmp.eq.s32.totalorder %s20, 1
    %p122 = por %p120, %p121
    %p123 = scmp.ne.s32.totalorder %s114, %s115
    %p124 = scmp.eq.s32.totalorder %s20, 0
    %p125 = por %p123, %p124
    %p126 = scmp.ne.s32.totalorder %s114, %s115
    %p127 = scmp.eq.s32.totalorder %s21, 1
    %p128 = por %p126, %p127
    %p130 = scmp.ne.s32.totalorder %s115, %s129
    %p131 = scmp.eq.s32.totalorder %s21, 0
    %p132 = por %p130, %p131
    %s134 = sadd.s32 %s133, 1
    %p137 = scmp.eq.s32.totalorder %s15, 1
    %p138 = scmp.ne.s32.totalorder %s133, %s135
    %p139 = scmp.eq.s32.totalorder %s15, 0
    %p140 = por %p138, %p139
    %p141 = scmp.ne.s32.totalorder %s133, %s135
    %p142 = scmp.eq.s32.totalorder %s20, 1
    %p143 = por %p141, %p142
    %p144 = scmp.ne.s32.totalorder %s135, %s136
    %p145 = scmp.eq.s32.totalorder %s20, 0
    %p146 = por %p144, %p145
    %p147 = scmp.ne.s32.totalorder %s135, %s136
    %p148 = scmp.eq.s32.totalorder %s21, 1
    %p149 = por %p147, %p148
    %p151 = scmp.ne.s32.totalorder %s136, %s150
    %p152 = scmp.eq.s32.totalorder %s21, 0
    %p153 = por %p151, %p152
    %s155 = sadd.s32 %s154, 1
    %p158 = scmp.eq.s32.totalorder %s15, 1
    %p159 = scmp.ne.s32.totalorder %s154, %s156
    %p160 = scmp.eq.s32.totalorder %s15, 0
    %p161 = por %p159, %p160
    %p162 = scmp.ne.s32.totalorder %s154, %s156
    %p163 = scmp.eq.s32.totalorder %s20, 1
    %p164 = por %p162, %p163
    %p165 = scmp.ne.s32.totalorder %s156, %s157
    %p166 = scmp.eq.s32.totalorder %s20, 0
    %p167 = por %p165, %p166
    %p168 = scmp.ne.s32.totalorder %s156, %s157
    %p169 = scmp.eq.s32.totalorder %s21, 1
    %p170 = por %p168, %p169
    %p172 = scmp.ne.s32.totalorder %s157, %s171
    %p173 = scmp.eq.s32.totalorder %s21, 0
    %p174 = por %p172, %p173
    %s175 = ssub.s32 %s15, %s22
    %p176 = scmp.eq.s32.totalorder %s175, 0
    %s178 = sadd.s32 %s177, 1
    %s179 = scalar_select %p176, %s177, %s178
    %p182 = pneg %p176
    %p183 = scmp.eq.s32.totalorder %s15, 1
    %p184 = por %p182, %p183
    %p185 = scmp.ne.s32.totalorder %s177, %s180
    %p186 = scmp.eq.s32.totalorder %s15, 0
    %p187 = por %p185, %p186
    %p188 = scmp.ne.s32.totalorder %s177, %s180
    %p189 = scmp.eq.s32.totalorder %s20, 1
    %p190 = por %p188, %p189
    %p191 = scmp.ne.s32.totalorder %s180, %s181
    %p192 = scmp.eq.s32.totalorder %s20, 0
    %p193 = por %p191, %p192
    %p194 = scmp.ne.s32.totalorder %s180, %s181
    %p195 = scmp.eq.s32.totalorder %s21, 1
    %p196 = por %p194, %p195
    %p198 = scmp.ne.s32.totalorder %s181, %s197
    %p199 = scmp.eq.s32.totalorder %s21, 0
    %p200 = por %p198, %p199
    %p201 = scmp.le.s32.totalorder 1, %s15
    %p202 = scmp.lt.s32.totalorder %s15, 3
    %p203 = pnand %p201, %p202
    %p204 = pneg %p203
    // Predicated region
    $region9: #{tpu_custom_call.1} parent=5 // pred_check
      _
    $region10: #{tpu_custom_call.1} parent=5 // pred_check_branch
      %206 = sbr.rel (%p203) target = $region12
    $region11: #{tpu_custom_call.1} parent=5 // pred_region
      %s207 = ssub.s32 %s15, 1
      // Predicated region
      $region13: #{tpu_custom_call.1} parent=11 // pred_check
        %p208 = pneg %p62
      $region14: #{tpu_custom_call.1} parent=11 // pred_check_branch
        %210 = sbr.rel (%p208) target = $region16
      $region15: #{tpu_custom_call.1} parent=11 // pred_region
        _
      $region16: #{tpu_custom_call.1} parent=11 // pred_fallthru
        _
      // Predicated region
      $region17: #{tpu_custom_call.1} parent=11 // pred_check
        %p211 = pneg %p83
      $region18: #{tpu_custom_call.1} parent=11 // pred_check_branch
        %213 = sbr.rel (%p211) target = $region20
      $region19: #{tpu_custom_call.1} parent=11 // pred_region
        _
      $region20: #{tpu_custom_call.1} parent=11 // pred_fallthru
        _
      // Predicated region
      $region21: #{tpu_custom_call.1} parent=11 // pred_check
        %p214 = pneg %p104
      $region22: #{tpu_custom_call.1} parent=11 // pred_check_branch
        %216 = sbr.rel (%p214) target = $region24
      $region23: #{tpu_custom_call.1} parent=11 // pred_region
        _
      $region24: #{tpu_custom_call.1} parent=11 // pred_fallthru
        _
      // Predicated region
      $region25: #{tpu_custom_call.1} parent=11 // pred_check
        %p217 = pneg %p125
      $region26: #{tpu_custom_call.1} parent=11 // pred_check_branch
        %219 = sbr.rel (%p217) target = $region28
      $region27: #{tpu_custom_call.1} parent=11 // pred_region
        _
      $region28: #{tpu_custom_call.1} parent=11 // pred_fallthru
        _
      // Predicated region
      $region29: #{tpu_custom_call.1} parent=11 // pred_check
        %p220 = pneg %p146
      $region30: #{tpu_custom_call.1} parent=11 // pred_check_branch
        %222 = sbr.rel (%p220) target = $region32
      $region31: #{tpu_custom_call.1} parent=11 // pred_region
        _
      $region32: #{tpu_custom_call.1} parent=11 // pred_fallthru
        _
      // Predicated region
      $region33: #{tpu_custom_call.1} parent=11 // pred_check
        %p223 = pneg %p167
      $region34: #{tpu_custom_call.1} parent=11 // pred_check_branch
        %225 = sbr.rel (%p223) target = $region36
      $region35: #{tpu_custom_call.1} parent=11 // pred_region
        _
      $region36: #{tpu_custom_call.1} parent=11 // pred_fallthru
        _
    $region12: #{tpu_custom_call.1} parent=5 // pred_fallthru
      _
    %p226 = scmp.lt.s32.totalorder %s15, 2
    // Predicated region
    $region37: #{tpu_custom_call.1} parent=5 // pred_check
      %p227 = pneg %p226
    $region38: #{tpu_custom_call.1} parent=5 // pred_check_branch
      %229 = sbr.rel (%p227) target = $region40
    $region39: #{tpu_custom_call.1} parent=5 // pred_region
      // Predicated region
      $region41: #{tpu_custom_call.1} parent=39 // pred_check
        %p230 = pneg %p35
      $region42: #{tpu_custom_call.1} parent=39 // pred_check_branch
        %232 = sbr.rel (%p230) target = $region44
      $region43: #{tpu_custom_call.1} parent=39 // pred_region
        %p233 = scmp.lt.s32.totalorder %s15, 1
        %s234 = scalar_select %p233, %s15, 1
        %s235 = smul.addr %s234, 32
        %s236 = smul.addr %s235, 8
        %s237 = scalar_lea.vmem %s0, %s236
      $region44: #{tpu_custom_call.1} parent=39 // pred_fallthru
        _
    $region40: #{tpu_custom_call.1} parent=5 // pred_fallthru
      _
    %p238 = scmp.le.s32.totalorder 1, %s15
    %p239 = scmp.lt.s32.totalorder %s15, 3
    %p240 = pnand %p238, %p239
    %p241 = pneg %p240
    // Predicated region
    $region45: #{tpu_custom_call.1} parent=5 // pred_check
      _
    $region46: #{tpu_custom_call.1} parent=5 // pred_check_branch
      %243 = sbr.rel (%p240) target = $region48
    $region47: #{tpu_custom_call.1} parent=5 // pred_region
      %s244 = ssub.s32 %s15, 1
      %p245 = scmp.lt.s32.totalorder %s20, 1
      %s246 = scalar_select %p245, %s20, 1
      %s247 = smul.addr %s246, 32
      %s248 = smul.addr %s247, 8
      %s249 = scalar_lea.vmem %s0, %s248
      %p250 = pneg %p41
      %p251 = pneg %p38
      %p252 = pneg %p62
      %p253 = pneg %p59
      %p254 = pneg %p83
      %p255 = pneg %p80
      %p256 = pneg %p104
      %p257 = pneg %p101
      %p258 = pneg %p125
      %p259 = pneg %p122
      %p260 = pneg %p146
      %p261 = pneg %p143
      %p262 = pneg %p167
      %p263 = pneg %p164
      %p264 = pneg %p193
      %p265 = pneg %p190
      %p266 = scmp.lt.s32.totalorder %s20, 1
      %s267 = scalar_select %p266, %s20, 1
      %s268 = smul.addr %s267, 32
      %s269 = smul.addr %s268, 8
      %s270 = scalar_lea.vmem %s7, %s269
      %p271 = scmp.lt.s32.totalorder %s20, 1
      %s272 = scalar_select %p271, %s20, 1
      %s273 = smul.addr %s272, 32
      %s274 = smul.addr %s273, 8
      %s275 = scalar_lea.vmem %s0, %s274
      %p276 = scmp.lt.s32.totalorder %s20, 1
      %s277 = scalar_select %p276, %s20, 1
      %s278 = smul.addr %s277, 32
      %s279 = smul.addr %s278, 8
      %s280 = scalar_lea.vmem %s7, %s279
      %vm282 = vcmask 31744
      %283 = vst.msk [vmem:[#allocation2] sm:$0xff] %vm282, 0.0
      %284 = vst.msk [vmem:[#allocation2 + $0x8] sm:$0xff] %vm282, 0.0
      %vm285 = vcmask 25600
      %286 = vst.msk [vmem:[#allocation2 + $0x10] sm:$0x3] %vm285, 0.0
      %s287 = scalar_lea.vmem [#allocation2], 408
      %288 = vst.msk [vmem:[%s287] sm:$0xff] %vm282, 0.0
      %289 = vst.msk [vmem:[%s287 + $0x8] sm:$0xff] %vm282, 0.0
      %290 = vst.msk [vmem:[%s287 + $0x10] sm:$0x3] %vm285, 0.0
      %vm291 = vcmask 257024
      %292 = vst.msk [vmem:[#allocation3] sm:$0xf] %vm291, 0
      %293 = vst.msk [vmem:[#allocation3 + $0x4] sm:$0xf] %vm291, 0
      %vm294 = vcmask 253952
      %295 = vst.msk [vmem:[#allocation3 + $0x8] sm:$0x1] %vm294, 0
      %s296 = scalar_lea.vmem [#allocation3], 204
      %297 = vst.msk [vmem:[%s296] sm:$0xf] %vm291, 0
      %298 = vst.msk [vmem:[%s296 + $0x4] sm:$0xf] %vm291, 0
      %299 = vst.msk [vmem:[%s296 + $0x8] sm:$0x1] %vm294, 0
      %v300 = vld [vmem:[%s275] sm:$0xff]
      %v301 = vld [vmem:[%s275 + $0x8] sm:$0xff]
      %v302 = vld [vmem:[%s275 + $0x10] sm:$0xff]
      %v303 = vld [vmem:[%s275 + $0x18] sm:$0xff]
      %v304 = vld [vmem:[%s275 + $0x20] sm:$0xff]
      %v305 = vld [vmem:[%s275 + $0x28] sm:$0xff]
      %v306 = vld [vmem:[%s275 + $0x30] sm:$0xff]
      %v307 = vld [vmem:[%s275 + $0x38] sm:$0xff]
      %v308 = vld [vmem:[%s275 + $0x40] sm:$0xff]
      %v309 = vld [vmem:[%s275 + $0x48] sm:$0xff]
      %v310 = vld [vmem:[%s275 + $0x50] sm:$0xff]
      %v311 = vld [vmem:[%s275 + $0x58] sm:$0xff]
      %v312 = vld [vmem:[%s275 + $0x60] sm:$0xff]
      %v313 = vld [vmem:[%s275 + $0x68] sm:$0xff]
      %v314 = vld [vmem:[%s275 + $0x70] sm:$0xff]
      %v315 = vld [vmem:[%s275 + $0x78] sm:$0xff]
      %v316 = vld [vmem:[%s275 + $0x80] sm:$0xff]
      %v317 = vld [vmem:[%s275 + $0x88] sm:$0xff]
      %v318 = vld [vmem:[%s275 + $0x90] sm:$0xff]
      %v319 = vld [vmem:[%s275 + $0x98] sm:$0xff]
      %v320 = vld [vmem:[%s275 + $0xa0] sm:$0xff]
      %v321 = vld [vmem:[%s275 + $0xa8] sm:$0xff]
      %v322 = vld [vmem:[%s275 + $0xb0] sm:$0xff]
      %v323 = vld [vmem:[%s275 + $0xb8] sm:$0xff]
      %v324 = vld [vmem:[%s275 + $0xc0] sm:$0xff]
      %v325 = vld [vmem:[%s275 + $0xc8] sm:$0xff]
      %v326 = vld [vmem:[%s275 + $0xd0] sm:$0xff]
      %v327 = vld [vmem:[%s275 + $0xd8] sm:$0xff]
      %v328 = vld [vmem:[%s275 + $0xe0] sm:$0xff]
      %v329 = vld [vmem:[%s275 + $0xe8] sm:$0xff]
      %v330 = vld [vmem:[%s275 + $0xf0] sm:$0xff]
      %v331 = vld [vmem:[%s275 + $0xf8] sm:$0xff]
      %vm364 = vcmask 1040384
      %v365 = vrot.slane %v300, 7
      %v366 = vrot.slane %v301, 7
      %v367 = vsel %vm364, %v365, %v366
      %v368 = vrot.slane %v302, 7
      %v369 = vrot.slane %v303, 7
      %v370 = vsel %vm364, %v368, %v369
      %v371 = vrot.slane %v304, 7
      %v372 = vrot.slane %v305, 7
      %v373 = vsel %vm364, %v371, %v372
      %v374 = vrot.slane %v306, 7
      %v375 = vrot.slane %v307, 7
      %v376 = vsel %vm364, %v374, %v375
      %v377 = vrot.slane %v308, 7
      %v378 = vrot.slane %v309, 7
      %v379 = vsel %vm364, %v377, %v378
      %v380 = vrot.slane %v310, 7
      %v381 = vrot.slane %v311, 7
      %v382 = vsel %vm364, %v380, %v381
      %v383 = vrot.slane %v312, 7
      %v384 = vrot.slane %v313, 7
      %v385 = vsel %vm364, %v383, %v384
      %v386 = vrot.slane %v314, 7
      %v387 = vrot.slane %v315, 7
      %v388 = vsel %vm364, %v386, %v387
      %v389 = vrot.slane %v316, 7
      %v390 = vrot.slane %v317, 7
      %v391 = vsel %vm364, %v389, %v390
      %v392 = vrot.slane %v318, 7
      %v393 = vrot.slane %v319, 7
      %v394 = vsel %vm364, %v392, %v393
      %v395 = vrot.slane %v320, 7
      %v396 = vrot.slane %v321, 7
      %v397 = vsel %vm364, %v395, %v396
      %v398 = vrot.slane %v322, 7
      %v399 = vrot.slane %v323, 7
      %v400 = vsel %vm364, %v398, %v399
      %v401 = vrot.slane %v324, 7
      %v402 = vrot.slane %v325, 7
      %v403 = vsel %vm364, %v401, %v402
      %v404 = vrot.slane %v326, 7
      %v405 = vrot.slane %v327, 7
      %v406 = vsel %vm364, %v404, %v405
      %v407 = vrot.slane %v328, 7
      %v408 = vrot.slane %v329, 7
      %v409 = vsel %vm364, %v407, %v408
      %v410 = vrot.slane %v330, 7
      %v411 = vrot.slane %v331, 7
      %v412 = vsel %vm364, %v410, %v411
      %v461 = vsel %vm364, 0.0, %v365
      %v462 = vsel %vm364, 0.0, %v368
      %v463 = vsel %vm364, 0.0, %v371
      %v464 = vsel %vm364, 0.0, %v374
      %v465 = vsel %vm364, 0.0, %v377
      %v466 = vsel %vm364, 0.0, %v380
      %v467 = vsel %vm364, 0.0, %v383
      %v468 = vsel %vm364, 0.0, %v386
      %v469 = vsel %vm364, 0.0, %v389
      %v470 = vsel %vm364, 0.0, %v392
      %v471 = vsel %vm364, 0.0, %v395
      %v472 = vsel %vm364, 0.0, %v398
      %v473 = vsel %vm364, 0.0, %v401
      %v474 = vsel %vm364, 0.0, %v404
      %v475 = vsel %vm364, 0.0, %v407
      %v476 = vsel %vm364, 0.0, %v410
      %v477 = vsel %vm364, %v366, 0.0
      %v478 = vsel %vm364, %v369, 0.0
      %v479 = vsel %vm364, %v372, 0.0
      %v480 = vsel %vm364, %v375, 0.0
      %v481 = vsel %vm364, %v378, 0.0
      %v482 = vsel %vm364, %v381, 0.0
      %v483 = vsel %vm364, %v384, 0.0
      %v484 = vsel %vm364, %v387, 0.0
      %v485 = vsel %vm364, %v390, 0.0
      %v486 = vsel %vm364, %v393, 0.0
      %v487 = vsel %vm364, %v396, 0.0
      %v488 = vsel %vm364, %v399, 0.0
      %v489 = vsel %vm364, %v402, 0.0
      %v490 = vsel %vm364, %v405, 0.0
      %v491 = vsel %vm364, %v408, 0.0
      %v492 = vsel %vm364, %v411, 0.0
      %s493 = scalar_lea.vmem [#allocation2], 24
      %494 = vst.msk [vmem:[%s493] sm:$0xff] %vm282, %v461
      %495 = vst.msk [vmem:[%s493 + $0x8] sm:$0xff] %vm282, %v367
      %496 = vst.msk [vmem:[%s493 + $0x10] sm:$0x3] %vm285, %v477
      %497 = vst.msk [vmem:[%s493 + $0x18] sm:$0xff] %vm282, %v462
      %498 = vst.msk [vmem:[%s493 + $0x20] sm:$0xff] %vm282, %v370
      %499 = vst.msk [vmem:[%s493 + $0x28] sm:$0x3] %vm285, %v478
      %500 = vst.msk [vmem:[%s493 + $0x30] sm:$0xff] %vm282, %v463
      %501 = vst.msk [vmem:[%s493 + $0x38] sm:$0xff] %vm282, %v373
      %502 = vst.msk [vmem:[%s493 + $0x40] sm:$0x3] %vm285, %v479
      %503 = vst.msk [vmem:[%s493 + $0x48] sm:$0xff] %vm282, %v464
      %504 = vst.msk [vmem:[%s493 + $0x50] sm:$0xff] %vm282, %v376
      %505 = vst.msk [vmem:[%s493 + $0x58] sm:$0x3] %vm285, %v480
      %506 = vst.msk [vmem:[%s493 + $0x60] sm:$0xff] %vm282, %v465
      %507 = vst.msk [vmem:[%s493 + $0x68] sm:$0xff] %vm282, %v379
      %508 = vst.msk [vmem:[%s493 + $0x70] sm:$0x3] %vm285, %v481
      %509 = vst.msk [vmem:[%s493 + $0x78] sm:$0xff] %vm282, %v466
      %510 = vst.msk [vmem:[%s493 + $0x80] sm:$0xff] %vm282, %v382
      %511 = vst.msk [vmem:[%s493 + $0x88] sm:$0x3] %vm285, %v482
      %512 = vst.msk [vmem:[%s493 + $0x90] sm:$0xff] %vm282, %v467
      %513 = vst.msk [vmem:[%s493 + $0x98] sm:$0xff] %vm282, %v385
      %514 = vst.msk [vmem:[%s493 + $0xa0] sm:$0x3] %vm285, %v483
      %515 = vst.msk [vmem:[%s493 + $0xa8] sm:$0xff] %vm282, %v468
      %516 = vst.msk [vmem:[%s493 + $0xb0] sm:$0xff] %vm282, %v388
      %517 = vst.msk [vmem:[%s493 + $0xb8] sm:$0x3] %vm285, %v484
      %518 = vst.msk [vmem:[%s493 + $0xc0] sm:$0xff] %vm282, %v469
      %519 = vst.msk [vmem:[%s493 + $0xc8] sm:$0xff] %vm282, %v391
      %520 = vst.msk [vmem:[%s493 + $0xd0] sm:$0x3] %vm285, %v485
      %521 = vst.msk [vmem:[%s493 + $0xd8] sm:$0xff] %vm282, %v470
      %522 = vst.msk [vmem:[%s493 + $0xe0] sm:$0xff] %vm282, %v394
      %523 = vst.msk [vmem:[%s493 + $0xe8] sm:$0x3] %vm285, %v486
      %524 = vst.msk [vmem:[%s493 + $0xf0] sm:$0xff] %vm282, %v471
      %525 = vst.msk [vmem:[%s493 + $0xf8] sm:$0xff] %vm282, %v397
      %526 = vst.msk [vmem:[%s493 + $0x100] sm:$0x3] %vm285, %v487
      %527 = vst.msk [vmem:[%s493 + $0x108] sm:$0xff] %vm282, %v472
      %528 = vst.msk [vmem:[%s493 + $0x110] sm:$0xff] %vm282, %v400
      %529 = vst.msk [vmem:[%s493 + $0x118] sm:$0x3] %vm285, %v488
      %530 = vst.msk [vmem:[%s493 + $0x120] sm:$0xff] %vm282, %v473
      %531 = vst.msk [vmem:[%s493 + $0x128] sm:$0xff] %vm282, %v403
      %532 = vst.msk [vmem:[%s493 + $0x130] sm:$0x3] %vm285, %v489
      %533 = vst.msk [vmem:[%s493 + $0x138] sm:$0xff] %vm282, %v474
      %534 = vst.msk [vmem:[%s493 + $0x140] sm:$0xff] %vm282, %v406
      %535 = vst.msk [vmem:[%s493 + $0x148] sm:$0x3] %vm285, %v490
      %536 = vst.msk [vmem:[%s493 + $0x150] sm:$0xff] %vm282, %v475
      %537 = vst.msk [vmem:[%s493 + $0x158] sm:$0xff] %vm282, %v409
      %538 = vst.msk [vmem:[%s493 + $0x160] sm:$0x3] %vm285, %v491
      %539 = vst.msk [vmem:[%s493 + $0x168] sm:$0xff] %vm282, %v476
      %540 = vst.msk [vmem:[%s493 + $0x170] sm:$0xff] %vm282, %v412
      %541 = vst.msk [vmem:[%s493 + $0x178] sm:$0x3] %vm285, %v492
      %v542 = vld [vmem:[%s1] sm:$0xf]
      %v543 = vld [vmem:[%s1 + $0x4] sm:$0x3]
      %v544 = vld [vmem:[%s1 + $0x8] sm:$0xf]
      %v545 = vld [vmem:[%s1 + $0xc] sm:$0x3]
      %v546 = vld [vmem:[%s1 + $0x10] sm:$0xf]
      %v547 = vld [vmem:[%s1 + $0x14] sm:$0x3]
      %v548 = vld [vmem:[%s2] sm:$0x1]
      %v549 = vld [vmem:[#allocation2] sm:$0xff]
      %v550 = vld [vmem:[#allocation2 + $0x8] sm:$0xff]
      %v551 = vld [vmem:[#allocation2 + $0x10] sm:$0x3]
      %v552 = vld [vmem:[#allocation2 + $0x18] sm:$0xff]
      %v553 = vld [vmem:[#allocation2 + $0x20] sm:$0xff]
      %v554 = vld [vmem:[#allocation2 + $0x28] sm:$0x3]
      %v555 = vld [vmem:[#allocation2 + $0x30] sm:$0xff]
      %v556 = vld [vmem:[#allocation2 + $0x38] sm:$0xff]
      %v557 = vld [vmem:[#allocation2 + $0x40] sm:$0x3]
      %v558 = vld [vmem:[#allocation2 + $0x48] sm:$0xff]
      %v559 = vld [vmem:[#allocation2 + $0x50] sm:$0xff]
      %v560 = vld [vmem:[#allocation2 + $0x58] sm:$0x3]
      %v561 = vld [vmem:[#allocation2 + $0x60] sm:$0xff]
      %v562 = vld [vmem:[#allocation2 + $0x68] sm:$0xff]
      %v563 = vld [vmem:[#allocation2 + $0x70] sm:$0x3]
      %v564 = vld [vmem:[#allocation2 + $0x78] sm:$0xff]
      %v565 = vld [vmem:[#allocation2 + $0x80] sm:$0xff]
      %v566 = vld [vmem:[#allocation2 + $0x88] sm:$0x3]
      %v567 = vld [vmem:[#allocation2 + $0x90] sm:$0xff]
      %v568 = vld [vmem:[#allocation2 + $0x98] sm:$0xff]
      %v569 = vld [vmem:[#allocation2 + $0xa0] sm:$0x3]
      %v570 = vld [vmem:[#allocation2 + $0xa8] sm:$0xff]
      %v571 = vld [vmem:[#allocation2 + $0xb0] sm:$0xff]
      %v572 = vld [vmem:[#allocation2 + $0xb8] sm:$0x3]
      %v573 = vld [vmem:[#allocation2 + $0xc0] sm:$0xff]
      %v574 = vld [vmem:[#allocation2 + $0xc8] sm:$0xff]
      %v575 = vld [vmem:[#allocation2 + $0xd0] sm:$0x3]
      %v576 = vld [vmem:[#allocation2 + $0xd8] sm:$0xff]
      %v577 = vld [vmem:[#allocation2 + $0xe0] sm:$0xff]
      %v578 = vld [vmem:[#allocation2 + $0xe8] sm:$0x3]
      %v579 = vld [vmem:[#allocation2 + $0xf0] sm:$0xff]
      %v580 = vld [vmem:[#allocation2 + $0xf8] sm:$0xff]
      %v581 = vld [vmem:[#allocation2 + $0x100] sm:$0x3]
      %v582 = vld [vmem:[#allocation2 + $0x108] sm:$0xff]
      %v583 = vld [vmem:[#allocation2 + $0x110] sm:$0xff]
      %v584 = vld [vmem:[#allocation2 + $0x118] sm:$0x3]
      %v585 = vld [vmem:[#allocation2 + $0x120] sm:$0xff]
      %v586 = vld [vmem:[#allocation2 + $0x128] sm:$0xff]
      %v587 = vld [vmem:[#allocation2 + $0x130] sm:$0x3]
      %v588 = vld [vmem:[#allocation2 + $0x138] sm:$0xff]
      %v589 = vld [vmem:[#allocation2 + $0x140] sm:$0xff]
      %v590 = vld [vmem:[#allocation2 + $0x148] sm:$0x3]
      %v591 = vld [vmem:[#allocation2 + $0x150] sm:$0xff]
      %v592 = vld [vmem:[#allocation2 + $0x158] sm:$0xff]
      %v593 = vld [vmem:[#allocation2 + $0x160] sm:$0x3]
      %v594 = vld [vmem:[#allocation2 + $0x168] sm:$0xff]
      %v595 = vld [vmem:[#allocation2 + $0x170] sm:$0xff]
      %v596 = vld [vmem:[#allocation2 + $0x178] sm:$0x3]
      %vm645 = vcmask 1046528
      %v646 = vrot.slane %v549, 1
      %v647 = vrot.slane %v550, 1
      %v648 = vsel %vm645, %v646, %v647
      %v649 = vrot.slane %v551, 1
      %v650 = vsel %vm645, %v647, %v649
      %v651 = vrot.slane %v552, 1
      %v652 = vrot.slane %v553, 1
      %v653 = vsel %vm645, %v651, %v652
      %v654 = vrot.slane %v554, 1
      %v655 = vsel %vm645, %v652, %v654
      %v656 = vrot.slane %v555, 1
      %v657 = vrot.slane %v556, 1
      %v658 = vsel %vm645, %v656, %v657
      %v659 = vrot.slane %v557, 1
      %v660 = vsel %vm645, %v657, %v659
      %v661 = vrot.slane %v558, 1
      %v662 = vrot.slane %v559, 1
      %v663 = vsel %vm645, %v661, %v662
      %v664 = vrot.slane %v560, 1
      %v665 = vsel %vm645, %v662, %v664
      %v666 = vrot.slane %v561, 1
      %v667 = vrot.slane %v562, 1
      %v668 = vsel %vm645, %v666, %v667
      %v669 = vrot.slane %v563, 1
      %v670 = vsel %vm645, %v667, %v669
      %v671 = vrot.slane %v564, 1
      %v672 = vrot.slane %v565, 1
      %v673 = vsel %vm645, %v671, %v672
      %v674 = vrot.slane %v566, 1
      %v675 = vsel %vm645, %v672, %v674
      %v676 = vrot.slane %v567, 1
      %v677 = vrot.slane %v568, 1
      %v678 = vsel %vm645, %v676, %v677
      %v679 = vrot.slane %v569, 1
      %v680 = vsel %vm645, %v677, %v679
      %v681 = vrot.slane %v570, 1
      %v682 = vrot.slane %v571, 1
      %v683 = vsel %vm645, %v681, %v682
      %v684 = vrot.slane %v572, 1
      %v685 = vsel %vm645, %v682, %v684
      %v686 = vrot.slane %v573, 1
      %v687 = vrot.slane %v574, 1
      %v688 = vsel %vm645, %v686, %v687
      %v689 = vrot.slane %v575, 1
      %v690 = vsel %vm645, %v687, %v689
      %v691 = vrot.slane %v576, 1
      %v692 = vrot.slane %v577, 1
      %v693 = vsel %vm645, %v691, %v692
      %v694 = vrot.slane %v578, 1
      %v695 = vsel %vm645, %v692, %v694
      %v696 = vrot.slane %v579, 1
      %v697 = vrot.slane %v580, 1
      %v698 = vsel %vm645, %v696, %v697
      %v699 = vrot.slane %v581, 1
      %v700 = vsel %vm645, %v697, %v699
      %v701 = vrot.slane %v582, 1
      %v702 = vrot.slane %v583, 1
      %v703 = vsel %vm645, %v701, %v702
      %v704 = vrot.slane %v584, 1
      %v705 = vsel %vm645, %v702, %v704
      %v706 = vrot.slane %v585, 1
      %v707 = vrot.slane %v586, 1
      %v708 = vsel %vm645, %v706, %v707
      %v709 = vrot.slane %v587, 1
      %v710 = vsel %vm645, %v707, %v709
      %v711 = vrot.slane %v588, 1
      %v712 = vrot.slane %v589, 1
      %v713 = vsel %vm645, %v711, %v712
      %v714 = vrot.slane %v590, 1
      %v715 = vsel %vm645, %v712, %v714
      %v716 = vrot.slane %v591, 1
      %v717 = vrot.slane %v592, 1
      %v718 = vsel %vm645, %v716, %v717
      %v719 = vrot.slane %v593, 1
      %v720 = vsel %vm645, %v717, %v719
      %v721 = vrot.slane %v594, 1
      %v722 = vrot.slane %v595, 1
      %v723 = vsel %vm645, %v721, %v722
      %v724 = vrot.slane %v596, 1
      %v725 = vsel %vm645, %v722, %v724
      %726 = vrot.lane.b32.xlu0 %v648, 4
      %v727 = vpop.permute.xlu0 %726
      %728 = vrot.lane.b32.xlu0 %v650, 4
      %v729 = vpop.permute.xlu0 %728
      %730 = vrot.lane.b32.xlu0 %v653, 4
      %v731 = vpop.permute.xlu0 %730
      %732 = vrot.lane.b32.xlu0 %v655, 4
      %v733 = vpop.permute.xlu0 %732
      %734 = vrot.lane.b32.xlu0 %v658, 4
      %v735 = vpop.permute.xlu0 %734
      %736 = vrot.lane.b32.xlu0 %v660, 4
      %v737 = vpop.permute.xlu0 %736
      %738 = vrot.lane.b32.xlu0 %v663, 4
      %v739 = vpop.permute.xlu0 %738
      %740 = vrot.lane.b32.xlu0 %v665, 4
      %v741 = vpop.permute.xlu0 %740
      %742 = vrot.lane.b32.xlu0 %v668, 4
      %v743 = vpop.permute.xlu0 %742
      %744 = vrot.lane.b32.xlu0 %v670, 4
      %v745 = vpop.permute.xlu0 %744
      %746 = vrot.lane.b32.xlu0 %v673, 4
      %v747 = vpop.permute.xlu0 %746
      %748 = vrot.lane.b32.xlu0 %v675, 4
      %v749 = vpop.permute.xlu0 %748
      %750 = vrot.lane.b32.xlu0 %v678, 4
      %v751 = vpop.permute.xlu0 %750
      %752 = vrot.lane.b32.xlu0 %v680, 4
      %v753 = vpop.permute.xlu0 %752
      %754 = vrot.lane.b32.xlu0 %v683, 4
      %v755 = vpop.permute.xlu0 %754
      %756 = vrot.lane.b32.xlu0 %v685, 4
      %v757 = vpop.permute.xlu0 %756
      %758 = vrot.lane.b32.xlu0 %v688, 4
      %v759 = vpop.permute.xlu0 %758
      %760 = vrot.lane.b32.xlu0 %v690, 4
      %v761 = vpop.permute.xlu0 %760
      %762 = vrot.lane.b32.xlu0 %v693, 4
      %v763 = vpop.permute.xlu0 %762
      %764 = vrot.lane.b32.xlu0 %v695, 4
      %v765 = vpop.permute.xlu0 %764
      %766 = vrot.lane.b32.xlu0 %v698, 4
      %v767 = vpop.permute.xlu0 %766
      %768 = vrot.lane.b32.xlu0 %v700, 4
      %v769 = vpop.permute.xlu0 %768
      %770 = vrot.lane.b32.xlu0 %v703, 4
      %v771 = vpop.permute.xlu0 %770
      %772 = vrot.lane.b32.xlu0 %v705, 4
      %v773 = vpop.permute.xlu0 %772
      %774 = vrot.lane.b32.xlu0 %v708, 4
      %v775 = vpop.permute.xlu0 %774
      %776 = vrot.lane.b32.xlu0 %v710, 4
      %v777 = vpop.permute.xlu0 %776
      %778 = vrot.lane.b32.xlu0 %v713, 4
      %v779 = vpop.permute.xlu0 %778
      %780 = vrot.lane.b32.xlu0 %v715, 4
      %v781 = vpop.permute.xlu0 %780
      %782 = vrot.lane.b32.xlu0 %v718, 4
      %v783 = vpop.permute.xlu0 %782
      %784 = vrot.lane.b32.xlu0 %v720, 4
      %v785 = vpop.permute.xlu0 %784
      %786 = vrot.lane.b32.xlu0 %v723, 4
      %v787 = vpop.permute.xlu0 %786
      %788 = vrot.lane.b32.xlu0 %v725, 4
      %v789 = vpop.permute.xlu0 %788
      %vm822 = vcmask 1045504
      %v823 = vrot.slane %v549, 2
      %v824 = vrot.slane %v550, 2
      %v825 = vsel %vm822, %v823, %v824
      %v826 = vrot.slane %v551, 2
      %v827 = vsel %vm822, %v824, %v826
      %v828 = vrot.slane %v552, 2
      %v829 = vrot.slane %v553, 2
      %v830 = vsel %vm822, %v828, %v829
      %v831 = vrot.slane %v554, 2
      %v832 = vsel %vm822, %v829, %v831
      %v833 = vrot.slane %v555, 2
      %v834 = vrot.slane %v556, 2
      %v835 = vsel %vm822, %v833, %v834
      %v836 = vrot.slane %v557, 2
      %v837 = vsel %vm822, %v834, %v836
      %v838 = vrot.slane %v558, 2
      %v839 = vrot.slane %v559, 2
      %v840 = vsel %vm822, %v838, %v839
      %v841 = vrot.slane %v560, 2
      %v842 = vsel %vm822, %v839, %v841
      %v843 = vrot.slane %v561, 2
      %v844 = vrot.slane %v562, 2
      %v845 = vsel %vm822, %v843, %v844
      %v846 = vrot.slane %v563, 2
      %v847 = vsel %vm822, %v844, %v846
      %v848 = vrot.slane %v564, 2
      %v849 = vrot.slane %v565, 2
      %v850 = vsel %vm822, %v848, %v849
      %v851 = vrot.slane %v566, 2
      %v852 = vsel %vm822, %v849, %v851
      %v853 = vrot.slane %v567, 2
      %v854 = vrot.slane %v568, 2
      %v855 = vsel %vm822, %v853, %v854
      %v856 = vrot.slane %v569, 2
      %v857 = vsel %vm822, %v854, %v856
      %v858 = vrot.slane %v570, 2
      %v859 = vrot.slane %v571, 2
      %v860 = vsel %vm822, %v858, %v859
      %v861 = vrot.slane %v572, 2
      %v862 = vsel %vm822, %v859, %v861
      %v863 = vrot.slane %v573, 2
      %v864 = vrot.slane %v574, 2
      %v865 = vsel %vm822, %v863, %v864
      %v866 = vrot.slane %v575, 2
      %v867 = vsel %vm822, %v864, %v866
      %v868 = vrot.slane %v576, 2
      %v869 = vrot.slane %v577, 2
      %v870 = vsel %vm822, %v868, %v869
      %v871 = vrot.slane %v578, 2
      %v872 = vsel %vm822, %v869, %v871
      %v873 = vrot.slane %v579, 2
      %v874 = vrot.slane %v580, 2
      %v875 = vsel %vm822, %v873, %v874
      %v876 = vrot.slane %v581, 2
      %v877 = vsel %vm822, %v874, %v876
      %v878 = vrot.slane %v582, 2
      %v879 = vrot.slane %v583, 2
      %v880 = vsel %vm822, %v878, %v879
      %v881 = vrot.slane %v584, 2
      %v882 = vsel %vm822, %v879, %v881
      %v883 = vrot.slane %v585, 2
      %v884 = vrot.slane %v586, 2
      %v885 = vsel %vm822, %v883, %v884
      %v886 = vrot.slane %v587, 2
      %v887 = vsel %vm822, %v884, %v886
      %v888 = vrot.slane %v588, 2
      %v889 = vrot.slane %v589, 2
      %v890 = vsel %vm822, %v888, %v889
      %v891 = vrot.slane %v590, 2
      %v892 = vsel %vm822, %v889, %v891
      %v893 = vrot.slane %v591, 2
      %v894 = vrot.slane %v592, 2
      %v895 = vsel %vm822, %v893, %v894
      %v896 = vrot.slane %v593, 2
      %v897 = vsel %vm822, %v894, %v896
      %v898 = vrot.slane %v594, 2
      %v899 = vrot.slane %v595, 2
      %v900 = vsel %vm822, %v898, %v899
      %v901 = vrot.slane %v596, 2
      %v902 = vsel %vm822, %v899, %v901
      %903 = vrot.lane.b32.xlu0 %v825, 8
      %v904 = vpop.permute.xlu0 %903
      %905 = vrot.lane.b32.xlu0 %v827, 8
      %v906 = vpop.permute.xlu0 %905
      %907 = vrot.lane.b32.xlu0 %v830, 8
      %v908 = vpop.permute.xlu0 %907
      %909 = vrot.lane.b32.xlu0 %v832, 8
      %v910 = vpop.permute.xlu0 %909
      %911 = vrot.lane.b32.xlu0 %v835, 8
      %v912 = vpop.permute.xlu0 %911
      %913 = vrot.lane.b32.xlu0 %v837, 8
      %v914 = vpop.permute.xlu0 %913
      %915 = vrot.lane.b32.xlu0 %v840, 8
      %v916 = vpop.permute.xlu0 %915
      %917 = vrot.lane.b32.xlu0 %v842, 8
      %v918 = vpop.permute.xlu0 %917
      %919 = vrot.lane.b32.xlu0 %v845, 8
      %v920 = vpop.permute.xlu0 %919
      %921 = vrot.lane.b32.xlu0 %v847, 8
      %v922 = vpop.permute.xlu0 %921
      %923 = vrot.lane.b32.xlu0 %v850, 8
      %v924 = vpop.permute.xlu0 %923
      %925 = vrot.lane.b32.xlu0 %v852, 8
      %v926 = vpop.permute.xlu0 %925
      %927 = vrot.lane.b32.xlu0 %v855, 8
      %v928 = vpop.permute.xlu0 %927
      %929 = vrot.lane.b32.xlu0 %v857, 8
      %v930 = vpop.permute.xlu0 %929
      %931 = vrot.lane.b32.xlu0 %v860, 8
      %v932 = vpop.permute.xlu0 %931
      %933 = vrot.lane.b32.xlu0 %v862, 8
      %v934 = vpop.permute.xlu0 %933
      %935 = vrot.lane.b32.xlu0 %v865, 8
      %v936 = vpop.permute.xlu0 %935
      %937 = vrot.lane.b32.xlu0 %v867, 8
      %v938 = vpop.permute.xlu0 %937
      %939 = vrot.lane.b32.xlu0 %v870, 8
      %v940 = vpop.permute.xlu0 %939
      %941 = vrot.lane.b32.xlu0 %v872, 8
      %v942 = vpop.permute.xlu0 %941
      %943 = vrot.lane.b32.xlu0 %v875, 8
      %v944 = vpop.permute.xlu0 %943
      %945 = vrot.lane.b32.xlu0 %v877, 8
      %v946 = vpop.permute.xlu0 %945
      %947 = vrot.lane.b32.xlu0 %v880, 8
      %v948 = vpop.permute.xlu0 %947
      %949 = vrot.lane.b32.xlu0 %v882, 8
      %v950 = vpop.permute.xlu0 %949
      %951 = vrot.lane.b32.xlu0 %v885, 8
      %v952 = vpop.permute.xlu0 %951
      %953 = vrot.lane.b32.xlu0 %v887, 8
      %v954 = vpop.permute.xlu0 %953
      %955 = vrot.lane.b32.xlu0 %v890, 8
      %v956 = vpop.permute.xlu0 %955
      %957 = vrot.lane.b32.xlu0 %v892, 8
      %v958 = vpop.permute.xlu0 %957
      %959 = vrot.lane.b32.xlu0 %v895, 8
      %v960 = vpop.permute.xlu0 %959
      %961 = vrot.lane.b32.xlu0 %v897, 8
      %v962 = vpop.permute.xlu0 %961
      %963 = vrot.lane.b32.xlu0 %v900, 8
      %v964 = vpop.permute.xlu0 %963
      %965 = vrot.lane.b32.xlu0 %v902, 8
      %v966 = vpop.permute.xlu0 %965
      %v999 = vsel %vm282, %v549, %v727
      %v1000 = vsel %vm282, %v550, %v729
      %v1001 = vsel %vm282, %v552, %v731
      %v1002 = vsel %vm282, %v553, %v733
      %v1003 = vsel %vm282, %v555, %v735
      %v1004 = vsel %vm282, %v556, %v737
      %v1005 = vsel %vm282, %v558, %v739
      %v1006 = vsel %vm282, %v559, %v741
      %v1007 = vsel %vm282, %v561, %v743
      %v1008 = vsel %vm282, %v562, %v745
      %v1009 = vsel %vm282, %v564, %v747
      %v1010 = vsel %vm282, %v565, %v749
      %v1011 = vsel %vm282, %v567, %v751
      %v1012 = vsel %vm282, %v568, %v753
      %v1013 = vsel %vm282, %v570, %v755
      %v1014 = vsel %vm282, %v571, %v757
      %v1015 = vsel %vm282, %v573, %v759
      %v1016 = vsel %vm282, %v574, %v761
      %v1017 = vsel %vm282, %v576, %v763
      %v1018 = vsel %vm282, %v577, %v765
      %v1019 = vsel %vm282, %v579, %v767
      %v1020 = vsel %vm282, %v580, %v769
      %v1021 = vsel %vm282, %v582, %v771
      %v1022 = vsel %vm282, %v583, %v773
      %v1023 = vsel %vm282, %v585, %v775
      %v1024 = vsel %vm282, %v586, %v777
      %v1025 = vsel %vm282, %v588, %v779
      %v1026 = vsel %vm282, %v589, %v781
      %v1027 = vsel %vm282, %v591, %v783
      %v1028 = vsel %vm282, %v592, %v785
      %v1029 = vsel %vm282, %v594, %v787
      %v1030 = vsel %vm282, %v595, %v789
      %vm1031 = vcmask 64512
      %v1032 = vsel %vm1031, %v999, %v904
      %v1033 = vsel %vm1031, %v1000, %v906
      %v1034 = vsel %vm1031, %v1001, %v908
      %v1035 = vsel %vm1031, %v1002, %v910
      %v1036 = vsel %vm1031, %v1003, %v912
      %v1037 = vsel %vm1031, %v1004, %v914
      %v1038 = vsel %vm1031, %v1005, %v916
      %v1039 = vsel %vm1031, %v1006, %v918
      %v1040 = vsel %vm1031, %v1007, %v920
      %v1041 = vsel %vm1031, %v1008, %v922
      %v1042 = vsel %vm1031, %v1009, %v924
      %v1043 = vsel %vm1031, %v1010, %v926
      %v1044 = vsel %vm1031, %v1011, %v928
      %v1045 = vsel %vm1031, %v1012, %v930
      %v1046 = vsel %vm1031, %v1013, %v932
      %v1047 = vsel %vm1031, %v1014, %v934
      %v1048 = vsel %vm1031, %v1015, %v936
      %v1049 = vsel %vm1031, %v1016, %v938
      %v1050 = vsel %vm1031, %v1017, %v940
      %v1051 = vsel %vm1031, %v1018, %v942
      %v1052 = vsel %vm1031, %v1019, %v944
      %v1053 = vsel %vm1031, %v1020, %v946
      %v1054 = vsel %vm1031, %v1021, %v948
      %v1055 = vsel %vm1031, %v1022, %v950
      %v1056 = vsel %vm1031, %v1023, %v952
      %v1057 = vsel %vm1031, %v1024, %v954
      %v1058 = vsel %vm1031, %v1025, %v956
      %v1059 = vsel %vm1031, %v1026, %v958
      %v1060 = vsel %vm1031, %v1027, %v960
      %v1061 = vsel %vm1031, %v1028, %v962
      %v1062 = vsel %vm1031, %v1029, %v964
      %v1063 = vsel %vm1031, %v1030, %v966
      %v1064 = vpack.c.bf16 %v1033, %v1032
      %v1065 = vpack.c.bf16 %v1035, %v1034
      %v1066 = vpack.c.bf16 %v1037, %v1036
      %v1067 = vpack.c.bf16 %v1039, %v1038
      %v1068 = vpack.c.bf16 %v1041, %v1040
      %v1069 = vpack.c.bf16 %v1043, %v1042
      %v1070 = vpack.c.bf16 %v1045, %v1044
      %v1071 = vpack.c.bf16 %v1047, %v1046
      %v1072 = vpack.c.bf16 %v1049, %v1048
      %v1073 = vpack.c.bf16 %v1051, %v1050
      %v1074 = vpack.c.bf16 %v1053, %v1052
      %v1075 = vpack.c.bf16 %v1055, %v1054
      %v1076 = vpack.c.bf16 %v1057, %v1056
      %v1077 = vpack.c.bf16 %v1059, %v1058
      %v1078 = vpack.c.bf16 %v1061, %v1060
      %v1079 = vpack.c.bf16 %v1063, %v1062
      %v1080 = vld [vmem:[%s493] sm:$0xff]
      %v1081 = vld [vmem:[%s493 + $0x8] sm:$0xff]
      %v1082 = vld [vmem:[%s493 + $0x10] sm:$0x3]
      %v1083 = vld [vmem:[%s493 + $0x18] sm:$0xff]
      %v1084 = vld [vmem:[%s493 + $0x20] sm:$0xff]
      %v1085 = vld [vmem:[%s493 + $0x28] sm:$0x3]
      %v1086 = vld [vmem:[%s493 + $0x30] sm:$0xff]
      %v1087 = vld [vmem:[%s493 + $0x38] sm:$0xff]
      %v1088 = vld [vmem:[%s493 + $0x40] sm:$0x3]
      %v1089 = vld [vmem:[%s493 + $0x48] sm:$0xff]
      %v1090 = vld [vmem:[%s493 + $0x50] sm:$0xff]
      %v1091 = vld [vmem:[%s493 + $0x58] sm:$0x3]
      %v1092 = vld [vmem:[%s493 + $0x60] sm:$0xff]
      %v1093 = vld [vmem:[%s493 + $0x68] sm:$0xff]
      %v1094 = vld [vmem:[%s493 + $0x70] sm:$0x3]
      %v1095 = vld [vmem:[%s493 + $0x78] sm:$0xff]
      %v1096 = vld [vmem:[%s493 + $0x80] sm:$0xff]
      %v1097 = vld [vmem:[%s493 + $0x88] sm:$0x3]
      %v1098 = vld [vmem:[%s493 + $0x90] sm:$0xff]
      %v1099 = vld [vmem:[%s493 + $0x98] sm:$0xff]
      %v1100 = vld [vmem:[%s493 + $0xa0] sm:$0x3]
      %v1101 = vld [vmem:[%s493 + $0xa8] sm:$0xff]
      %v1102 = vld [vmem:[%s493 + $0xb0] sm:$0xff]
      %v1103 = vld [vmem:[%s493 + $0xb8] sm:$0x3]
      %v1104 = vld [vmem:[%s493 + $0xc0] sm:$0xff]
      %v1105 = vld [vmem:[%s493 + $0xc8] sm:$0xff]
      %v1106 = vld [vmem:[%s493 + $0xd0] sm:$0x3]
      %v1107 = vld [vmem:[%s493 + $0xd8] sm:$0xff]
      %v1108 = vld [vmem:[%s493 + $0xe0] sm:$0xff]
      %v1109 = vld [vmem:[%s493 + $0xe8] sm:$0x3]
      %v1110 = vld [vmem:[%s493 + $0xf0] sm:$0xff]
      %v1111 = vld [vmem:[%s493 + $0xf8] sm:$0xff]
      %v1112 = vld [vmem:[%s493 + $0x100] sm:$0x3]
      %v1113 = vld [vmem:[%s493 + $0x108] sm:$0xff]
      %v1114 = vld [vmem:[%s493 + $0x110] sm:$0xff]
      %v1115 = vld [vmem:[%s493 + $0x118] sm:$0x3]
      %v1116 = vld [vmem:[%s493 + $0x120] sm:$0xff]
      %v1117 = vld [vmem:[%s493 + $0x128] sm:$0xff]
      %v1118 = vld [vmem:[%s493 + $0x130] sm:$0x3]
      %v1119 = vld [vmem:[%s493 + $0x138] sm:$0xff]
      %v1120 = vld [vmem:[%s493 + $0x140] sm:$0xff]
      %v1121 = vld [vmem:[%s493 + $0x148] sm:$0x3]
      %v1122 = vld [vmem:[%s493 + $0x150] sm:$0xff]
      %v1123 = vld [vmem:[%s493 + $0x158] sm:$0xff]
      %v1124 = vld [vmem:[%s493 + $0x160] sm:$0x3]
      %v1125 = vld [vmem:[%s493 + $0x168] sm:$0xff]
      %v1126 = vld [vmem:[%s493 + $0x170] sm:$0xff]
      %v1127 = vld [vmem:[%s493 + $0x178] sm:$0x3]
      %v1176 = vrot.slane %v1080, 1
      %v1177 = vrot.slane %v1081, 1
      %v1178 = vsel %vm645, %v1176, %v1177
      %v1179 = vrot.slane %v1082, 1
      %v1180 = vsel %vm645, %v1177, %v1179
      %v1181 = vrot.slane %v1083, 1
      %v1182 = vrot.slane %v1084, 1
      %v1183 = vsel %vm645, %v1181, %v1182
      %v1184 = vrot.slane %v1085, 1
      %v1185 = vsel %vm645, %v1182, %v1184
      %v1186 = vrot.slane %v1086, 1
      %v1187 = vrot.slane %v1087, 1
      %v1188 = vsel %vm645, %v1186, %v1187
      %v1189 = vrot.slane %v1088, 1
      %v1190 = vsel %vm645, %v1187, %v1189
      %v1191 = vrot.slane %v1089, 1
      %v1192 = vrot.slane %v1090, 1
      %v1193 = vsel %vm645, %v1191, %v1192
      %v1194 = vrot.slane %v1091, 1
      %v1195 = vsel %vm645, %v1192, %v1194
      %v1196 = vrot.slane %v1092, 1
      %v1197 = vrot.slane %v1093, 1
      %v1198 = vsel %vm645, %v1196, %v1197
      %v1199 = vrot.slane %v1094, 1
      %v1200 = vsel %vm645, %v1197, %v1199
      %v1201 = vrot.slane %v1095, 1
      %v1202 = vrot.slane %v1096, 1
      %v1203 = vsel %vm645, %v1201, %v1202
      %v1204 = vrot.slane %v1097, 1
      %v1205 = vsel %vm645, %v1202, %v1204
      %v1206 = vrot.slane %v1098, 1
      %v1207 = vrot.slane %v1099, 1
      %v1208 = vsel %vm645, %v1206, %v1207
      %v1209 = vrot.slane %v1100, 1
      %v1210 = vsel %vm645, %v1207, %v1209
      %v1211 = vrot.slane %v1101, 1
      %v1212 = vrot.slane %v1102, 1
      %v1213 = vsel %vm645, %v1211, %v1212
      %v1214 = vrot.slane %v1103, 1
      %v1215 = vsel %vm645, %v1212, %v1214
      %v1216 = vrot.slane %v1104, 1
      %v1217 = vrot.slane %v1105, 1
      %v1218 = vsel %vm645, %v1216, %v1217
      %v1219 = vrot.slane %v1106, 1
      %v1220 = vsel %vm645, %v1217, %v1219
      %v1221 = vrot.slane %v1107, 1
      %v1222 = vrot.slane %v1108, 1
      %v1223 = vsel %vm645, %v1221, %v1222
      %v1224 = vrot.slane %v1109, 1
      %v1225 = vsel %vm645, %v1222, %v1224
      %v1226 = vrot.slane %v1110, 1
      %v1227 = vrot.slane %v1111, 1
      %v1228 = vsel %vm645, %v1226, %v1227
      %v1229 = vrot.slane %v1112, 1
      %v1230 = vsel %vm645, %v1227, %v1229
      %v1231 = vrot.slane %v1113, 1
      %v1232 = vrot.slane %v1114, 1
      %v1233 = vsel %vm645, %v1231, %v1232
      %v1234 = vrot.slane %v1115, 1
      %v1235 = vsel %vm645, %v1232, %v1234
      %v1236 = vrot.slane %v1116, 1
      %v1237 = vrot.slane %v1117, 1
      %v1238 = vsel %vm645, %v1236, %v1237
      %v1239 = vrot.slane %v1118, 1
      %v1240 = vsel %vm645, %v1237, %v1239
      %v1241 = vrot.slane %v1119, 1
      %v1242 = vrot.slane %v1120, 1
      %v1243 = vsel %vm645, %v1241, %v1242
      %v1244 = vrot.slane %v1121, 1
      %v1245 = vsel %vm645, %v1242, %v1244
      %v1246 = vrot.slane %v1122, 1
      %v1247 = vrot.slane %v1123, 1
      %v1248 = vsel %vm645, %v1246, %v1247
      %v1249 = vrot.slane %v1124, 1
      %v1250 = vsel %vm645, %v1247, %v1249
      %v1251 = vrot.slane %v1125, 1
      %v1252 = vrot.slane %v1126, 1
      %v1253 = vsel %vm645, %v1251, %v1252
      %v1254 = vrot.slane %v1127, 1
      %v1255 = vsel %vm645, %v1252, %v1254
      %1256 = vrot.lane.b32.xlu0 %v1178, 4
      %v1257 = vpop.permute.xlu0 %1256
      %1258 = vrot.lane.b32.xlu0 %v1180, 4
      %v1259 = vpop.permute.xlu0 %1258
      %1260 = vrot.lane.b32.xlu0 %v1183, 4
      %v1261 = vpop.permute.xlu0 %1260
      %1262 = vrot.lane.b32.xlu0 %v1185, 4
      %v1263 = vpop.permute.xlu0 %1262
      %1264 = vrot.lane.b32.xlu0 %v1188, 4
      %v1265 = vpop.permute.xlu0 %1264
      %1266 = vrot.lane.b32.xlu0 %v1190, 4
      %v1267 = vpop.permute.xlu0 %1266
      %1268 = vrot.lane.b32.xlu0 %v1193, 4
      %v1269 = vpop.permute.xlu0 %1268
      %1270 = vrot.lane.b32.xlu0 %v1195, 4
      %v1271 = vpop.permute.xlu0 %1270
      %1272 = vrot.lane.b32.xlu0 %v1198, 4
      %v1273 = vpop.permute.xlu0 %1272
      %1274 = vrot.lane.b32.xlu0 %v1200, 4
      %v1275 = vpop.permute.xlu0 %1274
      %1276 = vrot.lane.b32.xlu0 %v1203, 4
      %v1277 = vpop.permute.xlu0 %1276
      %1278 = vrot.lane.b32.xlu0 %v1205, 4
      %v1279 = vpop.permute.xlu0 %1278
      %1280 = vrot.lane.b32.xlu0 %v1208, 4
      %v1281 = vpop.permute.xlu0 %1280
      %1282 = vrot.lane.b32.xlu0 %v1210, 4
      %v1283 = vpop.permute.xlu0 %1282
      %1284 = vrot.lane.b32.xlu0 %v1213, 4
      %v1285 = vpop.permute.xlu0 %1284
      %1286 = vrot.lane.b32.xlu0 %v1215, 4
      %v1287 = vpop.permute.xlu0 %1286
      %1288 = vrot.lane.b32.xlu0 %v1218, 4
      %v1289 = vpop.permute.xlu0 %1288
      %1290 = vrot.lane.b32.xlu0 %v1220, 4
      %v1291 = vpop.permute.xlu0 %1290
      %1292 = vrot.lane.b32.xlu0 %v1223, 4
      %v1293 = vpop.permute.xlu0 %1292
      %1294 = vrot.lane.b32.xlu0 %v1225, 4
      %v1295 = vpop.permute.xlu0 %1294
      %1296 = vrot.lane.b32.xlu0 %v1228, 4
      %v1297 = vpop.permute.xlu0 %1296
      %1298 = vrot.lane.b32.xlu0 %v1230, 4
      %v1299 = vpop.permute.xlu0 %1298
      %1300 = vrot.lane.b32.xlu0 %v1233, 4
      %v1301 = vpop.permute.xlu0 %1300
      %1302 = vrot.lane.b32.xlu0 %v1235, 4
      %v1303 = vpop.permute.xlu0 %1302
      %1304 = vrot.lane.b32.xlu0 %v1238, 4
      %v1305 = vpop.permute.xlu0 %1304
      %1306 = vrot.lane.b32.xlu0 %v1240, 4
      %v1307 = vpop.permute.xlu0 %1306
      %1308 = vrot.lane.b32.xlu0 %v1243, 4
      %v1309 = vpop.permute.xlu0 %1308
      %1310 = vrot.lane.b32.xlu0 %v1245, 4
      %v1311 = vpop.permute.xlu0 %1310
      %1312 = vrot.lane.b32.xlu0 %v1248, 4
      %v1313 = vpop.permute.xlu0 %1312
      %1314 = vrot.lane.b32.xlu0 %v1250, 4
      %v1315 = vpop.permute.xlu0 %1314
      %1316 = vrot.lane.b32.xlu0 %v1253, 4
      %v1317 = vpop.permute.xlu0 %1316
      %1318 = vrot.lane.b32.xlu0 %v1255, 4
      %v1319 = vpop.permute.xlu0 %1318
      %v1352 = vrot.slane %v1080, 2
      %v1353 = vrot.slane %v1081, 2
      %v1354 = vsel %vm822, %v1352, %v1353
      %v1355 = vrot.slane %v1082, 2
      %v1356 = vsel %vm822, %v1353, %v1355
      %v1357 = vrot.slane %v1083, 2
      %v1358 = vrot.slane %v1084, 2
      %v1359 = vsel %vm822, %v1357, %v1358
      %v1360 = vrot.slane %v1085, 2
      %v1361 = vsel %vm822, %v1358, %v1360
      %v1362 = vrot.slane %v1086, 2
      %v1363 = vrot.slane %v1087, 2
      %v1364 = vsel %vm822, %v1362, %v1363
      %v1365 = vrot.slane %v1088, 2
      %v1366 = vsel %vm822, %v1363, %v1365
      %v1367 = vrot.slane %v1089, 2
      %v1368 = vrot.slane %v1090, 2
      %v1369 = vsel %vm822, %v1367, %v1368
      %v1370 = vrot.slane %v1091, 2
      %v1371 = vsel %vm822, %v1368, %v1370
      %v1372 = vrot.slane %v1092, 2
      %v1373 = vrot.slane %v1093, 2
      %v1374 = vsel %vm822, %v1372, %v1373
      %v1375 = vrot.slane %v1094, 2
      %v1376 = vsel %vm822, %v1373, %v1375
      %v1377 = vrot.slane %v1095, 2
      %v1378 = vrot.slane %v1096, 2
      %v1379 = vsel %vm822, %v1377, %v1378
      %v1380 = vrot.slane %v1097, 2
      %v1381 = vsel %vm822, %v1378, %v1380
      %v1382 = vrot.slane %v1098, 2
      %v1383 = vrot.slane %v1099, 2
      %v1384 = vsel %vm822, %v1382, %v1383
      %v1385 = vrot.slane %v1100, 2
      %v1386 = vsel %vm822, %v1383, %v1385
      %v1387 = vrot.slane %v1101, 2
      %v1388 = vrot.slane %v1102, 2
      %v1389 = vsel %vm822, %v1387, %v1388
      %v1390 = vrot.slane %v1103, 2
      %v1391 = vsel %vm822, %v1388, %v1390
      %v1392 = vrot.slane %v1104, 2
      %v1393 = vrot.slane %v1105, 2
      %v1394 = vsel %vm822, %v1392, %v1393
      %v1395 = vrot.slane %v1106, 2
      %v1396 = vsel %vm822, %v1393, %v1395
      %v1397 = vrot.slane %v1107, 2
      %v1398 = vrot.slane %v1108, 2
      %v1399 = vsel %vm822, %v1397, %v1398
      %v1400 = vrot.slane %v1109, 2
      %v1401 = vsel %vm822, %v1398, %v1400
      %v1402 = vrot.slane %v1110, 2
      %v1403 = vrot.slane %v1111, 2
      %v1404 = vsel %vm822, %v1402, %v1403
      %v1405 = vrot.slane %v1112, 2
      %v1406 = vsel %vm822, %v1403, %v1405
      %v1407 = vrot.slane %v1113, 2
      %v1408 = vrot.slane %v1114, 2
      %v1409 = vsel %vm822, %v1407, %v1408
      %v1410 = vrot.slane %v1115, 2
      %v1411 = vsel %vm822, %v1408, %v1410
      %v1412 = vrot.slane %v1116, 2
      %v1413 = vrot.slane %v1117, 2
      %v1414 = vsel %vm822, %v1412, %v1413
      %v1415 = vrot.slane %v1118, 2
      %v1416 = vsel %vm822, %v1413, %v1415
      %v1417 = vrot.slane %v1119, 2
      %v1418 = vrot.slane %v1120, 2
      %v1419 = vsel %vm822, %v1417, %v1418
      %v1420 = vrot.slane %v1121, 2
      %v1421 = vsel %vm822, %v1418, %v1420
      %v1422 = vrot.slane %v1122, 2
      %v1423 = vrot.slane %v1123, 2
      %v1424 = vsel %vm822, %v1422, %v1423
      %v1425 = vrot.slane %v1124, 2
      %v1426 = vsel %vm822, %v1423, %v1425
      %v1427 = vrot.slane %v1125, 2
      %v1428 = vrot.slane %v1126, 2
      %v1429 = vsel %vm822, %v1427, %v1428
      %v1430 = vrot.slane %v1127, 2
      %v1431 = vsel %vm822, %v1428, %v1430
      %1432 = vrot.lane.b32.xlu0 %v1354, 8
      %v1433 = vpop.permute.xlu0 %1432
      %1434 = vrot.lane.b32.xlu0 %v1356, 8
      %v1435 = vpop.permute.xlu0 %1434
      %1436 = vrot.lane.b32.xlu0 %v1359, 8
      %v1437 = vpop.permute.xlu0 %1436
      %1438 = vrot.lane.b32.xlu0 %v1361, 8
      %v1439 = vpop.permute.xlu0 %1438
      %1440 = vrot.lane.b32.xlu0 %v1364, 8
      %v1441 = vpop.permute.xlu0 %1440
      %1442 = vrot.lane.b32.xlu0 %v1366, 8
      %v1443 = vpop.permute.xlu0 %1442
      %1444 = vrot.lane.b32.xlu0 %v1369, 8
      %v1445 = vpop.permute.xlu0 %1444
      %1446 = vrot.lane.b32.xlu0 %v1371, 8
      %v1447 = vpop.permute.xlu0 %1446
      %1448 = vrot.lane.b32.xlu0 %v1374, 8
      %v1449 = vpop.permute.xlu0 %1448
      %1450 = vrot.lane.b32.xlu0 %v1376, 8
      %v1451 = vpop.permute.xlu0 %1450
      %1452 = vrot.lane.b32.xlu0 %v1379, 8
      %v1453 = vpop.permute.xlu0 %1452
      %1454 = vrot.lane.b32.xlu0 %v1381, 8
      %v1455 = vpop.permute.xlu0 %1454
      %1456 = vrot.lane.b32.xlu0 %v1384, 8
      %v1457 = vpop.permute.xlu0 %1456
      %1458 = vrot.lane.b32.xlu0 %v1386, 8
      %v1459 = vpop.permute.xlu0 %1458
      %1460 = vrot.lane.b32.xlu0 %v1389, 8
      %v1461 = vpop.permute.xlu0 %1460
      %1462 = vrot.lane.b32.xlu0 %v1391, 8
      %v1463 = vpop.permute.xlu0 %1462
      %1464 = vrot.lane.b32.xlu0 %v1394, 8
      %v1465 = vpop.permute.xlu0 %1464
      %1466 = vrot.lane.b32.xlu0 %v1396, 8
      %v1467 = vpop.permute.xlu0 %1466
      %1468 = vrot.lane.b32.xlu0 %v1399, 8
      %v1469 = vpop.permute.xlu0 %1468
      %1470 = vrot.lane.b32.xlu0 %v1401, 8
      %v1471 = vpop.permute.xlu0 %1470
      %1472 = vrot.lane.b32.xlu0 %v1404, 8
      %v1473 = vpop.permute.xlu0 %1472
      %1474 = vrot.lane.b32.xlu0 %v1406, 8
      %v1475 = vpop.permute.xlu0 %1474
      %1476 = vrot.lane.b32.xlu0 %v1409, 8
      %v1477 = vpop.permute.xlu0 %1476
      %1478 = vrot.lane.b32.xlu0 %v1411, 8
      %v1479 = vpop.permute.xlu0 %1478
      %1480 = vrot.lane.b32.xlu0 %v1414, 8
      %v1481 = vpop.permute.xlu0 %1480
      %1482 = vrot.lane.b32.xlu0 %v1416, 8
      %v1483 = vpop.permute.xlu0 %1482
      %1484 = vrot.lane.b32.xlu0 %v1419, 8
      %v1485 = vpop.permute.xlu0 %1484
      %1486 = vrot.lane.b32.xlu0 %v1421, 8
      %v1487 = vpop.permute.xlu0 %1486
      %1488 = vrot.lane.b32.xlu0 %v1424, 8
      %v1489 = vpop.permute.xlu0 %1488
      %1490 = vrot.lane.b32.xlu0 %v1426, 8
      %v1491 = vpop.permute.xlu0 %1490
      %1492 = vrot.lane.b32.xlu0 %v1429, 8
      %v1493 = vpop.permute.xlu0 %1492
      %1494 = vrot.lane.b32.xlu0 %v1431, 8
      %v1495 = vpop.permute.xlu0 %1494
      %v1528 = vsel %vm282, %v1080, %v1257
      %v1529 = vsel %vm282, %v1081, %v1259
      %v1530 = vsel %vm282, %v1083, %v1261
      %v1531 = vsel %vm282, %v1084, %v1263
      %v1532 = vsel %vm282, %v1086, %v1265
      %v1533 = vsel %vm282, %v1087, %v1267
      %v1534 = vsel %vm282, %v1089, %v1269
      %v1535 = vsel %vm282, %v1090, %v1271
      %v1536 = vsel %vm282, %v1092, %v1273
      %v1537 = vsel %vm282, %v1093, %v1275
      %v1538 = vsel %vm282, %v1095, %v1277
      %v1539 = vsel %vm282, %v1096, %v1279
      %v1540 = vsel %vm282, %v1098, %v1281
      %v1541 = vsel %vm282, %v1099, %v1283
      %v1542 = vsel %vm282, %v1101, %v1285
      %v1543 = vsel %vm282, %v1102, %v1287
      %v1544 = vsel %vm282, %v1104, %v1289
      %v1545 = vsel %vm282, %v1105, %v1291
      %v1546 = vsel %vm282, %v1107, %v1293
      %v1547 = vsel %vm282, %v1108, %v1295
      %v1548 = vsel %vm282, %v1110, %v1297
      %v1549 = vsel %vm282, %v1111, %v1299
      %v1550 = vsel %vm282, %v1113, %v1301
      %v1551 = vsel %vm282, %v1114, %v1303
      %v1552 = vsel %vm282, %v1116, %v1305
      %v1553 = vsel %vm282, %v1117, %v1307
      %v1554 = vsel %vm282, %v1119, %v1309
      %v1555 = vsel %vm282, %v1120, %v1311
      %v1556 = vsel %vm282, %v1122, %v1313
      %v1557 = vsel %vm282, %v1123, %v1315
      %v1558 = vsel %vm282, %v1125, %v1317
      %v1559 = vsel %vm282, %v1126, %v1319
      %v1560 = vsel %vm1031, %v1528, %v1433
      %v1561 = vsel %vm1031, %v1529, %v1435
      %v1562 = vsel %vm1031, %v1530, %v1437
      %v1563 = vsel %vm1031, %v1531, %v1439
      %v1564 = vsel %vm1031, %v1532, %v1441
      %v1565 = vsel %vm1031, %v1533, %v1443
      %v1566 = vsel %vm1031, %v1534, %v1445
      %v1567 = vsel %vm1031, %v1535, %v1447
      %v1568 = vsel %vm1031, %v1536, %v1449
      %v1569 = vsel %vm1031, %v1537, %v1451
      %v1570 = vsel %vm1031, %v1538, %v1453
      %v1571 = vsel %vm1031, %v1539, %v1455
      %v1572 = vsel %vm1031, %v1540, %v1457
      %v1573 = vsel %vm1031, %v1541, %v1459
      %v1574 = vsel %vm1031, %v1542, %v1461
      %v1575 = vsel %vm1031, %v1543, %v1463
      %v1576 = vsel %vm1031, %v1544, %v1465
      %v1577 = vsel %vm1031, %v1545, %v1467
      %v1578 = vsel %vm1031, %v1546, %v1469
      %v1579 = vsel %vm1031, %v1547, %v1471
      %v1580 = vsel %vm1031, %v1548, %v1473
      %v1581 = vsel %vm1031, %v1549, %v1475
      %v1582 = vsel %vm1031, %v1550, %v1477
      %v1583 = vsel %vm1031, %v1551, %v1479
      %v1584 = vsel %vm1031, %v1552, %v1481
      %v1585 = vsel %vm1031, %v1553, %v1483
      %v1586 = vsel %vm1031, %v1554, %v1485
      %v1587 = vsel %vm1031, %v1555, %v1487
      %v1588 = vsel %vm1031, %v1556, %v1489
      %v1589 = vsel %vm1031, %v1557, %v1491
      %v1590 = vsel %vm1031, %v1558, %v1493
      %v1591 = vsel %vm1031, %v1559, %v1495
      %v1592 = vpack.c.bf16 %v1561, %v1560
      %v1593 = vpack.c.bf16 %v1563, %v1562
      %v1594 = vpack.c.bf16 %v1565, %v1564
      %v1595 = vpack.c.bf16 %v1567, %v1566
      %v1596 = vpack.c.bf16 %v1569, %v1568
      %v1597 = vpack.c.bf16 %v1571, %v1570
      %v1598 = vpack.c.bf16 %v1573, %v1572
      %v1599 = vpack.c.bf16 %v1575, %v1574
      %v1600 = vpack.c.bf16 %v1577, %v1576
      %v1601 = vpack.c.bf16 %v1579, %v1578
      %v1602 = vpack.c.bf16 %v1581, %v1580
      %v1603 = vpack.c.bf16 %v1583, %v1582
      %v1604 = vpack.c.bf16 %v1585, %v1584
      %v1605 = vpack.c.bf16 %v1587, %v1586
      %v1606 = vpack.c.bf16 %v1589, %v1588
      %v1607 = vpack.c.bf16 %v1591, %v1590
      %v1610 = vunpack.c.l.b16 %v544
      %v1611 = vunpack.c.l.b16 %v545
      %v1612 = vpack.c.b16 %v1611, %v1610
      %vm1613 = vcmask 97280
      %v1615 = vsel %vm1613, %v1592, 0
      %v1618 = vsel %vm1613, %v1593, 0
      %v1621 = vsel %vm1613, %v1594, 0
      %v1624 = vsel %vm1613, %v1595, 0
      %v1627 = vsel %vm1613, %v1596, 0
      %v1630 = vsel %vm1613, %v1597, 0
      %v1633 = vsel %vm1613, %v1598, 0
      %v1636 = vsel %vm1613, %v1599, 0
      %v1639 = vsel %vm1613, %v1600, 0
      %v1642 = vsel %vm1613, %v1601, 0
      %v1645 = vsel %vm1613, %v1602, 0
      %v1648 = vsel %vm1613, %v1603, 0
      %v1651 = vsel %vm1613, %v1604, 0
      %v1654 = vsel %vm1613, %v1605, 0
      %v1657 = vsel %vm1613, %v1606, 0
      %v1660 = vsel %vm1613, %v1607, 0
      %v1663 = vsel %vm822, %v1612, 0
      %1665 = vmatprep.subr.bf16.mxu0 0
      %1666 = vmatpush1.bf16.msra.mxu0 %v1663
      %1667 = vmatprep.subr.bf16.mxu0 0
      %1668 = vmatpush1.bf16.msra.mxu0 0
      %1669 = vmatprep.subr.bf16.mxu0 0
      %1670 = vmatpush1.bf16.msra.mxu0 0
      %1671 = vmatprep.subr.bf16.mxu0 0
      %1672 = vmatpush1.bf16.msra.mxu0 0
      %1673 = vmatprep.subr.bf16.mxu0 0
      %1674 = vmatpush1.bf16.msra.mxu0 0
      %1675 = vmatprep.subr.bf16.mxu0 0
      %1676 = vmatpush1.bf16.msra.mxu0 0
      %1677 = vmatprep.subr.bf16.mxu0 0
      %1678 = vmatpush1.bf16.msra.mxu0 0
      %1679 = vmatprep.subr.bf16.mxu0 0
      %1680 = vmatpush1.bf16.msra.mxu0 0
      %1681 = vmatprep.subr.bf16.mxu0 0
      %1682 = vmatpush1.bf16.msra.mxu0 0
      %1683 = vmatprep.subr.bf16.mxu0 0
      %1684 = vmatpush1.bf16.msra.mxu0 0
      %1685 = vmatprep.subr.bf16.mxu0 0
      %1686 = vmatpush1.bf16.msra.mxu0 0
      %1687 = vmatprep.subr.bf16.mxu0 0
      %1688 = vmatpush1.bf16.msra.mxu0 0
      %1689 = vmatprep.subr.bf16.mxu0 0
      %1690 = vmatpush1.bf16.msra.mxu0 0
      %1691 = vmatprep.subr.bf16.mxu0 0
      %1692 = vmatpush1.bf16.msra.mxu0 0
      %1693 = vmatprep.subr.bf16.mxu0 0
      %1694 = vmatpush1.bf16.msra.mxu0 0
      %1695 = vmatprep.subr.bf16.mxu0 0
      %1696 = vmatpush1.bf16.msra.mxu0 0
      %1697 = vmatprep.mubr.bf16.mxu0 0
      %1698 = vmatmul.mubr.bf16.gmra.mrb[0].mxu0 %v1615
      %v1699 = vpop.f32.mrb[0].mxu0
      %v1700 = vadd.f32 0.0, %v1699
      %v1701 = vpop.f32.mrb[0].mxu0
      %v1702 = vpop.f32.mrb[0].mxu0
      %v1703 = vadd.f32 0.0, %v1702
      %v1704 = vpop.f32.mrb[0].mxu0
      %1705 = vmatprep.mubr.bf16.mxu0 0
      %1706 = vmatmul.mubr.bf16.gmra.mrb[0].mxu0 %v1618
      %v1707 = vpop.f32.mrb[0].mxu0
      %v1708 = vadd.f32 0.0, %v1707
      %v1709 = vpop.f32.mrb[0].mxu0
      %v1710 = vpop.f32.mrb[0].mxu0
      %v1711 = vadd.f32 0.0, %v1710
      %v1712 = vpop.f32.mrb[0].mxu0
      %1713 = vmatprep.mubr.bf16.mxu0 0
      %1714 = vmatmul.mubr.bf16.gmra.mrb[0].mxu0 %v1621
      %v1715 = vpop.f32.mrb[0].mxu0
      %v1716 = vadd.f32 0.0, %v1715
      %v1717 = vpop.f32.mrb[0].mxu0
      %v1718 = vpop.f32.mrb[0].mxu0
      %v1719 = vadd.f32 0.0, %v1718
      %v1720 = vpop.f32.mrb[0].mxu0
      %1721 = vmatprep.mubr.bf16.mxu0 0
      %1722 = vmatmul.mubr.bf16.gmra.mrb[0].mxu0 %v1624
      %v1723 = vpop.f32.mrb[0].mxu0
      %v1724 = vadd.f32 0.0, %v1723
      %v1725 = vpop.f32.mrb[0].mxu0
      %v1726 = vpop.f32.mrb[0].mxu0
      %v1727 = vadd.f32 0.0, %v1726
      %v1728 = vpop.f32.mrb[0].mxu0
      %1729 = vmatprep.mubr.bf16.mxu0 0
      %1730 = vmatmul.mubr.bf16.gmra.mrb[0].mxu0 %v1627
      %v1731 = vpop.f32.mrb[0].mxu0
      %v1732 = vadd.f32 0.0, %v1731
      %v1733 = vpop.f32.mrb[0].mxu0
      %v1734 = vpop.f32.mrb[0].mxu0
      %v1735 = vadd.f32 0.0, %v1734
      %v1736 = vpop.f32.mrb[0].mxu0
      %1737 = vmatprep.mubr.bf16.mxu0 0
      %1738 = vmatmul.mubr.bf16.gmra.mrb[0].mxu0 %v1630
      %v1739 = vpop.f32.mrb[0].mxu0
      %v1740 = vadd.f32 0.0, %v1739
      %v1741 = vpop.f32.mrb[0].mxu0
      %v1742 = vpop.f32.mrb[0].mxu0
      %v1743 = vadd.f32 0.0, %v1742
      %v1744 = vpop.f32.mrb[0].mxu0
      %1745 = vmatprep.mubr.bf16.mxu0 0
      %1746 = vmatmul.mubr.bf16.gmra.mrb[0].mxu0 %v1633
      %v1747 = vpop.f32.mrb[0].mxu0
      %v1748 = vadd.f32 0.0, %v1747
      %v1749 = vpop.f32.mrb[0].mxu0
      %v1750 = vpop.f32.mrb[0].mxu0
      %v1751 = vadd.f32 0.0, %v1750
      %v1752 = vpop.f32.mrb[0].mxu0
      %1753 = vmatprep.mubr.bf16.mxu0 0
      %1754 = vmatmul.mubr.bf16.gmra.mrb[0].mxu0 %v1636
      %v1755 = vpop.f32.mrb[0].mxu0
      %v1756 = vadd.f32 0.0, %v1755
      %v1757 = vpop.f32.mrb[0].mxu0
      %v1758 = vpop.f32.mrb[0].mxu0
      %v1759 = vadd.f32 0.0, %v1758
      %v1760 = vpop.f32.mrb[0].mxu0
      %1761 = vmatprep.mubr.bf16.mxu0 0
      %1762 = vmatmul.mubr.bf16.gmra.mrb[0].mxu0 %v1639
      %v1763 = vpop.f32.mrb[0].mxu0
      %v1764 = vadd.f32 0.0, %v1763
      %v1765 = vpop.f32.mrb[0].mxu0
      %v1766 = vpop.f32.mrb[0].mxu0
      %v1767 = vadd.f32 0.0, %v1766
      %v1768 = vpop.f32.mrb[0].mxu0
      %1769 = vmatprep.mubr.bf16.mxu0 0
      %1770 = vmatmul.mubr.bf16.gmra.mrb[0].mxu0 %v1642
      %v1771 = vpop.f32.mrb[0].mxu0
      %v1772 = vadd.f32 0.0, %v1771
      %v1773 = vpop.f32.mrb[0].mxu0
      %v1774 = vpop.f32.mrb[0].mxu0
      %v1775 = vadd.f32 0.0, %v1774
      %v1776 = vpop.f32.mrb[0].mxu0
      %1777 = vmatprep.mubr.bf16.mxu0 0
      %1778 = vmatmul.mubr.bf16.gmra.mrb[0].mxu0 %v1645
      %v1779 = vpop.f32.mrb[0].mxu0
      %v1780 = vadd.f32 0.0, %v1779
      %v1781 = vpop.f32.mrb[0].mxu0
      %v1782 = vpop.f32.mrb[0].mxu0
      %v1783 = vadd.f32 0.0, %v1782
      %v1784 = vpop.f32.mrb[0].mxu0
      %1785 = vmatprep.mubr.bf16.mxu0 0
      %1786 = vmatmul.mubr.bf16.gmra.mrb[0].mxu0 %v1648
      %v1787 = vpop.f32.mrb[0].mxu0
      %v1788 = vadd.f32 0.0, %v1787
      %v1789 = vpop.f32.mrb[0].mxu0
      %v1790 = vpop.f32.mrb[0].mxu0
      %v1791 = vadd.f32 0.0, %v1790
      %v1792 = vpop.f32.mrb[0].mxu0
      %1793 = vmatprep.mubr.bf16.mxu0 0
      %1794 = vmatmul.mubr.bf16.gmra.mrb[0].mxu0 %v1651
      %v1795 = vpop.f32.mrb[0].mxu0
      %v1796 = vadd.f32 0.0, %v1795
      %v1797 = vpop.f32.mrb[0].mxu0
      %v1798 = vpop.f32.mrb[0].mxu0
      %v1799 = vadd.f32 0.0, %v1798
      %v1800 = vpop.f32.mrb[0].mxu0
      %1801 = vmatprep.mubr.bf16.mxu0 0
      %1802 = vmatmul.mubr.bf16.gmra.mrb[0].mxu0 %v1654
      %v1803 = vpop.f32.mrb[0].mxu0
      %v1804 = vadd.f32 0.0, %v1803
      %v1805 = vpop.f32.mrb[0].mxu0
      %v1806 = vpop.f32.mrb[0].mxu0
      %v1807 = vadd.f32 0.0, %v1806
      %v1808 = vpop.f32.mrb[0].mxu0
      %1809 = vmatprep.mubr.bf16.mxu0 0
      %1810 = vmatmul.mubr.bf16.gmra.mrb[0].mxu0 %v1657
      %v1811 = vpop.f32.mrb[0].mxu0
      %v1812 = vadd.f32 0.0, %v1811
      %v1813 = vpop.f32.mrb[0].mxu0
      %v1814 = vpop.f32.mrb[0].mxu0
      %v1815 = vadd.f32 0.0, %v1814
      %v1816 = vpop.f32.mrb[0].mxu0
      %1817 = vmatprep.mubr.bf16.mxu0 0
      %1818 = vmatmul.mubr.bf16.gmra.mrb[0].mxu0 %v1660
      %v1819 = vpop.f32.mrb[0].mxu0
      %v1820 = vadd.f32 0.0, %v1819
      %v1821 = vpop.f32.mrb[0].mxu0
      %v1822 = vpop.f32.mrb[0].mxu0
      %v1823 = vadd.f32 0.0, %v1822
      %v1824 = vpop.f32.mrb[0].mxu0
      %1825 = vdwg.mxu0
      %v1828 = vunpack.c.l.b16 %v542
      %v1829 = vunpack.c.l.b16 %v543
      %v1830 = vpack.c.b16 %v1829, %v1828
      %v1832 = vsel %vm1613, %v1064, 0
      %v1835 = vsel %vm1613, %v1065, 0
      %v1838 = vsel %vm1613, %v1066, 0
      %v1841 = vsel %vm1613, %v1067, 0
      %v1844 = vsel %vm1613, %v1068, 0
      %v1847 = vsel %vm1613, %v1069, 0
      %v1850 = vsel %vm1613, %v1070, 0
      %v1853 = vsel %vm1613, %v1071, 0
      %v1856 = vsel %vm1613, %v1072, 0
      %v1859 = vsel %vm1613, %v1073, 0
      %v1862 = vsel %vm1613, %v1074, 0
      %v1865 = vsel %vm1613, %v1075, 0
      %v1868 = vsel %vm1613, %v1076, 0
      %v1871 = vsel %vm1613, %v1077, 0
      %v1874 = vsel %vm1613, %v1078, 0
      %v1877 = vsel %vm1613, %v1079, 0
      %v1880 = vsel %vm822, %v1830, 0
      %1882 = vmatprep.subr.bf16.mxu0 0
      %1883 = vmatpush1.bf16.msra.mxu0 %v1880
      %1884 = vmatprep.subr.bf16.mxu0 0
      %1885 = vmatpush1.bf16.msra.mxu0 0
      %1886 = vmatprep.subr.bf16.mxu0 0
      %1887 = vmatpush1.bf16.msra.mxu0 0
      %1888 = vmatprep.subr.bf16.mxu0 0
      %1889 = vmatpush1.bf16.msra.mxu0 0
      %1890 = vmatprep.subr.bf16.mxu0 0
      %1891 = vmatpush1.bf16.msra.mxu0 0
      %1892 = vmatprep.subr.bf16.mxu0 0
      %1893 = vmatpush1.bf16.msra.mxu0 0
      %1894 = vmatprep.subr.bf16.mxu0 0
      %1895 = vmatpush1.bf16.msra.mxu0 0
      %1896 = vmatprep.subr.bf16.mxu0 0
      %1897 = vmatpush1.bf16.msra.mxu0 0
      %1898 = vmatprep.subr.bf16.mxu0 0
      %1899 = vmatpush1.bf16.msra.mxu0 0
      %1900 = vmatprep.subr.bf16.mxu0 0
      %1901 = vmatpush1.bf16.msra.mxu0 0
      %1902 = vmatprep.subr.bf16.mxu0 0
      %1903 = vmatpush1.bf16.msra.mxu0 0
      %1904 = vmatprep.subr.bf16.mxu0 0
      %1905 = vmatpush1.bf16.msra.mxu0 0
      %1906 = vmatprep.subr.bf16.mxu0 0
      %1907 = vmatpush1.bf16.msra.mxu0 0
      %1908 = vmatprep.subr.bf16.mxu0 0
      %1909 = vmatpush1.bf16.msra.mxu0 0
      %1910 = vmatprep.subr.bf16.mxu0 0
      %1911 = vmatpush1.bf16.msra.mxu0 0
      %1912 = vmatprep.subr.bf16.mxu0 0
      %1913 = vmatpush1.bf16.msra.mxu0 0
      %1914 = vmatprep.mubr.bf16.mxu0 0
      %1915 = vmatmul.mubr.bf16.gmra.mrb[0].mxu0 %v1832
      %v1916 = vpop.f32.mrb[0].mxu0
      %v1917 = vadd.f32 %v1700, %v1916
      %v1918 = vpop.f32.mrb[0].mxu0
      %v1919 = vpop.f32.mrb[0].mxu0
      %v1920 = vadd.f32 %v1703, %v1919
      %v1921 = vpop.f32.mrb[0].mxu0
      %1922 = vmatprep.mubr.bf16.mxu0 0
      %1923 = vmatmul.mubr.bf16.gmra.mrb[0].mxu0 %v1835
      %v1924 = vpop.f32.mrb[0].mxu0
      %v1925 = vadd.f32 %v1708, %v1924
      %v1926 = vpop.f32.mrb[0].mxu0
      %v1927 = vpop.f32.mrb[0].mxu0
      %v1928 = vadd.f32 %v1711, %v1927
      %v1929 = vpop.f32.mrb[0].mxu0
      %1930 = vmatprep.mubr.bf16.mxu0 0
      %1931 = vmatmul.mubr.bf16.gmra.mrb[0].mxu0 %v1838
      %v1932 = vpop.f32.mrb[0].mxu0
      %v1933 = vadd.f32 %v1716, %v1932
      %v1934 = vpop.f32.mrb[0].mxu0
      %v1935 = vpop.f32.mrb[0].mxu0
      %v1936 = vadd.f32 %v1719, %v1935
      %v1937 = vpop.f32.mrb[0].mxu0
      %1938 = vmatprep.mubr.bf16.mxu0 0
      %1939 = vmatmul.mubr.bf16.gmra.mrb[0].mxu0 %v1841
      %v1940 = vpop.f32.mrb[0].mxu0
      %v1941 = vadd.f32 %v1724, %v1940
      %v1942 = vpop.f32.mrb[0].mxu0
      %v1943 = vpop.f32.mrb[0].mxu0
      %v1944 = vadd.f32 %v1727, %v1943
      %v1945 = vpop.f32.mrb[0].mxu0
      %1946 = vmatprep.mubr.bf16.mxu0 0
      %1947 = vmatmul.mubr.bf16.gmra.mrb[0].mxu0 %v1844
      %v1948 = vpop.f32.mrb[0].mxu0
      %v1949 = vadd.f32 %v1732, %v1948
      %v1950 = vpop.f32.mrb[0].mxu0
      %v1951 = vpop.f32.mrb[0].mxu0
      %v1952 = vadd.f32 %v1735, %v1951
      %v1953 = vpop.f32.mrb[0].mxu0
      %1954 = vmatprep.mubr.bf16.mxu0 0
      %1955 = vmatmul.mubr.bf16.gmra.mrb[0].mxu0 %v1847
      %v1956 = vpop.f32.mrb[0].mxu0
      %v1957 = vadd.f32 %v1740, %v1956
      %v1958 = vpop.f32.mrb[0].mxu0
      %v1959 = vpop.f32.mrb[0].mxu0
      %v1960 = vadd.f32 %v1743, %v1959
      %v1961 = vpop.f32.mrb[0].mxu0
      %1962 = vmatprep.mubr.bf16.mxu0 0
      %1963 = vmatmul.mubr.bf16.gmra.mrb[0].mxu0 %v1850
      %v1964 = vpop.f32.mrb[0].mxu0
      %v1965 = vadd.f32 %v1748, %v1964
      %v1966 = vpop.f32.mrb[0].mxu0
      %v1967 = vpop.f32.mrb[0].mxu0
      %v1968 = vadd.f32 %v1751, %v1967
      %v1969 = vpop.f32.mrb[0].mxu0
      %1970 = vmatprep.mubr.bf16.mxu0 0
      %1971 = vmatmul.mubr.bf16.gmra.mrb[0].mxu0 %v1853
      %v1972 = vpop.f32.mrb[0].mxu0
      %v1973 = vadd.f32 %v1756, %v1972
      %v1974 = vpop.f32.mrb[0].mxu0
      %v1975 = vpop.f32.mrb[0].mxu0
      %v1976 = vadd.f32 %v1759, %v1975
      %v1977 = vpop.f32.mrb[0].mxu0
      %1978 = vmatprep.mubr.bf16.mxu0 0
      %1979 = vmatmul.mubr.bf16.gmra.mrb[0].mxu0 %v1856
      %v1980 = vpop.f32.mrb[0].mxu0
      %v1981 = vadd.f32 %v1764, %v1980
      %v1982 = vpop.f32.mrb[0].mxu0
      %v1983 = vpop.f32.mrb[0].mxu0
      %v1984 = vadd.f32 %v1767, %v1983
      %v1985 = vpop.f32.mrb[0].mxu0
      %1986 = vmatprep.mubr.bf16.mxu0 0
      %1987 = vmatmul.mubr.bf16.gmra.mrb[0].mxu0 %v1859
      %v1988 = vpop.f32.mrb[0].mxu0
      %v1989 = vadd.f32 %v1772, %v1988
      %v1990 = vpop.f32.mrb[0].mxu0
      %v1991 = vpop.f32.mrb[0].mxu0
      %v1992 = vadd.f32 %v1775, %v1991
      %v1993 = vpop.f32.mrb[0].mxu0
      %1994 = vmatprep.mubr.bf16.mxu0 0
      %1995 = vmatmul.mubr.bf16.gmra.mrb[0].mxu0 %v1862
      %v1996 = vpop.f32.mrb[0].mxu0
      %v1997 = vadd.f32 %v1780, %v1996
      %v1998 = vpop.f32.mrb[0].mxu0
      %v1999 = vpop.f32.mrb[0].mxu0
      %v2000 = vadd.f32 %v1783, %v1999
      %v2001 = vpop.f32.mrb[0].mxu0
      %2002 = vmatprep.mubr.bf16.mxu0 0
      %2003 = vmatmul.mubr.bf16.gmra.mrb[0].mxu0 %v1865
      %v2004 = vpop.f32.mrb[0].mxu0
      %v2005 = vadd.f32 %v1788, %v2004
      %v2006 = vpop.f32.mrb[0].mxu0
      %v2007 = vpop.f32.mrb[0].mxu0
      %v2008 = vadd.f32 %v1791, %v2007
      %v2009 = vpop.f32.mrb[0].mxu0
      %2010 = vmatprep.mubr.bf16.mxu0 0
      %2011 = vmatmul.mubr.bf16.gmra.mrb[0].mxu0 %v1868
      %v2012 = vpop.f32.mrb[0].mxu0
      %v2013 = vadd.f32 %v1796, %v2012
      %v2014 = vpop.f32.mrb[0].mxu0
      %v2015 = vpop.f32.mrb[0].mxu0
      %v2016 = vadd.f32 %v1799, %v2015
      %v2017 = vpop.f32.mrb[0].mxu0
      %2018 = vmatprep.mubr.bf16.mxu0 0
      %2019 = vmatmul.mubr.bf16.gmra.mrb[0].mxu0 %v1871
      %v2020 = vpop.f32.mrb[0].mxu0
      %v2021 = vadd.f32 %v1804, %v2020
      %v2022 = vpop.f32.mrb[0].mxu0
      %v2023 = vpop.f32.mrb[0].mxu0
      %v2024 = vadd.f32 %v1807, %v2023
      %v2025 = vpop.f32.mrb[0].mxu0
      %2026 = vmatprep.mubr.bf16.mxu0 0
      %2027 = vmatmul.mubr.bf16.gmra.mrb[0].mxu0 %v1874
      %v2028 = vpop.f32.mrb[0].mxu0
      %v2029 = vadd.f32 %v1812, %v2028
      %v2030 = vpop.f32.mrb[0].mxu0
      %v2031 = vpop.f32.mrb[0].mxu0
      %v2032 = vadd.f32 %v1815, %v2031
      %v2033 = vpop.f32.mrb[0].mxu0
      %2034 = vmatprep.mubr.bf16.mxu0 0
      %2035 = vmatmul.mubr.bf16.gmra.mrb[0].mxu0 %v1877
      %v2036 = vpop.f32.mrb[0].mxu0
      %v2037 = vadd.f32 %v1820, %v2036
      %v2038 = vpop.f32.mrb[0].mxu0
      %v2039 = vpop.f32.mrb[0].mxu0
      %v2040 = vadd.f32 %v1823, %v2039
      %v2041 = vpop.f32.mrb[0].mxu0
      %2042 = vdwg.mxu0
      %s2043 = scalar_lea.vmem [#allocation2], 48
      %v2044 = vld [vmem:[%s2043] sm:$0xff]
      %v2045 = vld [vmem:[%s2043 + $0x8] sm:$0xff]
      %v2046 = vld [vmem:[%s2043 + $0x10] sm:$0x3]
      %v2047 = vld [vmem:[%s2043 + $0x18] sm:$0xff]
      %v2048 = vld [vmem:[%s2043 + $0x20] sm:$0xff]
      %v2049 = vld [vmem:[%s2043 + $0x28] sm:$0x3]
      %v2050 = vld [vmem:[%s2043 + $0x30] sm:$0xff]
      %v2051 = vld [vmem:[%s2043 + $0x38] sm:$0xff]
      %v2052 = vld [vmem:[%s2043 + $0x40] sm:$0x3]
      %v2053 = vld [vmem:[%s2043 + $0x48] sm:$0xff]
      %v2054 = vld [vmem:[%s2043 + $0x50] sm:$0xff]
      %v2055 = vld [vmem:[%s2043 + $0x58] sm:$0x3]
      %v2056 = vld [vmem:[%s2043 + $0x60] sm:$0xff]
      %v2057 = vld [vmem:[%s2043 + $0x68] sm:$0xff]
      %v2058 = vld [vmem:[%s2043 + $0x70] sm:$0x3]
      %v2059 = vld [vmem:[%s2043 + $0x78] sm:$0xff]
      %v2060 = vld [vmem:[%s2043 + $0x80] sm:$0xff]
      %v2061 = vld [vmem:[%s2043 + $0x88] sm:$0x3]
      %v2062 = vld [vmem:[%s2043 + $0x90] sm:$0xff]
      %v2063 = vld [vmem:[%s2043 + $0x98] sm:$0xff]
      %v2064 = vld [vmem:[%s2043 + $0xa0] sm:$0x3]
      %v2065 = vld [vmem:[%s2043 + $0xa8] sm:$0xff]
      %v2066 = vld [vmem:[%s2043 + $0xb0] sm:$0xff]
      %v2067 = vld [vmem:[%s2043 + $0xb8] sm:$0x3]
      %v2068 = vld [vmem:[%s2043 + $0xc0] sm:$0xff]
      %v2069 = vld [vmem:[%s2043 + $0xc8] sm:$0xff]
      %v2070 = vld [vmem:[%s2043 + $0xd0] sm:$0x3]
      %v2071 = vld [vmem:[%s2043 + $0xd8] sm:$0xff]
      %v2072 = vld [vmem:[%s2043 + $0xe0] sm:$0xff]
      %v2073 = vld [vmem:[%s2043 + $0xe8] sm:$0x3]
      %v2074 = vld [vmem:[%s2043 + $0xf0] sm:$0xff]
      %v2075 = vld [vmem:[%s2043 + $0xf8] sm:$0xff]
      %v2076 = vld [vmem:[%s2043 + $0x100] sm:$0x3]
      %v2077 = vld [vmem:[%s2043 + $0x108] sm:$0xff]
      %v2078 = vld [vmem:[%s2043 + $0x110] sm:$0xff]
      %v2079 = vld [vmem:[%s2043 + $0x118] sm:$0x3]
      %v2080 = vld [vmem:[%s2043 + $0x120] sm:$0xff]
      %v2081 = vld [vmem:[%s2043 + $0x128] sm:$0xff]
      %v2082 = vld [vmem:[%s2043 + $0x130] sm:$0x3]
      %v2083 = vld [vmem:[%s2043 + $0x138] sm:$0xff]
      %v2084 = vld [vmem:[%s2043 + $0x140] sm:$0xff]
      %v2085 = vld [vmem:[%s2043 + $0x148] sm:$0x3]
      %v2086 = vld [vmem:[%s2043 + $0x150] sm:$0xff]
      %v2087 = vld [vmem:[%s2043 + $0x158] sm:$0xff]
      %v2088 = vld [vmem:[%s2043 + $0x160] sm:$0x3]
      %v2089 = vld [vmem:[%s2043 + $0x168] sm:$0xff]
      %v2090 = vld [vmem:[%s2043 + $0x170] sm:$0xff]
      %v2091 = vld [vmem:[%s2043 + $0x178] sm:$0x3]
      %v2140 = vrot.slane %v2044, 1
      %v2141 = vrot.slane %v2045, 1
      %v2142 = vsel %vm645, %v2140, %v2141
      %v2143 = vrot.slane %v2046, 1
      %v2144 = vsel %vm645, %v2141, %v2143
      %v2145 = vrot.slane %v2047, 1
      %v2146 = vrot.slane %v2048, 1
      %v2147 = vsel %vm645, %v2145, %v2146
      %v2148 = vrot.slane %v2049, 1
      %v2149 = vsel %vm645, %v2146, %v2148
      %v2150 = vrot.slane %v2050, 1
      %v2151 = vrot.slane %v2051, 1
      %v2152 = vsel %vm645, %v2150, %v2151
      %v2153 = vrot.slane %v2052, 1
      %v2154 = vsel %vm645, %v2151, %v2153
      %v2155 = vrot.slane %v2053, 1
      %v2156 = vrot.slane %v2054, 1
      %v2157 = vsel %vm645, %v2155, %v2156
      %v2158 = vrot.slane %v2055, 1
      %v2159 = vsel %vm645, %v2156, %v2158
      %v2160 = vrot.slane %v2056, 1
      %v2161 = vrot.slane %v2057, 1
      %v2162 = vsel %vm645, %v2160, %v2161
      %v2163 = vrot.slane %v2058, 1
      %v2164 = vsel %vm645, %v2161, %v2163
      %v2165 = vrot.slane %v2059, 1
      %v2166 = vrot.slane %v2060, 1
      %v2167 = vsel %vm645, %v2165, %v2166
      %v2168 = vrot.slane %v2061, 1
      %v2169 = vsel %vm645, %v2166, %v2168
      %v2170 = vrot.slane %v2062, 1
      %v2171 = vrot.slane %v2063, 1
      %v2172 = vsel %vm645, %v2170, %v2171
      %v2173 = vrot.slane %v2064, 1
      %v2174 = vsel %vm645, %v2171, %v2173
      %v2175 = vrot.slane %v2065, 1
      %v2176 = vrot.slane %v2066, 1
      %v2177 = vsel %vm645, %v2175, %v2176
      %v2178 = vrot.slane %v2067, 1
      %v2179 = vsel %vm645, %v2176, %v2178
      %v2180 = vrot.slane %v2068, 1
      %v2181 = vrot.slane %v2069, 1
      %v2182 = vsel %vm645, %v2180, %v2181
      %v2183 = vrot.slane %v2070, 1
      %v2184 = vsel %vm645, %v2181, %v2183
      %v2185 = vrot.slane %v2071, 1
      %v2186 = vrot.slane %v2072, 1
      %v2187 = vsel %vm645, %v2185, %v2186
      %v2188 = vrot.slane %v2073, 1
      %v2189 = vsel %vm645, %v2186, %v2188
      %v2190 = vrot.slane %v2074, 1
      %v2191 = vrot.slane %v2075, 1
      %v2192 = vsel %vm645, %v2190, %v2191
      %v2193 = vrot.slane %v2076, 1
      %v2194 = vsel %vm645, %v2191, %v2193
      %v2195 = vrot.slane %v2077, 1
      %v2196 = vrot.slane %v2078, 1
      %v2197 = vsel %vm645, %v2195, %v2196
      %v2198 = vrot.slane %v2079, 1
      %v2199 = vsel %vm645, %v2196, %v2198
      %v2200 = vrot.slane %v2080, 1
      %v2201 = vrot.slane %v2081, 1
      %v2202 = vsel %vm645, %v2200, %v2201
      %v2203 = vrot.slane %v2082, 1
      %v2204 = vsel %vm645, %v2201, %v2203
      %v2205 = vrot.slane %v2083, 1
      %v2206 = vrot.slane %v2084, 1
      %v2207 = vsel %vm645, %v2205, %v2206
      %v2208 = vrot.slane %v2085, 1
      %v2209 = vsel %vm645, %v2206, %v2208
      %v2210 = vrot.slane %v2086, 1
      %v2211 = vrot.slane %v2087, 1
      %v2212 = vsel %vm645, %v2210, %v2211
      %v2213 = vrot.slane %v2088, 1
      %v2214 = vsel %vm645, %v2211, %v2213
      %v2215 = vrot.slane %v2089, 1
      %v2216 = vrot.slane %v2090, 1
      %v2217 = vsel %vm645, %v2215, %v2216
      %v2218 = vrot.slane %v2091, 1
      %v2219 = vsel %vm645, %v2216, %v2218
      %2220 = vrot.lane.b32.xlu0 %v2142, 4
      %v2221 = vpop.permute.xlu0 %2220
      %2222 = vrot.lane.b32.xlu0 %v2144, 4
      %v2223 = vpop.permute.xlu0 %2222
      %2224 = vrot.lane.b32.xlu0 %v2147, 4
      %v2225 = vpop.permute.xlu0 %2224
      %2226 = vrot.lane.b32.xlu0 %v2149, 4
      %v2227 = vpop.permute.xlu0 %2226
      %2228 = vrot.lane.b32.xlu0 %v2152, 4
      %v2229 = vpop.permute.xlu0 %2228
      %2230 = vrot.lane.b32.xlu0 %v2154, 4
      %v2231 = vpop.permute.xlu0 %2230
      %2232 = vrot.lane.b32.xlu0 %v2157, 4
      %v2233 = vpop.permute.xlu0 %2232
      %2234 = vrot.lane.b32.xlu0 %v2159, 4
      %v2235 = vpop.permute.xlu0 %2234
      %2236 = vrot.lane.b32.xlu0 %v2162, 4
      %v2237 = vpop.permute.xlu0 %2236
      %2238 = vrot.lane.b32.xlu0 %v2164, 4
      %v2239 = vpop.permute.xlu0 %2238
      %2240 = vrot.lane.b32.xlu0 %v2167, 4
      %v2241 = vpop.permute.xlu0 %2240
      %2242 = vrot.lane.b32.xlu0 %v2169, 4
      %v2243 = vpop.permute.xlu0 %2242
      %2244 = vrot.lane.b32.xlu0 %v2172, 4
      %v2245 = vpop.permute.xlu0 %2244
      %2246 = vrot.lane.b32.xlu0 %v2174, 4
      %v2247 = vpop.permute.xlu0 %2246
      %2248 = vrot.lane.b32.xlu0 %v2177, 4
      %v2249 = vpop.permute.xlu0 %2248
      %2250 = vrot.lane.b32.xlu0 %v2179, 4
      %v2251 = vpop.permute.xlu0 %2250
      %2252 = vrot.lane.b32.xlu0 %v2182, 4
      %v2253 = vpop.permute.xlu0 %2252
      %2254 = vrot.lane.b32.xlu0 %v2184, 4
      %v2255 = vpop.permute.xlu0 %2254
      %2256 = vrot.lane.b32.xlu0 %v2187, 4
      %v2257 = vpop.permute.xlu0 %2256
      %2258 = vrot.lane.b32.xlu0 %v2189, 4
      %v2259 = vpop.permute.xlu0 %2258
      %2260 = vrot.lane.b32.xlu0 %v2192, 4
      %v2261 = vpop.permute.xlu0 %2260
      %2262 = vrot.lane.b32.xlu0 %v2194, 4
      %v2263 = vpop.permute.xlu0 %2262
      %2264 = vrot.lane.b32.xlu0 %v2197, 4
      %v2265 = vpop.permute.xlu0 %2264
      %2266 = vrot.lane.b32.xlu0 %v2199, 4
      %v2267 = vpop.permute.xlu0 %2266
      %2268 = vrot.lane.b32.xlu0 %v2202, 4
      %v2269 = vpop.permute.xlu0 %2268
      %2270 = vrot.lane.b32.xlu0 %v2204, 4
      %v2271 = vpop.permute.xlu0 %2270
      %2272 = vrot.lane.b32.xlu0 %v2207, 4
      %v2273 = vpop.permute.xlu0 %2272
      %2274 = vrot.lane.b32.xlu0 %v2209, 4
      %v2275 = vpop.permute.xlu0 %2274
      %2276 = vrot.lane.b32.xlu0 %v2212, 4
      %v2277 = vpop.permute.xlu0 %2276
      %2278 = vrot.lane.b32.xlu0 %v2214, 4
      %v2279 = vpop.permute.xlu0 %2278
      %2280 = vrot.lane.b32.xlu0 %v2217, 4
      %v2281 = vpop.permute.xlu0 %2280
      %2282 = vrot.lane.b32.xlu0 %v2219, 4
      %v2283 = vpop.permute.xlu0 %2282
      %v2316 = vrot.slane %v2044, 2
      %v2317 = vrot.slane %v2045, 2
      %v2318 = vsel %vm822, %v2316, %v2317
      %v2319 = vrot.slane %v2046, 2
      %v2320 = vsel %vm822, %v2317, %v2319
      %v2321 = vrot.slane %v2047, 2
      %v2322 = vrot.slane %v2048, 2
      %v2323 = vsel %vm822, %v2321, %v2322
      %v2324 = vrot.slane %v2049, 2
      %v2325 = vsel %vm822, %v2322, %v2324
      %v2326 = vrot.slane %v2050, 2
      %v2327 = vrot.slane %v2051, 2
      %v2328 = vsel %vm822, %v2326, %v2327
      %v2329 = vrot.slane %v2052, 2
      %v2330 = vsel %vm822, %v2327, %v2329
      %v2331 = vrot.slane %v2053, 2
      %v2332 = vrot.slane %v2054, 2
      %v2333 = vsel %vm822, %v2331, %v2332
      %v2334 = vrot.slane %v2055, 2
      %v2335 = vsel %vm822, %v2332, %v2334
      %v2336 = vrot.slane %v2056, 2
      %v2337 = vrot.slane %v2057, 2
      %v2338 = vsel %vm822, %v2336, %v2337
      %v2339 = vrot.slane %v2058, 2
      %v2340 = vsel %vm822, %v2337, %v2339
      %v2341 = vrot.slane %v2059, 2
      %v2342 = vrot.slane %v2060, 2
      %v2343 = vsel %vm822, %v2341, %v2342
      %v2344 = vrot.slane %v2061, 2
      %v2345 = vsel %vm822, %v2342, %v2344
      %v2346 = vrot.slane %v2062, 2
      %v2347 = vrot.slane %v2063, 2
      %v2348 = vsel %vm822, %v2346, %v2347
      %v2349 = vrot.slane %v2064, 2
      %v2350 = vsel %vm822, %v2347, %v2349
      %v2351 = vrot.slane %v2065, 2
      %v2352 = vrot.slane %v2066, 2
      %v2353 = vsel %vm822, %v2351, %v2352
      %v2354 = vrot.slane %v2067, 2
      %v2355 = vsel %vm822, %v2352, %v2354
      %v2356 = vrot.slane %v2068, 2
      %v2357 = vrot.slane %v2069, 2
      %v2358 = vsel %vm822, %v2356, %v2357
      %v2359 = vrot.slane %v2070, 2
      %v2360 = vsel %vm822, %v2357, %v2359
      %v2361 = vrot.slane %v2071, 2
      %v2362 = vrot.slane %v2072, 2
      %v2363 = vsel %vm822, %v2361, %v2362
      %v2364 = vrot.slane %v2073, 2
      %v2365 = vsel %vm822, %v2362, %v2364
      %v2366 = vrot.slane %v2074, 2
      %v2367 = vrot.slane %v2075, 2
      %v2368 = vsel %vm822, %v2366, %v2367
      %v2369 = vrot.slane %v2076, 2
      %v2370 = vsel %vm822, %v2367, %v2369
      %v2371 = vrot.slane %v2077, 2
      %v2372 = vrot.slane %v2078, 2
      %v2373 = vsel %vm822, %v2371, %v2372
      %v2374 = vrot.slane %v2079, 2
      %v2375 = vsel %vm822, %v2372, %v2374
      %v2376 = vrot.slane %v2080, 2
      %v2377 = vrot.slane %v2081, 2
      %v2378 = vsel %vm822, %v2376, %v2377
      %v2379 = vrot.slane %v2082, 2
      %v2380 = vsel %vm822, %v2377, %v2379
      %v2381 = vrot.slane %v2083, 2
      %v2382 = vrot.slane %v2084, 2
      %v2383 = vsel %vm822, %v2381, %v2382
      %v2384 = vrot.slane %v2085, 2
      %v2385 = vsel %vm822, %v2382, %v2384
      %v2386 = vrot.slane %v2086, 2
      %v2387 = vrot.slane %v2087, 2
      %v2388 = vsel %vm822, %v2386, %v2387
      %v2389 = vrot.slane %v2088, 2
      %v2390 = vsel %vm822, %v2387, %v2389
      %v2391 = vrot.slane %v2089, 2
      %v2392 = vrot.slane %v2090, 2
      %v2393 = vsel %vm822, %v2391, %v2392
      %v2394 = vrot.slane %v2091, 2
      %v2395 = vsel %vm822, %v2392, %v2394
      %2396 = vrot.lane.b32.xlu0 %v2318, 8
      %v2397 = vpop.permute.xlu0 %2396
      %2398 = vrot.lane.b32.xlu0 %v2320, 8
      %v2399 = vpop.permute.xlu0 %2398
      %2400 = vrot.lane.b32.xlu0 %v2323, 8
      %v2401 = vpop.permute.xlu0 %2400
      %2402 = vrot.lane.b32.xlu0 %v2325, 8
      %v2403 = vpop.permute.xlu0 %2402
      %2404 = vrot.lane.b32.xlu0 %v2328, 8
      %v2405 = vpop.permute.xlu0 %2404
      %2406 = vrot.lane.b32.xlu0 %v2330, 8
      %v2407 = vpop.permute.xlu0 %2406
      %2408 = vrot.lane.b32.xlu0 %v2333, 8
      %v2409 = vpop.permute.xlu0 %2408
      %2410 = vrot.lane.b32.xlu0 %v2335, 8
      %v2411 = vpop.permute.xlu0 %2410
      %2412 = vrot.lane.b32.xlu0 %v2338, 8
      %v2413 = vpop.permute.xlu0 %2412
      %2414 = vrot.lane.b32.xlu0 %v2340, 8
      %v2415 = vpop.permute.xlu0 %2414
      %2416 = vrot.lane.b32.xlu0 %v2343, 8
      %v2417 = vpop.permute.xlu0 %2416
      %2418 = vrot.lane.b32.xlu0 %v2345, 8
      %v2419 = vpop.permute.xlu0 %2418
      %2420 = vrot.lane.b32.xlu0 %v2348, 8
      %v2421 = vpop.permute.xlu0 %2420
      %2422 = vrot.lane.b32.xlu0 %v2350, 8
      %v2423 = vpop.permute.xlu0 %2422
      %2424 = vrot.lane.b32.xlu0 %v2353, 8
      %v2425 = vpop.permute.xlu0 %2424
      %2426 = vrot.lane.b32.xlu0 %v2355, 8
      %v2427 = vpop.permute.xlu0 %2426
      %2428 = vrot.lane.b32.xlu0 %v2358, 8
      %v2429 = vpop.permute.xlu0 %2428
      %2430 = vrot.lane.b32.xlu0 %v2360, 8
      %v2431 = vpop.permute.xlu0 %2430
      %2432 = vrot.lane.b32.xlu0 %v2363, 8
      %v2433 = vpop.permute.xlu0 %2432
      %2434 = vrot.lane.b32.xlu0 %v2365, 8
      %v2435 = vpop.permute.xlu0 %2434
      %2436 = vrot.lane.b32.xlu0 %v2368, 8
      %v2437 = vpop.permute.xlu0 %2436
      %2438 = vrot.lane.b32.xlu0 %v2370, 8
      %v2439 = vpop.permute.xlu0 %2438
      %2440 = vrot.lane.b32.xlu0 %v2373, 8
      %v2441 = vpop.permute.xlu0 %2440
      %2442 = vrot.lane.b32.xlu0 %v2375, 8
      %v2443 = vpop.permute.xlu0 %2442
      %2444 = vrot.lane.b32.xlu0 %v2378, 8
      %v2445 = vpop.permute.xlu0 %2444
      %2446 = vrot.lane.b32.xlu0 %v2380, 8
      %v2447 = vpop.permute.xlu0 %2446
      %2448 = vrot.lane.b32.xlu0 %v2383, 8
      %v2449 = vpop.permute.xlu0 %2448
      %2450 = vrot.lane.b32.xlu0 %v2385, 8
      %v2451 = vpop.permute.xlu0 %2450
      %2452 = vrot.lane.b32.xlu0 %v2388, 8
      %v2453 = vpop.permute.xlu0 %2452
      %2454 = vrot.lane.b32.xlu0 %v2390, 8
      %v2455 = vpop.permute.xlu0 %2454
      %2456 = vrot.lane.b32.xlu0 %v2393, 8
      %v2457 = vpop.permute.xlu0 %2456
      %2458 = vrot.lane.b32.xlu0 %v2395, 8
      %v2459 = vpop.permute.xlu0 %2458
      %v2492 = vsel %vm282, %v2044, %v2221
      %v2493 = vsel %vm282, %v2045, %v2223
      %v2494 = vsel %vm282, %v2047, %v2225
      %v2495 = vsel %vm282, %v2048, %v2227
      %v2496 = vsel %vm282, %v2050, %v2229
      %v2497 = vsel %vm282, %v2051, %v2231
      %v2498 = vsel %vm282, %v2053, %v2233
      %v2499 = vsel %vm282, %v2054, %v2235
      %v2500 = vsel %vm282, %v2056, %v2237
      %v2501 = vsel %vm282, %v2057, %v2239
      %v2502 = vsel %vm282, %v2059, %v2241
      %v2503 = vsel %vm282, %v2060, %v2243
      %v2504 = vsel %vm282, %v2062, %v2245
      %v2505 = vsel %vm282, %v2063, %v2247
      %v2506 = vsel %vm282, %v2065, %v2249
      %v2507 = vsel %vm282, %v2066, %v2251
      %v2508 = vsel %vm282, %v2068, %v2253
      %v2509 = vsel %vm282, %v2069, %v2255
      %v2510 = vsel %vm282, %v2071, %v2257
      %v2511 = vsel %vm282, %v2072, %v2259
      %v2512 = vsel %vm282, %v2074, %v2261
      %v2513 = vsel %vm282, %v2075, %v2263
      %v2514 = vsel %vm282, %v2077, %v2265
      %v2515 = vsel %vm282, %v2078, %v2267
      %v2516 = vsel %vm282, %v2080, %v2269
      %v2517 = vsel %vm282, %v2081, %v2271
      %v2518 = vsel %vm282, %v2083, %v2273
      %v2519 = vsel %vm282, %v2084, %v2275
      %v2520 = vsel %vm282, %v2086, %v2277
      %v2521 = vsel %vm282, %v2087, %v2279
      %v2522 = vsel %vm282, %v2089, %v2281
      %v2523 = vsel %vm282, %v2090, %v2283
      %v2524 = vsel %vm1031, %v2492, %v2397
      %v2525 = vsel %vm1031, %v2493, %v2399
      %v2526 = vsel %vm1031, %v2494, %v2401
      %v2527 = vsel %vm1031, %v2495, %v2403
      %v2528 = vsel %vm1031, %v2496, %v2405
      %v2529 = vsel %vm1031, %v2497, %v2407
      %v2530 = vsel %vm1031, %v2498, %v2409
      %v2531 = vsel %vm1031, %v2499, %v2411
      %v2532 = vsel %vm1031, %v2500, %v2413
      %v2533 = vsel %vm1031, %v2501, %v2415
      %v2534 = vsel %vm1031, %v2502, %v2417
      %v2535 = vsel %vm1031, %v2503, %v2419
      %v2536 = vsel %vm1031, %v2504, %v2421
      %v2537 = vsel %vm1031, %v2505, %v2423
      %v2538 = vsel %vm1031, %v2506, %v2425
      %v2539 = vsel %vm1031, %v2507, %v2427
      %v2540 = vsel %vm1031, %v2508, %v2429
      %v2541 = vsel %vm1031, %v2509, %v2431
      %v2542 = vsel %vm1031, %v2510, %v2433
      %v2543 = vsel %vm1031, %v2511, %v2435
      %v2544 = vsel %vm1031, %v2512, %v2437
      %v2545 = vsel %vm1031, %v2513, %v2439
      %v2546 = vsel %vm1031, %v2514, %v2441
      %v2547 = vsel %vm1031, %v2515, %v2443
      %v2548 = vsel %vm1031, %v2516, %v2445
      %v2549 = vsel %vm1031, %v2517, %v2447
      %v2550 = vsel %vm1031, %v2518, %v2449
      %v2551 = vsel %vm1031, %v2519, %v2451
      %v2552 = vsel %vm1031, %v2520, %v2453
      %v2553 = vsel %vm1031, %v2521, %v2455
      %v2554 = vsel %vm1031, %v2522, %v2457
      %v2555 = vsel %vm1031, %v2523, %v2459
      %v2556 = vpack.c.bf16 %v2525, %v2524
      %v2557 = vpack.c.bf16 %v2527, %v2526
      %v2558 = vpack.c.bf16 %v2529, %v2528
      %v2559 = vpack.c.bf16 %v2531, %v2530
      %v2560 = vpack.c.bf16 %v2533, %v2532
      %v2561 = vpack.c.bf16 %v2535, %v2534
      %v2562 = vpack.c.bf16 %v2537, %v2536
      %v2563 = vpack.c.bf16 %v2539, %v2538
      %v2564 = vpack.c.bf16 %v2541, %v2540
      %v2565 = vpack.c.bf16 %v2543, %v2542
      %v2566 = vpack.c.bf16 %v2545, %v2544
      %v2567 = vpack.c.bf16 %v2547, %v2546
      %v2568 = vpack.c.bf16 %v2549, %v2548
      %v2569 = vpack.c.bf16 %v2551, %v2550
      %v2570 = vpack.c.bf16 %v2553, %v2552
      %v2571 = vpack.c.bf16 %v2555, %v2554
      %v2574 = vunpack.c.l.b16 %v546
      %v2575 = vunpack.c.l.b16 %v547
      %v2576 = vpack.c.b16 %v2575, %v2574
      %v2578 = vsel %vm1613, %v2556, 0
      %v2581 = vsel %vm1613, %v2557, 0
      %v2584 = vsel %vm1613, %v2558, 0
      %v2587 = vsel %vm1613, %v2559, 0
      %v2590 = vsel %vm1613, %v2560, 0
      %v2593 = vsel %vm1613, %v2561, 0
      %v2596 = vsel %vm1613, %v2562, 0
      %v2599 = vsel %vm1613, %v2563, 0
      %v2602 = vsel %vm1613, %v2564, 0
      %v2605 = vsel %vm1613, %v2565, 0
      %v2608 = vsel %vm1613, %v2566, 0
      %v2611 = vsel %vm1613, %v2567, 0
      %v2614 = vsel %vm1613, %v2568, 0
      %v2617 = vsel %vm1613, %v2569, 0
      %v2620 = vsel %vm1613, %v2570, 0
      %v2623 = vsel %vm1613, %v2571, 0
      %v2626 = vsel %vm822, %v2576, 0
      %2628 = vmatprep.subr.bf16.mxu0 0
      %2629 = vmatpush1.bf16.msra.mxu0 %v2626
      %2630 = vmatprep.subr.bf16.mxu0 0
      %2631 = vmatpush1.bf16.msra.mxu0 0
      %2632 = vmatprep.subr.bf16.mxu0 0
      %2633 = vmatpush1.bf16.msra.mxu0 0
      %2634 = vmatprep.subr.bf16.mxu0 0
      %2635 = vmatpush1.bf16.msra.mxu0 0
      %2636 = vmatprep.subr.bf16.mxu0 0
      %2637 = vmatpush1.bf16.msra.mxu0 0
      %2638 = vmatprep.subr.bf16.mxu0 0
      %2639 = vmatpush1.bf16.msra.mxu0 0
      %2640 = vmatprep.subr.bf16.mxu0 0
      %2641 = vmatpush1.bf16.msra.mxu0 0
      %2642 = vmatprep.subr.bf16.mxu0 0
      %2643 = vmatpush1.bf16.msra.mxu0 0
      %2644 = vmatprep.subr.bf16.mxu0 0
      %2645 = vmatpush1.bf16.msra.mxu0 0
      %2646 = vmatprep.subr.bf16.mxu0 0
      %2647 = vmatpush1.bf16.msra.mxu0 0
      %2648 = vmatprep.subr.bf16.mxu0 0
      %2649 = vmatpush1.bf16.msra.mxu0 0
      %2650 = vmatprep.subr.bf16.mxu0 0
      %2651 = vmatpush1.bf16.msra.mxu0 0
      %2652 = vmatprep.subr.bf16.mxu0 0
      %2653 = vmatpush1.bf16.msra.mxu0 0
      %2654 = vmatprep.subr.bf16.mxu0 0
      %2655 = vmatpush1.bf16.msra.mxu0 0
      %2656 = vmatprep.subr.bf16.mxu0 0
      %2657 = vmatpush1.bf16.msra.mxu0 0
      %2658 = vmatprep.subr.bf16.mxu0 0
      %2659 = vmatpush1.bf16.msra.mxu0 0
      %2660 = vmatprep.mubr.bf16.mxu0 0
      %2661 = vmatmul.mubr.bf16.gmra.mrb[0].mxu0 %v2578
      %v2662 = vpop.f32.mrb[0].mxu0
      %v2663 = vadd.f32 0.0, %v2662
      %v2664 = vpop.f32.mrb[0].mxu0
      %v2665 = vpop.f32.mrb[0].mxu0
      %v2666 = vadd.f32 0.0, %v2665
      %v2667 = vpop.f32.mrb[0].mxu0
      %2668 = vmatprep.mubr.bf16.mxu0 0
      %2669 = vmatmul.mubr.bf16.gmra.mrb[0].mxu0 %v2581
      %v2670 = vpop.f32.mrb[0].mxu0
      %v2671 = vadd.f32 0.0, %v2670
      %v2672 = vpop.f32.mrb[0].mxu0
      %v2673 = vpop.f32.mrb[0].mxu0
      %v2674 = vadd.f32 0.0, %v2673
      %v2675 = vpop.f32.mrb[0].mxu0
      %2676 = vmatprep.mubr.bf16.mxu0 0
      %2677 = vmatmul.mubr.bf16.gmra.mrb[0].mxu0 %v2584
      %v2678 = vpop.f32.mrb[0].mxu0
      %v2679 = vadd.f32 0.0, %v2678
      %v2680 = vpop.f32.mrb[0].mxu0
      %v2681 = vpop.f32.mrb[0].mxu0
      %v2682 = vadd.f32 0.0, %v2681
      %v2683 = vpop.f32.mrb[0].mxu0
      %2684 = vmatprep.mubr.bf16.mxu0 0
      %2685 = vmatmul.mubr.bf16.gmra.mrb[0].mxu0 %v2587
      %v2686 = vpop.f32.mrb[0].mxu0
      %v2687 = vadd.f32 0.0, %v2686
      %v2688 = vpop.f32.mrb[0].mxu0
      %v2689 = vpop.f32.mrb[0].mxu0
      %v2690 = vadd.f32 0.0, %v2689
      %v2691 = vpop.f32.mrb[0].mxu0
      %2692 = vmatprep.mubr.bf16.mxu0 0
      %2693 = vmatmul.mubr.bf16.gmra.mrb[0].mxu0 %v2590
      %v2694 = vpop.f32.mrb[0].mxu0
      %v2695 = vadd.f32 0.0, %v2694
      %v2696 = vpop.f32.mrb[0].mxu0
      %v2697 = vpop.f32.mrb[0].mxu0
      %v2698 = vadd.f32 0.0, %v2697
      %v2699 = vpop.f32.mrb[0].mxu0
      %2700 = vmatprep.mubr.bf16.mxu0 0
      %2701 = vmatmul.mubr.bf16.gmra.mrb[0].mxu0 %v2593
      %v2702 = vpop.f32.mrb[0].mxu0
      %v2703 = vadd.f32 0.0, %v2702
      %v2704 = vpop.f32.mrb[0].mxu0
      %v2705 = vpop.f32.mrb[0].mxu0
      %v2706 = vadd.f32 0.0, %v2705
      %v2707 = vpop.f32.mrb[0].mxu0
      %2708 = vmatprep.mubr.bf16.mxu0 0
      %2709 = vmatmul.mubr.bf16.gmra.mrb[0].mxu0 %v2596
      %v2710 = vpop.f32.mrb[0].mxu0
      %v2711 = vadd.f32 0.0, %v2710
      %v2712 = vpop.f32.mrb[0].mxu0
      %v2713 = vpop.f32.mrb[0].mxu0
      %v2714 = vadd.f32 0.0, %v2713
      %v2715 = vpop.f32.mrb[0].mxu0
      %2716 = vmatprep.mubr.bf16.mxu0 0
      %2717 = vmatmul.mubr.bf16.gmra.mrb[0].mxu0 %v2599
      %v2718 = vpop.f32.mrb[0].mxu0
      %v2719 = vadd.f32 0.0, %v2718
      %v2720 = vpop.f32.mrb[0].mxu0
      %v2721 = vpop.f32.mrb[0].mxu0
      %v2722 = vadd.f32 0.0, %v2721
      %v2723 = vpop.f32.mrb[0].mxu0
      %2724 = vmatprep.mubr.bf16.mxu0 0
      %2725 = vmatmul.mubr.bf16.gmra.mrb[0].mxu0 %v2602
      %v2726 = vpop.f32.mrb[0].mxu0
      %v2727 = vadd.f32 0.0, %v2726
      %v2728 = vpop.f32.mrb[0].mxu0
      %v2729 = vpop.f32.mrb[0].mxu0
      %v2730 = vadd.f32 0.0, %v2729
      %v2731 = vpop.f32.mrb[0].mxu0
      %2732 = vmatprep.mubr.bf16.mxu0 0
      %2733 = vmatmul.mubr.bf16.gmra.mrb[0].mxu0 %v2605
      %v2734 = vpop.f32.mrb[0].mxu0
      %v2735 = vadd.f32 0.0, %v2734
      %v2736 = vpop.f32.mrb[0].mxu0
      %v2737 = vpop.f32.mrb[0].mxu0
      %v2738 = vadd.f32 0.0, %v2737
      %v2739 = vpop.f32.mrb[0].mxu0
      %2740 = vmatprep.mubr.bf16.mxu0 0
      %2741 = vmatmul.mubr.bf16.gmra.mrb[0].mxu0 %v2608
      %v2742 = vpop.f32.mrb[0].mxu0
      %v2743 = vadd.f32 0.0, %v2742
      %v2744 = vpop.f32.mrb[0].mxu0
      %v2745 = vpop.f32.mrb[0].mxu0
      %v2746 = vadd.f32 0.0, %v2745
      %v2747 = vpop.f32.mrb[0].mxu0
      %2748 = vmatprep.mubr.bf16.mxu0 0
      %2749 = vmatmul.mubr.bf16.gmra.mrb[0].mxu0 %v2611
      %v2750 = vpop.f32.mrb[0].mxu0
      %v2751 = vadd.f32 0.0, %v2750
      %v2752 = vpop.f32.mrb[0].mxu0
      %v2753 = vpop.f32.mrb[0].mxu0
      %v2754 = vadd.f32 0.0, %v2753
      %v2755 = vpop.f32.mrb[0].mxu0
      %2756 = vmatprep.mubr.bf16.mxu0 0
      %2757 = vmatmul.mubr.bf16.gmra.mrb[0].mxu0 %v2614
      %v2758 = vpop.f32.mrb[0].mxu0
      %v2759 = vadd.f32 0.0, %v2758
      %v2760 = vpop.f32.mrb[0].mxu0
      %v2761 = vpop.f32.mrb[0].mxu0
      %v2762 = vadd.f32 0.0, %v2761
      %v2763 = vpop.f32.mrb[0].mxu0
      %2764 = vmatprep.mubr.bf16.mxu0 0
      %2765 = vmatmul.mubr.bf16.gmra.mrb[0].mxu0 %v2617
      %v2766 = vpop.f32.mrb[0].mxu0
      %v2767 = vadd.f32 0.0, %v2766
      %v2768 = vpop.f32.mrb[0].mxu0
      %v2769 = vpop.f32.mrb[0].mxu0
      %v2770 = vadd.f32 0.0, %v2769
      %v2771 = vpop.f32.mrb[0].mxu0
      %2772 = vmatprep.mubr.bf16.mxu0 0
      %2773 = vmatmul.mubr.bf16.gmra.mrb[0].mxu0 %v2620
      %v2774 = vpop.f32.mrb[0].mxu0
      %v2775 = vadd.f32 0.0, %v2774
      %v2776 = vpop.f32.mrb[0].mxu0
      %v2777 = vpop.f32.mrb[0].mxu0
      %v2778 = vadd.f32 0.0, %v2777
      %v2779 = vpop.f32.mrb[0].mxu0
      %2780 = vmatprep.mubr.bf16.mxu0 0
      %2781 = vmatmul.mubr.bf16.gmra.mrb[0].mxu0 %v2623
      %v2782 = vpop.f32.mrb[0].mxu0
      %v2783 = vadd.f32 0.0, %v2782
      %v2784 = vpop.f32.mrb[0].mxu0
      %v2785 = vpop.f32.mrb[0].mxu0
      %v2786 = vadd.f32 0.0, %v2785
      %v2787 = vpop.f32.mrb[0].mxu0
      %2788 = vdwg.mxu0
      %v2789 = vadd.f32 %v1917, %v2663
      %v2790 = vadd.f32 %v1920, %v2666
      %v2791 = vadd.f32 %v1925, %v2671
      %v2792 = vadd.f32 %v1928, %v2674
      %v2793 = vadd.f32 %v1933, %v2679
      %v2794 = vadd.f32 %v1936, %v2682
      %v2795 = vadd.f32 %v1941, %v2687
      %v2796 = vadd.f32 %v1944, %v2690
      %v2797 = vadd.f32 %v1949, %v2695
      %v2798 = vadd.f32 %v1952, %v2698
      %v2799 = vadd.f32 %v1957, %v2703
      %v2800 = vadd.f32 %v1960, %v2706
      %v2801 = vadd.f32 %v1965, %v2711
      %v2802 = vadd.f32 %v1968, %v2714
      %v2803 = vadd.f32 %v1973, %v2719
      %v2804 = vadd.f32 %v1976, %v2722
      %v2805 = vadd.f32 %v1981, %v2727
      %v2806 = vadd.f32 %v1984, %v2730
      %v2807 = vadd.f32 %v1989, %v2735
      %v2808 = vadd.f32 %v1992, %v2738
      %v2809 = vadd.f32 %v1997, %v2743
      %v2810 = vadd.f32 %v2000, %v2746
      %v2811 = vadd.f32 %v2005, %v2751
      %v2812 = vadd.f32 %v2008, %v2754
      %v2813 = vadd.f32 %v2013, %v2759
      %v2814 = vadd.f32 %v2016, %v2762
      %v2815 = vadd.f32 %v2021, %v2767
      %v2816 = vadd.f32 %v2024, %v2770
      %v2817 = vadd.f32 %v2029, %v2775
      %v2818 = vadd.f32 %v2032, %v2778
      %v2819 = vadd.f32 %v2037, %v2783
      %v2820 = vadd.f32 %v2040, %v2786
      %v2822 = vlaneseq
      %v2823 = vshrl.u32 %v2822, 7
      %v2824 = vsub.s32 0, %v2823
      %v2825 = vrot.slane %v548, %v2824
      %v2827 = vadd.f32 %v2789, %v2825
      %v2828 = vadd.f32 %v2790, %v2825
      %v2829 = vadd.f32 %v2791, %v2825
      %v2830 = vadd.f32 %v2792, %v2825
      %v2831 = vadd.f32 %v2793, %v2825
      %v2832 = vadd.f32 %v2794, %v2825
      %v2833 = vadd.f32 %v2795, %v2825
      %v2834 = vadd.f32 %v2796, %v2825
      %v2835 = vadd.f32 %v2797, %v2825
      %v2836 = vadd.f32 %v2798, %v2825
      %v2837 = vadd.f32 %v2799, %v2825
      %v2838 = vadd.f32 %v2800, %v2825
      %v2839 = vadd.f32 %v2801, %v2825
      %v2840 = vadd.f32 %v2802, %v2825
      %v2841 = vadd.f32 %v2803, %v2825
      %v2842 = vadd.f32 %v2804, %v2825
      %v2843 = vadd.f32 %v2805, %v2825
      %v2844 = vadd.f32 %v2806, %v2825
      %v2845 = vadd.f32 %v2807, %v2825
      %v2846 = vadd.f32 %v2808, %v2825
      %v2847 = vadd.f32 %v2809, %v2825
      %v2848 = vadd.f32 %v2810, %v2825
      %v2849 = vadd.f32 %v2811, %v2825
      %v2850 = vadd.f32 %v2812, %v2825
      %v2851 = vadd.f32 %v2813, %v2825
      %v2852 = vadd.f32 %v2814, %v2825
      %v2853 = vadd.f32 %v2815, %v2825
      %v2854 = vadd.f32 %v2816, %v2825
      %v2855 = vadd.f32 %v2817, %v2825
      %v2856 = vadd.f32 %v2818, %v2825
      %v2857 = vadd.f32 %v2819, %v2825
      %v2858 = vadd.f32 %v2820, %v2825
      %v2859 = vmax.f32 %v2827, 0.0
      %v2860 = vmax.f32 %v2828, 0.0
      %v2861 = vmax.f32 %v2829, 0.0
      %v2862 = vmax.f32 %v2830, 0.0
      %v2863 = vmax.f32 %v2831, 0.0
      %v2864 = vmax.f32 %v2832, 0.0
      %v2865 = vmax.f32 %v2833, 0.0
      %v2866 = vmax.f32 %v2834, 0.0
      %v2867 = vmax.f32 %v2835, 0.0
      %v2868 = vmax.f32 %v2836, 0.0
      %v2869 = vmax.f32 %v2837, 0.0
      %v2870 = vmax.f32 %v2838, 0.0
      %v2871 = vmax.f32 %v2839, 0.0
      %v2872 = vmax.f32 %v2840, 0.0
      %v2873 = vmax.f32 %v2841, 0.0
      %v2874 = vmax.f32 %v2842, 0.0
      %v2875 = vmax.f32 %v2843, 0.0
      %v2876 = vmax.f32 %v2844, 0.0
      %v2877 = vmax.f32 %v2845, 0.0
      %v2878 = vmax.f32 %v2846, 0.0
      %v2879 = vmax.f32 %v2847, 0.0
      %v2880 = vmax.f32 %v2848, 0.0
      %v2881 = vmax.f32 %v2849, 0.0
      %v2882 = vmax.f32 %v2850, 0.0
      %v2883 = vmax.f32 %v2851, 0.0
      %v2884 = vmax.f32 %v2852, 0.0
      %v2885 = vmax.f32 %v2853, 0.0
      %v2886 = vmax.f32 %v2854, 0.0
      %v2887 = vmax.f32 %v2855, 0.0
      %v2888 = vmax.f32 %v2856, 0.0
      %v2889 = vmax.f32 %v2857, 0.0
      %v2890 = vmax.f32 %v2858, 0.0
      loop: start=0, step=1, limit=3
      $region49: #{tpu_custom_call.1} parent=47 // loop_pre_header
        _
      $region50: #{tpu_custom_call.1} parent=47 // loop_header
        %s2892 = sphi 0, %s2896
        %p2893 = scmp.ge.s32.totalorder %s2892, 3
        %v2897 = vphi %v2859, %v5782
        %v2898 = vphi %v2860, %v5783
        %v2899 = vphi %v2861, %v5784
        %v2900 = vphi %v2862, %v5785
        %v2901 = vphi %v2863, %v5786
        %v2902 = vphi %v2864, %v5787
        %v2903 = vphi %v2865, %v5788
        %v2904 = vphi %v2866, %v5789
        %v2905 = vphi %v2867, %v5790
        %v2906 = vphi %v2868, %v5791
        %v2907 = vphi %v2869, %v5792
        %v2908 = vphi %v2870, %v5793
        %v2909 = vphi %v2871, %v5794
        %v2910 = vphi %v2872, %v5795
        %v2911 = vphi %v2873, %v5796
        %v2912 = vphi %v2874, %v5797
        %v2913 = vphi %v2875, %v5798
        %v2914 = vphi %v2876, %v5799
        %v2915 = vphi %v2877, %v5800
        %v2916 = vphi %v2878, %v5801
        %v2917 = vphi %v2879, %v5802
        %v2918 = vphi %v2880, %v5803
        %v2919 = vphi %v2881, %v5804
        %v2920 = vphi %v2882, %v5805
        %v2921 = vphi %v2883, %v5806
        %v2922 = vphi %v2884, %v5807
        %v2923 = vphi %v2885, %v5808
        %v2924 = vphi %v2886, %v5809
        %v2925 = vphi %v2887, %v5810
        %v2926 = vphi %v2888, %v5811
        %v2927 = vphi %v2889, %v5812
        %v2928 = vphi %v2890, %v5813
      $region51: #{tpu_custom_call.1} parent=47 // loop_header_branch
        %2895 = sbr.rel (%p2893) target = $region55
      $region52: #{tpu_custom_call.1} parent=47 // loop_body
        %v2961 = vrot.slane %v2897, 7
        %v2962 = vrot.slane %v2898, 7
        %v2963 = vsel %vm364, %v2961, %v2962
        %v2964 = vrot.slane %v2899, 7
        %v2965 = vrot.slane %v2900, 7
        %v2966 = vsel %vm364, %v2964, %v2965
        %v2967 = vrot.slane %v2901, 7
        %v2968 = vrot.slane %v2902, 7
        %v2969 = vsel %vm364, %v2967, %v2968
        %v2970 = vrot.slane %v2903, 7
        %v2971 = vrot.slane %v2904, 7
        %v2972 = vsel %vm364, %v2970, %v2971
        %v2973 = vrot.slane %v2905, 7
        %v2974 = vrot.slane %v2906, 7
        %v2975 = vsel %vm364, %v2973, %v2974
        %v2976 = vrot.slane %v2907, 7
        %v2977 = vrot.slane %v2908, 7
        %v2978 = vsel %vm364, %v2976, %v2977
        %v2979 = vrot.slane %v2909, 7
        %v2980 = vrot.slane %v2910, 7
        %v2981 = vsel %vm364, %v2979, %v2980
        %v2982 = vrot.slane %v2911, 7
        %v2983 = vrot.slane %v2912, 7
        %v2984 = vsel %vm364, %v2982, %v2983
        %v2985 = vrot.slane %v2913, 7
        %v2986 = vrot.slane %v2914, 7
        %v2987 = vsel %vm364, %v2985, %v2986
        %v2988 = vrot.slane %v2915, 7
        %v2989 = vrot.slane %v2916, 7
        %v2990 = vsel %vm364, %v2988, %v2989
        %v2991 = vrot.slane %v2917, 7
        %v2992 = vrot.slane %v2918, 7
        %v2993 = vsel %vm364, %v2991, %v2992
        %v2994 = vrot.slane %v2919, 7
        %v2995 = vrot.slane %v2920, 7
        %v2996 = vsel %vm364, %v2994, %v2995
        %v2997 = vrot.slane %v2921, 7
        %v2998 = vrot.slane %v2922, 7
        %v2999 = vsel %vm364, %v2997, %v2998
        %v3000 = vrot.slane %v2923, 7
        %v3001 = vrot.slane %v2924, 7
        %v3002 = vsel %vm364, %v3000, %v3001
        %v3003 = vrot.slane %v2925, 7
        %v3004 = vrot.slane %v2926, 7
        %v3005 = vsel %vm364, %v3003, %v3004
        %v3006 = vrot.slane %v2927, 7
        %v3007 = vrot.slane %v2928, 7
        %v3008 = vsel %vm364, %v3006, %v3007
        %v3057 = vsel %vm364, 0.0, %v2961
        %v3058 = vsel %vm364, 0.0, %v2964
        %v3059 = vsel %vm364, 0.0, %v2967
        %v3060 = vsel %vm364, 0.0, %v2970
        %v3061 = vsel %vm364, 0.0, %v2973
        %v3062 = vsel %vm364, 0.0, %v2976
        %v3063 = vsel %vm364, 0.0, %v2979
        %v3064 = vsel %vm364, 0.0, %v2982
        %v3065 = vsel %vm364, 0.0, %v2985
        %v3066 = vsel %vm364, 0.0, %v2988
        %v3067 = vsel %vm364, 0.0, %v2991
        %v3068 = vsel %vm364, 0.0, %v2994
        %v3069 = vsel %vm364, 0.0, %v2997
        %v3070 = vsel %vm364, 0.0, %v3000
        %v3071 = vsel %vm364, 0.0, %v3003
        %v3072 = vsel %vm364, 0.0, %v3006
        %v3073 = vsel %vm364, %v2962, 0.0
        %v3074 = vsel %vm364, %v2965, 0.0
        %v3075 = vsel %vm364, %v2968, 0.0
        %v3076 = vsel %vm364, %v2971, 0.0
        %v3077 = vsel %vm364, %v2974, 0.0
        %v3078 = vsel %vm364, %v2977, 0.0
        %v3079 = vsel %vm364, %v2980, 0.0
        %v3080 = vsel %vm364, %v2983, 0.0
        %v3081 = vsel %vm364, %v2986, 0.0
        %v3082 = vsel %vm364, %v2989, 0.0
        %v3083 = vsel %vm364, %v2992, 0.0
        %v3084 = vsel %vm364, %v2995, 0.0
        %v3085 = vsel %vm364, %v2998, 0.0
        %v3086 = vsel %vm364, %v3001, 0.0
        %v3087 = vsel %vm364, %v3004, 0.0
        %v3088 = vsel %vm364, %v3007, 0.0
        %v3089 = vpack.c.bf16 %v2963, %v3057
        %v3090 = vpack.c.bf16 %v3073, %v3073
        %v3091 = vpack.c.bf16 %v2966, %v3058
        %v3092 = vpack.c.bf16 %v3074, %v3074
        %v3093 = vpack.c.bf16 %v2969, %v3059
        %v3094 = vpack.c.bf16 %v3075, %v3075
        %v3095 = vpack.c.bf16 %v2972, %v3060
        %v3096 = vpack.c.bf16 %v3076, %v3076
        %v3097 = vpack.c.bf16 %v2975, %v3061
        %v3098 = vpack.c.bf16 %v3077, %v3077
        %v3099 = vpack.c.bf16 %v2978, %v3062
        %v3100 = vpack.c.bf16 %v3078, %v3078
        %v3101 = vpack.c.bf16 %v2981, %v3063
        %v3102 = vpack.c.bf16 %v3079, %v3079
        %v3103 = vpack.c.bf16 %v2984, %v3064
        %v3104 = vpack.c.bf16 %v3080, %v3080
        %v3105 = vpack.c.bf16 %v2987, %v3065
        %v3106 = vpack.c.bf16 %v3081, %v3081
        %v3107 = vpack.c.bf16 %v2990, %v3066
        %v3108 = vpack.c.bf16 %v3082, %v3082
        %v3109 = vpack.c.bf16 %v2993, %v3067
        %v3110 = vpack.c.bf16 %v3083, %v3083
        %v3111 = vpack.c.bf16 %v2996, %v3068
        %v3112 = vpack.c.bf16 %v3084, %v3084
        %v3113 = vpack.c.bf16 %v2999, %v3069
        %v3114 = vpack.c.bf16 %v3085, %v3085
        %v3115 = vpack.c.bf16 %v3002, %v3070
        %v3116 = vpack.c.bf16 %v3086, %v3086
        %v3117 = vpack.c.bf16 %v3005, %v3071
        %v3118 = vpack.c.bf16 %v3087, %v3087
        %v3119 = vpack.c.bf16 %v3008, %v3072
        %v3120 = vpack.c.bf16 %v3088, %v3088
        %v3153 = vunpack.c.l.b16 %v3089
        %v3154 = vunpack.c.h.b16 %v3089
        %v3155 = vunpack.c.l.b16 %v3090
        %v3156 = vunpack.c.l.b16 %v3091
        %v3157 = vunpack.c.h.b16 %v3091
        %v3158 = vunpack.c.l.b16 %v3092
        %v3159 = vunpack.c.l.b16 %v3093
        %v3160 = vunpack.c.h.b16 %v3093
        %v3161 = vunpack.c.l.b16 %v3094
        %v3162 = vunpack.c.l.b16 %v3095
        %v3163 = vunpack.c.h.b16 %v3095
        %v3164 = vunpack.c.l.b16 %v3096
        %v3165 = vunpack.c.l.b16 %v3097
        %v3166 = vunpack.c.h.b16 %v3097
        %v3167 = vunpack.c.l.b16 %v3098
        %v3168 = vunpack.c.l.b16 %v3099
        %v3169 = vunpack.c.h.b16 %v3099
        %v3170 = vunpack.c.l.b16 %v3100
        %v3171 = vunpack.c.l.b16 %v3101
        %v3172 = vunpack.c.h.b16 %v3101
        %v3173 = vunpack.c.l.b16 %v3102
        %v3174 = vunpack.c.l.b16 %v3103
        %v3175 = vunpack.c.h.b16 %v3103
        %v3176 = vunpack.c.l.b16 %v3104
        %v3177 = vunpack.c.l.b16 %v3105
        %v3178 = vunpack.c.h.b16 %v3105
        %v3179 = vunpack.c.l.b16 %v3106
        %v3180 = vunpack.c.l.b16 %v3107
        %v3181 = vunpack.c.h.b16 %v3107
        %v3182 = vunpack.c.l.b16 %v3108
        %v3183 = vunpack.c.l.b16 %v3109
        %v3184 = vunpack.c.h.b16 %v3109
        %v3185 = vunpack.c.l.b16 %v3110
        %v3186 = vunpack.c.l.b16 %v3111
        %v3187 = vunpack.c.h.b16 %v3111
        %v3188 = vunpack.c.l.b16 %v3112
        %v3189 = vunpack.c.l.b16 %v3113
        %v3190 = vunpack.c.h.b16 %v3113
        %v3191 = vunpack.c.l.b16 %v3114
        %v3192 = vunpack.c.l.b16 %v3115
        %v3193 = vunpack.c.h.b16 %v3115
        %v3194 = vunpack.c.l.b16 %v3116
        %v3195 = vunpack.c.l.b16 %v3117
        %v3196 = vunpack.c.h.b16 %v3117
        %v3197 = vunpack.c.l.b16 %v3118
        %v3198 = vunpack.c.l.b16 %v3119
        %v3199 = vunpack.c.h.b16 %v3119
        %v3200 = vunpack.c.l.b16 %v3120
        %v3201 = vpack.c.b16 %v3153, %v3153
        %v3202 = vpack.c.b16 %v3154, %v3154
        %v3203 = vpack.c.b16 %v3155, %v3155
        %v3204 = vpack.c.b16 %v3156, %v3156
        %v3205 = vpack.c.b16 %v3157, %v3157
        %v3206 = vpack.c.b16 %v3158, %v3158
        %v3207 = vpack.c.b16 %v3159, %v3159
        %v3208 = vpack.c.b16 %v3160, %v3160
        %v3209 = vpack.c.b16 %v3161, %v3161
        %v3210 = vpack.c.b16 %v3162, %v3162
        %v3211 = vpack.c.b16 %v3163, %v3163
        %v3212 = vpack.c.b16 %v3164, %v3164
        %v3213 = vpack.c.b16 %v3165, %v3165
        %v3214 = vpack.c.b16 %v3166, %v3166
        %v3215 = vpack.c.b16 %v3167, %v3167
        %v3216 = vpack.c.b16 %v3168, %v3168
        %v3217 = vpack.c.b16 %v3169, %v3169
        %v3218 = vpack.c.b16 %v3170, %v3170
        %v3219 = vpack.c.b16 %v3171, %v3171
        %v3220 = vpack.c.b16 %v3172, %v3172
        %v3221 = vpack.c.b16 %v3173, %v3173
        %v3222 = vpack.c.b16 %v3174, %v3174
        %v3223 = vpack.c.b16 %v3175, %v3175
        %v3224 = vpack.c.b16 %v3176, %v3176
        %v3225 = vpack.c.b16 %v3177, %v3177
        %v3226 = vpack.c.b16 %v3178, %v3178
        %v3227 = vpack.c.b16 %v3179, %v3179
        %v3228 = vpack.c.b16 %v3180, %v3180
        %v3229 = vpack.c.b16 %v3181, %v3181
        %v3230 = vpack.c.b16 %v3182, %v3182
        %v3231 = vpack.c.b16 %v3183, %v3183
        %v3232 = vpack.c.b16 %v3184, %v3184
        %v3233 = vpack.c.b16 %v3185, %v3185
        %v3234 = vpack.c.b16 %v3186, %v3186
        %v3235 = vpack.c.b16 %v3187, %v3187
        %v3236 = vpack.c.b16 %v3188, %v3188
        %v3237 = vpack.c.b16 %v3189, %v3189
        %v3238 = vpack.c.b16 %v3190, %v3190
        %v3239 = vpack.c.b16 %v3191, %v3191
        %v3240 = vpack.c.b16 %v3192, %v3192
        %v3241 = vpack.c.b16 %v3193, %v3193
        %v3242 = vpack.c.b16 %v3194, %v3194
        %v3243 = vpack.c.b16 %v3195, %v3195
        %v3244 = vpack.c.b16 %v3196, %v3196
        %v3245 = vpack.c.b16 %v3197, %v3197
        %v3246 = vpack.c.b16 %v3198, %v3198
        %v3247 = vpack.c.b16 %v3199, %v3199
        %v3248 = vpack.c.b16 %v3200, %v3200
        %s3297 = scalar_lea.vmem [#allocation3], 12
        %3298 = vst.msk [vmem:[%s3297] sm:$0xf] %vm291, %v3201
        %3299 = vst.msk [vmem:[%s3297 + $0x4] sm:$0xf] %vm291, %v3202
        %3300 = vst.msk [vmem:[%s3297 + $0x8] sm:$0x1] %vm294, %v3203
        %3301 = vst.msk [vmem:[%s3297 + $0xc] sm:$0xf] %vm291, %v3204
        %3302 = vst.msk [vmem:[%s3297 + $0x10] sm:$0xf] %vm291, %v3205
        %3303 = vst.msk [vmem:[%s3297 + $0x14] sm:$0x1] %vm294, %v3206
        %3304 = vst.msk [vmem:[%s3297 + $0x18] sm:$0xf] %vm291, %v3207
        %3305 = vst.msk [vmem:[%s3297 + $0x1c] sm:$0xf] %vm291, %v3208
        %3306 = vst.msk [vmem:[%s3297 + $0x20] sm:$0x1] %vm294, %v3209
        %3307 = vst.msk [vmem:[%s3297 + $0x24] sm:$0xf] %vm291, %v3210
        %3308 = vst.msk [vmem:[%s3297 + $0x28] sm:$0xf] %vm291, %v3211
        %3309 = vst.msk [vmem:[%s3297 + $0x2c] sm:$0x1] %vm294, %v3212
        %3310 = vst.msk [vmem:[%s3297 + $0x30] sm:$0xf] %vm291, %v3213
        %3311 = vst.msk [vmem:[%s3297 + $0x34] sm:$0xf] %vm291, %v3214
        %3312 = vst.msk [vmem:[%s3297 + $0x38] sm:$0x1] %vm294, %v3215
        %3313 = vst.msk [vmem:[%s3297 + $0x3c] sm:$0xf] %vm291, %v3216
        %3314 = vst.msk [vmem:[%s3297 + $0x40] sm:$0xf] %vm291, %v3217
        %3315 = vst.msk [vmem:[%s3297 + $0x44] sm:$0x1] %vm294, %v3218
        %3316 = vst.msk [vmem:[%s3297 + $0x48] sm:$0xf] %vm291, %v3219
        %3317 = vst.msk [vmem:[%s3297 + $0x4c] sm:$0xf] %vm291, %v3220
        %3318 = vst.msk [vmem:[%s3297 + $0x50] sm:$0x1] %vm294, %v3221
        %3319 = vst.msk [vmem:[%s3297 + $0x54] sm:$0xf] %vm291, %v3222
        %3320 = vst.msk [vmem:[%s3297 + $0x58] sm:$0xf] %vm291, %v3223
        %3321 = vst.msk [vmem:[%s3297 + $0x5c] sm:$0x1] %vm294, %v3224
        %3322 = vst.msk [vmem:[%s3297 + $0x60] sm:$0xf] %vm291, %v3225
        %3323 = vst.msk [vmem:[%s3297 + $0x64] sm:$0xf] %vm291, %v3226
        %3324 = vst.msk [vmem:[%s3297 + $0x68] sm:$0x1] %vm294, %v3227
        %3325 = vst.msk [vmem:[%s3297 + $0x6c] sm:$0xf] %vm291, %v3228
        %3326 = vst.msk [vmem:[%s3297 + $0x70] sm:$0xf] %vm291, %v3229
        %3327 = vst.msk [vmem:[%s3297 + $0x74] sm:$0x1] %vm294, %v3230
        %3328 = vst.msk [vmem:[%s3297 + $0x78] sm:$0xf] %vm291, %v3231
        %3329 = vst.msk [vmem:[%s3297 + $0x7c] sm:$0xf] %vm291, %v3232
        %3330 = vst.msk [vmem:[%s3297 + $0x80] sm:$0x1] %vm294, %v3233
        %3331 = vst.msk [vmem:[%s3297 + $0x84] sm:$0xf] %vm291, %v3234
        %3332 = vst.msk [vmem:[%s3297 + $0x88] sm:$0xf] %vm291, %v3235
        %3333 = vst.msk [vmem:[%s3297 + $0x8c] sm:$0x1] %vm294, %v3236
        %3334 = vst.msk [vmem:[%s3297 + $0x90] sm:$0xf] %vm291, %v3237
        %3335 = vst.msk [vmem:[%s3297 + $0x94] sm:$0xf] %vm291, %v3238
        %3336 = vst.msk [vmem:[%s3297 + $0x98] sm:$0x1] %vm294, %v3239
        %3337 = vst.msk [vmem:[%s3297 + $0x9c] sm:$0xf] %vm291, %v3240
        %3338 = vst.msk [vmem:[%s3297 + $0xa0] sm:$0xf] %vm291, %v3241
        %3339 = vst.msk [vmem:[%s3297 + $0xa4] sm:$0x1] %vm294, %v3242
        %3340 = vst.msk [vmem:[%s3297 + $0xa8] sm:$0xf] %vm291, %v3243
        %3341 = vst.msk [vmem:[%s3297 + $0xac] sm:$0xf] %vm291, %v3244
        %3342 = vst.msk [vmem:[%s3297 + $0xb0] sm:$0x1] %vm294, %v3245
        %3343 = vst.msk [vmem:[%s3297 + $0xb4] sm:$0xf] %vm291, %v3246
        %3344 = vst.msk [vmem:[%s3297 + $0xb8] sm:$0xf] %vm291, %v3247
        %3345 = vst.msk [vmem:[%s3297 + $0xbc] sm:$0x1] %vm294, %v3248
        %s3346 = smul.u32 %s2892, 36
        %s3347 = smul.addr %s3346, 4
        %s3348 = scalar_lea.vmem %s3, %s3347
        %v3349 = vld [vmem:[%s3348] sm:$0xf]
        %v3350 = vld [vmem:[%s3348 + $0x4] sm:$0xf]
        %v3351 = vld [vmem:[%s3348 + $0x8] sm:$0xf]
        %v3352 = vld [vmem:[%s3348 + $0xc] sm:$0xf]
        %v3353 = vld [vmem:[%s3348 + $0x10] sm:$0xf]
        %v3354 = vld [vmem:[%s3348 + $0x14] sm:$0xf]
        %v3355 = vld [vmem:[%s3348 + $0x18] sm:$0xf]
        %v3356 = vld [vmem:[%s3348 + $0x1c] sm:$0xf]
        %v3357 = vld [vmem:[%s3348 + $0x20] sm:$0xf]
        %v3358 = vld [vmem:[%s3348 + $0x24] sm:$0xf]
        %v3359 = vld [vmem:[%s3348 + $0x28] sm:$0xf]
        %v3360 = vld [vmem:[%s3348 + $0x2c] sm:$0xf]
        %v3361 = vld [vmem:[%s3348 + $0x30] sm:$0xf]
        %v3362 = vld [vmem:[%s3348 + $0x34] sm:$0xf]
        %v3363 = vld [vmem:[%s3348 + $0x38] sm:$0xf]
        %v3364 = vld [vmem:[%s3348 + $0x3c] sm:$0xf]
        %v3365 = vld [vmem:[%s3348 + $0x40] sm:$0xf]
        %v3366 = vld [vmem:[%s3348 + $0x44] sm:$0xf]
        %v3367 = vld [vmem:[%s3348 + $0x48] sm:$0xf]
        %v3368 = vld [vmem:[%s3348 + $0x4c] sm:$0xf]
        %v3369 = vld [vmem:[%s3348 + $0x50] sm:$0xf]
        %v3370 = vld [vmem:[%s3348 + $0x54] sm:$0xf]
        %v3371 = vld [vmem:[%s3348 + $0x58] sm:$0xf]
        %v3372 = vld [vmem:[%s3348 + $0x5c] sm:$0xf]
        %v3373 = vld [vmem:[%s3348 + $0x60] sm:$0xf]
        %v3374 = vld [vmem:[%s3348 + $0x64] sm:$0xf]
        %v3375 = vld [vmem:[%s3348 + $0x68] sm:$0xf]
        %v3376 = vld [vmem:[%s3348 + $0x6c] sm:$0xf]
        %v3377 = vld [vmem:[%s3348 + $0x70] sm:$0xf]
        %v3378 = vld [vmem:[%s3348 + $0x74] sm:$0xf]
        %v3379 = vld [vmem:[%s3348 + $0x78] sm:$0xf]
        %v3380 = vld [vmem:[%s3348 + $0x7c] sm:$0xf]
        %v3381 = vld [vmem:[%s3348 + $0x80] sm:$0xf]
        %v3382 = vld [vmem:[%s3348 + $0x84] sm:$0xf]
        %v3383 = vld [vmem:[%s3348 + $0x88] sm:$0xf]
        %v3384 = vld [vmem:[%s3348 + $0x8c] sm:$0xf]
        %s3385 = scalar_lea.vmem %s4, %s2892
        %v3386 = vld [vmem:[%s3385] sm:$0x1]
        %v3387 = vld [vmem:[#allocation3] sm:$0xf]
        %v3388 = vld [vmem:[#allocation3 + $0x4] sm:$0xf]
        %v3389 = vld [vmem:[#allocation3 + $0x8] sm:$0x1]
        %v3390 = vld [vmem:[#allocation3 + $0xc] sm:$0xf]
        %v3391 = vld [vmem:[#allocation3 + $0x10] sm:$0xf]
        %v3392 = vld [vmem:[#allocation3 + $0x14] sm:$0x1]
        %v3393 = vld [vmem:[#allocation3 + $0x18] sm:$0xf]
        %v3394 = vld [vmem:[#allocation3 + $0x1c] sm:$0xf]
        %v3395 = vld [vmem:[#allocation3 + $0x20] sm:$0x1]
        %v3396 = vld [vmem:[#allocation3 + $0x24] sm:$0xf]
        %v3397 = vld [vmem:[#allocation3 + $0x28] sm:$0xf]
        %v3398 = vld [vmem:[#allocation3 + $0x2c] sm:$0x1]
        %v3399 = vld [vmem:[#allocation3 + $0x30] sm:$0xf]
        %v3400 = vld [vmem:[#allocation3 + $0x34] sm:$0xf]
        %v3401 = vld [vmem:[#allocation3 + $0x38] sm:$0x1]
        %v3402 = vld [vmem:[#allocation3 + $0x3c] sm:$0xf]
        %v3403 = vld [vmem:[#allocation3 + $0x40] sm:$0xf]
        %v3404 = vld [vmem:[#allocation3 + $0x44] sm:$0x1]
        %v3405 = vld [vmem:[#allocation3 + $0x48] sm:$0xf]
        %v3406 = vld [vmem:[#allocation3 + $0x4c] sm:$0xf]
        %v3407 = vld [vmem:[#allocation3 + $0x50] sm:$0x1]
        %v3408 = vld [vmem:[#allocation3 + $0x54] sm:$0xf]
        %v3409 = vld [vmem:[#allocation3 + $0x58] sm:$0xf]
        %v3410 = vld [vmem:[#allocation3 + $0x5c] sm:$0x1]
        %v3411 = vld [vmem:[#allocation3 + $0x60] sm:$0xf]
        %v3412 = vld [vmem:[#allocation3 + $0x64] sm:$0xf]
        %v3413 = vld [vmem:[#allocation3 + $0x68] sm:$0x1]
        %v3414 = vld [vmem:[#allocation3 + $0x6c] sm:$0xf]
        %v3415 = vld [vmem:[#allocation3 + $0x70] sm:$0xf]
        %v3416 = vld [vmem:[#allocation3 + $0x74] sm:$0x1]
        %v3417 = vld [vmem:[#allocation3 + $0x78] sm:$0xf]
        %v3418 = vld [vmem:[#allocation3 + $0x7c] sm:$0xf]
        %v3419 = vld [vmem:[#allocation3 + $0x80] sm:$0x1]
        %v3420 = vld [vmem:[#allocation3 + $0x84] sm:$0xf]
        %v3421 = vld [vmem:[#allocation3 + $0x88] sm:$0xf]
        %v3422 = vld [vmem:[#allocation3 + $0x8c] sm:$0x1]
        %v3423 = vld [vmem:[#allocation3 + $0x90] sm:$0xf]
        %v3424 = vld [vmem:[#allocation3 + $0x94] sm:$0xf]
        %v3425 = vld [vmem:[#allocation3 + $0x98] sm:$0x1]
        %v3426 = vld [vmem:[#allocation3 + $0x9c] sm:$0xf]
        %v3427 = vld [vmem:[#allocation3 + $0xa0] sm:$0xf]
        %v3428 = vld [vmem:[#allocation3 + $0xa4] sm:$0x1]
        %v3429 = vld [vmem:[#allocation3 + $0xa8] sm:$0xf]
        %v3430 = vld [vmem:[#allocation3 + $0xac] sm:$0xf]
        %v3431 = vld [vmem:[#allocation3 + $0xb0] sm:$0x1]
        %v3432 = vld [vmem:[#allocation3 + $0xb4] sm:$0xf]
        %v3433 = vld [vmem:[#allocation3 + $0xb8] sm:$0xf]
        %v3434 = vld [vmem:[#allocation3 + $0xbc] sm:$0x1]
        %v3467 = vunpack.c.l.b16 %v3387
        %v3468 = vunpack.c.l.b16 %v3388
        %v3469 = vunpack.c.l.b16 %v3390
        %v3470 = vunpack.c.l.b16 %v3391
        %v3471 = vunpack.c.l.b16 %v3393
        %v3472 = vunpack.c.l.b16 %v3394
        %v3473 = vunpack.c.l.b16 %v3396
        %v3474 = vunpack.c.l.b16 %v3397
        %v3475 = vunpack.c.l.b16 %v3399
        %v3476 = vunpack.c.l.b16 %v3400
        %v3477 = vunpack.c.l.b16 %v3402
        %v3478 = vunpack.c.l.b16 %v3403
        %v3479 = vunpack.c.l.b16 %v3405
        %v3480 = vunpack.c.l.b16 %v3406
        %v3481 = vunpack.c.l.b16 %v3408
        %v3482 = vunpack.c.l.b16 %v3409
        %v3483 = vunpack.c.l.b16 %v3411
        %v3484 = vunpack.c.l.b16 %v3412
        %v3485 = vunpack.c.l.b16 %v3414
        %v3486 = vunpack.c.l.b16 %v3415
        %v3487 = vunpack.c.l.b16 %v3417
        %v3488 = vunpack.c.l.b16 %v3418
        %v3489 = vunpack.c.l.b16 %v3420
        %v3490 = vunpack.c.l.b16 %v3421
        %v3491 = vunpack.c.l.b16 %v3423
        %v3492 = vunpack.c.l.b16 %v3424
        %v3493 = vunpack.c.l.b16 %v3426
        %v3494 = vunpack.c.l.b16 %v3427
        %v3495 = vunpack.c.l.b16 %v3429
        %v3496 = vunpack.c.l.b16 %v3430
        %v3497 = vunpack.c.l.b16 %v3432
        %v3498 = vunpack.c.l.b16 %v3433
        %v3499 = vpack.c.b16 %v3468, %v3467
        %v3500 = vpack.c.b16 %v3470, %v3469
        %v3501 = vpack.c.b16 %v3472, %v3471
        %v3502 = vpack.c.b16 %v3474, %v3473
        %v3503 = vpack.c.b16 %v3476, %v3475
        %v3504 = vpack.c.b16 %v3478, %v3477
        %v3505 = vpack.c.b16 %v3480, %v3479
        %v3506 = vpack.c.b16 %v3482, %v3481
        %v3507 = vpack.c.b16 %v3484, %v3483
        %v3508 = vpack.c.b16 %v3486, %v3485
        %v3509 = vpack.c.b16 %v3488, %v3487
        %v3510 = vpack.c.b16 %v3490, %v3489
        %v3511 = vpack.c.b16 %v3492, %v3491
        %v3512 = vpack.c.b16 %v3494, %v3493
        %v3513 = vpack.c.b16 %v3496, %v3495
        %v3514 = vpack.c.b16 %v3498, %v3497
        %v3531 = vunpack.c.l.b16 %v3389
        %v3532 = vunpack.c.l.b16 %v3392
        %v3533 = vunpack.c.l.b16 %v3395
        %v3534 = vunpack.c.l.b16 %v3398
        %v3535 = vunpack.c.l.b16 %v3401
        %v3536 = vunpack.c.l.b16 %v3404
        %v3537 = vunpack.c.l.b16 %v3407
        %v3538 = vunpack.c.l.b16 %v3410
        %v3539 = vunpack.c.l.b16 %v3413
        %v3540 = vunpack.c.l.b16 %v3416
        %v3541 = vunpack.c.l.b16 %v3419
        %v3542 = vunpack.c.l.b16 %v3422
        %v3543 = vunpack.c.l.b16 %v3425
        %v3544 = vunpack.c.l.b16 %v3428
        %v3545 = vunpack.c.l.b16 %v3431
        %v3546 = vunpack.c.l.b16 %v3434
        %v3547 = vpack.c.b16 %v3531, %v3531
        %v3548 = vpack.c.b16 %v3532, %v3532
        %v3549 = vpack.c.b16 %v3533, %v3533
        %v3550 = vpack.c.b16 %v3534, %v3534
        %v3551 = vpack.c.b16 %v3535, %v3535
        %v3552 = vpack.c.b16 %v3536, %v3536
        %v3553 = vpack.c.b16 %v3537, %v3537
        %v3554 = vpack.c.b16 %v3538, %v3538
        %v3555 = vpack.c.b16 %v3539, %v3539
        %v3556 = vpack.c.b16 %v3540, %v3540
        %v3557 = vpack.c.b16 %v3541, %v3541
        %v3558 = vpack.c.b16 %v3542, %v3542
        %v3559 = vpack.c.b16 %v3543, %v3543
        %v3560 = vpack.c.b16 %v3544, %v3544
        %v3561 = vpack.c.b16 %v3545, %v3545
        %v3562 = vpack.c.b16 %v3546, %v3546
        %vm3563 = vsmask.f32 7424
        %v3565 = vshrl.u32 %v3499, 16
        %v3567 = vshll.u32 %v3499, 16
        %v3569 = vrot.slane %v3567, 1
        %v3570 = vor.u32 %v3565, %v3569
        %v3572 = vshll.u32 %v3547, 16
        %v3574 = vrot.slane %v3572, 1
        %v3575 = vsel %vm3563, %v3570, %v3574
        %v3577 = vshrl.u32 %v3500, 16
        %v3579 = vshll.u32 %v3500, 16
        %v3581 = vrot.slane %v3579, 1
        %v3582 = vor.u32 %v3577, %v3581
        %v3584 = vshll.u32 %v3548, 16
        %v3586 = vrot.slane %v3584, 1
        %v3587 = vsel %vm3563, %v3582, %v3586
        %v3589 = vshrl.u32 %v3501, 16
        %v3591 = vshll.u32 %v3501, 16
        %v3593 = vrot.slane %v3591, 1
        %v3594 = vor.u32 %v3589, %v3593
        %v3596 = vshll.u32 %v3549, 16
        %v3598 = vrot.slane %v3596, 1
        %v3599 = vsel %vm3563, %v3594, %v3598
        %v3601 = vshrl.u32 %v3502, 16
        %v3603 = vshll.u32 %v3502, 16
        %v3605 = vrot.slane %v3603, 1
        %v3606 = vor.u32 %v3601, %v3605
        %v3608 = vshll.u32 %v3550, 16
        %v3610 = vrot.slane %v3608, 1
        %v3611 = vsel %vm3563, %v3606, %v3610
        %v3613 = vshrl.u32 %v3503, 16
        %v3615 = vshll.u32 %v3503, 16
        %v3617 = vrot.slane %v3615, 1
        %v3618 = vor.u32 %v3613, %v3617
        %v3620 = vshll.u32 %v3551, 16
        %v3622 = vrot.slane %v3620, 1
        %v3623 = vsel %vm3563, %v3618, %v3622
        %v3625 = vshrl.u32 %v3504, 16
        %v3627 = vshll.u32 %v3504, 16
        %v3629 = vrot.slane %v3627, 1
        %v3630 = vor.u32 %v3625, %v3629
        %v3632 = vshll.u32 %v3552, 16
        %v3634 = vrot.slane %v3632, 1
        %v3635 = vsel %vm3563, %v3630, %v3634
        %v3637 = vshrl.u32 %v3505, 16
        %v3639 = vshll.u32 %v3505, 16
        %v3641 = vrot.slane %v3639, 1
        %v3642 = vor.u32 %v3637, %v3641
        %v3644 = vshll.u32 %v3553, 16
        %v3646 = vrot.slane %v3644, 1
        %v3647 = vsel %vm3563, %v3642, %v3646
        %v3649 = vshrl.u32 %v3506, 16
        %v3651 = vshll.u32 %v3506, 16
        %v3653 = vrot.slane %v3651, 1
        %v3654 = vor.u32 %v3649, %v3653
        %v3656 = vshll.u32 %v3554, 16
        %v3658 = vrot.slane %v3656, 1
        %v3659 = vsel %vm3563, %v3654, %v3658
        %v3661 = vshrl.u32 %v3507, 16
        %v3663 = vshll.u32 %v3507, 16
        %v3665 = vrot.slane %v3663, 1
        %v3666 = vor.u32 %v3661, %v3665
        %v3668 = vshll.u32 %v3555, 16
        %v3670 = vrot.slane %v3668, 1
        %v3671 = vsel %vm3563, %v3666, %v3670
        %v3673 = vshrl.u32 %v3508, 16
        %v3675 = vshll.u32 %v3508, 16
        %v3677 = vrot.slane %v3675, 1
        %v3678 = vor.u32 %v3673, %v3677
        %v3680 = vshll.u32 %v3556, 16
        %v3682 = vrot.slane %v3680, 1
        %v3683 = vsel %vm3563, %v3678, %v3682
        %v3685 = vshrl.u32 %v3509, 16
        %v3687 = vshll.u32 %v3509, 16
        %v3689 = vrot.slane %v3687, 1
        %v3690 = vor.u32 %v3685, %v3689
        %v3692 = vshll.u32 %v3557, 16
        %v3694 = vrot.slane %v3692, 1
        %v3695 = vsel %vm3563, %v3690, %v3694
        %v3697 = vshrl.u32 %v3510, 16
        %v3699 = vshll.u32 %v3510, 16
        %v3701 = vrot.slane %v3699, 1
        %v3702 = vor.u32 %v3697, %v3701
        %v3704 = vshll.u32 %v3558, 16
        %v3706 = vrot.slane %v3704, 1
        %v3707 = vsel %vm3563, %v3702, %v3706
        %v3709 = vshrl.u32 %v3511, 16
        %v3711 = vshll.u32 %v3511, 16
        %v3713 = vrot.slane %v3711, 1
        %v3714 = vor.u32 %v3709, %v3713
        %v3716 = vshll.u32 %v3559, 16
        %v3718 = vrot.slane %v3716, 1
        %v3719 = vsel %vm3563, %v3714, %v3718
        %v3721 = vshrl.u32 %v3512, 16
        %v3723 = vshll.u32 %v3512, 16
        %v3725 = vrot.slane %v3723, 1
        %v3726 = vor.u32 %v3721, %v3725
        %v3728 = vshll.u32 %v3560, 16
        %v3730 = vrot.slane %v3728, 1
        %v3731 = vsel %vm3563, %v3726, %v3730
        %v3733 = vshrl.u32 %v3513, 16
        %v3735 = vshll.u32 %v3513, 16
        %v3737 = vrot.slane %v3735, 1
        %v3738 = vor.u32 %v3733, %v3737
        %v3740 = vshll.u32 %v3561, 16
        %v3742 = vrot.slane %v3740, 1
        %v3743 = vsel %vm3563, %v3738, %v3742
        %v3745 = vshrl.u32 %v3514, 16
        %v3747 = vshll.u32 %v3514, 16
        %v3749 = vrot.slane %v3747, 1
        %v3750 = vor.u32 %v3745, %v3749
        %v3752 = vshll.u32 %v3562, 16
        %v3754 = vrot.slane %v3752, 1
        %v3755 = vsel %vm3563, %v3750, %v3754
        %3756 = vrot.lane.b32.xlu0 %v3575, 32
        %v3757 = vpop.permute.xlu0 %3756
        %3758 = vrot.lane.b32.xlu0 %v3587, 32
        %v3759 = vpop.permute.xlu0 %3758
        %3760 = vrot.lane.b32.xlu0 %v3599, 32
        %v3761 = vpop.permute.xlu0 %3760
        %3762 = vrot.lane.b32.xlu0 %v3611, 32
        %v3763 = vpop.permute.xlu0 %3762
        %3764 = vrot.lane.b32.xlu0 %v3623, 32
        %v3765 = vpop.permute.xlu0 %3764
        %3766 = vrot.lane.b32.xlu0 %v3635, 32
        %v3767 = vpop.permute.xlu0 %3766
        %3768 = vrot.lane.b32.xlu0 %v3647, 32
        %v3769 = vpop.permute.xlu0 %3768
        %3770 = vrot.lane.b32.xlu0 %v3659, 32
        %v3771 = vpop.permute.xlu0 %3770
        %3772 = vrot.lane.b32.xlu0 %v3671, 32
        %v3773 = vpop.permute.xlu0 %3772
        %3774 = vrot.lane.b32.xlu0 %v3683, 32
        %v3775 = vpop.permute.xlu0 %3774
        %3776 = vrot.lane.b32.xlu0 %v3695, 32
        %v3777 = vpop.permute.xlu0 %3776
        %3778 = vrot.lane.b32.xlu0 %v3707, 32
        %v3779 = vpop.permute.xlu0 %3778
        %3780 = vrot.lane.b32.xlu0 %v3719, 32
        %v3781 = vpop.permute.xlu0 %3780
        %3782 = vrot.lane.b32.xlu0 %v3731, 32
        %v3783 = vpop.permute.xlu0 %3782
        %3784 = vrot.lane.b32.xlu0 %v3743, 32
        %v3785 = vpop.permute.xlu0 %3784
        %3786 = vrot.lane.b32.xlu0 %v3755, 32
        %v3787 = vpop.permute.xlu0 %3786
        %vm3788 = vcmask 1046528
        %v3789 = vrot.slane %v3499, 1
        %v3790 = vrot.slane %v3547, 1
        %v3791 = vsel %vm3788, %v3789, %v3790
        %v3792 = vrot.slane %v3500, 1
        %v3793 = vrot.slane %v3548, 1
        %v3794 = vsel %vm3788, %v3792, %v3793
        %v3795 = vrot.slane %v3501, 1
        %v3796 = vrot.slane %v3549, 1
        %v3797 = vsel %vm3788, %v3795, %v3796
        %v3798 = vrot.slane %v3502, 1
        %v3799 = vrot.slane %v3550, 1
        %v3800 = vsel %vm3788, %v3798, %v3799
        %v3801 = vrot.slane %v3503, 1
        %v3802 = vrot.slane %v3551, 1
        %v3803 = vsel %vm3788, %v3801, %v3802
        %v3804 = vrot.slane %v3504, 1
        %v3805 = vrot.slane %v3552, 1
        %v3806 = vsel %vm3788, %v3804, %v3805
        %v3807 = vrot.slane %v3505, 1
        %v3808 = vrot.slane %v3553, 1
        %v3809 = vsel %vm3788, %v3807, %v3808
        %v3810 = vrot.slane %v3506, 1
        %v3811 = vrot.slane %v3554, 1
        %v3812 = vsel %vm3788, %v3810, %v3811
        %v3813 = vrot.slane %v3507, 1
        %v3814 = vrot.slane %v3555, 1
        %v3815 = vsel %vm3788, %v3813, %v3814
        %v3816 = vrot.slane %v3508, 1
        %v3817 = vrot.slane %v3556, 1
        %v3818 = vsel %vm3788, %v3816, %v3817
        %v3819 = vrot.slane %v3509, 1
        %v3820 = vrot.slane %v3557, 1
        %v3821 = vsel %vm3788, %v3819, %v3820
        %v3822 = vrot.slane %v3510, 1
        %v3823 = vrot.slane %v3558, 1
        %v3824 = vsel %vm3788, %v3822, %v3823
        %v3825 = vrot.slane %v3511, 1
        %v3826 = vrot.slane %v3559, 1
        %v3827 = vsel %vm3788, %v3825, %v3826
        %v3828 = vrot.slane %v3512, 1
        %v3829 = vrot.slane %v3560, 1
        %v3830 = vsel %vm3788, %v3828, %v3829
        %v3831 = vrot.slane %v3513, 1
        %v3832 = vrot.slane %v3561, 1
        %v3833 = vsel %vm3788, %v3831, %v3832
        %v3834 = vrot.slane %v3514, 1
        %v3835 = vrot.slane %v3562, 1
        %v3836 = vsel %vm3788, %v3834, %v3835
        %3837 = vrot.lane.b32.xlu0 %v3791, 64
        %v3838 = vpop.permute.xlu0 %3837
        %3839 = vrot.lane.b32.xlu0 %v3794, 64
        %v3840 = vpop.permute.xlu0 %3839
        %3841 = vrot.lane.b32.xlu0 %v3797, 64
        %v3842 = vpop.permute.xlu0 %3841
        %3843 = vrot.lane.b32.xlu0 %v3800, 64
        %v3844 = vpop.permute.xlu0 %3843
        %3845 = vrot.lane.b32.xlu0 %v3803, 64
        %v3846 = vpop.permute.xlu0 %3845
        %3847 = vrot.lane.b32.xlu0 %v3806, 64
        %v3848 = vpop.permute.xlu0 %3847
        %3849 = vrot.lane.b32.xlu0 %v3809, 64
        %v3850 = vpop.permute.xlu0 %3849
        %3851 = vrot.lane.b32.xlu0 %v3812, 64
        %v3852 = vpop.permute.xlu0 %3851
        %3853 = vrot.lane.b32.xlu0 %v3815, 64
        %v3854 = vpop.permute.xlu0 %3853
        %3855 = vrot.lane.b32.xlu0 %v3818, 64
        %v3856 = vpop.permute.xlu0 %3855
        %3857 = vrot.lane.b32.xlu0 %v3821, 64
        %v3858 = vpop.permute.xlu0 %3857
        %3859 = vrot.lane.b32.xlu0 %v3824, 64
        %v3860 = vpop.permute.xlu0 %3859
        %3861 = vrot.lane.b32.xlu0 %v3827, 64
        %v3862 = vpop.permute.xlu0 %3861
        %3863 = vrot.lane.b32.xlu0 %v3830, 64
        %v3864 = vpop.permute.xlu0 %3863
        %3865 = vrot.lane.b32.xlu0 %v3833, 64
        %v3866 = vpop.permute.xlu0 %3865
        %3867 = vrot.lane.b32.xlu0 %v3836, 64
        %v3868 = vpop.permute.xlu0 %3867
        %vm3869 = vcmask 261120
        %v3871 = vsel %vm3869, %v3499, %v3757
        %v3873 = vsel %vm3869, %v3500, %v3759
        %v3875 = vsel %vm3869, %v3501, %v3761
        %v3877 = vsel %vm3869, %v3502, %v3763
        %v3879 = vsel %vm3869, %v3503, %v3765
        %v3881 = vsel %vm3869, %v3504, %v3767
        %v3883 = vsel %vm3869, %v3505, %v3769
        %v3885 = vsel %vm3869, %v3506, %v3771
        %v3887 = vsel %vm3869, %v3507, %v3773
        %v3889 = vsel %vm3869, %v3508, %v3775
        %v3891 = vsel %vm3869, %v3509, %v3777
        %v3893 = vsel %vm3869, %v3510, %v3779
        %v3895 = vsel %vm3869, %v3511, %v3781
        %v3897 = vsel %vm3869, %v3512, %v3783
        %v3899 = vsel %vm3869, %v3513, %v3785
        %v3901 = vsel %vm3869, %v3514, %v3787
        %vm3902 = vcmask 523264
        %v3904 = vsel %vm3902, %v3871, %v3838
        %v3906 = vsel %vm3902, %v3873, %v3840
        %v3908 = vsel %vm3902, %v3875, %v3842
        %v3910 = vsel %vm3902, %v3877, %v3844
        %v3912 = vsel %vm3902, %v3879, %v3846
        %v3914 = vsel %vm3902, %v3881, %v3848
        %v3916 = vsel %vm3902, %v3883, %v3850
        %v3918 = vsel %vm3902, %v3885, %v3852
        %v3920 = vsel %vm3902, %v3887, %v3854
        %v3922 = vsel %vm3902, %v3889, %v3856
        %v3924 = vsel %vm3902, %v3891, %v3858
        %v3926 = vsel %vm3902, %v3893, %v3860
        %v3928 = vsel %vm3902, %v3895, %v3862
        %v3930 = vsel %vm3902, %v3897, %v3864
        %v3932 = vsel %vm3902, %v3899, %v3866
        %v3934 = vsel %vm3902, %v3901, %v3868
        %v3935 = vld [vmem:[%s3297] sm:$0xf]
        %v3936 = vld [vmem:[%s3297 + $0x4] sm:$0xf]
        %v3937 = vld [vmem:[%s3297 + $0x8] sm:$0x1]
        %v3938 = vld [vmem:[%s3297 + $0xc] sm:$0xf]
        %v3939 = vld [vmem:[%s3297 + $0x10] sm:$0xf]
        %v3940 = vld [vmem:[%s3297 + $0x14] sm:$0x1]
        %v3941 = vld [vmem:[%s3297 + $0x18] sm:$0xf]
        %v3942 = vld [vmem:[%s3297 + $0x1c] sm:$0xf]
        %v3943 = vld [vmem:[%s3297 + $0x20] sm:$0x1]
        %v3944 = vld [vmem:[%s3297 + $0x24] sm:$0xf]
        %v3945 = vld [vmem:[%s3297 + $0x28] sm:$0xf]
        %v3946 = vld [vmem:[%s3297 + $0x2c] sm:$0x1]
        %v3947 = vld [vmem:[%s3297 + $0x30] sm:$0xf]
        %v3948 = vld [vmem:[%s3297 + $0x34] sm:$0xf]
        %v3949 = vld [vmem:[%s3297 + $0x38] sm:$0x1]
        %v3950 = vld [vmem:[%s3297 + $0x3c] sm:$0xf]
        %v3951 = vld [vmem:[%s3297 + $0x40] sm:$0xf]
        %v3952 = vld [vmem:[%s3297 + $0x44] sm:$0x1]
        %v3953 = vld [vmem:[%s3297 + $0x48] sm:$0xf]
        %v3954 = vld [vmem:[%s3297 + $0x4c] sm:$0xf]
        %v3955 = vld [vmem:[%s3297 + $0x50] sm:$0x1]
        %v3956 = vld [vmem:[%s3297 + $0x54] sm:$0xf]
        %v3957 = vld [vmem:[%s3297 + $0x58] sm:$0xf]
        %v3958 = vld [vmem:[%s3297 + $0x5c] sm:$0x1]
        %v3959 = vld [vmem:[%s3297 + $0x60] sm:$0xf]
        %v3960 = vld [vmem:[%s3297 + $0x64] sm:$0xf]
        %v3961 = vld [vmem:[%s3297 + $0x68] sm:$0x1]
        %v3962 = vld [vmem:[%s3297 + $0x6c] sm:$0xf]
        %v3963 = vld [vmem:[%s3297 + $0x70] sm:$0xf]
        %v3964 = vld [vmem:[%s3297 + $0x74] sm:$0x1]
        %v3965 = vld [vmem:[%s3297 + $0x78] sm:$0xf]
        %v3966 = vld [vmem:[%s3297 + $0x7c] sm:$0xf]
        %v3967 = vld [vmem:[%s3297 + $0x80] sm:$0x1]
        %v3968 = vld [vmem:[%s3297 + $0x84] sm:$0xf]
        %v3969 = vld [vmem:[%s3297 + $0x88] sm:$0xf]
        %v3970 = vld [vmem:[%s3297 + $0x8c] sm:$0x1]
        %v3971 = vld [vmem:[%s3297 + $0x90] sm:$0xf]
        %v3972 = vld [vmem:[%s3297 + $0x94] sm:$0xf]
        %v3973 = vld [vmem:[%s3297 + $0x98] sm:$0x1]
        %v3974 = vld [vmem:[%s3297 + $0x9c] sm:$0xf]
        %v3975 = vld [vmem:[%s3297 + $0xa0] sm:$0xf]
        %v3976 = vld [vmem:[%s3297 + $0xa4] sm:$0x1]
        %v3977 = vld [vmem:[%s3297 + $0xa8] sm:$0xf]
        %v3978 = vld [vmem:[%s3297 + $0xac] sm:$0xf]
        %v3979 = vld [vmem:[%s3297 + $0xb0] sm:$0x1]
        %v3980 = vld [vmem:[%s3297 + $0xb4] sm:$0xf]
        %v3981 = vld [vmem:[%s3297 + $0xb8] sm:$0xf]
        %v3982 = vld [vmem:[%s3297 + $0xbc] sm:$0x1]
        %v4015 = vunpack.c.l.b16 %v3935
        %v4016 = vunpack.c.l.b16 %v3936
        %v4017 = vunpack.c.l.b16 %v3938
        %v4018 = vunpack.c.l.b16 %v3939
        %v4019 = vunpack.c.l.b16 %v3941
        %v4020 = vunpack.c.l.b16 %v3942
        %v4021 = vunpack.c.l.b16 %v3944
        %v4022 = vunpack.c.l.b16 %v3945
        %v4023 = vunpack.c.l.b16 %v3947
        %v4024 = vunpack.c.l.b16 %v3948
        %v4025 = vunpack.c.l.b16 %v3950
        %v4026 = vunpack.c.l.b16 %v3951
        %v4027 = vunpack.c.l.b16 %v3953
        %v4028 = vunpack.c.l.b16 %v3954
        %v4029 = vunpack.c.l.b16 %v3956
        %v4030 = vunpack.c.l.b16 %v3957
        %v4031 = vunpack.c.l.b16 %v3959
        %v4032 = vunpack.c.l.b16 %v3960
        %v4033 = vunpack.c.l.b16 %v3962
        %v4034 = vunpack.c.l.b16 %v3963
        %v4035 = vunpack.c.l.b16 %v3965
        %v4036 = vunpack.c.l.b16 %v3966
        %v4037 = vunpack.c.l.b16 %v3968
        %v4038 = vunpack.c.l.b16 %v3969
        %v4039 = vunpack.c.l.b16 %v3971
        %v4040 = vunpack.c.l.b16 %v3972
        %v4041 = vunpack.c.l.b16 %v3974
        %v4042 = vunpack.c.l.b16 %v3975
        %v4043 = vunpack.c.l.b16 %v3977
        %v4044 = vunpack.c.l.b16 %v3978
        %v4045 = vunpack.c.l.b16 %v3980
        %v4046 = vunpack.c.l.b16 %v3981
        %v4047 = vpack.c.b16 %v4016, %v4015
        %v4048 = vpack.c.b16 %v4018, %v4017
        %v4049 = vpack.c.b16 %v4020, %v4019
        %v4050 = vpack.c.b16 %v4022, %v4021
        %v4051 = vpack.c.b16 %v4024, %v4023
        %v4052 = vpack.c.b16 %v4026, %v4025
        %v4053 = vpack.c.b16 %v4028, %v4027
        %v4054 = vpack.c.b16 %v4030, %v4029
        %v4055 = vpack.c.b16 %v4032, %v4031
        %v4056 = vpack.c.b16 %v4034, %v4033
        %v4057 = vpack.c.b16 %v4036, %v4035
        %v4058 = vpack.c.b16 %v4038, %v4037
        %v4059 = vpack.c.b16 %v4040, %v4039
        %v4060 = vpack.c.b16 %v4042, %v4041
        %v4061 = vpack.c.b16 %v4044, %v4043
        %v4062 = vpack.c.b16 %v4046, %v4045
        %v4079 = vunpack.c.l.b16 %v3937
        %v4080 = vunpack.c.l.b16 %v3940
        %v4081 = vunpack.c.l.b16 %v3943
        %v4082 = vunpack.c.l.b16 %v3946
        %v4083 = vunpack.c.l.b16 %v3949
        %v4084 = vunpack.c.l.b16 %v3952
        %v4085 = vunpack.c.l.b16 %v3955
        %v4086 = vunpack.c.l.b16 %v3958
        %v4087 = vunpack.c.l.b16 %v3961
        %v4088 = vunpack.c.l.b16 %v3964
        %v4089 = vunpack.c.l.b16 %v3967
        %v4090 = vunpack.c.l.b16 %v3970
        %v4091 = vunpack.c.l.b16 %v3973
        %v4092 = vunpack.c.l.b16 %v3976
        %v4093 = vunpack.c.l.b16 %v3979
        %v4094 = vunpack.c.l.b16 %v3982
        %v4095 = vpack.c.b16 %v4079, %v4079
        %v4096 = vpack.c.b16 %v4080, %v4080
        %v4097 = vpack.c.b16 %v4081, %v4081
        %v4098 = vpack.c.b16 %v4082, %v4082
        %v4099 = vpack.c.b16 %v4083, %v4083
        %v4100 = vpack.c.b16 %v4084, %v4084
        %v4101 = vpack.c.b16 %v4085, %v4085
        %v4102 = vpack.c.b16 %v4086, %v4086
        %v4103 = vpack.c.b16 %v4087, %v4087
        %v4104 = vpack.c.b16 %v4088, %v4088
        %v4105 = vpack.c.b16 %v4089, %v4089
        %v4106 = vpack.c.b16 %v4090, %v4090
        %v4107 = vpack.c.b16 %v4091, %v4091
        %v4108 = vpack.c.b16 %v4092, %v4092
        %v4109 = vpack.c.b16 %v4093, %v4093
        %v4110 = vpack.c.b16 %v4094, %v4094
        %v4112 = vshrl.u32 %v4047, 16
        %v4114 = vshll.u32 %v4047, 16
        %v4116 = vrot.slane %v4114, 1
        %v4117 = vor.u32 %v4112, %v4116
        %v4119 = vshll.u32 %v4095, 16
        %v4121 = vrot.slane %v4119, 1
        %v4122 = vsel %vm3563, %v4117, %v4121
        %v4124 = vshrl.u32 %v4048, 16
        %v4126 = vshll.u32 %v4048, 16
        %v4128 = vrot.slane %v4126, 1
        %v4129 = vor.u32 %v4124, %v4128
        %v4131 = vshll.u32 %v4096, 16
        %v4133 = vrot.slane %v4131, 1
        %v4134 = vsel %vm3563, %v4129, %v4133
        %v4136 = vshrl.u32 %v4049, 16
        %v4138 = vshll.u32 %v4049, 16
        %v4140 = vrot.slane %v4138, 1
        %v4141 = vor.u32 %v4136, %v4140
        %v4143 = vshll.u32 %v4097, 16
        %v4145 = vrot.slane %v4143, 1
        %v4146 = vsel %vm3563, %v4141, %v4145
        %v4148 = vshrl.u32 %v4050, 16
        %v4150 = vshll.u32 %v4050, 16
        %v4152 = vrot.slane %v4150, 1
        %v4153 = vor.u32 %v4148, %v4152
        %v4155 = vshll.u32 %v4098, 16
        %v4157 = vrot.slane %v4155, 1
        %v4158 = vsel %vm3563, %v4153, %v4157
        %v4160 = vshrl.u32 %v4051, 16
        %v4162 = vshll.u32 %v4051, 16
        %v4164 = vrot.slane %v4162, 1
        %v4165 = vor.u32 %v4160, %v4164
        %v4167 = vshll.u32 %v4099, 16
        %v4169 = vrot.slane %v4167, 1
        %v4170 = vsel %vm3563, %v4165, %v4169
        %v4172 = vshrl.u32 %v4052, 16
        %v4174 = vshll.u32 %v4052, 16
        %v4176 = vrot.slane %v4174, 1
        %v4177 = vor.u32 %v4172, %v4176
        %v4179 = vshll.u32 %v4100, 16
        %v4181 = vrot.slane %v4179, 1
        %v4182 = vsel %vm3563, %v4177, %v4181
        %v4184 = vshrl.u32 %v4053, 16
        %v4186 = vshll.u32 %v4053, 16
        %v4188 = vrot.slane %v4186, 1
        %v4189 = vor.u32 %v4184, %v4188
        %v4191 = vshll.u32 %v4101, 16
        %v4193 = vrot.slane %v4191, 1
        %v4194 = vsel %vm3563, %v4189, %v4193
        %v4196 = vshrl.u32 %v4054, 16
        %v4198 = vshll.u32 %v4054, 16
        %v4200 = vrot.slane %v4198, 1
        %v4201 = vor.u32 %v4196, %v4200
        %v4203 = vshll.u32 %v4102, 16
        %v4205 = vrot.slane %v4203, 1
        %v4206 = vsel %vm3563, %v4201, %v4205
        %v4208 = vshrl.u32 %v4055, 16
        %v4210 = vshll.u32 %v4055, 16
        %v4212 = vrot.slane %v4210, 1
        %v4213 = vor.u32 %v4208, %v4212
        %v4215 = vshll.u32 %v4103, 16
        %v4217 = vrot.slane %v4215, 1
        %v4218 = vsel %vm3563, %v4213, %v4217
        %v4220 = vshrl.u32 %v4056, 16
        %v4222 = vshll.u32 %v4056, 16
        %v4224 = vrot.slane %v4222, 1
        %v4225 = vor.u32 %v4220, %v4224
        %v4227 = vshll.u32 %v4104, 16
        %v4229 = vrot.slane %v4227, 1
        %v4230 = vsel %vm3563, %v4225, %v4229
        %v4232 = vshrl.u32 %v4057, 16
        %v4234 = vshll.u32 %v4057, 16
        %v4236 = vrot.slane %v4234, 1
        %v4237 = vor.u32 %v4232, %v4236
        %v4239 = vshll.u32 %v4105, 16
        %v4241 = vrot.slane %v4239, 1
        %v4242 = vsel %vm3563, %v4237, %v4241
        %v4244 = vshrl.u32 %v4058, 16
        %v4246 = vshll.u32 %v4058, 16
        %v4248 = vrot.slane %v4246, 1
        %v4249 = vor.u32 %v4244, %v4248
        %v4251 = vshll.u32 %v4106, 16
        %v4253 = vrot.slane %v4251, 1
        %v4254 = vsel %vm3563, %v4249, %v4253
        %v4256 = vshrl.u32 %v4059, 16
        %v4258 = vshll.u32 %v4059, 16
        %v4260 = vrot.slane %v4258, 1
        %v4261 = vor.u32 %v4256, %v4260
        %v4263 = vshll.u32 %v4107, 16
        %v4265 = vrot.slane %v4263, 1
        %v4266 = vsel %vm3563, %v4261, %v4265
        %v4268 = vshrl.u32 %v4060, 16
        %v4270 = vshll.u32 %v4060, 16
        %v4272 = vrot.slane %v4270, 1
        %v4273 = vor.u32 %v4268, %v4272
        %v4275 = vshll.u32 %v4108, 16
        %v4277 = vrot.slane %v4275, 1
        %v4278 = vsel %vm3563, %v4273, %v4277
        %v4280 = vshrl.u32 %v4061, 16
        %v4282 = vshll.u32 %v4061, 16
        %v4284 = vrot.slane %v4282, 1
        %v4285 = vor.u32 %v4280, %v4284
        %v4287 = vshll.u32 %v4109, 16
        %v4289 = vrot.slane %v4287, 1
        %v4290 = vsel %vm3563, %v4285, %v4289
        %v4292 = vshrl.u32 %v4062, 16
        %v4294 = vshll.u32 %v4062, 16
        %v4296 = vrot.slane %v4294, 1
        %v4297 = vor.u32 %v4292, %v4296
        %v4299 = vshll.u32 %v4110, 16
        %v4301 = vrot.slane %v4299, 1
        %v4302 = vsel %vm3563, %v4297, %v4301
        %4303 = vrot.lane.b32.xlu0 %v4122, 32
        %v4304 = vpop.permute.xlu0 %4303
        %4305 = vrot.lane.b32.xlu0 %v4134, 32
        %v4306 = vpop.permute.xlu0 %4305
        %4307 = vrot.lane.b32.xlu0 %v4146, 32
        %v4308 = vpop.permute.xlu0 %4307
        %4309 = vrot.lane.b32.xlu0 %v4158, 32
        %v4310 = vpop.permute.xlu0 %4309
        %4311 = vrot.lane.b32.xlu0 %v4170, 32
        %v4312 = vpop.permute.xlu0 %4311
        %4313 = vrot.lane.b32.xlu0 %v4182, 32
        %v4314 = vpop.permute.xlu0 %4313
        %4315 = vrot.lane.b32.xlu0 %v4194, 32
        %v4316 = vpop.permute.xlu0 %4315
        %4317 = vrot.lane.b32.xlu0 %v4206, 32
        %v4318 = vpop.permute.xlu0 %4317
        %4319 = vrot.lane.b32.xlu0 %v4218, 32
        %v4320 = vpop.permute.xlu0 %4319
        %4321 = vrot.lane.b32.xlu0 %v4230, 32
        %v4322 = vpop.permute.xlu0 %4321
        %4323 = vrot.lane.b32.xlu0 %v4242, 32
        %v4324 = vpop.permute.xlu0 %4323
        %4325 = vrot.lane.b32.xlu0 %v4254, 32
        %v4326 = vpop.permute.xlu0 %4325
        %4327 = vrot.lane.b32.xlu0 %v4266, 32
        %v4328 = vpop.permute.xlu0 %4327
        %4329 = vrot.lane.b32.xlu0 %v4278, 32
        %v4330 = vpop.permute.xlu0 %4329
        %4331 = vrot.lane.b32.xlu0 %v4290, 32
        %v4332 = vpop.permute.xlu0 %4331
        %4333 = vrot.lane.b32.xlu0 %v4302, 32
        %v4334 = vpop.permute.xlu0 %4333
        %v4335 = vrot.slane %v4047, 1
        %v4336 = vrot.slane %v4095, 1
        %v4337 = vsel %vm3788, %v4335, %v4336
        %v4338 = vrot.slane %v4048, 1
        %v4339 = vrot.slane %v4096, 1
        %v4340 = vsel %vm3788, %v4338, %v4339
        %v4341 = vrot.slane %v4049, 1
        %v4342 = vrot.slane %v4097, 1
        %v4343 = vsel %vm3788, %v4341, %v4342
        %v4344 = vrot.slane %v4050, 1
        %v4345 = vrot.slane %v4098, 1
        %v4346 = vsel %vm3788, %v4344, %v4345
        %v4347 = vrot.slane %v4051, 1
        %v4348 = vrot.slane %v4099, 1
        %v4349 = vsel %vm3788, %v4347, %v4348
        %v4350 = vrot.slane %v4052, 1
        %v4351 = vrot.slane %v4100, 1
        %v4352 = vsel %vm3788, %v4350, %v4351
        %v4353 = vrot.slane %v4053, 1
        %v4354 = vrot.slane %v4101, 1
        %v4355 = vsel %vm3788, %v4353, %v4354
        %v4356 = vrot.slane %v4054, 1
        %v4357 = vrot.slane %v4102, 1
        %v4358 = vsel %vm3788, %v4356, %v4357
        %v4359 = vrot.slane %v4055, 1
        %v4360 = vrot.slane %v4103, 1
        %v4361 = vsel %vm3788, %v4359, %v4360
        %v4362 = vrot.slane %v4056, 1
        %v4363 = vrot.slane %v4104, 1
        %v4364 = vsel %vm3788, %v4362, %v4363
        %v4365 = vrot.slane %v4057, 1
        %v4366 = vrot.slane %v4105, 1
        %v4367 = vsel %vm3788, %v4365, %v4366
        %v4368 = vrot.slane %v4058, 1
        %v4369 = vrot.slane %v4106, 1
        %v4370 = vsel %vm3788, %v4368, %v4369
        %v4371 = vrot.slane %v4059, 1
        %v4372 = vrot.slane %v4107, 1
        %v4373 = vsel %vm3788, %v4371, %v4372
        %v4374 = vrot.slane %v4060, 1
        %v4375 = vrot.slane %v4108, 1
        %v4376 = vsel %vm3788, %v4374, %v4375
        %v4377 = vrot.slane %v4061, 1
        %v4378 = vrot.slane %v4109, 1
        %v4379 = vsel %vm3788, %v4377, %v4378
        %v4380 = vrot.slane %v4062, 1
        %v4381 = vrot.slane %v4110, 1
        %v4382 = vsel %vm3788, %v4380, %v4381
        %4383 = vrot.lane.b32.xlu0 %v4337, 64
        %v4384 = vpop.permute.xlu0 %4383
        %4385 = vrot.lane.b32.xlu0 %v4340, 64
        %v4386 = vpop.permute.xlu0 %4385
        %4387 = vrot.lane.b32.xlu0 %v4343, 64
        %v4388 = vpop.permute.xlu0 %4387
        %4389 = vrot.lane.b32.xlu0 %v4346, 64
        %v4390 = vpop.permute.xlu0 %4389
        %4391 = vrot.lane.b32.xlu0 %v4349, 64
        %v4392 = vpop.permute.xlu0 %4391
        %4393 = vrot.lane.b32.xlu0 %v4352, 64
        %v4394 = vpop.permute.xlu0 %4393
        %4395 = vrot.lane.b32.xlu0 %v4355, 64
        %v4396 = vpop.permute.xlu0 %4395
        %4397 = vrot.lane.b32.xlu0 %v4358, 64
        %v4398 = vpop.permute.xlu0 %4397
        %4399 = vrot.lane.b32.xlu0 %v4361, 64
        %v4400 = vpop.permute.xlu0 %4399
        %4401 = vrot.lane.b32.xlu0 %v4364, 64
        %v4402 = vpop.permute.xlu0 %4401
        %4403 = vrot.lane.b32.xlu0 %v4367, 64
        %v4404 = vpop.permute.xlu0 %4403
        %4405 = vrot.lane.b32.xlu0 %v4370, 64
        %v4406 = vpop.permute.xlu0 %4405
        %4407 = vrot.lane.b32.xlu0 %v4373, 64
        %v4408 = vpop.permute.xlu0 %4407
        %4409 = vrot.lane.b32.xlu0 %v4376, 64
        %v4410 = vpop.permute.xlu0 %4409
        %4411 = vrot.lane.b32.xlu0 %v4379, 64
        %v4412 = vpop.permute.xlu0 %4411
        %4413 = vrot.lane.b32.xlu0 %v4382, 64
        %v4414 = vpop.permute.xlu0 %4413
        %v4416 = vsel %vm3869, %v4047, %v4304
        %v4418 = vsel %vm3869, %v4048, %v4306
        %v4420 = vsel %vm3869, %v4049, %v4308
        %v4422 = vsel %vm3869, %v4050, %v4310
        %v4424 = vsel %vm3869, %v4051, %v4312
        %v4426 = vsel %vm3869, %v4052, %v4314
        %v4428 = vsel %vm3869, %v4053, %v4316
        %v4430 = vsel %vm3869, %v4054, %v4318
        %v4432 = vsel %vm3869, %v4055, %v4320
        %v4434 = vsel %vm3869, %v4056, %v4322
        %v4436 = vsel %vm3869, %v4057, %v4324
        %v4438 = vsel %vm3869, %v4058, %v4326
        %v4440 = vsel %vm3869, %v4059, %v4328
        %v4442 = vsel %vm3869, %v4060, %v4330
        %v4444 = vsel %vm3869, %v4061, %v4332
        %v4446 = vsel %vm3869, %v4062, %v4334
        %v4448 = vsel %vm3902, %v4416, %v4384
        %v4450 = vsel %vm3902, %v4418, %v4386
        %v4452 = vsel %vm3902, %v4420, %v4388
        %v4454 = vsel %vm3902, %v4422, %v4390
        %v4456 = vsel %vm3902, %v4424, %v4392
        %v4458 = vsel %vm3902, %v4426, %v4394
        %v4460 = vsel %vm3902, %v4428, %v4396
        %v4462 = vsel %vm3902, %v4430, %v4398
        %v4464 = vsel %vm3902, %v4432, %v4400
        %v4466 = vsel %vm3902, %v4434, %v4402
        %v4468 = vsel %vm3902, %v4436, %v4404
        %v4470 = vsel %vm3902, %v4438, %v4406
        %v4472 = vsel %vm3902, %v4440, %v4408
        %v4474 = vsel %vm3902, %v4442, %v4410
        %v4476 = vsel %vm3902, %v4444, %v4412
        %v4478 = vsel %vm3902, %v4446, %v4414
        %v4491 = vunpack.c.l.b16 %v3361
        %v4492 = vunpack.c.l.b16 %v3362
        %v4493 = vunpack.c.l.b16 %v3363
        %v4494 = vunpack.c.l.b16 %v3364
        %v4495 = vunpack.c.l.b16 %v3365
        %v4496 = vunpack.c.l.b16 %v3366
        %v4497 = vunpack.c.l.b16 %v3367
        %v4498 = vunpack.c.l.b16 %v3368
        %v4499 = vunpack.c.l.b16 %v3369
        %v4500 = vunpack.c.l.b16 %v3370
        %v4501 = vunpack.c.l.b16 %v3371
        %v4502 = vunpack.c.l.b16 %v3372
        %v4503 = vpack.c.b16 %v4492, %v4491
        %v4504 = vpack.c.b16 %v4494, %v4493
        %v4505 = vpack.c.b16 %v4496, %v4495
        %v4506 = vpack.c.b16 %v4498, %v4497
        %v4507 = vpack.c.b16 %v4500, %v4499
        %v4508 = vpack.c.b16 %v4502, %v4501
        %vm4515 = vcmask 785408
        %v4516 = vsel %vm4515, %v4448, 0
        %v4518 = vsel %vm4515, %v4450, 0
        %v4520 = vsel %vm4515, %v4452, 0
        %v4522 = vsel %vm4515, %v4454, 0
        %v4524 = vsel %vm4515, %v4456, 0
        %v4526 = vsel %vm4515, %v4458, 0
        %v4528 = vsel %vm4515, %v4460, 0
        %v4530 = vsel %vm4515, %v4462, 0
        %v4532 = vsel %vm4515, %v4464, 0
        %v4534 = vsel %vm4515, %v4466, 0
        %v4536 = vsel %vm4515, %v4468, 0
        %v4538 = vsel %vm4515, %v4470, 0
        %v4540 = vsel %vm4515, %v4472, 0
        %v4542 = vsel %vm4515, %v4474, 0
        %v4544 = vsel %vm4515, %v4476, 0
        %v4546 = vsel %vm4515, %v4478, 0
        %4548 = vmatprep.subr.bf16.mxu0 0
        %4549 = vmatpush1.bf16.msra.mxu0 %v4503
        %4550 = vmatprep.subr.bf16.mxu0 0
        %4551 = vmatpush1.bf16.msra.mxu0 %v4504
        %4552 = vmatprep.subr.bf16.mxu0 0
        %4553 = vmatpush1.bf16.msra.mxu0 %v4505
        %4554 = vmatprep.subr.bf16.mxu0 0
        %4555 = vmatpush1.bf16.msra.mxu0 %v4506
        %4556 = vmatprep.subr.bf16.mxu0 0
        %4557 = vmatpush1.bf16.msra.mxu0 %v4507
        %4558 = vmatprep.subr.bf16.mxu0 0
        %4559 = vmatpush1.bf16.msra.mxu0 %v4508
        %4560 = vmatprep.subr.bf16.mxu0 0
        %4561 = vmatpush1.bf16.msra.mxu0 0
        %4562 = vmatprep.subr.bf16.mxu0 0
        %4563 = vmatpush1.bf16.msra.mxu0 0
        %4564 = vmatprep.subr.bf16.mxu0 0
        %4565 = vmatpush1.bf16.msra.mxu0 0
        %4566 = vmatprep.subr.bf16.mxu0 0
        %4567 = vmatpush1.bf16.msra.mxu0 0
        %4568 = vmatprep.subr.bf16.mxu0 0
        %4569 = vmatpush1.bf16.msra.mxu0 0
        %4570 = vmatprep.subr.bf16.mxu0 0
        %4571 = vmatpush1.bf16.msra.mxu0 0
        %4572 = vmatprep.subr.bf16.mxu0 0
        %4573 = vmatpush1.bf16.msra.mxu0 0
        %4574 = vmatprep.subr.bf16.mxu0 0
        %4575 = vmatpush1.bf16.msra.mxu0 0
        %4576 = vmatprep.subr.bf16.mxu0 0
        %4577 = vmatpush1.bf16.msra.mxu0 0
        %4578 = vmatprep.subr.bf16.mxu0 0
        %4579 = vmatpush1.bf16.msra.mxu0 0
        %4580 = vmatprep.mubr.bf16.mxu0 0
        %4581 = vmatmul.mubr.bf16.gmra.mrb[0].mxu0 %v4516
        %v4582 = vpop.f32.mrb[0].mxu0
        %v4583 = vadd.f32 0.0, %v4582
        %v4584 = vpop.f32.mrb[0].mxu0
        %v4585 = vpop.f32.mrb[0].mxu0
        %v4586 = vadd.f32 0.0, %v4585
        %v4587 = vpop.f32.mrb[0].mxu0
        %4588 = vmatprep.mubr.bf16.mxu0 0
        %4589 = vmatmul.mubr.bf16.gmra.mrb[0].mxu0 %v4518
        %v4590 = vpop.f32.mrb[0].mxu0
        %v4591 = vadd.f32 0.0, %v4590
        %v4592 = vpop.f32.mrb[0].mxu0
        %v4593 = vpop.f32.mrb[0].mxu0
        %v4594 = vadd.f32 0.0, %v4593
        %v4595 = vpop.f32.mrb[0].mxu0
        %4596 = vmatprep.mubr.bf16.mxu0 0
        %4597 = vmatmul.mubr.bf16.gmra.mrb[0].mxu0 %v4520
        %v4598 = vpop.f32.mrb[0].mxu0
        %v4599 = vadd.f32 0.0, %v4598
        %v4600 = vpop.f32.mrb[0].mxu0
        %v4601 = vpop.f32.mrb[0].mxu0
        %v4602 = vadd.f32 0.0, %v4601
        %v4603 = vpop.f32.mrb[0].mxu0
        %4604 = vmatprep.mubr.bf16.mxu0 0
        %4605 = vmatmul.mubr.bf16.gmra.mrb[0].mxu0 %v4522
        %v4606 = vpop.f32.mrb[0].mxu0
        %v4607 = vadd.f32 0.0, %v4606
        %v4608 = vpop.f32.mrb[0].mxu0
        %v4609 = vpop.f32.mrb[0].mxu0
        %v4610 = vadd.f32 0.0, %v4609
        %v4611 = vpop.f32.mrb[0].mxu0
        %4612 = vmatprep.mubr.bf16.mxu0 0
        %4613 = vmatmul.mubr.bf16.gmra.mrb[0].mxu0 %v4524
        %v4614 = vpop.f32.mrb[0].mxu0
        %v4615 = vadd.f32 0.0, %v4614
        %v4616 = vpop.f32.mrb[0].mxu0
        %v4617 = vpop.f32.mrb[0].mxu0
        %v4618 = vadd.f32 0.0, %v4617
        %v4619 = vpop.f32.mrb[0].mxu0
        %4620 = vmatprep.mubr.bf16.mxu0 0
        %4621 = vmatmul.mubr.bf16.gmra.mrb[0].mxu0 %v4526
        %v4622 = vpop.f32.mrb[0].mxu0
        %v4623 = vadd.f32 0.0, %v4622
        %v4624 = vpop.f32.mrb[0].mxu0
        %v4625 = vpop.f32.mrb[0].mxu0
        %v4626 = vadd.f32 0.0, %v4625
        %v4627 = vpop.f32.mrb[0].mxu0
        %4628 = vmatprep.mubr.bf16.mxu0 0
        %4629 = vmatmul.mubr.bf16.gmra.mrb[0].mxu0 %v4528
        %v4630 = vpop.f32.mrb[0].mxu0
        %v4631 = vadd.f32 0.0, %v4630
        %v4632 = vpop.f32.mrb[0].mxu0
        %v4633 = vpop.f32.mrb[0].mxu0
        %v4634 = vadd.f32 0.0, %v4633
        %v4635 = vpop.f32.mrb[0].mxu0
        %4636 = vmatprep.mubr.bf16.mxu0 0
        %4637 = vmatmul.mubr.bf16.gmra.mrb[0].mxu0 %v4530
        %v4638 = vpop.f32.mrb[0].mxu0
        %v4639 = vadd.f32 0.0, %v4638
        %v4640 = vpop.f32.mrb[0].mxu0
        %v4641 = vpop.f32.mrb[0].mxu0
        %v4642 = vadd.f32 0.0, %v4641
        %v4643 = vpop.f32.mrb[0].mxu0
        %4644 = vmatprep.mubr.bf16.mxu0 0
        %4645 = vmatmul.mubr.bf16.gmra.mrb[0].mxu0 %v4532
        %v4646 = vpop.f32.mrb[0].mxu0
        %v4647 = vadd.f32 0.0, %v4646
        %v4648 = vpop.f32.mrb[0].mxu0
        %v4649 = vpop.f32.mrb[0].mxu0
        %v4650 = vadd.f32 0.0, %v4649
        %v4651 = vpop.f32.mrb[0].mxu0
        %4652 = vmatprep.mubr.bf16.mxu0 0
        %4653 = vmatmul.mubr.bf16.gmra.mrb[0].mxu0 %v4534
        %v4654 = vpop.f32.mrb[0].mxu0
        %v4655 = vadd.f32 0.0, %v4654
        %v4656 = vpop.f32.mrb[0].mxu0
        %v4657 = vpop.f32.mrb[0].mxu0
        %v4658 = vadd.f32 0.0, %v4657
        %v4659 = vpop.f32.mrb[0].mxu0
        %4660 = vmatprep.mubr.bf16.mxu0 0
        %4661 = vmatmul.mubr.bf16.gmra.mrb[0].mxu0 %v4536
        %v4662 = vpop.f32.mrb[0].mxu0
        %v4663 = vadd.f32 0.0, %v4662
        %v4664 = vpop.f32.mrb[0].mxu0
        %v4665 = vpop.f32.mrb[0].mxu0
        %v4666 = vadd.f32 0.0, %v4665
        %v4667 = vpop.f32.mrb[0].mxu0
        %4668 = vmatprep.mubr.bf16.mxu0 0
        %4669 = vmatmul.mubr.bf16.gmra.mrb[0].mxu0 %v4538
        %v4670 = vpop.f32.mrb[0].mxu0
        %v4671 = vadd.f32 0.0, %v4670
        %v4672 = vpop.f32.mrb[0].mxu0
        %v4673 = vpop.f32.mrb[0].mxu0
        %v4674 = vadd.f32 0.0, %v4673
        %v4675 = vpop.f32.mrb[0].mxu0
        %4676 = vmatprep.mubr.bf16.mxu0 0
        %4677 = vmatmul.mubr.bf16.gmra.mrb[0].mxu0 %v4540
        %v4678 = vpop.f32.mrb[0].mxu0
        %v4679 = vadd.f32 0.0, %v4678
        %v4680 = vpop.f32.mrb[0].mxu0
        %v4681 = vpop.f32.mrb[0].mxu0
        %v4682 = vadd.f32 0.0, %v4681
        %v4683 = vpop.f32.mrb[0].mxu0
        %4684 = vmatprep.mubr.bf16.mxu0 0
        %4685 = vmatmul.mubr.bf16.gmra.mrb[0].mxu0 %v4542
        %v4686 = vpop.f32.mrb[0].mxu0
        %v4687 = vadd.f32 0.0, %v4686
        %v4688 = vpop.f32.mrb[0].mxu0
        %v4689 = vpop.f32.mrb[0].mxu0
        %v4690 = vadd.f32 0.0, %v4689
        %v4691 = vpop.f32.mrb[0].mxu0
        %4692 = vmatprep.mubr.bf16.mxu0 0
        %4693 = vmatmul.mubr.bf16.gmra.mrb[0].mxu0 %v4544
        %v4694 = vpop.f32.mrb[0].mxu0
        %v4695 = vadd.f32 0.0, %v4694
        %v4696 = vpop.f32.mrb[0].mxu0
        %v4697 = vpop.f32.mrb[0].mxu0
        %v4698 = vadd.f32 0.0, %v4697
        %v4699 = vpop.f32.mrb[0].mxu0
        %4700 = vmatprep.mubr.bf16.mxu0 0
        %4701 = vmatmul.mubr.bf16.gmra.mrb[0].mxu0 %v4546
        %v4702 = vpop.f32.mrb[0].mxu0
        %v4703 = vadd.f32 0.0, %v4702
        %v4704 = vpop.f32.mrb[0].mxu0
        %v4705 = vpop.f32.mrb[0].mxu0
        %v4706 = vadd.f32 0.0, %v4705
        %v4707 = vpop.f32.mrb[0].mxu0
        %4708 = vdwg.mxu0
        %v4721 = vunpack.c.l.b16 %v3349
        %v4722 = vunpack.c.l.b16 %v3350
        %v4723 = vunpack.c.l.b16 %v3351
        %v4724 = vunpack.c.l.b16 %v3352
        %v4725 = vunpack.c.l.b16 %v3353
        %v4726 = vunpack.c.l.b16 %v3354
        %v4727 = vunpack.c.l.b16 %v3355
        %v4728 = vunpack.c.l.b16 %v3356
        %v4729 = vunpack.c.l.b16 %v3357
        %v4730 = vunpack.c.l.b16 %v3358
        %v4731 = vunpack.c.l.b16 %v3359
        %v4732 = vunpack.c.l.b16 %v3360
        %v4733 = vpack.c.b16 %v4722, %v4721
        %v4734 = vpack.c.b16 %v4724, %v4723
        %v4735 = vpack.c.b16 %v4726, %v4725
        %v4736 = vpack.c.b16 %v4728, %v4727
        %v4737 = vpack.c.b16 %v4730, %v4729
        %v4738 = vpack.c.b16 %v4732, %v4731
        %v4745 = vsel %vm4515, %v3904, 0
        %v4747 = vsel %vm4515, %v3906, 0
        %v4749 = vsel %vm4515, %v3908, 0
        %v4751 = vsel %vm4515, %v3910, 0
        %v4753 = vsel %vm4515, %v3912, 0
        %v4755 = vsel %vm4515, %v3914, 0
        %v4757 = vsel %vm4515, %v3916, 0
        %v4759 = vsel %vm4515, %v3918, 0
        %v4761 = vsel %vm4515, %v3920, 0
        %v4763 = vsel %vm4515, %v3922, 0
        %v4765 = vsel %vm4515, %v3924, 0
        %v4767 = vsel %vm4515, %v3926, 0
        %v4769 = vsel %vm4515, %v3928, 0
        %v4771 = vsel %vm4515, %v3930, 0
        %v4773 = vsel %vm4515, %v3932, 0
        %v4775 = vsel %vm4515, %v3934, 0
        %4777 = vmatprep.subr.bf16.mxu0 0
        %4778 = vmatpush1.bf16.msra.mxu0 %v4733
        %4779 = vmatprep.subr.bf16.mxu0 0
        %4780 = vmatpush1.bf16.msra.mxu0 %v4734
        %4781 = vmatprep.subr.bf16.mxu0 0
        %4782 = vmatpush1.bf16.msra.mxu0 %v4735
        %4783 = vmatprep.subr.bf16.mxu0 0
        %4784 = vmatpush1.bf16.msra.mxu0 %v4736
        %4785 = vmatprep.subr.bf16.mxu0 0
        %4786 = vmatpush1.bf16.msra.mxu0 %v4737
        %4787 = vmatprep.subr.bf16.mxu0 0
        %4788 = vmatpush1.bf16.msra.mxu0 %v4738
        %4789 = vmatprep.subr.bf16.mxu0 0
        %4790 = vmatpush1.bf16.msra.mxu0 0
        %4791 = vmatprep.subr.bf16.mxu0 0
        %4792 = vmatpush1.bf16.msra.mxu0 0
        %4793 = vmatprep.subr.bf16.mxu0 0
        %4794 = vmatpush1.bf16.msra.mxu0 0
        %4795 = vmatprep.subr.bf16.mxu0 0
        %4796 = vmatpush1.bf16.msra.mxu0 0
        %4797 = vmatprep.subr.bf16.mxu0 0
        %4798 = vmatpush1.bf16.msra.mxu0 0
        %4799 = vmatprep.subr.bf16.mxu0 0
        %4800 = vmatpush1.bf16.msra.mxu0 0
        %4801 = vmatprep.subr.bf16.mxu0 0
        %4802 = vmatpush1.bf16.msra.mxu0 0
        %4803 = vmatprep.subr.bf16.mxu0 0
        %4804 = vmatpush1.bf16.msra.mxu0 0
        %4805 = vmatprep.subr.bf16.mxu0 0
        %4806 = vmatpush1.bf16.msra.mxu0 0
        %4807 = vmatprep.subr.bf16.mxu0 0
        %4808 = vmatpush1.bf16.msra.mxu0 0
        %4809 = vmatprep.mubr.bf16.mxu0 0
        %4810 = vmatmul.mubr.bf16.gmra.mrb[0].mxu0 %v4745
        %v4811 = vpop.f32.mrb[0].mxu0
        %v4812 = vadd.f32 %v4583, %v4811
        %v4813 = vpop.f32.mrb[0].mxu0
        %v4814 = vpop.f32.mrb[0].mxu0
        %v4815 = vadd.f32 %v4586, %v4814
        %v4816 = vpop.f32.mrb[0].mxu0
        %4817 = vmatprep.mubr.bf16.mxu0 0
        %4818 = vmatmul.mubr.bf16.gmra.mrb[0].mxu0 %v4747
        %v4819 = vpop.f32.mrb[0].mxu0
        %v4820 = vadd.f32 %v4591, %v4819
        %v4821 = vpop.f32.mrb[0].mxu0
        %v4822 = vpop.f32.mrb[0].mxu0
        %v4823 = vadd.f32 %v4594, %v4822
        %v4824 = vpop.f32.mrb[0].mxu0
        %4825 = vmatprep.mubr.bf16.mxu0 0
        %4826 = vmatmul.mubr.bf16.gmra.mrb[0].mxu0 %v4749
        %v4827 = vpop.f32.mrb[0].mxu0
        %v4828 = vadd.f32 %v4599, %v4827
        %v4829 = vpop.f32.mrb[0].mxu0
        %v4830 = vpop.f32.mrb[0].mxu0
        %v4831 = vadd.f32 %v4602, %v4830
        %v4832 = vpop.f32.mrb[0].mxu0
        %4833 = vmatprep.mubr.bf16.mxu0 0
        %4834 = vmatmul.mubr.bf16.gmra.mrb[0].mxu0 %v4751
        %v4835 = vpop.f32.mrb[0].mxu0
        %v4836 = vadd.f32 %v4607, %v4835
        %v4837 = vpop.f32.mrb[0].mxu0
        %v4838 = vpop.f32.mrb[0].mxu0
        %v4839 = vadd.f32 %v4610, %v4838
        %v4840 = vpop.f32.mrb[0].mxu0
        %4841 = vmatprep.mubr.bf16.mxu0 0
        %4842 = vmatmul.mubr.bf16.gmra.mrb[0].mxu0 %v4753
        %v4843 = vpop.f32.mrb[0].mxu0
        %v4844 = vadd.f32 %v4615, %v4843
        %v4845 = vpop.f32.mrb[0].mxu0
        %v4846 = vpop.f32.mrb[0].mxu0
        %v4847 = vadd.f32 %v4618, %v4846
        %v4848 = vpop.f32.mrb[0].mxu0
        %4849 = vmatprep.mubr.bf16.mxu0 0
        %4850 = vmatmul.mubr.bf16.gmra.mrb[0].mxu0 %v4755
        %v4851 = vpop.f32.mrb[0].mxu0
        %v4852 = vadd.f32 %v4623, %v4851
        %v4853 = vpop.f32.mrb[0].mxu0
        %v4854 = vpop.f32.mrb[0].mxu0
        %v4855 = vadd.f32 %v4626, %v4854
        %v4856 = vpop.f32.mrb[0].mxu0
        %4857 = vmatprep.mubr.bf16.mxu0 0
        %4858 = vmatmul.mubr.bf16.gmra.mrb[0].mxu0 %v4757
        %v4859 = vpop.f32.mrb[0].mxu0
        %v4860 = vadd.f32 %v4631, %v4859
        %v4861 = vpop.f32.mrb[0].mxu0
        %v4862 = vpop.f32.mrb[0].mxu0
        %v4863 = vadd.f32 %v4634, %v4862
        %v4864 = vpop.f32.mrb[0].mxu0
        %4865 = vmatprep.mubr.bf16.mxu0 0
        %4866 = vmatmul.mubr.bf16.gmra.mrb[0].mxu0 %v4759
        %v4867 = vpop.f32.mrb[0].mxu0
        %v4868 = vadd.f32 %v4639, %v4867
        %v4869 = vpop.f32.mrb[0].mxu0
        %v4870 = vpop.f32.mrb[0].mxu0
        %v4871 = vadd.f32 %v4642, %v4870
        %v4872 = vpop.f32.mrb[0].mxu0
        %4873 = vmatprep.mubr.bf16.mxu0 0
        %4874 = vmatmul.mubr.bf16.gmra.mrb[0].mxu0 %v4761
        %v4875 = vpop.f32.mrb[0].mxu0
        %v4876 = vadd.f32 %v4647, %v4875
        %v4877 = vpop.f32.mrb[0].mxu0
        %v4878 = vpop.f32.mrb[0].mxu0
        %v4879 = vadd.f32 %v4650, %v4878
        %v4880 = vpop.f32.mrb[0].mxu0
        %4881 = vmatprep.mubr.bf16.mxu0 0
        %4882 = vmatmul.mubr.bf16.gmra.mrb[0].mxu0 %v4763
        %v4883 = vpop.f32.mrb[0].mxu0
        %v4884 = vadd.f32 %v4655, %v4883
        %v4885 = vpop.f32.mrb[0].mxu0
        %v4886 = vpop.f32.mrb[0].mxu0
        %v4887 = vadd.f32 %v4658, %v4886
        %v4888 = vpop.f32.mrb[0].mxu0
        %4889 = vmatprep.mubr.bf16.mxu0 0
        %4890 = vmatmul.mubr.bf16.gmra.mrb[0].mxu0 %v4765
        %v4891 = vpop.f32.mrb[0].mxu0
        %v4892 = vadd.f32 %v4663, %v4891
        %v4893 = vpop.f32.mrb[0].mxu0
        %v4894 = vpop.f32.mrb[0].mxu0
        %v4895 = vadd.f32 %v4666, %v4894
        %v4896 = vpop.f32.mrb[0].mxu0
        %4897 = vmatprep.mubr.bf16.mxu0 0
        %4898 = vmatmul.mubr.bf16.gmra.mrb[0].mxu0 %v4767
        %v4899 = vpop.f32.mrb[0].mxu0
        %v4900 = vadd.f32 %v4671, %v4899
        %v4901 = vpop.f32.mrb[0].mxu0
        %v4902 = vpop.f32.mrb[0].mxu0
        %v4903 = vadd.f32 %v4674, %v4902
        %v4904 = vpop.f32.mrb[0].mxu0
        %4905 = vmatprep.mubr.bf16.mxu0 0
        %4906 = vmatmul.mubr.bf16.gmra.mrb[0].mxu0 %v4769
        %v4907 = vpop.f32.mrb[0].mxu0
        %v4908 = vadd.f32 %v4679, %v4907
        %v4909 = vpop.f32.mrb[0].mxu0
        %v4910 = vpop.f32.mrb[0].mxu0
        %v4911 = vadd.f32 %v4682, %v4910
        %v4912 = vpop.f32.mrb[0].mxu0
        %4913 = vmatprep.mubr.bf16.mxu0 0
        %4914 = vmatmul.mubr.bf16.gmra.mrb[0].mxu0 %v4771
        %v4915 = vpop.f32.mrb[0].mxu0
        %v4916 = vadd.f32 %v4687, %v4915
        %v4917 = vpop.f32.mrb[0].mxu0
        %v4918 = vpop.f32.mrb[0].mxu0
        %v4919 = vadd.f32 %v4690, %v4918
        %v4920 = vpop.f32.mrb[0].mxu0
        %4921 = vmatprep.mubr.bf16.mxu0 0
        %4922 = vmatmul.mubr.bf16.gmra.mrb[0].mxu0 %v4773
        %v4923 = vpop.f32.mrb[0].mxu0
        %v4924 = vadd.f32 %v4695, %v4923
        %v4925 = vpop.f32.mrb[0].mxu0
        %v4926 = vpop.f32.mrb[0].mxu0
        %v4927 = vadd.f32 %v4698, %v4926
        %v4928 = vpop.f32.mrb[0].mxu0
        %4929 = vmatprep.mubr.bf16.mxu0 0
        %4930 = vmatmul.mubr.bf16.gmra.mrb[0].mxu0 %v4775
        %v4931 = vpop.f32.mrb[0].mxu0
        %v4932 = vadd.f32 %v4703, %v4931
        %v4933 = vpop.f32.mrb[0].mxu0
        %v4934 = vpop.f32.mrb[0].mxu0
        %v4935 = vadd.f32 %v4706, %v4934
        %v4936 = vpop.f32.mrb[0].mxu0
        %4937 = vdwg.mxu0
        %s4938 = scalar_lea.vmem [#allocation3], 24
        %v4939 = vld [vmem:[%s4938] sm:$0xf]
        %v4940 = vld [vmem:[%s4938 + $0x4] sm:$0xf]
        %v4941 = vld [vmem:[%s4938 + $0x8] sm:$0x1]
        %v4942 = vld [vmem:[%s4938 + $0xc] sm:$0xf]
        %v4943 = vld [vmem:[%s4938 + $0x10] sm:$0xf]
        %v4944 = vld [vmem:[%s4938 + $0x14] sm:$0x1]
        %v4945 = vld [vmem:[%s4938 + $0x18] sm:$0xf]
        %v4946 = vld [vmem:[%s4938 + $0x1c] sm:$0xf]
        %v4947 = vld [vmem:[%s4938 + $0x20] sm:$0x1]
        %v4948 = vld [vmem:[%s4938 + $0x24] sm:$0xf]
        %v4949 = vld [vmem:[%s4938 + $0x28] sm:$0xf]
        %v4950 = vld [vmem:[%s4938 + $0x2c] sm:$0x1]
        %v4951 = vld [vmem:[%s4938 + $0x30] sm:$0xf]
        %v4952 = vld [vmem:[%s4938 + $0x34] sm:$0xf]
        %v4953 = vld [vmem:[%s4938 + $0x38] sm:$0x1]
        %v4954 = vld [vmem:[%s4938 + $0x3c] sm:$0xf]
        %v4955 = vld [vmem:[%s4938 + $0x40] sm:$0xf]
        %v4956 = vld [vmem:[%s4938 + $0x44] sm:$0x1]
        %v4957 = vld [vmem:[%s4938 + $0x48] sm:$0xf]
        %v4958 = vld [vmem:[%s4938 + $0x4c] sm:$0xf]
        %v4959 = vld [vmem:[%s4938 + $0x50] sm:$0x1]
        %v4960 = vld [vmem:[%s4938 + $0x54] sm:$0xf]
        %v4961 = vld [vmem:[%s4938 + $0x58] sm:$0xf]
        %v4962 = vld [vmem:[%s4938 + $0x5c] sm:$0x1]
        %v4963 = vld [vmem:[%s4938 + $0x60] sm:$0xf]
        %v4964 = vld [vmem:[%s4938 + $0x64] sm:$0xf]
        %v4965 = vld [vmem:[%s4938 + $0x68] sm:$0x1]
        %v4966 = vld [vmem:[%s4938 + $0x6c] sm:$0xf]
        %v4967 = vld [vmem:[%s4938 + $0x70] sm:$0xf]
        %v4968 = vld [vmem:[%s4938 + $0x74] sm:$0x1]
        %v4969 = vld [vmem:[%s4938 + $0x78] sm:$0xf]
        %v4970 = vld [vmem:[%s4938 + $0x7c] sm:$0xf]
        %v4971 = vld [vmem:[%s4938 + $0x80] sm:$0x1]
        %v4972 = vld [vmem:[%s4938 + $0x84] sm:$0xf]
        %v4973 = vld [vmem:[%s4938 + $0x88] sm:$0xf]
        %v4974 = vld [vmem:[%s4938 + $0x8c] sm:$0x1]
        %v4975 = vld [vmem:[%s4938 + $0x90] sm:$0xf]
        %v4976 = vld [vmem:[%s4938 + $0x94] sm:$0xf]
        %v4977 = vld [vmem:[%s4938 + $0x98] sm:$0x1]
        %v4978 = vld [vmem:[%s4938 + $0x9c] sm:$0xf]
        %v4979 = vld [vmem:[%s4938 + $0xa0] sm:$0xf]
        %v4980 = vld [vmem:[%s4938 + $0xa4] sm:$0x1]
        %v4981 = vld [vmem:[%s4938 + $0xa8] sm:$0xf]
        %v4982 = vld [vmem:[%s4938 + $0xac] sm:$0xf]
        %v4983 = vld [vmem:[%s4938 + $0xb0] sm:$0x1]
        %v4984 = vld [vmem:[%s4938 + $0xb4] sm:$0xf]
        %v4985 = vld [vmem:[%s4938 + $0xb8] sm:$0xf]
        %v4986 = vld [vmem:[%s4938 + $0xbc] sm:$0x1]
        %v5019 = vunpack.c.l.b16 %v4939
        %v5020 = vunpack.c.l.b16 %v4940
        %v5021 = vunpack.c.l.b16 %v4942
        %v5022 = vunpack.c.l.b16 %v4943
        %v5023 = vunpack.c.l.b16 %v4945
        %v5024 = vunpack.c.l.b16 %v4946
        %v5025 = vunpack.c.l.b16 %v4948
        %v5026 = vunpack.c.l.b16 %v4949
        %v5027 = vunpack.c.l.b16 %v4951
        %v5028 = vunpack.c.l.b16 %v4952
        %v5029 = vunpack.c.l.b16 %v4954
        %v5030 = vunpack.c.l.b16 %v4955
        %v5031 = vunpack.c.l.b16 %v4957
        %v5032 = vunpack.c.l.b16 %v4958
        %v5033 = vunpack.c.l.b16 %v4960
        %v5034 = vunpack.c.l.b16 %v4961
        %v5035 = vunpack.c.l.b16 %v4963
        %v5036 = vunpack.c.l.b16 %v4964
        %v5037 = vunpack.c.l.b16 %v4966
        %v5038 = vunpack.c.l.b16 %v4967
        %v5039 = vunpack.c.l.b16 %v4969
        %v5040 = vunpack.c.l.b16 %v4970
        %v5041 = vunpack.c.l.b16 %v4972
        %v5042 = vunpack.c.l.b16 %v4973
        %v5043 = vunpack.c.l.b16 %v4975
        %v5044 = vunpack.c.l.b16 %v4976
        %v5045 = vunpack.c.l.b16 %v4978
        %v5046 = vunpack.c.l.b16 %v4979
        %v5047 = vunpack.c.l.b16 %v4981
        %v5048 = vunpack.c.l.b16 %v4982
        %v5049 = vunpack.c.l.b16 %v4984
        %v5050 = vunpack.c.l.b16 %v4985
        %v5051 = vpack.c.b16 %v5020, %v5019
        %v5052 = vpack.c.b16 %v5022, %v5021
        %v5053 = vpack.c.b16 %v5024, %v5023
        %v5054 = vpack.c.b16 %v5026, %v5025
        %v5055 = vpack.c.b16 %v5028, %v5027
        %v5056 = vpack.c.b16 %v5030, %v5029
        %v5057 = vpack.c.b16 %v5032, %v5031
        %v5058 = vpack.c.b16 %v5034, %v5033
        %v5059 = vpack.c.b16 %v5036, %v5035
        %v5060 = vpack.c.b16 %v5038, %v5037
        %v5061 = vpack.c.b16 %v5040, %v5039
        %v5062 = vpack.c.b16 %v5042, %v5041
        %v5063 = vpack.c.b16 %v5044, %v5043
        %v5064 = vpack.c.b16 %v5046, %v5045
        %v5065 = vpack.c.b16 %v5048, %v5047
        %v5066 = vpack.c.b16 %v5050, %v5049
        %v5083 = vunpack.c.l.b16 %v4941
        %v5084 = vunpack.c.l.b16 %v4944
        %v5085 = vunpack.c.l.b16 %v4947
        %v5086 = vunpack.c.l.b16 %v4950
        %v5087 = vunpack.c.l.b16 %v4953
        %v5088 = vunpack.c.l.b16 %v4956
        %v5089 = vunpack.c.l.b16 %v4959
        %v5090 = vunpack.c.l.b16 %v4962
        %v5091 = vunpack.c.l.b16 %v4965
        %v5092 = vunpack.c.l.b16 %v4968
        %v5093 = vunpack.c.l.b16 %v4971
        %v5094 = vunpack.c.l.b16 %v4974
        %v5095 = vunpack.c.l.b16 %v4977
        %v5096 = vunpack.c.l.b16 %v4980
        %v5097 = vunpack.c.l.b16 %v4983
        %v5098 = vunpack.c.l.b16 %v4986
        %v5099 = vpack.c.b16 %v5083, %v5083
        %v5100 = vpack.c.b16 %v5084, %v5084
        %v5101 = vpack.c.b16 %v5085, %v5085
        %v5102 = vpack.c.b16 %v5086, %v5086
        %v5103 = vpack.c.b16 %v5087, %v5087
        %v5104 = vpack.c.b16 %v5088, %v5088
        %v5105 = vpack.c.b16 %v5089, %v5089
        %v5106 = vpack.c.b16 %v5090, %v5090
        %v5107 = vpack.c.b16 %v5091, %v5091
        %v5108 = vpack.c.b16 %v5092, %v5092
        %v5109 = vpack.c.b16 %v5093, %v5093
        %v5110 = vpack.c.b16 %v5094, %v5094
        %v5111 = vpack.c.b16 %v5095, %v5095
        %v5112 = vpack.c.b16 %v5096, %v5096
        %v5113 = vpack.c.b16 %v5097, %v5097
        %v5114 = vpack.c.b16 %v5098, %v5098
        %v5116 = vshrl.u32 %v5051, 16
        %v5118 = vshll.u32 %v5051, 16
        %v5120 = vrot.slane %v5118, 1
        %v5121 = vor.u32 %v5116, %v5120
        %v5123 = vshll.u32 %v5099, 16
        %v5125 = vrot.slane %v5123, 1
        %v5126 = vsel %vm3563, %v5121, %v5125
        %v5128 = vshrl.u32 %v5052, 16
        %v5130 = vshll.u32 %v5052, 16
        %v5132 = vrot.slane %v5130, 1
        %v5133 = vor.u32 %v5128, %v5132
        %v5135 = vshll.u32 %v5100, 16
        %v5137 = vrot.slane %v5135, 1
        %v5138 = vsel %vm3563, %v5133, %v5137
        %v5140 = vshrl.u32 %v5053, 16
        %v5142 = vshll.u32 %v5053, 16
        %v5144 = vrot.slane %v5142, 1
        %v5145 = vor.u32 %v5140, %v5144
        %v5147 = vshll.u32 %v5101, 16
        %v5149 = vrot.slane %v5147, 1
        %v5150 = vsel %vm3563, %v5145, %v5149
        %v5152 = vshrl.u32 %v5054, 16
        %v5154 = vshll.u32 %v5054, 16
        %v5156 = vrot.slane %v5154, 1
        %v5157 = vor.u32 %v5152, %v5156
        %v5159 = vshll.u32 %v5102, 16
        %v5161 = vrot.slane %v5159, 1
        %v5162 = vsel %vm3563, %v5157, %v5161
        %v5164 = vshrl.u32 %v5055, 16
        %v5166 = vshll.u32 %v5055, 16
        %v5168 = vrot.slane %v5166, 1
        %v5169 = vor.u32 %v5164, %v5168
        %v5171 = vshll.u32 %v5103, 16
        %v5173 = vrot.slane %v5171, 1
        %v5174 = vsel %vm3563, %v5169, %v5173
        %v5176 = vshrl.u32 %v5056, 16
        %v5178 = vshll.u32 %v5056, 16
        %v5180 = vrot.slane %v5178, 1
        %v5181 = vor.u32 %v5176, %v5180
        %v5183 = vshll.u32 %v5104, 16
        %v5185 = vrot.slane %v5183, 1
        %v5186 = vsel %vm3563, %v5181, %v5185
        %v5188 = vshrl.u32 %v5057, 16
        %v5190 = vshll.u32 %v5057, 16
        %v5192 = vrot.slane %v5190, 1
        %v5193 = vor.u32 %v5188, %v5192
        %v5195 = vshll.u32 %v5105, 16
        %v5197 = vrot.slane %v5195, 1
        %v5198 = vsel %vm3563, %v5193, %v5197
        %v5200 = vshrl.u32 %v5058, 16
        %v5202 = vshll.u32 %v5058, 16
        %v5204 = vrot.slane %v5202, 1
        %v5205 = vor.u32 %v5200, %v5204
        %v5207 = vshll.u32 %v5106, 16
        %v5209 = vrot.slane %v5207, 1
        %v5210 = vsel %vm3563, %v5205, %v5209
        %v5212 = vshrl.u32 %v5059, 16
        %v5214 = vshll.u32 %v5059, 16
        %v5216 = vrot.slane %v5214, 1
        %v5217 = vor.u32 %v5212, %v5216
        %v5219 = vshll.u32 %v5107, 16
        %v5221 = vrot.slane %v5219, 1
        %v5222 = vsel %vm3563, %v5217, %v5221
        %v5224 = vshrl.u32 %v5060, 16
        %v5226 = vshll.u32 %v5060, 16
        %v5228 = vrot.slane %v5226, 1
        %v5229 = vor.u32 %v5224, %v5228
        %v5231 = vshll.u32 %v5108, 16
        %v5233 = vrot.slane %v5231, 1
        %v5234 = vsel %vm3563, %v5229, %v5233
        %v5236 = vshrl.u32 %v5061, 16
        %v5238 = vshll.u32 %v5061, 16
        %v5240 = vrot.slane %v5238, 1
        %v5241 = vor.u32 %v5236, %v5240
        %v5243 = vshll.u32 %v5109, 16
        %v5245 = vrot.slane %v5243, 1
        %v5246 = vsel %vm3563, %v5241, %v5245
        %v5248 = vshrl.u32 %v5062, 16
        %v5250 = vshll.u32 %v5062, 16
        %v5252 = vrot.slane %v5250, 1
        %v5253 = vor.u32 %v5248, %v5252
        %v5255 = vshll.u32 %v5110, 16
        %v5257 = vrot.slane %v5255, 1
        %v5258 = vsel %vm3563, %v5253, %v5257
        %v5260 = vshrl.u32 %v5063, 16
        %v5262 = vshll.u32 %v5063, 16
        %v5264 = vrot.slane %v5262, 1
        %v5265 = vor.u32 %v5260, %v5264
        %v5267 = vshll.u32 %v5111, 16
        %v5269 = vrot.slane %v5267, 1
        %v5270 = vsel %vm3563, %v5265, %v5269
        %v5272 = vshrl.u32 %v5064, 16
        %v5274 = vshll.u32 %v5064, 16
        %v5276 = vrot.slane %v5274, 1
        %v5277 = vor.u32 %v5272, %v5276
        %v5279 = vshll.u32 %v5112, 16
        %v5281 = vrot.slane %v5279, 1
        %v5282 = vsel %vm3563, %v5277, %v5281
        %v5284 = vshrl.u32 %v5065, 16
        %v5286 = vshll.u32 %v5065, 16
        %v5288 = vrot.slane %v5286, 1
        %v5289 = vor.u32 %v5284, %v5288
        %v5291 = vshll.u32 %v5113, 16
        %v5293 = vrot.slane %v5291, 1
        %v5294 = vsel %vm3563, %v5289, %v5293
        %v5296 = vshrl.u32 %v5066, 16
        %v5298 = vshll.u32 %v5066, 16
        %v5300 = vrot.slane %v5298, 1
        %v5301 = vor.u32 %v5296, %v5300
        %v5303 = vshll.u32 %v5114, 16
        %v5305 = vrot.slane %v5303, 1
        %v5306 = vsel %vm3563, %v5301, %v5305
        %5307 = vrot.lane.b32.xlu0 %v5126, 32
        %v5308 = vpop.permute.xlu0 %5307
        %5309 = vrot.lane.b32.xlu0 %v5138, 32
        %v5310 = vpop.permute.xlu0 %5309
        %5311 = vrot.lane.b32.xlu0 %v5150, 32
        %v5312 = vpop.permute.xlu0 %5311
        %5313 = vrot.lane.b32.xlu0 %v5162, 32
        %v5314 = vpop.permute.xlu0 %5313
        %5315 = vrot.lane.b32.xlu0 %v5174, 32
        %v5316 = vpop.permute.xlu0 %5315
        %5317 = vrot.lane.b32.xlu0 %v5186, 32
        %v5318 = vpop.permute.xlu0 %5317
        %5319 = vrot.lane.b32.xlu0 %v5198, 32
        %v5320 = vpop.permute.xlu0 %5319
        %5321 = vrot.lane.b32.xlu0 %v5210, 32
        %v5322 = vpop.permute.xlu0 %5321
        %5323 = vrot.lane.b32.xlu0 %v5222, 32
        %v5324 = vpop.permute.xlu0 %5323
        %5325 = vrot.lane.b32.xlu0 %v5234, 32
        %v5326 = vpop.permute.xlu0 %5325
        %5327 = vrot.lane.b32.xlu0 %v5246, 32
        %v5328 = vpop.permute.xlu0 %5327
        %5329 = vrot.lane.b32.xlu0 %v5258, 32
        %v5330 = vpop.permute.xlu0 %5329
        %5331 = vrot.lane.b32.xlu0 %v5270, 32
        %v5332 = vpop.permute.xlu0 %5331
        %5333 = vrot.lane.b32.xlu0 %v5282, 32
        %v5334 = vpop.permute.xlu0 %5333
        %5335 = vrot.lane.b32.xlu0 %v5294, 32
        %v5336 = vpop.permute.xlu0 %5335
        %5337 = vrot.lane.b32.xlu0 %v5306, 32
        %v5338 = vpop.permute.xlu0 %5337
        %v5339 = vrot.slane %v5051, 1
        %v5340 = vrot.slane %v5099, 1
        %v5341 = vsel %vm3788, %v5339, %v5340
        %v5342 = vrot.slane %v5052, 1
        %v5343 = vrot.slane %v5100, 1
        %v5344 = vsel %vm3788, %v5342, %v5343
        %v5345 = vrot.slane %v5053, 1
        %v5346 = vrot.slane %v5101, 1
        %v5347 = vsel %vm3788, %v5345, %v5346
        %v5348 = vrot.slane %v5054, 1
        %v5349 = vrot.slane %v5102, 1
        %v5350 = vsel %vm3788, %v5348, %v5349
        %v5351 = vrot.slane %v5055, 1
        %v5352 = vrot.slane %v5103, 1
        %v5353 = vsel %vm3788, %v5351, %v5352
        %v5354 = vrot.slane %v5056, 1
        %v5355 = vrot.slane %v5104, 1
        %v5356 = vsel %vm3788, %v5354, %v5355
        %v5357 = vrot.slane %v5057, 1
        %v5358 = vrot.slane %v5105, 1
        %v5359 = vsel %vm3788, %v5357, %v5358
        %v5360 = vrot.slane %v5058, 1
        %v5361 = vrot.slane %v5106, 1
        %v5362 = vsel %vm3788, %v5360, %v5361
        %v5363 = vrot.slane %v5059, 1
        %v5364 = vrot.slane %v5107, 1
        %v5365 = vsel %vm3788, %v5363, %v5364
        %v5366 = vrot.slane %v5060, 1
        %v5367 = vrot.slane %v5108, 1
        %v5368 = vsel %vm3788, %v5366, %v5367
        %v5369 = vrot.slane %v5061, 1
        %v5370 = vrot.slane %v5109, 1
        %v5371 = vsel %vm3788, %v5369, %v5370
        %v5372 = vrot.slane %v5062, 1
        %v5373 = vrot.slane %v5110, 1
        %v5374 = vsel %vm3788, %v5372, %v5373
        %v5375 = vrot.slane %v5063, 1
        %v5376 = vrot.slane %v5111, 1
        %v5377 = vsel %vm3788, %v5375, %v5376
        %v5378 = vrot.slane %v5064, 1
        %v5379 = vrot.slane %v5112, 1
        %v5380 = vsel %vm3788, %v5378, %v5379
        %v5381 = vrot.slane %v5065, 1
        %v5382 = vrot.slane %v5113, 1
        %v5383 = vsel %vm3788, %v5381, %v5382
        %v5384 = vrot.slane %v5066, 1
        %v5385 = vrot.slane %v5114, 1
        %v5386 = vsel %vm3788, %v5384, %v5385
        %5387 = vrot.lane.b32.xlu0 %v5341, 64
        %v5388 = vpop.permute.xlu0 %5387
        %5389 = vrot.lane.b32.xlu0 %v5344, 64
        %v5390 = vpop.permute.xlu0 %5389
        %5391 = vrot.lane.b32.xlu0 %v5347, 64
        %v5392 = vpop.permute.xlu0 %5391
        %5393 = vrot.lane.b32.xlu0 %v5350, 64
        %v5394 = vpop.permute.xlu0 %5393
        %5395 = vrot.lane.b32.xlu0 %v5353, 64
        %v5396 = vpop.permute.xlu0 %5395
        %5397 = vrot.lane.b32.xlu0 %v5356, 64
        %v5398 = vpop.permute.xlu0 %5397
        %5399 = vrot.lane.b32.xlu0 %v5359, 64
        %v5400 = vpop.permute.xlu0 %5399
        %5401 = vrot.lane.b32.xlu0 %v5362, 64
        %v5402 = vpop.permute.xlu0 %5401
        %5403 = vrot.lane.b32.xlu0 %v5365, 64
        %v5404 = vpop.permute.xlu0 %5403
        %5405 = vrot.lane.b32.xlu0 %v5368, 64
        %v5406 = vpop.permute.xlu0 %5405
        %5407 = vrot.lane.b32.xlu0 %v5371, 64
        %v5408 = vpop.permute.xlu0 %5407
        %5409 = vrot.lane.b32.xlu0 %v5374, 64
        %v5410 = vpop.permute.xlu0 %5409
        %5411 = vrot.lane.b32.xlu0 %v5377, 64
        %v5412 = vpop.permute.xlu0 %5411
        %5413 = vrot.lane.b32.xlu0 %v5380, 64
        %v5414 = vpop.permute.xlu0 %5413
        %5415 = vrot.lane.b32.xlu0 %v5383, 64
        %v5416 = vpop.permute.xlu0 %5415
        %5417 = vrot.lane.b32.xlu0 %v5386, 64
        %v5418 = vpop.permute.xlu0 %5417
        %v5420 = vsel %vm3869, %v5051, %v5308
        %v5422 = vsel %vm3869, %v5052, %v5310
        %v5424 = vsel %vm3869, %v5053, %v5312
        %v5426 = vsel %vm3869, %v5054, %v5314
        %v5428 = vsel %vm3869, %v5055, %v5316
        %v5430 = vsel %vm3869, %v5056, %v5318
        %v5432 = vsel %vm3869, %v5057, %v5320
        %v5434 = vsel %vm3869, %v5058, %v5322
        %v5436 = vsel %vm3869, %v5059, %v5324
        %v5438 = vsel %vm3869, %v5060, %v5326
        %v5440 = vsel %vm3869, %v5061, %v5328
        %v5442 = vsel %vm3869, %v5062, %v5330
        %v5444 = vsel %vm3869, %v5063, %v5332
        %v5446 = vsel %vm3869, %v5064, %v5334
        %v5448 = vsel %vm3869, %v5065, %v5336
        %v5450 = vsel %vm3869, %v5066, %v5338
        %v5452 = vsel %vm3902, %v5420, %v5388
        %v5454 = vsel %vm3902, %v5422, %v5390
        %v5456 = vsel %vm3902, %v5424, %v5392
        %v5458 = vsel %vm3902, %v5426, %v5394
        %v5460 = vsel %vm3902, %v5428, %v5396
        %v5462 = vsel %vm3902, %v5430, %v5398
        %v5464 = vsel %vm3902, %v5432, %v5400
        %v5466 = vsel %vm3902, %v5434, %v5402
        %v5468 = vsel %vm3902, %v5436, %v5404
        %v5470 = vsel %vm3902, %v5438, %v5406
        %v5472 = vsel %vm3902, %v5440, %v5408
        %v5474 = vsel %vm3902, %v5442, %v5410
        %v5476 = vsel %vm3902, %v5444, %v5412
        %v5478 = vsel %vm3902, %v5446, %v5414
        %v5480 = vsel %vm3902, %v5448, %v5416
        %v5482 = vsel %vm3902, %v5450, %v5418
        %v5495 = vunpack.c.l.b16 %v3373
        %v5496 = vunpack.c.l.b16 %v3374
        %v5497 = vunpack.c.l.b16 %v3375
        %v5498 = vunpack.c.l.b16 %v3376
        %v5499 = vunpack.c.l.b16 %v3377
        %v5500 = vunpack.c.l.b16 %v3378
        %v5501 = vunpack.c.l.b16 %v3379
        %v5502 = vunpack.c.l.b16 %v3380
        %v5503 = vunpack.c.l.b16 %v3381
        %v5504 = vunpack.c.l.b16 %v3382
        %v5505 = vunpack.c.l.b16 %v3383
        %v5506 = vunpack.c.l.b16 %v3384
        %v5507 = vpack.c.b16 %v5496, %v5495
        %v5508 = vpack.c.b16 %v5498, %v5497
        %v5509 = vpack.c.b16 %v5500, %v5499
        %v5510 = vpack.c.b16 %v5502, %v5501
        %v5511 = vpack.c.b16 %v5504, %v5503
        %v5512 = vpack.c.b16 %v5506, %v5505
        %v5519 = vsel %vm4515, %v5452, 0
        %v5521 = vsel %vm4515, %v5454, 0
        %v5523 = vsel %vm4515, %v5456, 0
        %v5525 = vsel %vm4515, %v5458, 0
        %v5527 = vsel %vm4515, %v5460, 0
        %v5529 = vsel %vm4515, %v5462, 0
        %v5531 = vsel %vm4515, %v5464, 0
        %v5533 = vsel %vm4515, %v5466, 0
        %v5535 = vsel %vm4515, %v5468, 0
        %v5537 = vsel %vm4515, %v5470, 0
        %v5539 = vsel %vm4515, %v5472, 0
        %v5541 = vsel %vm4515, %v5474, 0
        %v5543 = vsel %vm4515, %v5476, 0
        %v5545 = vsel %vm4515, %v5478, 0
        %v5547 = vsel %vm4515, %v5480, 0
        %v5549 = vsel %vm4515, %v5482, 0
        %5551 = vmatprep.subr.bf16.mxu0 0
        %5552 = vmatpush1.bf16.msra.mxu0 %v5507
        %5553 = vmatprep.subr.bf16.mxu0 0
        %5554 = vmatpush1.bf16.msra.mxu0 %v5508
        %5555 = vmatprep.subr.bf16.mxu0 0
        %5556 = vmatpush1.bf16.msra.mxu0 %v5509
        %5557 = vmatprep.subr.bf16.mxu0 0
        %5558 = vmatpush1.bf16.msra.mxu0 %v5510
        %5559 = vmatprep.subr.bf16.mxu0 0
        %5560 = vmatpush1.bf16.msra.mxu0 %v5511
        %5561 = vmatprep.subr.bf16.mxu0 0
        %5562 = vmatpush1.bf16.msra.mxu0 %v5512
        %5563 = vmatprep.subr.bf16.mxu0 0
        %5564 = vmatpush1.bf16.msra.mxu0 0
        %5565 = vmatprep.subr.bf16.mxu0 0
        %5566 = vmatpush1.bf16.msra.mxu0 0
        %5567 = vmatprep.subr.bf16.mxu0 0
        %5568 = vmatpush1.bf16.msra.mxu0 0
        %5569 = vmatprep.subr.bf16.mxu0 0
        %5570 = vmatpush1.bf16.msra.mxu0 0
        %5571 = vmatprep.subr.bf16.mxu0 0
        %5572 = vmatpush1.bf16.msra.mxu0 0
        %5573 = vmatprep.subr.bf16.mxu0 0
        %5574 = vmatpush1.bf16.msra.mxu0 0
        %5575 = vmatprep.subr.bf16.mxu0 0
        %5576 = vmatpush1.bf16.msra.mxu0 0
        %5577 = vmatprep.subr.bf16.mxu0 0
        %5578 = vmatpush1.bf16.msra.mxu0 0
        %5579 = vmatprep.subr.bf16.mxu0 0
        %5580 = vmatpush1.bf16.msra.mxu0 0
        %5581 = vmatprep.subr.bf16.mxu0 0
        %5582 = vmatpush1.bf16.msra.mxu0 0
        %5583 = vmatprep.mubr.bf16.mxu0 0
        %5584 = vmatmul.mubr.bf16.gmra.mrb[0].mxu0 %v5519
        %v5585 = vpop.f32.mrb[0].mxu0
        %v5586 = vadd.f32 0.0, %v5585
        %v5587 = vpop.f32.mrb[0].mxu0
        %v5588 = vpop.f32.mrb[0].mxu0
        %v5589 = vadd.f32 0.0, %v5588
        %v5590 = vpop.f32.mrb[0].mxu0
        %5591 = vmatprep.mubr.bf16.mxu0 0
        %5592 = vmatmul.mubr.bf16.gmra.mrb[0].mxu0 %v5521
        %v5593 = vpop.f32.mrb[0].mxu0
        %v5594 = vadd.f32 0.0, %v5593
        %v5595 = vpop.f32.mrb[0].mxu0
        %v5596 = vpop.f32.mrb[0].mxu0
        %v5597 = vadd.f32 0.0, %v5596
        %v5598 = vpop.f32.mrb[0].mxu0
        %5599 = vmatprep.mubr.bf16.mxu0 0
        %5600 = vmatmul.mubr.bf16.gmra.mrb[0].mxu0 %v5523
        %v5601 = vpop.f32.mrb[0].mxu0
        %v5602 = vadd.f32 0.0, %v5601
        %v5603 = vpop.f32.mrb[0].mxu0
        %v5604 = vpop.f32.mrb[0].mxu0
        %v5605 = vadd.f32 0.0, %v5604
        %v5606 = vpop.f32.mrb[0].mxu0
        %5607 = vmatprep.mubr.bf16.mxu0 0
        %5608 = vmatmul.mubr.bf16.gmra.mrb[0].mxu0 %v5525
        %v5609 = vpop.f32.mrb[0].mxu0
        %v5610 = vadd.f32 0.0, %v5609
        %v5611 = vpop.f32.mrb[0].mxu0
        %v5612 = vpop.f32.mrb[0].mxu0
        %v5613 = vadd.f32 0.0, %v5612
        %v5614 = vpop.f32.mrb[0].mxu0
        %5615 = vmatprep.mubr.bf16.mxu0 0
        %5616 = vmatmul.mubr.bf16.gmra.mrb[0].mxu0 %v5527
        %v5617 = vpop.f32.mrb[0].mxu0
        %v5618 = vadd.f32 0.0, %v5617
        %v5619 = vpop.f32.mrb[0].mxu0
        %v5620 = vpop.f32.mrb[0].mxu0
        %v5621 = vadd.f32 0.0, %v5620
        %v5622 = vpop.f32.mrb[0].mxu0
        %5623 = vmatprep.mubr.bf16.mxu0 0
        %5624 = vmatmul.mubr.bf16.gmra.mrb[0].mxu0 %v5529
        %v5625 = vpop.f32.mrb[0].mxu0
        %v5626 = vadd.f32 0.0, %v5625
        %v5627 = vpop.f32.mrb[0].mxu0
        %v5628 = vpop.f32.mrb[0].mxu0
        %v5629 = vadd.f32 0.0, %v5628
        %v5630 = vpop.f32.mrb[0].mxu0
        %5631 = vmatprep.mubr.bf16.mxu0 0
        %5632 = vmatmul.mubr.bf16.gmra.mrb[0].mxu0 %v5531
        %v5633 = vpop.f32.mrb[0].mxu0
        %v5634 = vadd.f32 0.0, %v5633
        %v5635 = vpop.f32.mrb[0].mxu0
        %v5636 = vpop.f32.mrb[0].mxu0
        %v5637 = vadd.f32 0.0, %v5636
        %v5638 = vpop.f32.mrb[0].mxu0
        %5639 = vmatprep.mubr.bf16.mxu0 0
        %5640 = vmatmul.mubr.bf16.gmra.mrb[0].mxu0 %v5533
        %v5641 = vpop.f32.mrb[0].mxu0
        %v5642 = vadd.f32 0.0, %v5641
        %v5643 = vpop.f32.mrb[0].mxu0
        %v5644 = vpop.f32.mrb[0].mxu0
        %v5645 = vadd.f32 0.0, %v5644
        %v5646 = vpop.f32.mrb[0].mxu0
        %5647 = vmatprep.mubr.bf16.mxu0 0
        %5648 = vmatmul.mubr.bf16.gmra.mrb[0].mxu0 %v5535
        %v5649 = vpop.f32.mrb[0].mxu0
        %v5650 = vadd.f32 0.0, %v5649
        %v5651 = vpop.f32.mrb[0].mxu0
        %v5652 = vpop.f32.mrb[0].mxu0
        %v5653 = vadd.f32 0.0, %v5652
        %v5654 = vpop.f32.mrb[0].mxu0
        %5655 = vmatprep.mubr.bf16.mxu0 0
        %5656 = vmatmul.mubr.bf16.gmra.mrb[0].mxu0 %v5537
        %v5657 = vpop.f32.mrb[0].mxu0
        %v5658 = vadd.f32 0.0, %v5657
        %v5659 = vpop.f32.mrb[0].mxu0
        %v5660 = vpop.f32.mrb[0].mxu0
        %v5661 = vadd.f32 0.0, %v5660
        %v5662 = vpop.f32.mrb[0].mxu0
        %5663 = vmatprep.mubr.bf16.mxu0 0
        %5664 = vmatmul.mubr.bf16.gmra.mrb[0].mxu0 %v5539
        %v5665 = vpop.f32.mrb[0].mxu0
        %v5666 = vadd.f32 0.0, %v5665
        %v5667 = vpop.f32.mrb[0].mxu0
        %v5668 = vpop.f32.mrb[0].mxu0
        %v5669 = vadd.f32 0.0, %v5668
        %v5670 = vpop.f32.mrb[0].mxu0
        %5671 = vmatprep.mubr.bf16.mxu0 0
        %5672 = vmatmul.mubr.bf16.gmra.mrb[0].mxu0 %v5541
        %v5673 = vpop.f32.mrb[0].mxu0
        %v5674 = vadd.f32 0.0, %v5673
        %v5675 = vpop.f32.mrb[0].mxu0
        %v5676 = vpop.f32.mrb[0].mxu0
        %v5677 = vadd.f32 0.0, %v5676
        %v5678 = vpop.f32.mrb[0].mxu0
        %5679 = vmatprep.mubr.bf16.mxu0 0
        %5680 = vmatmul.mubr.bf16.gmra.mrb[0].mxu0 %v5543
        %v5681 = vpop.f32.mrb[0].mxu0
        %v5682 = vadd.f32 0.0, %v5681
        %v5683 = vpop.f32.mrb[0].mxu0
        %v5684 = vpop.f32.mrb[0].mxu0
        %v5685 = vadd.f32 0.0, %v5684
        %v5686 = vpop.f32.mrb[0].mxu0
        %5687 = vmatprep.mubr.bf16.mxu0 0
        %5688 = vmatmul.mubr.bf16.gmra.mrb[0].mxu0 %v5545
        %v5689 = vpop.f32.mrb[0].mxu0
        %v5690 = vadd.f32 0.0, %v5689
        %v5691 = vpop.f32.mrb[0].mxu0
        %v5692 = vpop.f32.mrb[0].mxu0
        %v5693 = vadd.f32 0.0, %v5692
        %v5694 = vpop.f32.mrb[0].mxu0
        %5695 = vmatprep.mubr.bf16.mxu0 0
        %5696 = vmatmul.mubr.bf16.gmra.mrb[0].mxu0 %v5547
        %v5697 = vpop.f32.mrb[0].mxu0
        %v5698 = vadd.f32 0.0, %v5697
        %v5699 = vpop.f32.mrb[0].mxu0
        %v5700 = vpop.f32.mrb[0].mxu0
        %v5701 = vadd.f32 0.0, %v5700
        %v5702 = vpop.f32.mrb[0].mxu0
        %5703 = vmatprep.mubr.bf16.mxu0 0
        %5704 = vmatmul.mubr.bf16.gmra.mrb[0].mxu0 %v5549
        %v5705 = vpop.f32.mrb[0].mxu0
        %v5706 = vadd.f32 0.0, %v5705
        %v5707 = vpop.f32.mrb[0].mxu0
        %v5708 = vpop.f32.mrb[0].mxu0
        %v5709 = vadd.f32 0.0, %v5708
        %v5710 = vpop.f32.mrb[0].mxu0
        %5711 = vdwg.mxu0
        %v5712 = vadd.f32 %v4812, %v5586
        %v5713 = vadd.f32 %v4815, %v5589
        %v5714 = vadd.f32 %v4820, %v5594
        %v5715 = vadd.f32 %v4823, %v5597
        %v5716 = vadd.f32 %v4828, %v5602
        %v5717 = vadd.f32 %v4831, %v5605
        %v5718 = vadd.f32 %v4836, %v5610
        %v5719 = vadd.f32 %v4839, %v5613
        %v5720 = vadd.f32 %v4844, %v5618
        %v5721 = vadd.f32 %v4847, %v5621
        %v5722 = vadd.f32 %v4852, %v5626
        %v5723 = vadd.f32 %v4855, %v5629
        %v5724 = vadd.f32 %v4860, %v5634
        %v5725 = vadd.f32 %v4863, %v5637
        %v5726 = vadd.f32 %v4868, %v5642
        %v5727 = vadd.f32 %v4871, %v5645
        %v5728 = vadd.f32 %v4876, %v5650
        %v5729 = vadd.f32 %v4879, %v5653
        %v5730 = vadd.f32 %v4884, %v5658
        %v5731 = vadd.f32 %v4887, %v5661
        %v5732 = vadd.f32 %v4892, %v5666
        %v5733 = vadd.f32 %v4895, %v5669
        %v5734 = vadd.f32 %v4900, %v5674
        %v5735 = vadd.f32 %v4903, %v5677
        %v5736 = vadd.f32 %v4908, %v5682
        %v5737 = vadd.f32 %v4911, %v5685
        %v5738 = vadd.f32 %v4916, %v5690
        %v5739 = vadd.f32 %v4919, %v5693
        %v5740 = vadd.f32 %v4924, %v5698
        %v5741 = vadd.f32 %v4927, %v5701
        %v5742 = vadd.f32 %v4932, %v5706
        %v5743 = vadd.f32 %v4935, %v5709
        %v5745 = vlaneseq
        %v5746 = vshrl.u32 %v5745, 7
        %v5747 = vsub.s32 0, %v5746
        %v5748 = vrot.slane %v3386, %v5747
        %v5750 = vadd.f32 %v5712, %v5748
        %v5751 = vadd.f32 %v5713, %v5748
        %v5752 = vadd.f32 %v5714, %v5748
        %v5753 = vadd.f32 %v5715, %v5748
        %v5754 = vadd.f32 %v5716, %v5748
        %v5755 = vadd.f32 %v5717, %v5748
        %v5756 = vadd.f32 %v5718, %v5748
        %v5757 = vadd.f32 %v5719, %v5748
        %v5758 = vadd.f32 %v5720, %v5748
        %v5759 = vadd.f32 %v5721, %v5748
        %v5760 = vadd.f32 %v5722, %v5748
        %v5761 = vadd.f32 %v5723, %v5748
        %v5762 = vadd.f32 %v5724, %v5748
        %v5763 = vadd.f32 %v5725, %v5748
        %v5764 = vadd.f32 %v5726, %v5748
        %v5765 = vadd.f32 %v5727, %v5748
        %v5766 = vadd.f32 %v5728, %v5748
        %v5767 = vadd.f32 %v5729, %v5748
        %v5768 = vadd.f32 %v5730, %v5748
        %v5769 = vadd.f32 %v5731, %v5748
        %v5770 = vadd.f32 %v5732, %v5748
        %v5771 = vadd.f32 %v5733, %v5748
        %v5772 = vadd.f32 %v5734, %v5748
        %v5773 = vadd.f32 %v5735, %v5748
        %v5774 = vadd.f32 %v5736, %v5748
        %v5775 = vadd.f32 %v5737, %v5748
        %v5776 = vadd.f32 %v5738, %v5748
        %v5777 = vadd.f32 %v5739, %v5748
        %v5778 = vadd.f32 %v5740, %v5748
        %v5779 = vadd.f32 %v5741, %v5748
        %v5780 = vadd.f32 %v5742, %v5748
        %v5781 = vadd.f32 %v5743, %v5748
        %v5782 = vmax.f32 %v5750, 0.0
        %v5783 = vmax.f32 %v5751, 0.0
        %v5784 = vmax.f32 %v5752, 0.0
        %v5785 = vmax.f32 %v5753, 0.0
        %v5786 = vmax.f32 %v5754, 0.0
        %v5787 = vmax.f32 %v5755, 0.0
        %v5788 = vmax.f32 %v5756, 0.0
        %v5789 = vmax.f32 %v5757, 0.0
        %v5790 = vmax.f32 %v5758, 0.0
        %v5791 = vmax.f32 %v5759, 0.0
        %v5792 = vmax.f32 %v5760, 0.0
        %v5793 = vmax.f32 %v5761, 0.0
        %v5794 = vmax.f32 %v5762, 0.0
        %v5795 = vmax.f32 %v5763, 0.0
        %v5796 = vmax.f32 %v5764, 0.0
        %v5797 = vmax.f32 %v5765, 0.0
        %v5798 = vmax.f32 %v5766, 0.0
        %v5799 = vmax.f32 %v5767, 0.0
        %v5800 = vmax.f32 %v5768, 0.0
        %v5801 = vmax.f32 %v5769, 0.0
        %v5802 = vmax.f32 %v5770, 0.0
        %v5803 = vmax.f32 %v5771, 0.0
        %v5804 = vmax.f32 %v5772, 0.0
        %v5805 = vmax.f32 %v5773, 0.0
        %v5806 = vmax.f32 %v5774, 0.0
        %v5807 = vmax.f32 %v5775, 0.0
        %v5808 = vmax.f32 %v5776, 0.0
        %v5809 = vmax.f32 %v5777, 0.0
        %v5810 = vmax.f32 %v5778, 0.0
        %v5811 = vmax.f32 %v5779, 0.0
        %v5812 = vmax.f32 %v5780, 0.0
        %v5813 = vmax.f32 %v5781, 0.0
      $region53: #{tpu_custom_call.1} parent=47 // loop_footer
        %s2896 = sadd.s32 1, %s2892
      $region54: #{tpu_custom_call.1} parent=47 // loop_footer_branch
        %2891 = sbr.rel target = $region50
      $region55: #{tpu_custom_call.1} parent=47 // loop_exit
        _
      %v5846 = vrot.slane %v2897, 7
      %v5847 = vrot.slane %v2898, 7
      %v5848 = vsel %vm364, %v5846, %v5847
      %v5849 = vrot.slane %v2899, 7
      %v5850 = vrot.slane %v2900, 7
      %v5851 = vsel %vm364, %v5849, %v5850
      %v5852 = vrot.slane %v2901, 7
      %v5853 = vrot.slane %v2902, 7
      %v5854 = vsel %vm364, %v5852, %v5853
      %v5855 = vrot.slane %v2903, 7
      %v5856 = vrot.slane %v2904, 7
      %v5857 = vsel %vm364, %v5855, %v5856
      %v5858 = vrot.slane %v2905, 7
      %v5859 = vrot.slane %v2906, 7
      %v5860 = vsel %vm364, %v5858, %v5859
      %v5861 = vrot.slane %v2907, 7
      %v5862 = vrot.slane %v2908, 7
      %v5863 = vsel %vm364, %v5861, %v5862
      %v5864 = vrot.slane %v2909, 7
      %v5865 = vrot.slane %v2910, 7
      %v5866 = vsel %vm364, %v5864, %v5865
      %v5867 = vrot.slane %v2911, 7
      %v5868 = vrot.slane %v2912, 7
      %v5869 = vsel %vm364, %v5867, %v5868
      %v5870 = vrot.slane %v2913, 7
      %v5871 = vrot.slane %v2914, 7
      %v5872 = vsel %vm364, %v5870, %v5871
      %v5873 = vrot.slane %v2915, 7
      %v5874 = vrot.slane %v2916, 7
      %v5875 = vsel %vm364, %v5873, %v5874
      %v5876 = vrot.slane %v2917, 7
      %v5877 = vrot.slane %v2918, 7
      %v5878 = vsel %vm364, %v5876, %v5877
      %v5879 = vrot.slane %v2919, 7
      %v5880 = vrot.slane %v2920, 7
      %v5881 = vsel %vm364, %v5879, %v5880
      %v5882 = vrot.slane %v2921, 7
      %v5883 = vrot.slane %v2922, 7
      %v5884 = vsel %vm364, %v5882, %v5883
      %v5885 = vrot.slane %v2923, 7
      %v5886 = vrot.slane %v2924, 7
      %v5887 = vsel %vm364, %v5885, %v5886
      %v5888 = vrot.slane %v2925, 7
      %v5889 = vrot.slane %v2926, 7
      %v5890 = vsel %vm364, %v5888, %v5889
      %v5891 = vrot.slane %v2927, 7
      %v5892 = vrot.slane %v2928, 7
      %v5893 = vsel %vm364, %v5891, %v5892
      %v5942 = vsel %vm364, 0.0, %v5846
      %v5943 = vsel %vm364, 0.0, %v5849
      %v5944 = vsel %vm364, 0.0, %v5852
      %v5945 = vsel %vm364, 0.0, %v5855
      %v5946 = vsel %vm364, 0.0, %v5858
      %v5947 = vsel %vm364, 0.0, %v5861
      %v5948 = vsel %vm364, 0.0, %v5864
      %v5949 = vsel %vm364, 0.0, %v5867
      %v5950 = vsel %vm364, 0.0, %v5870
      %v5951 = vsel %vm364, 0.0, %v5873
      %v5952 = vsel %vm364, 0.0, %v5876
      %v5953 = vsel %vm364, 0.0, %v5879
      %v5954 = vsel %vm364, 0.0, %v5882
      %v5955 = vsel %vm364, 0.0, %v5885
      %v5956 = vsel %vm364, 0.0, %v5888
      %v5957 = vsel %vm364, 0.0, %v5891
      %v5958 = vsel %vm364, %v5847, 0.0
      %v5959 = vsel %vm364, %v5850, 0.0
      %v5960 = vsel %vm364, %v5853, 0.0
      %v5961 = vsel %vm364, %v5856, 0.0
      %v5962 = vsel %vm364, %v5859, 0.0
      %v5963 = vsel %vm364, %v5862, 0.0
      %v5964 = vsel %vm364, %v5865, 0.0
      %v5965 = vsel %vm364, %v5868, 0.0
      %v5966 = vsel %vm364, %v5871, 0.0
      %v5967 = vsel %vm364, %v5874, 0.0
      %v5968 = vsel %vm364, %v5877, 0.0
      %v5969 = vsel %vm364, %v5880, 0.0
      %v5970 = vsel %vm364, %v5883, 0.0
      %v5971 = vsel %vm364, %v5886, 0.0
      %v5972 = vsel %vm364, %v5889, 0.0
      %v5973 = vsel %vm364, %v5892, 0.0
      %v5974 = vpack.c.bf16 %v5848, %v5942
      %v5975 = vpack.c.bf16 %v5958, %v5958
      %v5976 = vpack.c.bf16 %v5851, %v5943
      %v5977 = vpack.c.bf16 %v5959, %v5959
      %v5978 = vpack.c.bf16 %v5854, %v5944
      %v5979 = vpack.c.bf16 %v5960, %v5960
      %v5980 = vpack.c.bf16 %v5857, %v5945
      %v5981 = vpack.c.bf16 %v5961, %v5961
      %v5982 = vpack.c.bf16 %v5860, %v5946
      %v5983 = vpack.c.bf16 %v5962, %v5962
      %v5984 = vpack.c.bf16 %v5863, %v5947
      %v5985 = vpack.c.bf16 %v5963, %v5963
      %v5986 = vpack.c.bf16 %v5866, %v5948
      %v5987 = vpack.c.bf16 %v5964, %v5964
      %v5988 = vpack.c.bf16 %v5869, %v5949
      %v5989 = vpack.c.bf16 %v5965, %v5965
      %v5990 = vpack.c.bf16 %v5872, %v5950
      %v5991 = vpack.c.bf16 %v5966, %v5966
      %v5992 = vpack.c.bf16 %v5875, %v5951
      %v5993 = vpack.c.bf16 %v5967, %v5967
      %v5994 = vpack.c.bf16 %v5878, %v5952
      %v5995 = vpack.c.bf16 %v5968, %v5968
      %v5996 = vpack.c.bf16 %v5881, %v5953
      %v5997 = vpack.c.bf16 %v5969, %v5969
      %v5998 = vpack.c.bf16 %v5884, %v5954
      %v5999 = vpack.c.bf16 %v5970, %v5970
      %v6000 = vpack.c.bf16 %v5887, %v5955
      %v6001 = vpack.c.bf16 %v5971, %v5971
      %v6002 = vpack.c.bf16 %v5890, %v5956
      %v6003 = vpack.c.bf16 %v5972, %v5972
      %v6004 = vpack.c.bf16 %v5893, %v5957
      %v6005 = vpack.c.bf16 %v5973, %v5973
      %v6038 = vunpack.c.l.b16 %v5974
      %v6039 = vunpack.c.h.b16 %v5974
      %v6040 = vunpack.c.l.b16 %v5975
      %v6041 = vunpack.c.l.b16 %v5976
      %v6042 = vunpack.c.h.b16 %v5976
      %v6043 = vunpack.c.l.b16 %v5977
      %v6044 = vunpack.c.l.b16 %v5978
      %v6045 = vunpack.c.h.b16 %v5978
      %v6046 = vunpack.c.l.b16 %v5979
      %v6047 = vunpack.c.l.b16 %v5980
      %v6048 = vunpack.c.h.b16 %v5980
      %v6049 = vunpack.c.l.b16 %v5981
      %v6050 = vunpack.c.l.b16 %v5982
      %v6051 = vunpack.c.h.b16 %v5982
      %v6052 = vunpack.c.l.b16 %v5983
      %v6053 = vunpack.c.l.b16 %v5984
      %v6054 = vunpack.c.h.b16 %v5984
      %v6055 = vunpack.c.l.b16 %v5985
      %v6056 = vunpack.c.l.b16 %v5986
      %v6057 = vunpack.c.h.b16 %v5986
      %v6058 = vunpack.c.l.b16 %v5987
      %v6059 = vunpack.c.l.b16 %v5988
      %v6060 = vunpack.c.h.b16 %v5988
      %v6061 = vunpack.c.l.b16 %v5989
      %v6062 = vunpack.c.l.b16 %v5990
      %v6063 = vunpack.c.h.b16 %v5990
      %v6064 = vunpack.c.l.b16 %v5991
      %v6065 = vunpack.c.l.b16 %v5992
      %v6066 = vunpack.c.h.b16 %v5992
      %v6067 = vunpack.c.l.b16 %v5993
      %v6068 = vunpack.c.l.b16 %v5994
      %v6069 = vunpack.c.h.b16 %v5994
      %v6070 = vunpack.c.l.b16 %v5995
      %v6071 = vunpack.c.l.b16 %v5996
      %v6072 = vunpack.c.h.b16 %v5996
      %v6073 = vunpack.c.l.b16 %v5997
      %v6074 = vunpack.c.l.b16 %v5998
      %v6075 = vunpack.c.h.b16 %v5998
      %v6076 = vunpack.c.l.b16 %v5999
      %v6077 = vunpack.c.l.b16 %v6000
      %v6078 = vunpack.c.h.b16 %v6000
      %v6079 = vunpack.c.l.b16 %v6001
      %v6080 = vunpack.c.l.b16 %v6002
      %v6081 = vunpack.c.h.b16 %v6002
      %v6082 = vunpack.c.l.b16 %v6003
      %v6083 = vunpack.c.l.b16 %v6004
      %v6084 = vunpack.c.h.b16 %v6004
      %v6085 = vunpack.c.l.b16 %v6005
      %v6086 = vpack.c.b16 %v6038, %v6038
      %v6087 = vpack.c.b16 %v6039, %v6039
      %v6088 = vpack.c.b16 %v6040, %v6040
      %v6089 = vpack.c.b16 %v6041, %v6041
      %v6090 = vpack.c.b16 %v6042, %v6042
      %v6091 = vpack.c.b16 %v6043, %v6043
      %v6092 = vpack.c.b16 %v6044, %v6044
      %v6093 = vpack.c.b16 %v6045, %v6045
      %v6094 = vpack.c.b16 %v6046, %v6046
      %v6095 = vpack.c.b16 %v6047, %v6047
      %v6096 = vpack.c.b16 %v6048, %v6048
      %v6097 = vpack.c.b16 %v6049, %v6049
      %v6098 = vpack.c.b16 %v6050, %v6050
      %v6099 = vpack.c.b16 %v6051, %v6051
      %v6100 = vpack.c.b16 %v6052, %v6052
      %v6101 = vpack.c.b16 %v6053, %v6053
      %v6102 = vpack.c.b16 %v6054, %v6054
      %v6103 = vpack.c.b16 %v6055, %v6055
      %v6104 = vpack.c.b16 %v6056, %v6056
      %v6105 = vpack.c.b16 %v6057, %v6057
      %v6106 = vpack.c.b16 %v6058, %v6058
      %v6107 = vpack.c.b16 %v6059, %v6059
      %v6108 = vpack.c.b16 %v6060, %v6060
      %v6109 = vpack.c.b16 %v6061, %v6061
      %v6110 = vpack.c.b16 %v6062, %v6062
      %v6111 = vpack.c.b16 %v6063, %v6063
      %v6112 = vpack.c.b16 %v6064, %v6064
      %v6113 = vpack.c.b16 %v6065, %v6065
      %v6114 = vpack.c.b16 %v6066, %v6066
      %v6115 = vpack.c.b16 %v6067, %v6067
      %v6116 = vpack.c.b16 %v6068, %v6068
      %v6117 = vpack.c.b16 %v6069, %v6069
      %v6118 = vpack.c.b16 %v6070, %v6070
      %v6119 = vpack.c.b16 %v6071, %v6071
      %v6120 = vpack.c.b16 %v6072, %v6072
      %v6121 = vpack.c.b16 %v6073, %v6073
      %v6122 = vpack.c.b16 %v6074, %v6074
      %v6123 = vpack.c.b16 %v6075, %v6075
      %v6124 = vpack.c.b16 %v6076, %v6076
      %v6125 = vpack.c.b16 %v6077, %v6077
      %v6126 = vpack.c.b16 %v6078, %v6078
      %v6127 = vpack.c.b16 %v6079, %v6079
      %v6128 = vpack.c.b16 %v6080, %v6080
      %v6129 = vpack.c.b16 %v6081, %v6081
      %v6130 = vpack.c.b16 %v6082, %v6082
      %v6131 = vpack.c.b16 %v6083, %v6083
      %v6132 = vpack.c.b16 %v6084, %v6084
      %v6133 = vpack.c.b16 %v6085, %v6085
      %s6182 = scalar_lea.vmem [#allocation3], 12
      %6183 = vst.msk [vmem:[%s6182] sm:$0xf] %vm291, %v6086
      %6184 = vst.msk [vmem:[%s6182 + $0x4] sm:$0xf] %vm291, %v6087
      %6185 = vst.msk [vmem:[%s6182 + $0x8] sm:$0x1] %vm294, %v6088
      %6186 = vst.msk [vmem:[%s6182 + $0xc] sm:$0xf] %vm291, %v6089
      %6187 = vst.msk [vmem:[%s6182 + $0x10] sm:$0xf] %vm291, %v6090
      %6188 = vst.msk [vmem:[%s6182 + $0x14] sm:$0x1] %vm294, %v6091
      %6189 = vst.msk [vmem:[%s6182 + $0x18] sm:$0xf] %vm291, %v6092
      %6190 = vst.msk [vmem:[%s6182 + $0x1c] sm:$0xf] %vm291, %v6093
      %6191 = vst.msk [vmem:[%s6182 + $0x20] sm:$0x1] %vm294, %v6094
      %6192 = vst.msk [vmem:[%s6182 + $0x24] sm:$0xf] %vm291, %v6095
      %6193 = vst.msk [vmem:[%s6182 + $0x28] sm:$0xf] %vm291, %v6096
      %6194 = vst.msk [vmem:[%s6182 + $0x2c] sm:$0x1] %vm294, %v6097
      %6195 = vst.msk [vmem:[%s6182 + $0x30] sm:$0xf] %vm291, %v6098
      %6196 = vst.msk [vmem:[%s6182 + $0x34] sm:$0xf] %vm291, %v6099
      %6197 = vst.msk [vmem:[%s6182 + $0x38] sm:$0x1] %vm294, %v6100
      %6198 = vst.msk [vmem:[%s6182 + $0x3c] sm:$0xf] %vm291, %v6101
      %6199 = vst.msk [vmem:[%s6182 + $0x40] sm:$0xf] %vm291, %v6102
      %6200 = vst.msk [vmem:[%s6182 + $0x44] sm:$0x1] %vm294, %v6103
      %6201 = vst.msk [vmem:[%s6182 + $0x48] sm:$0xf] %vm291, %v6104
      %6202 = vst.msk [vmem:[%s6182 + $0x4c] sm:$0xf] %vm291, %v6105
      %6203 = vst.msk [vmem:[%s6182 + $0x50] sm:$0x1] %vm294, %v6106
      %6204 = vst.msk [vmem:[%s6182 + $0x54] sm:$0xf] %vm291, %v6107
      %6205 = vst.msk [vmem:[%s6182 + $0x58] sm:$0xf] %vm291, %v6108
      %6206 = vst.msk [vmem:[%s6182 + $0x5c] sm:$0x1] %vm294, %v6109
      %6207 = vst.msk [vmem:[%s6182 + $0x60] sm:$0xf] %vm291, %v6110
      %6208 = vst.msk [vmem:[%s6182 + $0x64] sm:$0xf] %vm291, %v6111
      %6209 = vst.msk [vmem:[%s6182 + $0x68] sm:$0x1] %vm294, %v6112
      %6210 = vst.msk [vmem:[%s6182 + $0x6c] sm:$0xf] %vm291, %v6113
      %6211 = vst.msk [vmem:[%s6182 + $0x70] sm:$0xf] %vm291, %v6114
      %6212 = vst.msk [vmem:[%s6182 + $0x74] sm:$0x1] %vm294, %v6115
      %6213 = vst.msk [vmem:[%s6182 + $0x78] sm:$0xf] %vm291, %v6116
      %6214 = vst.msk [vmem:[%s6182 + $0x7c] sm:$0xf] %vm291, %v6117
      %6215 = vst.msk [vmem:[%s6182 + $0x80] sm:$0x1] %vm294, %v6118
      %6216 = vst.msk [vmem:[%s6182 + $0x84] sm:$0xf] %vm291, %v6119
      %6217 = vst.msk [vmem:[%s6182 + $0x88] sm:$0xf] %vm291, %v6120
      %6218 = vst.msk [vmem:[%s6182 + $0x8c] sm:$0x1] %vm294, %v6121
      %6219 = vst.msk [vmem:[%s6182 + $0x90] sm:$0xf] %vm291, %v6122
      %6220 = vst.msk [vmem:[%s6182 + $0x94] sm:$0xf] %vm291, %v6123
      %6221 = vst.msk [vmem:[%s6182 + $0x98] sm:$0x1] %vm294, %v6124
      %6222 = vst.msk [vmem:[%s6182 + $0x9c] sm:$0xf] %vm291, %v6125
      %6223 = vst.msk [vmem:[%s6182 + $0xa0] sm:$0xf] %vm291, %v6126
      %6224 = vst.msk [vmem:[%s6182 + $0xa4] sm:$0x1] %vm294, %v6127
      %6225 = vst.msk [vmem:[%s6182 + $0xa8] sm:$0xf] %vm291, %v6128
      %6226 = vst.msk [vmem:[%s6182 + $0xac] sm:$0xf] %vm291, %v6129
      %6227 = vst.msk [vmem:[%s6182 + $0xb0] sm:$0x1] %vm294, %v6130
      %6228 = vst.msk [vmem:[%s6182 + $0xb4] sm:$0xf] %vm291, %v6131
      %6229 = vst.msk [vmem:[%s6182 + $0xb8] sm:$0xf] %vm291, %v6132
      %6230 = vst.msk [vmem:[%s6182 + $0xbc] sm:$0x1] %vm294, %v6133
      %v6231 = vld [vmem:[%s5] sm:$0xf]
      %v6232 = vld [vmem:[%s5 + $0x4] sm:$0xf]
      %v6233 = vld [vmem:[%s5 + $0x8] sm:$0xf]
      %v6234 = vld [vmem:[%s5 + $0xc] sm:$0xf]
      %v6235 = vld [vmem:[%s5 + $0x10] sm:$0xf]
      %v6236 = vld [vmem:[%s5 + $0x14] sm:$0xf]
      %v6237 = vld [vmem:[%s5 + $0x18] sm:$0xf]
      %v6238 = vld [vmem:[%s5 + $0x1c] sm:$0xf]
      %v6239 = vld [vmem:[%s5 + $0x20] sm:$0xf]
      %v6240 = vld [vmem:[%s5 + $0x24] sm:$0xf]
      %v6241 = vld [vmem:[%s5 + $0x28] sm:$0xf]
      %v6242 = vld [vmem:[%s5 + $0x2c] sm:$0xf]
      %v6243 = vld [vmem:[%s5 + $0x30] sm:$0xf]
      %v6244 = vld [vmem:[%s5 + $0x34] sm:$0xf]
      %v6245 = vld [vmem:[%s5 + $0x38] sm:$0xf]
      %v6246 = vld [vmem:[%s5 + $0x3c] sm:$0xf]
      %v6247 = vld [vmem:[%s5 + $0x40] sm:$0xf]
      %v6248 = vld [vmem:[%s5 + $0x44] sm:$0xf]
      %v6249 = vld [vmem:[%s5 + $0x48] sm:$0xf]
      %v6250 = vld [vmem:[%s5 + $0x4c] sm:$0xf]
      %v6251 = vld [vmem:[%s5 + $0x50] sm:$0xf]
      %v6252 = vld [vmem:[%s5 + $0x54] sm:$0xf]
      %v6253 = vld [vmem:[%s5 + $0x58] sm:$0xf]
      %v6254 = vld [vmem:[%s5 + $0x5c] sm:$0xf]
      %v6255 = vld [vmem:[%s5 + $0x60] sm:$0xf]
      %v6256 = vld [vmem:[%s5 + $0x64] sm:$0xf]
      %v6257 = vld [vmem:[%s5 + $0x68] sm:$0xf]
      %v6258 = vld [vmem:[%s5 + $0x6c] sm:$0xf]
      %v6259 = vld [vmem:[%s5 + $0x70] sm:$0xf]
      %v6260 = vld [vmem:[%s5 + $0x74] sm:$0xf]
      %v6261 = vld [vmem:[%s5 + $0x78] sm:$0xf]
      %v6262 = vld [vmem:[%s5 + $0x7c] sm:$0xf]
      %v6263 = vld [vmem:[%s5 + $0x80] sm:$0xf]
      %v6264 = vld [vmem:[%s5 + $0x84] sm:$0xf]
      %v6265 = vld [vmem:[%s5 + $0x88] sm:$0xf]
      %v6266 = vld [vmem:[%s5 + $0x8c] sm:$0xf]
      %v6267 = vld [vmem:[#allocation4] sm:$0x1]
      %v6268 = vld [vmem:[#allocation3] sm:$0xf]
      %v6269 = vld [vmem:[#allocation3 + $0x4] sm:$0xf]
      %v6270 = vld [vmem:[#allocation3 + $0x8] sm:$0x1]
      %v6271 = vld [vmem:[#allocation3 + $0xc] sm:$0xf]
      %v6272 = vld [vmem:[#allocation3 + $0x10] sm:$0xf]
      %v6273 = vld [vmem:[#allocation3 + $0x14] sm:$0x1]
      %v6274 = vld [vmem:[#allocation3 + $0x18] sm:$0xf]
      %v6275 = vld [vmem:[#allocation3 + $0x1c] sm:$0xf]
      %v6276 = vld [vmem:[#allocation3 + $0x20] sm:$0x1]
      %v6277 = vld [vmem:[#allocation3 + $0x24] sm:$0xf]
      %v6278 = vld [vmem:[#allocation3 + $0x28] sm:$0xf]
      %v6279 = vld [vmem:[#allocation3 + $0x2c] sm:$0x1]
      %v6280 = vld [vmem:[#allocation3 + $0x30] sm:$0xf]
      %v6281 = vld [vmem:[#allocation3 + $0x34] sm:$0xf]
      %v6282 = vld [vmem:[#allocation3 + $0x38] sm:$0x1]
      %v6283 = vld [vmem:[#allocation3 + $0x3c] sm:$0xf]
      %v6284 = vld [vmem:[#allocation3 + $0x40] sm:$0xf]
      %v6285 = vld [vmem:[#allocation3 + $0x44] sm:$0x1]
      %v6286 = vld [vmem:[#allocation3 + $0x48] sm:$0xf]
      %v6287 = vld [vmem:[#allocation3 + $0x4c] sm:$0xf]
      %v6288 = vld [vmem:[#allocation3 + $0x50] sm:$0x1]
      %v6289 = vld [vmem:[#allocation3 + $0x54] sm:$0xf]
      %v6290 = vld [vmem:[#allocation3 + $0x58] sm:$0xf]
      %v6291 = vld [vmem:[#allocation3 + $0x5c] sm:$0x1]
      %v6292 = vld [vmem:[#allocation3 + $0x60] sm:$0xf]
      %v6293 = vld [vmem:[#allocation3 + $0x64] sm:$0xf]
      %v6294 = vld [vmem:[#allocation3 + $0x68] sm:$0x1]
      %v6295 = vld [vmem:[#allocation3 + $0x6c] sm:$0xf]
      %v6296 = vld [vmem:[#allocation3 + $0x70] sm:$0xf]
      %v6297 = vld [vmem:[#allocation3 + $0x74] sm:$0x1]
      %v6298 = vld [vmem:[#allocation3 + $0x78] sm:$0xf]
      %v6299 = vld [vmem:[#allocation3 + $0x7c] sm:$0xf]
      %v6300 = vld [vmem:[#allocation3 + $0x80] sm:$0x1]
      %v6301 = vld [vmem:[#allocation3 + $0x84] sm:$0xf]
      %v6302 = vld [vmem:[#allocation3 + $0x88] sm:$0xf]
      %v6303 = vld [vmem:[#allocation3 + $0x8c] sm:$0x1]
      %v6304 = vld [vmem:[#allocation3 + $0x90] sm:$0xf]
      %v6305 = vld [vmem:[#allocation3 + $0x94] sm:$0xf]
      %v6306 = vld [vmem:[#allocation3 + $0x98] sm:$0x1]
      %v6307 = vld [vmem:[#allocation3 + $0x9c] sm:$0xf]
      %v6308 = vld [vmem:[#allocation3 + $0xa0] sm:$0xf]
      %v6309 = vld [vmem:[#allocation3 + $0xa4] sm:$0x1]
      %v6310 = vld [vmem:[#allocation3 + $0xa8] sm:$0xf]
      %v6311 = vld [vmem:[#allocation3 + $0xac] sm:$0xf]
      %v6312 = vld [vmem:[#allocation3 + $0xb0] sm:$0x1]
      %v6313 = vld [vmem:[#allocation3 + $0xb4] sm:$0xf]
      %v6314 = vld [vmem:[#allocation3 + $0xb8] sm:$0xf]
      %v6315 = vld [vmem:[#allocation3 + $0xbc] sm:$0x1]
      %v6348 = vunpack.c.l.b16 %v6268
      %v6349 = vunpack.c.l.b16 %v6269
      %v6350 = vunpack.c.l.b16 %v6271
      %v6351 = vunpack.c.l.b16 %v6272
      %v6352 = vunpack.c.l.b16 %v6274
      %v6353 = vunpack.c.l.b16 %v6275
      %v6354 = vunpack.c.l.b16 %v6277
      %v6355 = vunpack.c.l.b16 %v6278
      %v6356 = vunpack.c.l.b16 %v6280
      %v6357 = vunpack.c.l.b16 %v6281
      %v6358 = vunpack.c.l.b16 %v6283
      %v6359 = vunpack.c.l.b16 %v6284
      %v6360 = vunpack.c.l.b16 %v6286
      %v6361 = vunpack.c.l.b16 %v6287
      %v6362 = vunpack.c.l.b16 %v6289
      %v6363 = vunpack.c.l.b16 %v6290
      %v6364 = vunpack.c.l.b16 %v6292
      %v6365 = vunpack.c.l.b16 %v6293
      %v6366 = vunpack.c.l.b16 %v6295
      %v6367 = vunpack.c.l.b16 %v6296
      %v6368 = vunpack.c.l.b16 %v6298
      %v6369 = vunpack.c.l.b16 %v6299
      %v6370 = vunpack.c.l.b16 %v6301
      %v6371 = vunpack.c.l.b16 %v6302
      %v6372 = vunpack.c.l.b16 %v6304
      %v6373 = vunpack.c.l.b16 %v6305
      %v6374 = vunpack.c.l.b16 %v6307
      %v6375 = vunpack.c.l.b16 %v6308
      %v6376 = vunpack.c.l.b16 %v6310
      %v6377 = vunpack.c.l.b16 %v6311
      %v6378 = vunpack.c.l.b16 %v6313
      %v6379 = vunpack.c.l.b16 %v6314
      %v6380 = vpack.c.b16 %v6349, %v6348
      %v6381 = vpack.c.b16 %v6351, %v6350
      %v6382 = vpack.c.b16 %v6353, %v6352
      %v6383 = vpack.c.b16 %v6355, %v6354
      %v6384 = vpack.c.b16 %v6357, %v6356
      %v6385 = vpack.c.b16 %v6359, %v6358
      %v6386 = vpack.c.b16 %v6361, %v6360
      %v6387 = vpack.c.b16 %v6363, %v6362
      %v6388 = vpack.c.b16 %v6365, %v6364
      %v6389 = vpack.c.b16 %v6367, %v6366
      %v6390 = vpack.c.b16 %v6369, %v6368
      %v6391 = vpack.c.b16 %v6371, %v6370
      %v6392 = vpack.c.b16 %v6373, %v6372
      %v6393 = vpack.c.b16 %v6375, %v6374
      %v6394 = vpack.c.b16 %v6377, %v6376
      %v6395 = vpack.c.b16 %v6379, %v6378
      %v6412 = vunpack.c.l.b16 %v6270
      %v6413 = vunpack.c.l.b16 %v6273
      %v6414 = vunpack.c.l.b16 %v6276
      %v6415 = vunpack.c.l.b16 %v6279
      %v6416 = vunpack.c.l.b16 %v6282
      %v6417 = vunpack.c.l.b16 %v6285
      %v6418 = vunpack.c.l.b16 %v6288
      %v6419 = vunpack.c.l.b16 %v6291
      %v6420 = vunpack.c.l.b16 %v6294
      %v6421 = vunpack.c.l.b16 %v6297
      %v6422 = vunpack.c.l.b16 %v6300
      %v6423 = vunpack.c.l.b16 %v6303
      %v6424 = vunpack.c.l.b16 %v6306
      %v6425 = vunpack.c.l.b16 %v6309
      %v6426 = vunpack.c.l.b16 %v6312
      %v6427 = vunpack.c.l.b16 %v6315
      %v6428 = vpack.c.b16 %v6412, %v6412
      %v6429 = vpack.c.b16 %v6413, %v6413
      %v6430 = vpack.c.b16 %v6414, %v6414
      %v6431 = vpack.c.b16 %v6415, %v6415
      %v6432 = vpack.c.b16 %v6416, %v6416
      %v6433 = vpack.c.b16 %v6417, %v6417
      %v6434 = vpack.c.b16 %v6418, %v6418
      %v6435 = vpack.c.b16 %v6419, %v6419
      %v6436 = vpack.c.b16 %v6420, %v6420
      %v6437 = vpack.c.b16 %v6421, %v6421
      %v6438 = vpack.c.b16 %v6422, %v6422
      %v6439 = vpack.c.b16 %v6423, %v6423
      %v6440 = vpack.c.b16 %v6424, %v6424
      %v6441 = vpack.c.b16 %v6425, %v6425
      %v6442 = vpack.c.b16 %v6426, %v6426
      %v6443 = vpack.c.b16 %v6427, %v6427
      %vm6444 = vsmask.f32 7424
      %v6446 = vshrl.u32 %v6380, 16
      %v6448 = vshll.u32 %v6380, 16
      %v6450 = vrot.slane %v6448, 1
      %v6451 = vor.u32 %v6446, %v6450
      %v6453 = vshll.u32 %v6428, 16
      %v6455 = vrot.slane %v6453, 1
      %v6456 = vsel %vm6444, %v6451, %v6455
      %v6458 = vshrl.u32 %v6381, 16
      %v6460 = vshll.u32 %v6381, 16
      %v6462 = vrot.slane %v6460, 1
      %v6463 = vor.u32 %v6458, %v6462
      %v6465 = vshll.u32 %v6429, 16
      %v6467 = vrot.slane %v6465, 1
      %v6468 = vsel %vm6444, %v6463, %v6467
      %v6470 = vshrl.u32 %v6382, 16
      %v6472 = vshll.u32 %v6382, 16
      %v6474 = vrot.slane %v6472, 1
      %v6475 = vor.u32 %v6470, %v6474
      %v6477 = vshll.u32 %v6430, 16
      %v6479 = vrot.slane %v6477, 1
      %v6480 = vsel %vm6444, %v6475, %v6479
      %v6482 = vshrl.u32 %v6383, 16
      %v6484 = vshll.u32 %v6383, 16
      %v6486 = vrot.slane %v6484, 1
      %v6487 = vor.u32 %v6482, %v6486
      %v6489 = vshll.u32 %v6431, 16
      %v6491 = vrot.slane %v6489, 1
      %v6492 = vsel %vm6444, %v6487, %v6491
      %v6494 = vshrl.u32 %v6384, 16
      %v6496 = vshll.u32 %v6384, 16
      %v6498 = vrot.slane %v6496, 1
      %v6499 = vor.u32 %v6494, %v6498
      %v6501 = vshll.u32 %v6432, 16
      %v6503 = vrot.slane %v6501, 1
      %v6504 = vsel %vm6444, %v6499, %v6503
      %v6506 = vshrl.u32 %v6385, 16
      %v6508 = vshll.u32 %v6385, 16
      %v6510 = vrot.slane %v6508, 1
      %v6511 = vor.u32 %v6506, %v6510
      %v6513 = vshll.u32 %v6433, 16
      %v6515 = vrot.slane %v6513, 1
      %v6516 = vsel %vm6444, %v6511, %v6515
      %v6518 = vshrl.u32 %v6386, 16
      %v6520 = vshll.u32 %v6386, 16
      %v6522 = vrot.slane %v6520, 1
      %v6523 = vor.u32 %v6518, %v6522
      %v6525 = vshll.u32 %v6434, 16
      %v6527 = vrot.slane %v6525, 1
      %v6528 = vsel %vm6444, %v6523, %v6527
      %v6530 = vshrl.u32 %v6387, 16
      %v6532 = vshll.u32 %v6387, 16
      %v6534 = vrot.slane %v6532, 1
      %v6535 = vor.u32 %v6530, %v6534
      %v6537 = vshll.u32 %v6435, 16
      %v6539 = vrot.slane %v6537, 1
      %v6540 = vsel %vm6444, %v6535, %v6539
      %v6542 = vshrl.u32 %v6388, 16
      %v6544 = vshll.u32 %v6388, 16
      %v6546 = vrot.slane %v6544, 1
      %v6547 = vor.u32 %v6542, %v6546
      %v6549 = vshll.u32 %v6436, 16
      %v6551 = vrot.slane %v6549, 1
      %v6552 = vsel %vm6444, %v6547, %v6551
      %v6554 = vshrl.u32 %v6389, 16
      %v6556 = vshll.u32 %v6389, 16
      %v6558 = vrot.slane %v6556, 1
      %v6559 = vor.u32 %v6554, %v6558
      %v6561 = vshll.u32 %v6437, 16
      %v6563 = vrot.slane %v6561, 1
      %v6564 = vsel %vm6444, %v6559, %v6563
      %v6566 = vshrl.u32 %v6390, 16
      %v6568 = vshll.u32 %v6390, 16
      %v6570 = vrot.slane %v6568, 1
      %v6571 = vor.u32 %v6566, %v6570
      %v6573 = vshll.u32 %v6438, 16
      %v6575 = vrot.slane %v6573, 1
      %v6576 = vsel %vm6444, %v6571, %v6575
      %v6578 = vshrl.u32 %v6391, 16
      %v6580 = vshll.u32 %v6391, 16
      %v6582 = vrot.slane %v6580, 1
      %v6583 = vor.u32 %v6578, %v6582
      %v6585 = vshll.u32 %v6439, 16
      %v6587 = vrot.slane %v6585, 1
      %v6588 = vsel %vm6444, %v6583, %v6587
      %v6590 = vshrl.u32 %v6392, 16
      %v6592 = vshll.u32 %v6392, 16
      %v6594 = vrot.slane %v6592, 1
      %v6595 = vor.u32 %v6590, %v6594
      %v6597 = vshll.u32 %v6440, 16
      %v6599 = vrot.slane %v6597, 1
      %v6600 = vsel %vm6444, %v6595, %v6599
      %v6602 = vshrl.u32 %v6393, 16
      %v6604 = vshll.u32 %v6393, 16
      %v6606 = vrot.slane %v6604, 1
      %v6607 = vor.u32 %v6602, %v6606
      %v6609 = vshll.u32 %v6441, 16
      %v6611 = vrot.slane %v6609, 1
      %v6612 = vsel %vm6444, %v6607, %v6611
      %v6614 = vshrl.u32 %v6394, 16
      %v6616 = vshll.u32 %v6394, 16
      %v6618 = vrot.slane %v6616, 1
      %v6619 = vor.u32 %v6614, %v6618
      %v6621 = vshll.u32 %v6442, 16
      %v6623 = vrot.slane %v6621, 1
      %v6624 = vsel %vm6444, %v6619, %v6623
      %v6626 = vshrl.u32 %v6395, 16
      %v6628 = vshll.u32 %v6395, 16
      %v6630 = vrot.slane %v6628, 1
      %v6631 = vor.u32 %v6626, %v6630
      %v6633 = vshll.u32 %v6443, 16
      %v6635 = vrot.slane %v6633, 1
      %v6636 = vsel %vm6444, %v6631, %v6635
      %6637 = vrot.lane.b32.xlu0 %v6456, 32
      %v6638 = vpop.permute.xlu0 %6637
      %6639 = vrot.lane.b32.xlu0 %v6468, 32
      %v6640 = vpop.permute.xlu0 %6639
      %6641 = vrot.lane.b32.xlu0 %v6480, 32
      %v6642 = vpop.permute.xlu0 %6641
      %6643 = vrot.lane.b32.xlu0 %v6492, 32
      %v6644 = vpop.permute.xlu0 %6643
      %6645 = vrot.lane.b32.xlu0 %v6504, 32
      %v6646 = vpop.permute.xlu0 %6645
      %6647 = vrot.lane.b32.xlu0 %v6516, 32
      %v6648 = vpop.permute.xlu0 %6647
      %6649 = vrot.lane.b32.xlu0 %v6528, 32
      %v6650 = vpop.permute.xlu0 %6649
      %6651 = vrot.lane.b32.xlu0 %v6540, 32
      %v6652 = vpop.permute.xlu0 %6651
      %6653 = vrot.lane.b32.xlu0 %v6552, 32
      %v6654 = vpop.permute.xlu0 %6653
      %6655 = vrot.lane.b32.xlu0 %v6564, 32
      %v6656 = vpop.permute.xlu0 %6655
      %6657 = vrot.lane.b32.xlu0 %v6576, 32
      %v6658 = vpop.permute.xlu0 %6657
      %6659 = vrot.lane.b32.xlu0 %v6588, 32
      %v6660 = vpop.permute.xlu0 %6659
      %6661 = vrot.lane.b32.xlu0 %v6600, 32
      %v6662 = vpop.permute.xlu0 %6661
      %6663 = vrot.lane.b32.xlu0 %v6612, 32
      %v6664 = vpop.permute.xlu0 %6663
      %6665 = vrot.lane.b32.xlu0 %v6624, 32
      %v6666 = vpop.permute.xlu0 %6665
      %6667 = vrot.lane.b32.xlu0 %v6636, 32
      %v6668 = vpop.permute.xlu0 %6667
      %vm6669 = vcmask 1046528
      %v6670 = vrot.slane %v6380, 1
      %v6671 = vrot.slane %v6428, 1
      %v6672 = vsel %vm6669, %v6670, %v6671
      %v6673 = vrot.slane %v6381, 1
      %v6674 = vrot.slane %v6429, 1
      %v6675 = vsel %vm6669, %v6673, %v6674
      %v6676 = vrot.slane %v6382, 1
      %v6677 = vrot.slane %v6430, 1
      %v6678 = vsel %vm6669, %v6676, %v6677
      %v6679 = vrot.slane %v6383, 1
      %v6680 = vrot.slane %v6431, 1
      %v6681 = vsel %vm6669, %v6679, %v6680
      %v6682 = vrot.slane %v6384, 1
      %v6683 = vrot.slane %v6432, 1
      %v6684 = vsel %vm6669, %v6682, %v6683
      %v6685 = vrot.slane %v6385, 1
      %v6686 = vrot.slane %v6433, 1
      %v6687 = vsel %vm6669, %v6685, %v6686
      %v6688 = vrot.slane %v6386, 1
      %v6689 = vrot.slane %v6434, 1
      %v6690 = vsel %vm6669, %v6688, %v6689
      %v6691 = vrot.slane %v6387, 1
      %v6692 = vrot.slane %v6435, 1
      %v6693 = vsel %vm6669, %v6691, %v6692
      %v6694 = vrot.slane %v6388, 1
      %v6695 = vrot.slane %v6436, 1
      %v6696 = vsel %vm6669, %v6694, %v6695
      %v6697 = vrot.slane %v6389, 1
      %v6698 = vrot.slane %v6437, 1
      %v6699 = vsel %vm6669, %v6697, %v6698
      %v6700 = vrot.slane %v6390, 1
      %v6701 = vrot.slane %v6438, 1
      %v6702 = vsel %vm6669, %v6700, %v6701
      %v6703 = vrot.slane %v6391, 1
      %v6704 = vrot.slane %v6439, 1
      %v6705 = vsel %vm6669, %v6703, %v6704
      %v6706 = vrot.slane %v6392, 1
      %v6707 = vrot.slane %v6440, 1
      %v6708 = vsel %vm6669, %v6706, %v6707
      %v6709 = vrot.slane %v6393, 1
      %v6710 = vrot.slane %v6441, 1
      %v6711 = vsel %vm6669, %v6709, %v6710
      %v6712 = vrot.slane %v6394, 1
      %v6713 = vrot.slane %v6442, 1
      %v6714 = vsel %vm6669, %v6712, %v6713
      %v6715 = vrot.slane %v6395, 1
      %v6716 = vrot.slane %v6443, 1
      %v6717 = vsel %vm6669, %v6715, %v6716
      %6718 = vrot.lane.b32.xlu0 %v6672, 64
      %v6719 = vpop.permute.xlu0 %6718
      %6720 = vrot.lane.b32.xlu0 %v6675, 64
      %v6721 = vpop.permute.xlu0 %6720
      %6722 = vrot.lane.b32.xlu0 %v6678, 64
      %v6723 = vpop.permute.xlu0 %6722
      %6724 = vrot.lane.b32.xlu0 %v6681, 64
      %v6725 = vpop.permute.xlu0 %6724
      %6726 = vrot.lane.b32.xlu0 %v6684, 64
      %v6727 = vpop.permute.xlu0 %6726
      %6728 = vrot.lane.b32.xlu0 %v6687, 64
      %v6729 = vpop.permute.xlu0 %6728
      %6730 = vrot.lane.b32.xlu0 %v6690, 64
      %v6731 = vpop.permute.xlu0 %6730
      %6732 = vrot.lane.b32.xlu0 %v6693, 64
      %v6733 = vpop.permute.xlu0 %6732
      %6734 = vrot.lane.b32.xlu0 %v6696, 64
      %v6735 = vpop.permute.xlu0 %6734
      %6736 = vrot.lane.b32.xlu0 %v6699, 64
      %v6737 = vpop.permute.xlu0 %6736
      %6738 = vrot.lane.b32.xlu0 %v6702, 64
      %v6739 = vpop.permute.xlu0 %6738
      %6740 = vrot.lane.b32.xlu0 %v6705, 64
      %v6741 = vpop.permute.xlu0 %6740
      %6742 = vrot.lane.b32.xlu0 %v6708, 64
      %v6743 = vpop.permute.xlu0 %6742
      %6744 = vrot.lane.b32.xlu0 %v6711, 64
      %v6745 = vpop.permute.xlu0 %6744
      %6746 = vrot.lane.b32.xlu0 %v6714, 64
      %v6747 = vpop.permute.xlu0 %6746
      %6748 = vrot.lane.b32.xlu0 %v6717, 64
      %v6749 = vpop.permute.xlu0 %6748
      %vm6750 = vcmask 261120
      %v6752 = vsel %vm6750, %v6380, %v6638
      %v6754 = vsel %vm6750, %v6381, %v6640
      %v6756 = vsel %vm6750, %v6382, %v6642
      %v6758 = vsel %vm6750, %v6383, %v6644
      %v6760 = vsel %vm6750, %v6384, %v6646
      %v6762 = vsel %vm6750, %v6385, %v6648
      %v6764 = vsel %vm6750, %v6386, %v6650
      %v6766 = vsel %vm6750, %v6387, %v6652
      %v6768 = vsel %vm6750, %v6388, %v6654
      %v6770 = vsel %vm6750, %v6389, %v6656
      %v6772 = vsel %vm6750, %v6390, %v6658
      %v6774 = vsel %vm6750, %v6391, %v6660
      %v6776 = vsel %vm6750, %v6392, %v6662
      %v6778 = vsel %vm6750, %v6393, %v6664
      %v6780 = vsel %vm6750, %v6394, %v6666
      %v6782 = vsel %vm6750, %v6395, %v6668
      %vm6783 = vcmask 523264
      %v6785 = vsel %vm6783, %v6752, %v6719
      %v6787 = vsel %vm6783, %v6754, %v6721
      %v6789 = vsel %vm6783, %v6756, %v6723
      %v6791 = vsel %vm6783, %v6758, %v6725
      %v6793 = vsel %vm6783, %v6760, %v6727
      %v6795 = vsel %vm6783, %v6762, %v6729
      %v6797 = vsel %vm6783, %v6764, %v6731
      %v6799 = vsel %vm6783, %v6766, %v6733
      %v6801 = vsel %vm6783, %v6768, %v6735
      %v6803 = vsel %vm6783, %v6770, %v6737
      %v6805 = vsel %vm6783, %v6772, %v6739
      %v6807 = vsel %vm6783, %v6774, %v6741
      %v6809 = vsel %vm6783, %v6776, %v6743
      %v6811 = vsel %vm6783, %v6778, %v6745
      %v6813 = vsel %vm6783, %v6780, %v6747
      %v6815 = vsel %vm6783, %v6782, %v6749
      %v6816 = vld [vmem:[%s6182] sm:$0xf]
      %v6817 = vld [vmem:[%s6182 + $0x4] sm:$0xf]
      %v6818 = vld [vmem:[%s6182 + $0x8] sm:$0x1]
      %v6819 = vld [vmem:[%s6182 + $0xc] sm:$0xf]
      %v6820 = vld [vmem:[%s6182 + $0x10] sm:$0xf]
      %v6821 = vld [vmem:[%s6182 + $0x14] sm:$0x1]
      %v6822 = vld [vmem:[%s6182 + $0x18] sm:$0xf]
      %v6823 = vld [vmem:[%s6182 + $0x1c] sm:$0xf]
      %v6824 = vld [vmem:[%s6182 + $0x20] sm:$0x1]
      %v6825 = vld [vmem:[%s6182 + $0x24] sm:$0xf]
      %v6826 = vld [vmem:[%s6182 + $0x28] sm:$0xf]
      %v6827 = vld [vmem:[%s6182 + $0x2c] sm:$0x1]
      %v6828 = vld [vmem:[%s6182 + $0x30] sm:$0xf]
      %v6829 = vld [vmem:[%s6182 + $0x34] sm:$0xf]
      %v6830 = vld [vmem:[%s6182 + $0x38] sm:$0x1]
      %v6831 = vld [vmem:[%s6182 + $0x3c] sm:$0xf]
      %v6832 = vld [vmem:[%s6182 + $0x40] sm:$0xf]
      %v6833 = vld [vmem:[%s6182 + $0x44] sm:$0x1]
      %v6834 = vld [vmem:[%s6182 + $0x48] sm:$0xf]
      %v6835 = vld [vmem:[%s6182 + $0x4c] sm:$0xf]
      %v6836 = vld [vmem:[%s6182 + $0x50] sm:$0x1]
      %v6837 = vld [vmem:[%s6182 + $0x54] sm:$0xf]
      %v6838 = vld [vmem:[%s6182 + $0x58] sm:$0xf]
      %v6839 = vld [vmem:[%s6182 + $0x5c] sm:$0x1]
      %v6840 = vld [vmem:[%s6182 + $0x60] sm:$0xf]
      %v6841 = vld [vmem:[%s6182 + $0x64] sm:$0xf]
      %v6842 = vld [vmem:[%s6182 + $0x68] sm:$0x1]
      %v6843 = vld [vmem:[%s6182 + $0x6c] sm:$0xf]
      %v6844 = vld [vmem:[%s6182 + $0x70] sm:$0xf]
      %v6845 = vld [vmem:[%s6182 + $0x74] sm:$0x1]
      %v6846 = vld [vmem:[%s6182 + $0x78] sm:$0xf]
      %v6847 = vld [vmem:[%s6182 + $0x7c] sm:$0xf]
      %v6848 = vld [vmem:[%s6182 + $0x80] sm:$0x1]
      %v6849 = vld [vmem:[%s6182 + $0x84] sm:$0xf]
      %v6850 = vld [vmem:[%s6182 + $0x88] sm:$0xf]
      %v6851 = vld [vmem:[%s6182 + $0x8c] sm:$0x1]
      %v6852 = vld [vmem:[%s6182 + $0x90] sm:$0xf]
      %v6853 = vld [vmem:[%s6182 + $0x94] sm:$0xf]
      %v6854 = vld [vmem:[%s6182 + $0x98] sm:$0x1]
      %v6855 = vld [vmem:[%s6182 + $0x9c] sm:$0xf]
      %v6856 = vld [vmem:[%s6182 + $0xa0] sm:$0xf]
      %v6857 = vld [vmem:[%s6182 + $0xa4] sm:$0x1]
      %v6858 = vld [vmem:[%s6182 + $0xa8] sm:$0xf]
      %v6859 = vld [vmem:[%s6182 + $0xac] sm:$0xf]
      %v6860 = vld [vmem:[%s6182 + $0xb0] sm:$0x1]
      %v6861 = vld [vmem:[%s6182 + $0xb4] sm:$0xf]
      %v6862 = vld [vmem:[%s6182 + $0xb8] sm:$0xf]
      %v6863 = vld [vmem:[%s6182 + $0xbc] sm:$0x1]
      %v6896 = vunpack.c.l.b16 %v6816
      %v6897 = vunpack.c.l.b16 %v6817
      %v6898 = vunpack.c.l.b16 %v6819
      %v6899 = vunpack.c.l.b16 %v6820
      %v6900 = vunpack.c.l.b16 %v6822
      %v6901 = vunpack.c.l.b16 %v6823
      %v6902 = vunpack.c.l.b16 %v6825
      %v6903 = vunpack.c.l.b16 %v6826
      %v6904 = vunpack.c.l.b16 %v6828
      %v6905 = vunpack.c.l.b16 %v6829
      %v6906 = vunpack.c.l.b16 %v6831
      %v6907 = vunpack.c.l.b16 %v6832
      %v6908 = vunpack.c.l.b16 %v6834
      %v6909 = vunpack.c.l.b16 %v6835
      %v6910 = vunpack.c.l.b16 %v6837
      %v6911 = vunpack.c.l.b16 %v6838
      %v6912 = vunpack.c.l.b16 %v6840
      %v6913 = vunpack.c.l.b16 %v6841
      %v6914 = vunpack.c.l.b16 %v6843
      %v6915 = vunpack.c.l.b16 %v6844
      %v6916 = vunpack.c.l.b16 %v6846
      %v6917 = vunpack.c.l.b16 %v6847
      %v6918 = vunpack.c.l.b16 %v6849
      %v6919 = vunpack.c.l.b16 %v6850
      %v6920 = vunpack.c.l.b16 %v6852
      %v6921 = vunpack.c.l.b16 %v6853
      %v6922 = vunpack.c.l.b16 %v6855
      %v6923 = vunpack.c.l.b16 %v6856
      %v6924 = vunpack.c.l.b16 %v6858
      %v6925 = vunpack.c.l.b16 %v6859
      %v6926 = vunpack.c.l.b16 %v6861
      %v6927 = vunpack.c.l.b16 %v6862
      %v6928 = vpack.c.b16 %v6897, %v6896
      %v6929 = vpack.c.b16 %v6899, %v6898
      %v6930 = vpack.c.b16 %v6901, %v6900
      %v6931 = vpack.c.b16 %v6903, %v6902
      %v6932 = vpack.c.b16 %v6905, %v6904
      %v6933 = vpack.c.b16 %v6907, %v6906
      %v6934 = vpack.c.b16 %v6909, %v6908
      %v6935 = vpack.c.b16 %v6911, %v6910
      %v6936 = vpack.c.b16 %v6913, %v6912
      %v6937 = vpack.c.b16 %v6915, %v6914
      %v6938 = vpack.c.b16 %v6917, %v6916
      %v6939 = vpack.c.b16 %v6919, %v6918
      %v6940 = vpack.c.b16 %v6921, %v6920
      %v6941 = vpack.c.b16 %v6923, %v6922
      %v6942 = vpack.c.b16 %v6925, %v6924
      %v6943 = vpack.c.b16 %v6927, %v6926
      %v6960 = vunpack.c.l.b16 %v6818
      %v6961 = vunpack.c.l.b16 %v6821
      %v6962 = vunpack.c.l.b16 %v6824
      %v6963 = vunpack.c.l.b16 %v6827
      %v6964 = vunpack.c.l.b16 %v6830
      %v6965 = vunpack.c.l.b16 %v6833
      %v6966 = vunpack.c.l.b16 %v6836
      %v6967 = vunpack.c.l.b16 %v6839
      %v6968 = vunpack.c.l.b16 %v6842
      %v6969 = vunpack.c.l.b16 %v6845
      %v6970 = vunpack.c.l.b16 %v6848
      %v6971 = vunpack.c.l.b16 %v6851
      %v6972 = vunpack.c.l.b16 %v6854
      %v6973 = vunpack.c.l.b16 %v6857
      %v6974 = vunpack.c.l.b16 %v6860
      %v6975 = vunpack.c.l.b16 %v6863
      %v6976 = vpack.c.b16 %v6960, %v6960
      %v6977 = vpack.c.b16 %v6961, %v6961
      %v6978 = vpack.c.b16 %v6962, %v6962
      %v6979 = vpack.c.b16 %v6963, %v6963
      %v6980 = vpack.c.b16 %v6964, %v6964
      %v6981 = vpack.c.b16 %v6965, %v6965
      %v6982 = vpack.c.b16 %v6966, %v6966
      %v6983 = vpack.c.b16 %v6967, %v6967
      %v6984 = vpack.c.b16 %v6968, %v6968
      %v6985 = vpack.c.b16 %v6969, %v6969
      %v6986 = vpack.c.b16 %v6970, %v6970
      %v6987 = vpack.c.b16 %v6971, %v6971
      %v6988 = vpack.c.b16 %v6972, %v6972
      %v6989 = vpack.c.b16 %v6973, %v6973
      %v6990 = vpack.c.b16 %v6974, %v6974
      %v6991 = vpack.c.b16 %v6975, %v6975
      %v6993 = vshrl.u32 %v6928, 16
      %v6995 = vshll.u32 %v6928, 16
      %v6997 = vrot.slane %v6995, 1
      %v6998 = vor.u32 %v6993, %v6997
      %v7000 = vshll.u32 %v6976, 16
      %v7002 = vrot.slane %v7000, 1
      %v7003 = vsel %vm6444, %v6998, %v7002
      %v7005 = vshrl.u32 %v6929, 16
      %v7007 = vshll.u32 %v6929, 16
      %v7009 = vrot.slane %v7007, 1
      %v7010 = vor.u32 %v7005, %v7009
      %v7012 = vshll.u32 %v6977, 16
      %v7014 = vrot.slane %v7012, 1
      %v7015 = vsel %vm6444, %v7010, %v7014
      %v7017 = vshrl.u32 %v6930, 16
      %v7019 = vshll.u32 %v6930, 16
      %v7021 = vrot.slane %v7019, 1
      %v7022 = vor.u32 %v7017, %v7021
      %v7024 = vshll.u32 %v6978, 16
      %v7026 = vrot.slane %v7024, 1
      %v7027 = vsel %vm6444, %v7022, %v7026
      %v7029 = vshrl.u32 %v6931, 16
      %v7031 = vshll.u32 %v6931, 16
      %v7033 = vrot.slane %v7031, 1
      %v7034 = vor.u32 %v7029, %v7033
      %v7036 = vshll.u32 %v6979, 16
      %v7038 = vrot.slane %v7036, 1
      %v7039 = vsel %vm6444, %v7034, %v7038
      %v7041 = vshrl.u32 %v6932, 16
      %v7043 = vshll.u32 %v6932, 16
      %v7045 = vrot.slane %v7043, 1
      %v7046 = vor.u32 %v7041, %v7045
      %v7048 = vshll.u32 %v6980, 16
      %v7050 = vrot.slane %v7048, 1
      %v7051 = vsel %vm6444, %v7046, %v7050
      %v7053 = vshrl.u32 %v6933, 16
      %v7055 = vshll.u32 %v6933, 16
      %v7057 = vrot.slane %v7055, 1
      %v7058 = vor.u32 %v7053, %v7057
      %v7060 = vshll.u32 %v6981, 16
      %v7062 = vrot.slane %v7060, 1
      %v7063 = vsel %vm6444, %v7058, %v7062
      %v7065 = vshrl.u32 %v6934, 16
      %v7067 = vshll.u32 %v6934, 16
      %v7069 = vrot.slane %v7067, 1
      %v7070 = vor.u32 %v7065, %v7069
      %v7072 = vshll.u32 %v6982, 16
      %v7074 = vrot.slane %v7072, 1
      %v7075 = vsel %vm6444, %v7070, %v7074
      %v7077 = vshrl.u32 %v6935, 16
      %v7079 = vshll.u32 %v6935, 16
      %v7081 = vrot.slane %v7079, 1
      %v7082 = vor.u32 %v7077, %v7081
      %v7084 = vshll.u32 %v6983, 16
      %v7086 = vrot.slane %v7084, 1
      %v7087 = vsel %vm6444, %v7082, %v7086
      %v7089 = vshrl.u32 %v6936, 16
      %v7091 = vshll.u32 %v6936, 16
      %v7093 = vrot.slane %v7091, 1
      %v7094 = vor.u32 %v7089, %v7093
      %v7096 = vshll.u32 %v6984, 16
      %v7098 = vrot.slane %v7096, 1
      %v7099 = vsel %vm6444, %v7094, %v7098
      %v7101 = vshrl.u32 %v6937, 16
      %v7103 = vshll.u32 %v6937, 16
      %v7105 = vrot.slane %v7103, 1
      %v7106 = vor.u32 %v7101, %v7105
      %v7108 = vshll.u32 %v6985, 16
      %v7110 = vrot.slane %v7108, 1
      %v7111 = vsel %vm6444, %v7106, %v7110
      %v7113 = vshrl.u32 %v6938, 16
      %v7115 = vshll.u32 %v6938, 16
      %v7117 = vrot.slane %v7115, 1
      %v7118 = vor.u32 %v7113, %v7117
      %v7120 = vshll.u32 %v6986, 16
      %v7122 = vrot.slane %v7120, 1
      %v7123 = vsel %vm6444, %v7118, %v7122
      %v7125 = vshrl.u32 %v6939, 16
      %v7127 = vshll.u32 %v6939, 16
      %v7129 = vrot.slane %v7127, 1
      %v7130 = vor.u32 %v7125, %v7129
      %v7132 = vshll.u32 %v6987, 16
      %v7134 = vrot.slane %v7132, 1
      %v7135 = vsel %vm6444, %v7130, %v7134
      %v7137 = vshrl.u32 %v6940, 16
      %v7139 = vshll.u32 %v6940, 16
      %v7141 = vrot.slane %v7139, 1
      %v7142 = vor.u32 %v7137, %v7141
      %v7144 = vshll.u32 %v6988, 16
      %v7146 = vrot.slane %v7144, 1
      %v7147 = vsel %vm6444, %v7142, %v7146
      %v7149 = vshrl.u32 %v6941, 16
      %v7151 = vshll.u32 %v6941, 16
      %v7153 = vrot.slane %v7151, 1
      %v7154 = vor.u32 %v7149, %v7153
      %v7156 = vshll.u32 %v6989, 16
      %v7158 = vrot.slane %v7156, 1
      %v7159 = vsel %vm6444, %v7154, %v7158
      %v7161 = vshrl.u32 %v6942, 16
      %v7163 = vshll.u32 %v6942, 16
      %v7165 = vrot.slane %v7163, 1
      %v7166 = vor.u32 %v7161, %v7165
      %v7168 = vshll.u32 %v6990, 16
      %v7170 = vrot.slane %v7168, 1
      %v7171 = vsel %vm6444, %v7166, %v7170
      %v7173 = vshrl.u32 %v6943, 16
      %v7175 = vshll.u32 %v6943, 16
      %v7177 = vrot.slane %v7175, 1
      %v7178 = vor.u32 %v7173, %v7177
      %v7180 = vshll.u32 %v6991, 16
      %v7182 = vrot.slane %v7180, 1
      %v7183 = vsel %vm6444, %v7178, %v7182
      %7184 = vrot.lane.b32.xlu0 %v7003, 32
      %v7185 = vpop.permute.xlu0 %7184
      %7186 = vrot.lane.b32.xlu0 %v7015, 32
      %v7187 = vpop.permute.xlu0 %7186
      %7188 = vrot.lane.b32.xlu0 %v7027, 32
      %v7189 = vpop.permute.xlu0 %7188
      %7190 = vrot.lane.b32.xlu0 %v7039, 32
      %v7191 = vpop.permute.xlu0 %7190
      %7192 = vrot.lane.b32.xlu0 %v7051, 32
      %v7193 = vpop.permute.xlu0 %7192
      %7194 = vrot.lane.b32.xlu0 %v7063, 32
      %v7195 = vpop.permute.xlu0 %7194
      %7196 = vrot.lane.b32.xlu0 %v7075, 32
      %v7197 = vpop.permute.xlu0 %7196
      %7198 = vrot.lane.b32.xlu0 %v7087, 32
      %v7199 = vpop.permute.xlu0 %7198
      %7200 = vrot.lane.b32.xlu0 %v7099, 32
      %v7201 = vpop.permute.xlu0 %7200
      %7202 = vrot.lane.b32.xlu0 %v7111, 32
      %v7203 = vpop.permute.xlu0 %7202
      %7204 = vrot.lane.b32.xlu0 %v7123, 32
      %v7205 = vpop.permute.xlu0 %7204
      %7206 = vrot.lane.b32.xlu0 %v7135, 32
      %v7207 = vpop.permute.xlu0 %7206
      %7208 = vrot.lane.b32.xlu0 %v7147, 32
      %v7209 = vpop.permute.xlu0 %7208
      %7210 = vrot.lane.b32.xlu0 %v7159, 32
      %v7211 = vpop.permute.xlu0 %7210
      %7212 = vrot.lane.b32.xlu0 %v7171, 32
      %v7213 = vpop.permute.xlu0 %7212
      %7214 = vrot.lane.b32.xlu0 %v7183, 32
      %v7215 = vpop.permute.xlu0 %7214
      %v7216 = vrot.slane %v6928, 1
      %v7217 = vrot.slane %v6976, 1
      %v7218 = vsel %vm6669, %v7216, %v7217
      %v7219 = vrot.slane %v6929, 1
      %v7220 = vrot.slane %v6977, 1
      %v7221 = vsel %vm6669, %v7219, %v7220
      %v7222 = vrot.slane %v6930, 1
      %v7223 = vrot.slane %v6978, 1
      %v7224 = vsel %vm6669, %v7222, %v7223
      %v7225 = vrot.slane %v6931, 1
      %v7226 = vrot.slane %v6979, 1
      %v7227 = vsel %vm6669, %v7225, %v7226
      %v7228 = vrot.slane %v6932, 1
      %v7229 = vrot.slane %v6980, 1
      %v7230 = vsel %vm6669, %v7228, %v7229
      %v7231 = vrot.slane %v6933, 1
      %v7232 = vrot.slane %v6981, 1
      %v7233 = vsel %vm6669, %v7231, %v7232
      %v7234 = vrot.slane %v6934, 1
      %v7235 = vrot.slane %v6982, 1
      %v7236 = vsel %vm6669, %v7234, %v7235
      %v7237 = vrot.slane %v6935, 1
      %v7238 = vrot.slane %v6983, 1
      %v7239 = vsel %vm6669, %v7237, %v7238
      %v7240 = vrot.slane %v6936, 1
      %v7241 = vrot.slane %v6984, 1
      %v7242 = vsel %vm6669, %v7240, %v7241
      %v7243 = vrot.slane %v6937, 1
      %v7244 = vrot.slane %v6985, 1
      %v7245 = vsel %vm6669, %v7243, %v7244
      %v7246 = vrot.slane %v6938, 1
      %v7247 = vrot.slane %v6986, 1
      %v7248 = vsel %vm6669, %v7246, %v7247
      %v7249 = vrot.slane %v6939, 1
      %v7250 = vrot.slane %v6987, 1
      %v7251 = vsel %vm6669, %v7249, %v7250
      %v7252 = vrot.slane %v6940, 1
      %v7253 = vrot.slane %v6988, 1
      %v7254 = vsel %vm6669, %v7252, %v7253
      %v7255 = vrot.slane %v6941, 1
      %v7256 = vrot.slane %v6989, 1
      %v7257 = vsel %vm6669, %v7255, %v7256
      %v7258 = vrot.slane %v6942, 1
      %v7259 = vrot.slane %v6990, 1
      %v7260 = vsel %vm6669, %v7258, %v7259
      %v7261 = vrot.slane %v6943, 1
      %v7262 = vrot.slane %v6991, 1
      %v7263 = vsel %vm6669, %v7261, %v7262
      %7264 = vrot.lane.b32.xlu0 %v7218, 64
      %v7265 = vpop.permute.xlu0 %7264
      %7266 = vrot.lane.b32.xlu0 %v7221, 64
      %v7267 = vpop.permute.xlu0 %7266
      %7268 = vrot.lane.b32.xlu0 %v7224, 64
      %v7269 = vpop.permute.xlu0 %7268
      %7270 = vrot.lane.b32.xlu0 %v7227, 64
      %v7271 = vpop.permute.xlu0 %7270
      %7272 = vrot.lane.b32.xlu0 %v7230, 64
      %v7273 = vpop.permute.xlu0 %7272
      %7274 = vrot.lane.b32.xlu0 %v7233, 64
      %v7275 = vpop.permute.xlu0 %7274
      %7276 = vrot.lane.b32.xlu0 %v7236, 64
      %v7277 = vpop.permute.xlu0 %7276
      %7278 = vrot.lane.b32.xlu0 %v7239, 64
      %v7279 = vpop.permute.xlu0 %7278
      %7280 = vrot.lane.b32.xlu0 %v7242, 64
      %v7281 = vpop.permute.xlu0 %7280
      %7282 = vrot.lane.b32.xlu0 %v7245, 64
      %v7283 = vpop.permute.xlu0 %7282
      %7284 = vrot.lane.b32.xlu0 %v7248, 64
      %v7285 = vpop.permute.xlu0 %7284
      %7286 = vrot.lane.b32.xlu0 %v7251, 64
      %v7287 = vpop.permute.xlu0 %7286
      %7288 = vrot.lane.b32.xlu0 %v7254, 64
      %v7289 = vpop.permute.xlu0 %7288
      %7290 = vrot.lane.b32.xlu0 %v7257, 64
      %v7291 = vpop.permute.xlu0 %7290
      %7292 = vrot.lane.b32.xlu0 %v7260, 64
      %v7293 = vpop.permute.xlu0 %7292
      %7294 = vrot.lane.b32.xlu0 %v7263, 64
      %v7295 = vpop.permute.xlu0 %7294
      %v7297 = vsel %vm6750, %v6928, %v7185
      %v7299 = vsel %vm6750, %v6929, %v7187
      %v7301 = vsel %vm6750, %v6930, %v7189
      %v7303 = vsel %vm6750, %v6931, %v7191
      %v7305 = vsel %vm6750, %v6932, %v7193
      %v7307 = vsel %vm6750, %v6933, %v7195
      %v7309 = vsel %vm6750, %v6934, %v7197
      %v7311 = vsel %vm6750, %v6935, %v7199
      %v7313 = vsel %vm6750, %v6936, %v7201
      %v7315 = vsel %vm6750, %v6937, %v7203
      %v7317 = vsel %vm6750, %v6938, %v7205
      %v7319 = vsel %vm6750, %v6939, %v7207
      %v7321 = vsel %vm6750, %v6940, %v7209
      %v7323 = vsel %vm6750, %v6941, %v7211
      %v7325 = vsel %vm6750, %v6942, %v7213
      %v7327 = vsel %vm6750, %v6943, %v7215
      %v7329 = vsel %vm6783, %v7297, %v7265
      %v7331 = vsel %vm6783, %v7299, %v7267
      %v7333 = vsel %vm6783, %v7301, %v7269
      %v7335 = vsel %vm6783, %v7303, %v7271
      %v7337 = vsel %vm6783, %v7305, %v7273
      %v7339 = vsel %vm6783, %v7307, %v7275
      %v7341 = vsel %vm6783, %v7309, %v7277
      %v7343 = vsel %vm6783, %v7311, %v7279
      %v7345 = vsel %vm6783, %v7313, %v7281
      %v7347 = vsel %vm6783, %v7315, %v7283
      %v7349 = vsel %vm6783, %v7317, %v7285
      %v7351 = vsel %vm6783, %v7319, %v7287
      %v7353 = vsel %vm6783, %v7321, %v7289
      %v7355 = vsel %vm6783, %v7323, %v7291
      %v7357 = vsel %vm6783, %v7325, %v7293
      %v7359 = vsel %vm6783, %v7327, %v7295
      %v7372 = vunpack.c.l.b16 %v6243
      %v7373 = vunpack.c.l.b16 %v6244
      %v7374 = vunpack.c.l.b16 %v6245
      %v7375 = vunpack.c.l.b16 %v6246
      %v7376 = vunpack.c.l.b16 %v6247
      %v7377 = vunpack.c.l.b16 %v6248
      %v7378 = vunpack.c.l.b16 %v6249
      %v7379 = vunpack.c.l.b16 %v6250
      %v7380 = vunpack.c.l.b16 %v6251
      %v7381 = vunpack.c.l.b16 %v6252
      %v7382 = vunpack.c.l.b16 %v6253
      %v7383 = vunpack.c.l.b16 %v6254
      %v7384 = vpack.c.b16 %v7373, %v7372
      %v7385 = vpack.c.b16 %v7375, %v7374
      %v7386 = vpack.c.b16 %v7377, %v7376
      %v7387 = vpack.c.b16 %v7379, %v7378
      %v7388 = vpack.c.b16 %v7381, %v7380
      %v7389 = vpack.c.b16 %v7383, %v7382
      %vm7396 = vcmask 785408
      %v7397 = vsel %vm7396, %v7329, 0
      %v7399 = vsel %vm7396, %v7331, 0
      %v7401 = vsel %vm7396, %v7333, 0
      %v7403 = vsel %vm7396, %v7335, 0
      %v7405 = vsel %vm7396, %v7337, 0
      %v7407 = vsel %vm7396, %v7339, 0
      %v7409 = vsel %vm7396, %v7341, 0
      %v7411 = vsel %vm7396, %v7343, 0
      %v7413 = vsel %vm7396, %v7345, 0
      %v7415 = vsel %vm7396, %v7347, 0
      %v7417 = vsel %vm7396, %v7349, 0
      %v7419 = vsel %vm7396, %v7351, 0
      %v7421 = vsel %vm7396, %v7353, 0
      %v7423 = vsel %vm7396, %v7355, 0
      %v7425 = vsel %vm7396, %v7357, 0
      %v7427 = vsel %vm7396, %v7359, 0
      %7429 = vmatprep.subr.bf16.mxu0 0
      %7430 = vmatpush1.bf16.msra.mxu0 %v7384
      %7431 = vmatprep.subr.bf16.mxu0 0
      %7432 = vmatpush1.bf16.msra.mxu0 %v7385
      %7433 = vmatprep.subr.bf16.mxu0 0
      %7434 = vmatpush1.bf16.msra.mxu0 %v7386
      %7435 = vmatprep.subr.bf16.mxu0 0
      %7436 = vmatpush1.bf16.msra.mxu0 %v7387
      %7437 = vmatprep.subr.bf16.mxu0 0
      %7438 = vmatpush1.bf16.msra.mxu0 %v7388
      %7439 = vmatprep.subr.bf16.mxu0 0
      %7440 = vmatpush1.bf16.msra.mxu0 %v7389
      %7441 = vmatprep.subr.bf16.mxu0 0
      %7442 = vmatpush1.bf16.msra.mxu0 0
      %7443 = vmatprep.subr.bf16.mxu0 0
      %7444 = vmatpush1.bf16.msra.mxu0 0
      %7445 = vmatprep.subr.bf16.mxu0 0
      %7446 = vmatpush1.bf16.msra.mxu0 0
      %7447 = vmatprep.subr.bf16.mxu0 0
      %7448 = vmatpush1.bf16.msra.mxu0 0
      %7449 = vmatprep.subr.bf16.mxu0 0
      %7450 = vmatpush1.bf16.msra.mxu0 0
      %7451 = vmatprep.subr.bf16.mxu0 0
      %7452 = vmatpush1.bf16.msra.mxu0 0
      %7453 = vmatprep.subr.bf16.mxu0 0
      %7454 = vmatpush1.bf16.msra.mxu0 0
      %7455 = vmatprep.subr.bf16.mxu0 0
      %7456 = vmatpush1.bf16.msra.mxu0 0
      %7457 = vmatprep.subr.bf16.mxu0 0
      %7458 = vmatpush1.bf16.msra.mxu0 0
      %7459 = vmatprep.subr.bf16.mxu0 0
      %7460 = vmatpush1.bf16.msra.mxu0 0
      %7461 = vmatprep.mubr.bf16.mxu0 0
      %7462 = vmatmul.mubr.bf16.gmra.mrb[0].mxu0 %v7397
      %v7463 = vpop.f32.mrb[0].mxu0
      %v7464 = vadd.f32 0.0, %v7463
      %v7465 = vpop.f32.mrb[0].mxu0
      %v7466 = vpop.f32.mrb[0].mxu0
      %v7467 = vadd.f32 0.0, %v7466
      %v7468 = vpop.f32.mrb[0].mxu0
      %7469 = vmatprep.mubr.bf16.mxu0 0
      %7470 = vmatmul.mubr.bf16.gmra.mrb[0].mxu0 %v7399
      %v7471 = vpop.f32.mrb[0].mxu0
      %v7472 = vadd.f32 0.0, %v7471
      %v7473 = vpop.f32.mrb[0].mxu0
      %v7474 = vpop.f32.mrb[0].mxu0
      %v7475 = vadd.f32 0.0, %v7474
      %v7476 = vpop.f32.mrb[0].mxu0
      %7477 = vmatprep.mubr.bf16.mxu0 0
      %7478 = vmatmul.mubr.bf16.gmra.mrb[0].mxu0 %v7401
      %v7479 = vpop.f32.mrb[0].mxu0
      %v7480 = vadd.f32 0.0, %v7479
      %v7481 = vpop.f32.mrb[0].mxu0
      %v7482 = vpop.f32.mrb[0].mxu0
      %v7483 = vadd.f32 0.0, %v7482
      %v7484 = vpop.f32.mrb[0].mxu0
      %7485 = vmatprep.mubr.bf16.mxu0 0
      %7486 = vmatmul.mubr.bf16.gmra.mrb[0].mxu0 %v7403
      %v7487 = vpop.f32.mrb[0].mxu0
      %v7488 = vadd.f32 0.0, %v7487
      %v7489 = vpop.f32.mrb[0].mxu0
      %v7490 = vpop.f32.mrb[0].mxu0
      %v7491 = vadd.f32 0.0, %v7490
      %v7492 = vpop.f32.mrb[0].mxu0
      %7493 = vmatprep.mubr.bf16.mxu0 0
      %7494 = vmatmul.mubr.bf16.gmra.mrb[0].mxu0 %v7405
      %v7495 = vpop.f32.mrb[0].mxu0
      %v7496 = vadd.f32 0.0, %v7495
      %v7497 = vpop.f32.mrb[0].mxu0
      %v7498 = vpop.f32.mrb[0].mxu0
      %v7499 = vadd.f32 0.0, %v7498
      %v7500 = vpop.f32.mrb[0].mxu0
      %7501 = vmatprep.mubr.bf16.mxu0 0
      %7502 = vmatmul.mubr.bf16.gmra.mrb[0].mxu0 %v7407
      %v7503 = vpop.f32.mrb[0].mxu0
      %v7504 = vadd.f32 0.0, %v7503
      %v7505 = vpop.f32.mrb[0].mxu0
      %v7506 = vpop.f32.mrb[0].mxu0
      %v7507 = vadd.f32 0.0, %v7506
      %v7508 = vpop.f32.mrb[0].mxu0
      %7509 = vmatprep.mubr.bf16.mxu0 0
      %7510 = vmatmul.mubr.bf16.gmra.mrb[0].mxu0 %v7409
      %v7511 = vpop.f32.mrb[0].mxu0
      %v7512 = vadd.f32 0.0, %v7511
      %v7513 = vpop.f32.mrb[0].mxu0
      %v7514 = vpop.f32.mrb[0].mxu0
      %v7515 = vadd.f32 0.0, %v7514
      %v7516 = vpop.f32.mrb[0].mxu0
      %7517 = vmatprep.mubr.bf16.mxu0 0
      %7518 = vmatmul.mubr.bf16.gmra.mrb[0].mxu0 %v7411
      %v7519 = vpop.f32.mrb[0].mxu0
      %v7520 = vadd.f32 0.0, %v7519
      %v7521 = vpop.f32.mrb[0].mxu0
      %v7522 = vpop.f32.mrb[0].mxu0
      %v7523 = vadd.f32 0.0, %v7522
      %v7524 = vpop.f32.mrb[0].mxu0
      %7525 = vmatprep.mubr.bf16.mxu0 0
      %7526 = vmatmul.mubr.bf16.gmra.mrb[0].mxu0 %v7413
      %v7527 = vpop.f32.mrb[0].mxu0
      %v7528 = vadd.f32 0.0, %v7527
      %v7529 = vpop.f32.mrb[0].mxu0
      %v7530 = vpop.f32.mrb[0].mxu0
      %v7531 = vadd.f32 0.0, %v7530
      %v7532 = vpop.f32.mrb[0].mxu0
      %7533 = vmatprep.mubr.bf16.mxu0 0
      %7534 = vmatmul.mubr.bf16.gmra.mrb[0].mxu0 %v7415
      %v7535 = vpop.f32.mrb[0].mxu0
      %v7536 = vadd.f32 0.0, %v7535
      %v7537 = vpop.f32.mrb[0].mxu0
      %v7538 = vpop.f32.mrb[0].mxu0
      %v7539 = vadd.f32 0.0, %v7538
      %v7540 = vpop.f32.mrb[0].mxu0
      %7541 = vmatprep.mubr.bf16.mxu0 0
      %7542 = vmatmul.mubr.bf16.gmra.mrb[0].mxu0 %v7417
      %v7543 = vpop.f32.mrb[0].mxu0
      %v7544 = vadd.f32 0.0, %v7543
      %v7545 = vpop.f32.mrb[0].mxu0
      %v7546 = vpop.f32.mrb[0].mxu0
      %v7547 = vadd.f32 0.0, %v7546
      %v7548 = vpop.f32.mrb[0].mxu0
      %7549 = vmatprep.mubr.bf16.mxu0 0
      %7550 = vmatmul.mubr.bf16.gmra.mrb[0].mxu0 %v7419
      %v7551 = vpop.f32.mrb[0].mxu0
      %v7552 = vadd.f32 0.0, %v7551
      %v7553 = vpop.f32.mrb[0].mxu0
      %v7554 = vpop.f32.mrb[0].mxu0
      %v7555 = vadd.f32 0.0, %v7554
      %v7556 = vpop.f32.mrb[0].mxu0
      %7557 = vmatprep.mubr.bf16.mxu0 0
      %7558 = vmatmul.mubr.bf16.gmra.mrb[0].mxu0 %v7421
      %v7559 = vpop.f32.mrb[0].mxu0
      %v7560 = vadd.f32 0.0, %v7559
      %v7561 = vpop.f32.mrb[0].mxu0
      %v7562 = vpop.f32.mrb[0].mxu0
      %v7563 = vadd.f32 0.0, %v7562
      %v7564 = vpop.f32.mrb[0].mxu0
      %7565 = vmatprep.mubr.bf16.mxu0 0
      %7566 = vmatmul.mubr.bf16.gmra.mrb[0].mxu0 %v7423
      %v7567 = vpop.f32.mrb[0].mxu0
      %v7568 = vadd.f32 0.0, %v7567
      %v7569 = vpop.f32.mrb[0].mxu0
      %v7570 = vpop.f32.mrb[0].mxu0
      %v7571 = vadd.f32 0.0, %v7570
      %v7572 = vpop.f32.mrb[0].mxu0
      %7573 = vmatprep.mubr.bf16.mxu0 0
      %7574 = vmatmul.mubr.bf16.gmra.mrb[0].mxu0 %v7425
      %v7575 = vpop.f32.mrb[0].mxu0
      %v7576 = vadd.f32 0.0, %v7575
      %v7577 = vpop.f32.mrb[0].mxu0
      %v7578 = vpop.f32.mrb[0].mxu0
      %v7579 = vadd.f32 0.0, %v7578
      %v7580 = vpop.f32.mrb[0].mxu0
      %7581 = vmatprep.mubr.bf16.mxu0 0
      %7582 = vmatmul.mubr.bf16.gmra.mrb[0].mxu0 %v7427
      %v7583 = vpop.f32.mrb[0].mxu0
      %v7584 = vadd.f32 0.0, %v7583
      %v7585 = vpop.f32.mrb[0].mxu0
      %v7586 = vpop.f32.mrb[0].mxu0
      %v7587 = vadd.f32 0.0, %v7586
      %v7588 = vpop.f32.mrb[0].mxu0
      %7589 = vdwg.mxu0
      %v7602 = vunpack.c.l.b16 %v6231
      %v7603 = vunpack.c.l.b16 %v6232
      %v7604 = vunpack.c.l.b16 %v6233
      %v7605 = vunpack.c.l.b16 %v6234
      %v7606 = vunpack.c.l.b16 %v6235
      %v7607 = vunpack.c.l.b16 %v6236
      %v7608 = vunpack.c.l.b16 %v6237
      %v7609 = vunpack.c.l.b16 %v6238
      %v7610 = vunpack.c.l.b16 %v6239
      %v7611 = vunpack.c.l.b16 %v6240
      %v7612 = vunpack.c.l.b16 %v6241
      %v7613 = vunpack.c.l.b16 %v6242
      %v7614 = vpack.c.b16 %v7603, %v7602
      %v7615 = vpack.c.b16 %v7605, %v7604
      %v7616 = vpack.c.b16 %v7607, %v7606
      %v7617 = vpack.c.b16 %v7609, %v7608
      %v7618 = vpack.c.b16 %v7611, %v7610
      %v7619 = vpack.c.b16 %v7613, %v7612
      %v7626 = vsel %vm7396, %v6785, 0
      %v7628 = vsel %vm7396, %v6787, 0
      %v7630 = vsel %vm7396, %v6789, 0
      %v7632 = vsel %vm7396, %v6791, 0
      %v7634 = vsel %vm7396, %v6793, 0
      %v7636 = vsel %vm7396, %v6795, 0
      %v7638 = vsel %vm7396, %v6797, 0
      %v7640 = vsel %vm7396, %v6799, 0
      %v7642 = vsel %vm7396, %v6801, 0
      %v7644 = vsel %vm7396, %v6803, 0
      %v7646 = vsel %vm7396, %v6805, 0
      %v7648 = vsel %vm7396, %v6807, 0
      %v7650 = vsel %vm7396, %v6809, 0
      %v7652 = vsel %vm7396, %v6811, 0
      %v7654 = vsel %vm7396, %v6813, 0
      %v7656 = vsel %vm7396, %v6815, 0
      %7658 = vmatprep.subr.bf16.mxu0 0
      %7659 = vmatpush1.bf16.msra.mxu0 %v7614
      %7660 = vmatprep.subr.bf16.mxu0 0
      %7661 = vmatpush1.bf16.msra.mxu0 %v7615
      %7662 = vmatprep.subr.bf16.mxu0 0
      %7663 = vmatpush1.bf16.msra.mxu0 %v7616
      %7664 = vmatprep.subr.bf16.mxu0 0
      %7665 = vmatpush1.bf16.msra.mxu0 %v7617
      %7666 = vmatprep.subr.bf16.mxu0 0
      %7667 = vmatpush1.bf16.msra.mxu0 %v7618
      %7668 = vmatprep.subr.bf16.mxu0 0
      %7669 = vmatpush1.bf16.msra.mxu0 %v7619
      %7670 = vmatprep.subr.bf16.mxu0 0
      %7671 = vmatpush1.bf16.msra.mxu0 0
      %7672 = vmatprep.subr.bf16.mxu0 0
      %7673 = vmatpush1.bf16.msra.mxu0 0
      %7674 = vmatprep.subr.bf16.mxu0 0
      %7675 = vmatpush1.bf16.msra.mxu0 0
      %7676 = vmatprep.subr.bf16.mxu0 0
      %7677 = vmatpush1.bf16.msra.mxu0 0
      %7678 = vmatprep.subr.bf16.mxu0 0
      %7679 = vmatpush1.bf16.msra.mxu0 0
      %7680 = vmatprep.subr.bf16.mxu0 0
      %7681 = vmatpush1.bf16.msra.mxu0 0
      %7682 = vmatprep.subr.bf16.mxu0 0
      %7683 = vmatpush1.bf16.msra.mxu0 0
      %7684 = vmatprep.subr.bf16.mxu0 0
      %7685 = vmatpush1.bf16.msra.mxu0 0
      %7686 = vmatprep.subr.bf16.mxu0 0
      %7687 = vmatpush1.bf16.msra.mxu0 0
      %7688 = vmatprep.subr.bf16.mxu0 0
      %7689 = vmatpush1.bf16.msra.mxu0 0
      %7690 = vmatprep.mubr.bf16.mxu0 0
      %7691 = vmatmul.mubr.bf16.gmra.mrb[0].mxu0 %v7626
      %v7692 = vpop.f32.mrb[0].mxu0
      %v7693 = vadd.f32 %v7464, %v7692
      %v7694 = vpop.f32.mrb[0].mxu0
      %v7695 = vpop.f32.mrb[0].mxu0
      %v7696 = vadd.f32 %v7467, %v7695
      %v7697 = vpop.f32.mrb[0].mxu0
      %7698 = vmatprep.mubr.bf16.mxu0 0
      %7699 = vmatmul.mubr.bf16.gmra.mrb[0].mxu0 %v7628
      %v7700 = vpop.f32.mrb[0].mxu0
      %v7701 = vadd.f32 %v7472, %v7700
      %v7702 = vpop.f32.mrb[0].mxu0
      %v7703 = vpop.f32.mrb[0].mxu0
      %v7704 = vadd.f32 %v7475, %v7703
      %v7705 = vpop.f32.mrb[0].mxu0
      %7706 = vmatprep.mubr.bf16.mxu0 0
      %7707 = vmatmul.mubr.bf16.gmra.mrb[0].mxu0 %v7630
      %v7708 = vpop.f32.mrb[0].mxu0
      %v7709 = vadd.f32 %v7480, %v7708
      %v7710 = vpop.f32.mrb[0].mxu0
      %v7711 = vpop.f32.mrb[0].mxu0
      %v7712 = vadd.f32 %v7483, %v7711
      %v7713 = vpop.f32.mrb[0].mxu0
      %7714 = vmatprep.mubr.bf16.mxu0 0
      %7715 = vmatmul.mubr.bf16.gmra.mrb[0].mxu0 %v7632
      %v7716 = vpop.f32.mrb[0].mxu0
      %v7717 = vadd.f32 %v7488, %v7716
      %v7718 = vpop.f32.mrb[0].mxu0
      %v7719 = vpop.f32.mrb[0].mxu0
      %v7720 = vadd.f32 %v7491, %v7719
      %v7721 = vpop.f32.mrb[0].mxu0
      %7722 = vmatprep.mubr.bf16.mxu0 0
      %7723 = vmatmul.mubr.bf16.gmra.mrb[0].mxu0 %v7634
      %v7724 = vpop.f32.mrb[0].mxu0
      %v7725 = vadd.f32 %v7496, %v7724
      %v7726 = vpop.f32.mrb[0].mxu0
      %v7727 = vpop.f32.mrb[0].mxu0
      %v7728 = vadd.f32 %v7499, %v7727
      %v7729 = vpop.f32.mrb[0].mxu0
      %7730 = vmatprep.mubr.bf16.mxu0 0
      %7731 = vmatmul.mubr.bf16.gmra.mrb[0].mxu0 %v7636
      %v7732 = vpop.f32.mrb[0].mxu0
      %v7733 = vadd.f32 %v7504, %v7732
      %v7734 = vpop.f32.mrb[0].mxu0
      %v7735 = vpop.f32.mrb[0].mxu0
      %v7736 = vadd.f32 %v7507, %v7735
      %v7737 = vpop.f32.mrb[0].mxu0
      %7738 = vmatprep.mubr.bf16.mxu0 0
      %7739 = vmatmul.mubr.bf16.gmra.mrb[0].mxu0 %v7638
      %v7740 = vpop.f32.mrb[0].mxu0
      %v7741 = vadd.f32 %v7512, %v7740
      %v7742 = vpop.f32.mrb[0].mxu0
      %v7743 = vpop.f32.mrb[0].mxu0
      %v7744 = vadd.f32 %v7515, %v7743
      %v7745 = vpop.f32.mrb[0].mxu0
      %7746 = vmatprep.mubr.bf16.mxu0 0
      %7747 = vmatmul.mubr.bf16.gmra.mrb[0].mxu0 %v7640
      %v7748 = vpop.f32.mrb[0].mxu0
      %v7749 = vadd.f32 %v7520, %v7748
      %v7750 = vpop.f32.mrb[0].mxu0
      %v7751 = vpop.f32.mrb[0].mxu0
      %v7752 = vadd.f32 %v7523, %v7751
      %v7753 = vpop.f32.mrb[0].mxu0
      %7754 = vmatprep.mubr.bf16.mxu0 0
      %7755 = vmatmul.mubr.bf16.gmra.mrb[0].mxu0 %v7642
      %v7756 = vpop.f32.mrb[0].mxu0
      %v7757 = vadd.f32 %v7528, %v7756
      %v7758 = vpop.f32.mrb[0].mxu0
      %v7759 = vpop.f32.mrb[0].mxu0
      %v7760 = vadd.f32 %v7531, %v7759
      %v7761 = vpop.f32.mrb[0].mxu0
      %7762 = vmatprep.mubr.bf16.mxu0 0
      %7763 = vmatmul.mubr.bf16.gmra.mrb[0].mxu0 %v7644
      %v7764 = vpop.f32.mrb[0].mxu0
      %v7765 = vadd.f32 %v7536, %v7764
      %v7766 = vpop.f32.mrb[0].mxu0
      %v7767 = vpop.f32.mrb[0].mxu0
      %v7768 = vadd.f32 %v7539, %v7767
      %v7769 = vpop.f32.mrb[0].mxu0
      %7770 = vmatprep.mubr.bf16.mxu0 0
      %7771 = vmatmul.mubr.bf16.gmra.mrb[0].mxu0 %v7646
      %v7772 = vpop.f32.mrb[0].mxu0
      %v7773 = vadd.f32 %v7544, %v7772
      %v7774 = vpop.f32.mrb[0].mxu0
      %v7775 = vpop.f32.mrb[0].mxu0
      %v7776 = vadd.f32 %v7547, %v7775
      %v7777 = vpop.f32.mrb[0].mxu0
      %7778 = vmatprep.mubr.bf16.mxu0 0
      %7779 = vmatmul.mubr.bf16.gmra.mrb[0].mxu0 %v7648
      %v7780 = vpop.f32.mrb[0].mxu0
      %v7781 = vadd.f32 %v7552, %v7780
      %v7782 = vpop.f32.mrb[0].mxu0
      %v7783 = vpop.f32.mrb[0].mxu0
      %v7784 = vadd.f32 %v7555, %v7783
      %v7785 = vpop.f32.mrb[0].mxu0
      %7786 = vmatprep.mubr.bf16.mxu0 0
      %7787 = vmatmul.mubr.bf16.gmra.mrb[0].mxu0 %v7650
      %v7788 = vpop.f32.mrb[0].mxu0
      %v7789 = vadd.f32 %v7560, %v7788
      %v7790 = vpop.f32.mrb[0].mxu0
      %v7791 = vpop.f32.mrb[0].mxu0
      %v7792 = vadd.f32 %v7563, %v7791
      %v7793 = vpop.f32.mrb[0].mxu0
      %7794 = vmatprep.mubr.bf16.mxu0 0
      %7795 = vmatmul.mubr.bf16.gmra.mrb[0].mxu0 %v7652
      %v7796 = vpop.f32.mrb[0].mxu0
      %v7797 = vadd.f32 %v7568, %v7796
      %v7798 = vpop.f32.mrb[0].mxu0
      %v7799 = vpop.f32.mrb[0].mxu0
      %v7800 = vadd.f32 %v7571, %v7799
      %v7801 = vpop.f32.mrb[0].mxu0
      %7802 = vmatprep.mubr.bf16.mxu0 0
      %7803 = vmatmul.mubr.bf16.gmra.mrb[0].mxu0 %v7654
      %v7804 = vpop.f32.mrb[0].mxu0
      %v7805 = vadd.f32 %v7576, %v7804
      %v7806 = vpop.f32.mrb[0].mxu0
      %v7807 = vpop.f32.mrb[0].mxu0
      %v7808 = vadd.f32 %v7579, %v7807
      %v7809 = vpop.f32.mrb[0].mxu0
      %7810 = vmatprep.mubr.bf16.mxu0 0
      %7811 = vmatmul.mubr.bf16.gmra.mrb[0].mxu0 %v7656
      %v7812 = vpop.f32.mrb[0].mxu0
      %v7813 = vadd.f32 %v7584, %v7812
      %v7814 = vpop.f32.mrb[0].mxu0
      %v7815 = vpop.f32.mrb[0].mxu0
      %v7816 = vadd.f32 %v7587, %v7815
      %v7817 = vpop.f32.mrb[0].mxu0
      %7818 = vdwg.mxu0
      %s7819 = scalar_lea.vmem [#allocation3], 24
      %v7820 = vld [vmem:[%s7819] sm:$0xf]
      %v7821 = vld [vmem:[%s7819 + $0x4] sm:$0xf]
      %v7822 = vld [vmem:[%s7819 + $0x8] sm:$0x1]
      %v7823 = vld [vmem:[%s7819 + $0xc] sm:$0xf]
      %v7824 = vld [vmem:[%s7819 + $0x10] sm:$0xf]
      %v7825 = vld [vmem:[%s7819 + $0x14] sm:$0x1]
      %v7826 = vld [vmem:[%s7819 + $0x18] sm:$0xf]
      %v7827 = vld [vmem:[%s7819 + $0x1c] sm:$0xf]
      %v7828 = vld [vmem:[%s7819 + $0x20] sm:$0x1]
      %v7829 = vld [vmem:[%s7819 + $0x24] sm:$0xf]
      %v7830 = vld [vmem:[%s7819 + $0x28] sm:$0xf]
      %v7831 = vld [vmem:[%s7819 + $0x2c] sm:$0x1]
      %v7832 = vld [vmem:[%s7819 + $0x30] sm:$0xf]
      %v7833 = vld [vmem:[%s7819 + $0x34] sm:$0xf]
      %v7834 = vld [vmem:[%s7819 + $0x38] sm:$0x1]
      %v7835 = vld [vmem:[%s7819 + $0x3c] sm:$0xf]
      %v7836 = vld [vmem:[%s7819 + $0x40] sm:$0xf]
      %v7837 = vld [vmem:[%s7819 + $0x44] sm:$0x1]
      %v7838 = vld [vmem:[%s7819 + $0x48] sm:$0xf]
      %v7839 = vld [vmem:[%s7819 + $0x4c] sm:$0xf]
      %v7840 = vld [vmem:[%s7819 + $0x50] sm:$0x1]
      %v7841 = vld [vmem:[%s7819 + $0x54] sm:$0xf]
      %v7842 = vld [vmem:[%s7819 + $0x58] sm:$0xf]
      %v7843 = vld [vmem:[%s7819 + $0x5c] sm:$0x1]
      %v7844 = vld [vmem:[%s7819 + $0x60] sm:$0xf]
      %v7845 = vld [vmem:[%s7819 + $0x64] sm:$0xf]
      %v7846 = vld [vmem:[%s7819 + $0x68] sm:$0x1]
      %v7847 = vld [vmem:[%s7819 + $0x6c] sm:$0xf]
      %v7848 = vld [vmem:[%s7819 + $0x70] sm:$0xf]
      %v7849 = vld [vmem:[%s7819 + $0x74] sm:$0x1]
      %v7850 = vld [vmem:[%s7819 + $0x78] sm:$0xf]
      %v7851 = vld [vmem:[%s7819 + $0x7c] sm:$0xf]
      %v7852 = vld [vmem:[%s7819 + $0x80] sm:$0x1]
      %v7853 = vld [vmem:[%s7819 + $0x84] sm:$0xf]
      %v7854 = vld [vmem:[%s7819 + $0x88] sm:$0xf]
      %v7855 = vld [vmem:[%s7819 + $0x8c] sm:$0x1]
      %v7856 = vld [vmem:[%s7819 + $0x90] sm:$0xf]
      %v7857 = vld [vmem:[%s7819 + $0x94] sm:$0xf]
      %v7858 = vld [vmem:[%s7819 + $0x98] sm:$0x1]
      %v7859 = vld [vmem:[%s7819 + $0x9c] sm:$0xf]
      %v7860 = vld [vmem:[%s7819 + $0xa0] sm:$0xf]
      %v7861 = vld [vmem:[%s7819 + $0xa4] sm:$0x1]
      %v7862 = vld [vmem:[%s7819 + $0xa8] sm:$0xf]
      %v7863 = vld [vmem:[%s7819 + $0xac] sm:$0xf]
      %v7864 = vld [vmem:[%s7819 + $0xb0] sm:$0x1]
      %v7865 = vld [vmem:[%s7819 + $0xb4] sm:$0xf]
      %v7866 = vld [vmem:[%s7819 + $0xb8] sm:$0xf]
      %v7867 = vld [vmem:[%s7819 + $0xbc] sm:$0x1]
      %v7900 = vunpack.c.l.b16 %v7820
      %v7901 = vunpack.c.l.b16 %v7821
      %v7902 = vunpack.c.l.b16 %v7823
      %v7903 = vunpack.c.l.b16 %v7824
      %v7904 = vunpack.c.l.b16 %v7826
      %v7905 = vunpack.c.l.b16 %v7827
      %v7906 = vunpack.c.l.b16 %v7829
      %v7907 = vunpack.c.l.b16 %v7830
      %v7908 = vunpack.c.l.b16 %v7832
      %v7909 = vunpack.c.l.b16 %v7833
      %v7910 = vunpack.c.l.b16 %v7835
      %v7911 = vunpack.c.l.b16 %v7836
      %v7912 = vunpack.c.l.b16 %v7838
      %v7913 = vunpack.c.l.b16 %v7839
      %v7914 = vunpack.c.l.b16 %v7841
      %v7915 = vunpack.c.l.b16 %v7842
      %v7916 = vunpack.c.l.b16 %v7844
      %v7917 = vunpack.c.l.b16 %v7845
      %v7918 = vunpack.c.l.b16 %v7847
      %v7919 = vunpack.c.l.b16 %v7848
      %v7920 = vunpack.c.l.b16 %v7850
      %v7921 = vunpack.c.l.b16 %v7851
      %v7922 = vunpack.c.l.b16 %v7853
      %v7923 = vunpack.c.l.b16 %v7854
      %v7924 = vunpack.c.l.b16 %v7856
      %v7925 = vunpack.c.l.b16 %v7857
      %v7926 = vunpack.c.l.b16 %v7859
      %v7927 = vunpack.c.l.b16 %v7860
      %v7928 = vunpack.c.l.b16 %v7862
      %v7929 = vunpack.c.l.b16 %v7863
      %v7930 = vunpack.c.l.b16 %v7865
      %v7931 = vunpack.c.l.b16 %v7866
      %v7932 = vpack.c.b16 %v7901, %v7900
      %v7933 = vpack.c.b16 %v7903, %v7902
      %v7934 = vpack.c.b16 %v7905, %v7904
      %v7935 = vpack.c.b16 %v7907, %v7906
      %v7936 = vpack.c.b16 %v7909, %v7908
      %v7937 = vpack.c.b16 %v7911, %v7910
      %v7938 = vpack.c.b16 %v7913, %v7912
      %v7939 = vpack.c.b16 %v7915, %v7914
      %v7940 = vpack.c.b16 %v7917, %v7916
      %v7941 = vpack.c.b16 %v7919, %v7918
      %v7942 = vpack.c.b16 %v7921, %v7920
      %v7943 = vpack.c.b16 %v7923, %v7922
      %v7944 = vpack.c.b16 %v7925, %v7924
      %v7945 = vpack.c.b16 %v7927, %v7926
      %v7946 = vpack.c.b16 %v7929, %v7928
      %v7947 = vpack.c.b16 %v7931, %v7930
      %v7964 = vunpack.c.l.b16 %v7822
      %v7965 = vunpack.c.l.b16 %v7825
      %v7966 = vunpack.c.l.b16 %v7828
      %v7967 = vunpack.c.l.b16 %v7831
      %v7968 = vunpack.c.l.b16 %v7834
      %v7969 = vunpack.c.l.b16 %v7837
      %v7970 = vunpack.c.l.b16 %v7840
      %v7971 = vunpack.c.l.b16 %v7843
      %v7972 = vunpack.c.l.b16 %v7846
      %v7973 = vunpack.c.l.b16 %v7849
      %v7974 = vunpack.c.l.b16 %v7852
      %v7975 = vunpack.c.l.b16 %v7855
      %v7976 = vunpack.c.l.b16 %v7858
      %v7977 = vunpack.c.l.b16 %v7861
      %v7978 = vunpack.c.l.b16 %v7864
      %v7979 = vunpack.c.l.b16 %v7867
      %v7980 = vpack.c.b16 %v7964, %v7964
      %v7981 = vpack.c.b16 %v7965, %v7965
      %v7982 = vpack.c.b16 %v7966, %v7966
      %v7983 = vpack.c.b16 %v7967, %v7967
      %v7984 = vpack.c.b16 %v7968, %v7968
      %v7985 = vpack.c.b16 %v7969, %v7969
      %v7986 = vpack.c.b16 %v7970, %v7970
      %v7987 = vpack.c.b16 %v7971, %v7971
      %v7988 = vpack.c.b16 %v7972, %v7972
      %v7989 = vpack.c.b16 %v7973, %v7973
      %v7990 = vpack.c.b16 %v7974, %v7974
      %v7991 = vpack.c.b16 %v7975, %v7975
      %v7992 = vpack.c.b16 %v7976, %v7976
      %v7993 = vpack.c.b16 %v7977, %v7977
      %v7994 = vpack.c.b16 %v7978, %v7978
      %v7995 = vpack.c.b16 %v7979, %v7979
      %v7997 = vshrl.u32 %v7932, 16
      %v7999 = vshll.u32 %v7932, 16
      %v8001 = vrot.slane %v7999, 1
      %v8002 = vor.u32 %v7997, %v8001
      %v8004 = vshll.u32 %v7980, 16
      %v8006 = vrot.slane %v8004, 1
      %v8007 = vsel %vm6444, %v8002, %v8006
      %v8009 = vshrl.u32 %v7933, 16
      %v8011 = vshll.u32 %v7933, 16
      %v8013 = vrot.slane %v8011, 1
      %v8014 = vor.u32 %v8009, %v8013
      %v8016 = vshll.u32 %v7981, 16
      %v8018 = vrot.slane %v8016, 1
      %v8019 = vsel %vm6444, %v8014, %v8018
      %v8021 = vshrl.u32 %v7934, 16
      %v8023 = vshll.u32 %v7934, 16
      %v8025 = vrot.slane %v8023, 1
      %v8026 = vor.u32 %v8021, %v8025
      %v8028 = vshll.u32 %v7982, 16
      %v8030 = vrot.slane %v8028, 1
      %v8031 = vsel %vm6444, %v8026, %v8030
      %v8033 = vshrl.u32 %v7935, 16
      %v8035 = vshll.u32 %v7935, 16
      %v8037 = vrot.slane %v8035, 1
      %v8038 = vor.u32 %v8033, %v8037
      %v8040 = vshll.u32 %v7983, 16
      %v8042 = vrot.slane %v8040, 1
      %v8043 = vsel %vm6444, %v8038, %v8042
      %v8045 = vshrl.u32 %v7936, 16
      %v8047 = vshll.u32 %v7936, 16
      %v8049 = vrot.slane %v8047, 1
      %v8050 = vor.u32 %v8045, %v8049
      %v8052 = vshll.u32 %v7984, 16
      %v8054 = vrot.slane %v8052, 1
      %v8055 = vsel %vm6444, %v8050, %v8054
      %v8057 = vshrl.u32 %v7937, 16
      %v8059 = vshll.u32 %v7937, 16
      %v8061 = vrot.slane %v8059, 1
      %v8062 = vor.u32 %v8057, %v8061
      %v8064 = vshll.u32 %v7985, 16
      %v8066 = vrot.slane %v8064, 1
      %v8067 = vsel %vm6444, %v8062, %v8066
      %v8069 = vshrl.u32 %v7938, 16
      %v8071 = vshll.u32 %v7938, 16
      %v8073 = vrot.slane %v8071, 1
      %v8074 = vor.u32 %v8069, %v8073
      %v8076 = vshll.u32 %v7986, 16
      %v8078 = vrot.slane %v8076, 1
      %v8079 = vsel %vm6444, %v8074, %v8078
      %v8081 = vshrl.u32 %v7939, 16
      %v8083 = vshll.u32 %v7939, 16
      %v8085 = vrot.slane %v8083, 1
      %v8086 = vor.u32 %v8081, %v8085
      %v8088 = vshll.u32 %v7987, 16
      %v8090 = vrot.slane %v8088, 1
      %v8091 = vsel %vm6444, %v8086, %v8090
      %v8093 = vshrl.u32 %v7940, 16
      %v8095 = vshll.u32 %v7940, 16
      %v8097 = vrot.slane %v8095, 1
      %v8098 = vor.u32 %v8093, %v8097
      %v8100 = vshll.u32 %v7988, 16
      %v8102 = vrot.slane %v8100, 1
      %v8103 = vsel %vm6444, %v8098, %v8102
      %v8105 = vshrl.u32 %v7941, 16
      %v8107 = vshll.u32 %v7941, 16
      %v8109 = vrot.slane %v8107, 1
      %v8110 = vor.u32 %v8105, %v8109
      %v8112 = vshll.u32 %v7989, 16
      %v8114 = vrot.slane %v8112, 1
      %v8115 = vsel %vm6444, %v8110, %v8114
      %v8117 = vshrl.u32 %v7942, 16
      %v8119 = vshll.u32 %v7942, 16
      %v8121 = vrot.slane %v8119, 1
      %v8122 = vor.u32 %v8117, %v8121
      %v8124 = vshll.u32 %v7990, 16
      %v8126 = vrot.slane %v8124, 1
      %v8127 = vsel %vm6444, %v8122, %v8126
      %v8129 = vshrl.u32 %v7943, 16
      %v8131 = vshll.u32 %v7943, 16
      %v8133 = vrot.slane %v8131, 1
      %v8134 = vor.u32 %v8129, %v8133
      %v8136 = vshll.u32 %v7991, 16
      %v8138 = vrot.slane %v8136, 1
      %v8139 = vsel %vm6444, %v8134, %v8138
      %v8141 = vshrl.u32 %v7944, 16
      %v8143 = vshll.u32 %v7944, 16
      %v8145 = vrot.slane %v8143, 1
      %v8146 = vor.u32 %v8141, %v8145
      %v8148 = vshll.u32 %v7992, 16
      %v8150 = vrot.slane %v8148, 1
      %v8151 = vsel %vm6444, %v8146, %v8150
      %v8153 = vshrl.u32 %v7945, 16
      %v8155 = vshll.u32 %v7945, 16
      %v8157 = vrot.slane %v8155, 1
      %v8158 = vor.u32 %v8153, %v8157
      %v8160 = vshll.u32 %v7993, 16
      %v8162 = vrot.slane %v8160, 1
      %v8163 = vsel %vm6444, %v8158, %v8162
      %v8165 = vshrl.u32 %v7946, 16
      %v8167 = vshll.u32 %v7946, 16
      %v8169 = vrot.slane %v8167, 1
      %v8170 = vor.u32 %v8165, %v8169
      %v8172 = vshll.u32 %v7994, 16
      %v8174 = vrot.slane %v8172, 1
      %v8175 = vsel %vm6444, %v8170, %v8174
      %v8177 = vshrl.u32 %v7947, 16
      %v8179 = vshll.u32 %v7947, 16
      %v8181 = vrot.slane %v8179, 1
      %v8182 = vor.u32 %v8177, %v8181
      %v8184 = vshll.u32 %v7995, 16
      %v8186 = vrot.slane %v8184, 1
      %v8187 = vsel %vm6444, %v8182, %v8186
      %8188 = vrot.lane.b32.xlu0 %v8007, 32
      %v8189 = vpop.permute.xlu0 %8188
      %8190 = vrot.lane.b32.xlu0 %v8019, 32
      %v8191 = vpop.permute.xlu0 %8190
      %8192 = vrot.lane.b32.xlu0 %v8031, 32
      %v8193 = vpop.permute.xlu0 %8192
      %8194 = vrot.lane.b32.xlu0 %v8043, 32
      %v8195 = vpop.permute.xlu0 %8194
      %8196 = vrot.lane.b32.xlu0 %v8055, 32
      %v8197 = vpop.permute.xlu0 %8196
      %8198 = vrot.lane.b32.xlu0 %v8067, 32
      %v8199 = vpop.permute.xlu0 %8198
      %8200 = vrot.lane.b32.xlu0 %v8079, 32
      %v8201 = vpop.permute.xlu0 %8200
      %8202 = vrot.lane.b32.xlu0 %v8091, 32
      %v8203 = vpop.permute.xlu0 %8202
      %8204 = vrot.lane.b32.xlu0 %v8103, 32
      %v8205 = vpop.permute.xlu0 %8204
      %8206 = vrot.lane.b32.xlu0 %v8115, 32
      %v8207 = vpop.permute.xlu0 %8206
      %8208 = vrot.lane.b32.xlu0 %v8127, 32
      %v8209 = vpop.permute.xlu0 %8208
      %8210 = vrot.lane.b32.xlu0 %v8139, 32
      %v8211 = vpop.permute.xlu0 %8210
      %8212 = vrot.lane.b32.xlu0 %v8151, 32
      %v8213 = vpop.permute.xlu0 %8212
      %8214 = vrot.lane.b32.xlu0 %v8163, 32
      %v8215 = vpop.permute.xlu0 %8214
      %8216 = vrot.lane.b32.xlu0 %v8175, 32
      %v8217 = vpop.permute.xlu0 %8216
      %8218 = vrot.lane.b32.xlu0 %v8187, 32
      %v8219 = vpop.permute.xlu0 %8218
      %v8220 = vrot.slane %v7932, 1
      %v8221 = vrot.slane %v7980, 1
      %v8222 = vsel %vm6669, %v8220, %v8221
      %v8223 = vrot.slane %v7933, 1
      %v8224 = vrot.slane %v7981, 1
      %v8225 = vsel %vm6669, %v8223, %v8224
      %v8226 = vrot.slane %v7934, 1
      %v8227 = vrot.slane %v7982, 1
      %v8228 = vsel %vm6669, %v8226, %v8227
      %v8229 = vrot.slane %v7935, 1
      %v8230 = vrot.slane %v7983, 1
      %v8231 = vsel %vm6669, %v8229, %v8230
      %v8232 = vrot.slane %v7936, 1
      %v8233 = vrot.slane %v7984, 1
      %v8234 = vsel %vm6669, %v8232, %v8233
      %v8235 = vrot.slane %v7937, 1
      %v8236 = vrot.slane %v7985, 1
      %v8237 = vsel %vm6669, %v8235, %v8236
      %v8238 = vrot.slane %v7938, 1
      %v8239 = vrot.slane %v7986, 1
      %v8240 = vsel %vm6669, %v8238, %v8239
      %v8241 = vrot.slane %v7939, 1
      %v8242 = vrot.slane %v7987, 1
      %v8243 = vsel %vm6669, %v8241, %v8242
      %v8244 = vrot.slane %v7940, 1
      %v8245 = vrot.slane %v7988, 1
      %v8246 = vsel %vm6669, %v8244, %v8245
      %v8247 = vrot.slane %v7941, 1
      %v8248 = vrot.slane %v7989, 1
      %v8249 = vsel %vm6669, %v8247, %v8248
      %v8250 = vrot.slane %v7942, 1
      %v8251 = vrot.slane %v7990, 1
      %v8252 = vsel %vm6669, %v8250, %v8251
      %v8253 = vrot.slane %v7943, 1
      %v8254 = vrot.slane %v7991, 1
      %v8255 = vsel %vm6669, %v8253, %v8254
      %v8256 = vrot.slane %v7944, 1
      %v8257 = vrot.slane %v7992, 1
      %v8258 = vsel %vm6669, %v8256, %v8257
      %v8259 = vrot.slane %v7945, 1
      %v8260 = vrot.slane %v7993, 1
      %v8261 = vsel %vm6669, %v8259, %v8260
      %v8262 = vrot.slane %v7946, 1
      %v8263 = vrot.slane %v7994, 1
      %v8264 = vsel %vm6669, %v8262, %v8263
      %v8265 = vrot.slane %v7947, 1
      %v8266 = vrot.slane %v7995, 1
      %v8267 = vsel %vm6669, %v8265, %v8266
      %8268 = vrot.lane.b32.xlu0 %v8222, 64
      %v8269 = vpop.permute.xlu0 %8268
      %8270 = vrot.lane.b32.xlu0 %v8225, 64
      %v8271 = vpop.permute.xlu0 %8270
      %8272 = vrot.lane.b32.xlu0 %v8228, 64
      %v8273 = vpop.permute.xlu0 %8272
      %8274 = vrot.lane.b32.xlu0 %v8231, 64
      %v8275 = vpop.permute.xlu0 %8274
      %8276 = vrot.lane.b32.xlu0 %v8234, 64
      %v8277 = vpop.permute.xlu0 %8276
      %8278 = vrot.lane.b32.xlu0 %v8237, 64
      %v8279 = vpop.permute.xlu0 %8278
      %8280 = vrot.lane.b32.xlu0 %v8240, 64
      %v8281 = vpop.permute.xlu0 %8280
      %8282 = vrot.lane.b32.xlu0 %v8243, 64
      %v8283 = vpop.permute.xlu0 %8282
      %8284 = vrot.lane.b32.xlu0 %v8246, 64
      %v8285 = vpop.permute.xlu0 %8284
      %8286 = vrot.lane.b32.xlu0 %v8249, 64
      %v8287 = vpop.permute.xlu0 %8286
      %8288 = vrot.lane.b32.xlu0 %v8252, 64
      %v8289 = vpop.permute.xlu0 %8288
      %8290 = vrot.lane.b32.xlu0 %v8255, 64
      %v8291 = vpop.permute.xlu0 %8290
      %8292 = vrot.lane.b32.xlu0 %v8258, 64
      %v8293 = vpop.permute.xlu0 %8292
      %8294 = vrot.lane.b32.xlu0 %v8261, 64
      %v8295 = vpop.permute.xlu0 %8294
      %8296 = vrot.lane.b32.xlu0 %v8264, 64
      %v8297 = vpop.permute.xlu0 %8296
      %8298 = vrot.lane.b32.xlu0 %v8267, 64
      %v8299 = vpop.permute.xlu0 %8298
      %v8301 = vsel %vm6750, %v7932, %v8189
      %v8303 = vsel %vm6750, %v7933, %v8191
      %v8305 = vsel %vm6750, %v7934, %v8193
      %v8307 = vsel %vm6750, %v7935, %v8195
      %v8309 = vsel %vm6750, %v7936, %v8197
      %v8311 = vsel %vm6750, %v7937, %v8199
      %v8313 = vsel %vm6750, %v7938, %v8201
      %v8315 = vsel %vm6750, %v7939, %v8203
      %v8317 = vsel %vm6750, %v7940, %v8205
      %v8319 = vsel %vm6750, %v7941, %v8207
      %v8321 = vsel %vm6750, %v7942, %v8209
      %v8323 = vsel %vm6750, %v7943, %v8211
      %v8325 = vsel %vm6750, %v7944, %v8213
      %v8327 = vsel %vm6750, %v7945, %v8215
      %v8329 = vsel %vm6750, %v7946, %v8217
      %v8331 = vsel %vm6750, %v7947, %v8219
      %v8333 = vsel %vm6783, %v8301, %v8269
      %v8335 = vsel %vm6783, %v8303, %v8271
      %v8337 = vsel %vm6783, %v8305, %v8273
      %v8339 = vsel %vm6783, %v8307, %v8275
      %v8341 = vsel %vm6783, %v8309, %v8277
      %v8343 = vsel %vm6783, %v8311, %v8279
      %v8345 = vsel %vm6783, %v8313, %v8281
      %v8347 = vsel %vm6783, %v8315, %v8283
      %v8349 = vsel %vm6783, %v8317, %v8285
      %v8351 = vsel %vm6783, %v8319, %v8287
      %v8353 = vsel %vm6783, %v8321, %v8289
      %v8355 = vsel %vm6783, %v8323, %v8291
      %v8357 = vsel %vm6783, %v8325, %v8293
      %v8359 = vsel %vm6783, %v8327, %v8295
      %v8361 = vsel %vm6783, %v8329, %v8297
      %v8363 = vsel %vm6783, %v8331, %v8299
      %v8376 = vunpack.c.l.b16 %v6255
      %v8377 = vunpack.c.l.b16 %v6256
      %v8378 = vunpack.c.l.b16 %v6257
      %v8379 = vunpack.c.l.b16 %v6258
      %v8380 = vunpack.c.l.b16 %v6259
      %v8381 = vunpack.c.l.b16 %v6260
      %v8382 = vunpack.c.l.b16 %v6261
      %v8383 = vunpack.c.l.b16 %v6262
      %v8384 = vunpack.c.l.b16 %v6263
      %v8385 = vunpack.c.l.b16 %v6264
      %v8386 = vunpack.c.l.b16 %v6265
      %v8387 = vunpack.c.l.b16 %v6266
      %v8388 = vpack.c.b16 %v8377, %v8376
      %v8389 = vpack.c.b16 %v8379, %v8378
      %v8390 = vpack.c.b16 %v8381, %v8380
      %v8391 = vpack.c.b16 %v8383, %v8382
      %v8392 = vpack.c.b16 %v8385, %v8384
      %v8393 = vpack.c.b16 %v8387, %v8386
      %v8400 = vsel %vm7396, %v8333, 0
      %v8402 = vsel %vm7396, %v8335, 0
      %v8404 = vsel %vm7396, %v8337, 0
      %v8406 = vsel %vm7396, %v8339, 0
      %v8408 = vsel %vm7396, %v8341, 0
      %v8410 = vsel %vm7396, %v8343, 0
      %v8412 = vsel %vm7396, %v8345, 0
      %v8414 = vsel %vm7396, %v8347, 0
      %v8416 = vsel %vm7396, %v8349, 0
      %v8418 = vsel %vm7396, %v8351, 0
      %v8420 = vsel %vm7396, %v8353, 0
      %v8422 = vsel %vm7396, %v8355, 0
      %v8424 = vsel %vm7396, %v8357, 0
      %v8426 = vsel %vm7396, %v8359, 0
      %v8428 = vsel %vm7396, %v8361, 0
      %v8430 = vsel %vm7396, %v8363, 0
      %8432 = vmatprep.subr.bf16.mxu0 0
      %8433 = vmatpush1.bf16.msra.mxu0 %v8388
      %8434 = vmatprep.subr.bf16.mxu0 0
      %8435 = vmatpush1.bf16.msra.mxu0 %v8389
      %8436 = vmatprep.subr.bf16.mxu0 0
      %8437 = vmatpush1.bf16.msra.mxu0 %v8390
      %8438 = vmatprep.subr.bf16.mxu0 0
      %8439 = vmatpush1.bf16.msra.mxu0 %v8391
      %8440 = vmatprep.subr.bf16.mxu0 0
      %8441 = vmatpush1.bf16.msra.mxu0 %v8392
      %8442 = vmatprep.subr.bf16.mxu0 0
      %8443 = vmatpush1.bf16.msra.mxu0 %v8393
      %8444 = vmatprep.subr.bf16.mxu0 0
      %8445 = vmatpush1.bf16.msra.mxu0 0
      %8446 = vmatprep.subr.bf16.mxu0 0
      %8447 = vmatpush1.bf16.msra.mxu0 0
      %8448 = vmatprep.subr.bf16.mxu0 0
      %8449 = vmatpush1.bf16.msra.mxu0 0
      %8450 = vmatprep.subr.bf16.mxu0 0
      %8451 = vmatpush1.bf16.msra.mxu0 0
      %8452 = vmatprep.subr.bf16.mxu0 0
      %8453 = vmatpush1.bf16.msra.mxu0 0
      %8454 = vmatprep.subr.bf16.mxu0 0
      %8455 = vmatpush1.bf16.msra.mxu0 0
      %8456 = vmatprep.subr.bf16.mxu0 0
      %8457 = vmatpush1.bf16.msra.mxu0 0
      %8458 = vmatprep.subr.bf16.mxu0 0
      %8459 = vmatpush1.bf16.msra.mxu0 0
      %8460 = vmatprep.subr.bf16.mxu0 0
      %8461 = vmatpush1.bf16.msra.mxu0 0
      %8462 = vmatprep.subr.bf16.mxu0 0
      %8463 = vmatpush1.bf16.msra.mxu0 0
      %8464 = vmatprep.mubr.bf16.mxu0 0
      %8465 = vmatmul.mubr.bf16.gmra.mrb[0].mxu0 %v8400
      %v8466 = vpop.f32.mrb[0].mxu0
      %v8467 = vadd.f32 0.0, %v8466
      %v8468 = vpop.f32.mrb[0].mxu0
      %v8469 = vpop.f32.mrb[0].mxu0
      %v8470 = vadd.f32 0.0, %v8469
      %v8471 = vpop.f32.mrb[0].mxu0
      %8472 = vmatprep.mubr.bf16.mxu0 0
      %8473 = vmatmul.mubr.bf16.gmra.mrb[0].mxu0 %v8402
      %v8474 = vpop.f32.mrb[0].mxu0
      %v8475 = vadd.f32 0.0, %v8474
      %v8476 = vpop.f32.mrb[0].mxu0
      %v8477 = vpop.f32.mrb[0].mxu0
      %v8478 = vadd.f32 0.0, %v8477
      %v8479 = vpop.f32.mrb[0].mxu0
      %8480 = vmatprep.mubr.bf16.mxu0 0
      %8481 = vmatmul.mubr.bf16.gmra.mrb[0].mxu0 %v8404
      %v8482 = vpop.f32.mrb[0].mxu0
      %v8483 = vadd.f32 0.0, %v8482
      %v8484 = vpop.f32.mrb[0].mxu0
      %v8485 = vpop.f32.mrb[0].mxu0
      %v8486 = vadd.f32 0.0, %v8485
      %v8487 = vpop.f32.mrb[0].mxu0
      %8488 = vmatprep.mubr.bf16.mxu0 0
      %8489 = vmatmul.mubr.bf16.gmra.mrb[0].mxu0 %v8406
      %v8490 = vpop.f32.mrb[0].mxu0
      %v8491 = vadd.f32 0.0, %v8490
      %v8492 = vpop.f32.mrb[0].mxu0
      %v8493 = vpop.f32.mrb[0].mxu0
      %v8494 = vadd.f32 0.0, %v8493
      %v8495 = vpop.f32.mrb[0].mxu0
      %8496 = vmatprep.mubr.bf16.mxu0 0
      %8497 = vmatmul.mubr.bf16.gmra.mrb[0].mxu0 %v8408
      %v8498 = vpop.f32.mrb[0].mxu0
      %v8499 = vadd.f32 0.0, %v8498
      %v8500 = vpop.f32.mrb[0].mxu0
      %v8501 = vpop.f32.mrb[0].mxu0
      %v8502 = vadd.f32 0.0, %v8501
      %v8503 = vpop.f32.mrb[0].mxu0
      %8504 = vmatprep.mubr.bf16.mxu0 0
      %8505 = vmatmul.mubr.bf16.gmra.mrb[0].mxu0 %v8410
      %v8506 = vpop.f32.mrb[0].mxu0
      %v8507 = vadd.f32 0.0, %v8506
      %v8508 = vpop.f32.mrb[0].mxu0
      %v8509 = vpop.f32.mrb[0].mxu0
      %v8510 = vadd.f32 0.0, %v8509
      %v8511 = vpop.f32.mrb[0].mxu0
      %8512 = vmatprep.mubr.bf16.mxu0 0
      %8513 = vmatmul.mubr.bf16.gmra.mrb[0].mxu0 %v8412
      %v8514 = vpop.f32.mrb[0].mxu0
      %v8515 = vadd.f32 0.0, %v8514
      %v8516 = vpop.f32.mrb[0].mxu0
      %v8517 = vpop.f32.mrb[0].mxu0
      %v8518 = vadd.f32 0.0, %v8517
      %v8519 = vpop.f32.mrb[0].mxu0
      %8520 = vmatprep.mubr.bf16.mxu0 0
      %8521 = vmatmul.mubr.bf16.gmra.mrb[0].mxu0 %v8414
      %v8522 = vpop.f32.mrb[0].mxu0
      %v8523 = vadd.f32 0.0, %v8522
      %v8524 = vpop.f32.mrb[0].mxu0
      %v8525 = vpop.f32.mrb[0].mxu0
      %v8526 = vadd.f32 0.0, %v8525
      %v8527 = vpop.f32.mrb[0].mxu0
      %8528 = vmatprep.mubr.bf16.mxu0 0
      %8529 = vmatmul.mubr.bf16.gmra.mrb[0].mxu0 %v8416
      %v8530 = vpop.f32.mrb[0].mxu0
      %v8531 = vadd.f32 0.0, %v8530
      %v8532 = vpop.f32.mrb[0].mxu0
      %v8533 = vpop.f32.mrb[0].mxu0
      %v8534 = vadd.f32 0.0, %v8533
      %v8535 = vpop.f32.mrb[0].mxu0
      %8536 = vmatprep.mubr.bf16.mxu0 0
      %8537 = vmatmul.mubr.bf16.gmra.mrb[0].mxu0 %v8418
      %v8538 = vpop.f32.mrb[0].mxu0
      %v8539 = vadd.f32 0.0, %v8538
      %v8540 = vpop.f32.mrb[0].mxu0
      %v8541 = vpop.f32.mrb[0].mxu0
      %v8542 = vadd.f32 0.0, %v8541
      %v8543 = vpop.f32.mrb[0].mxu0
      %8544 = vmatprep.mubr.bf16.mxu0 0
      %8545 = vmatmul.mubr.bf16.gmra.mrb[0].mxu0 %v8420
      %v8546 = vpop.f32.mrb[0].mxu0
      %v8547 = vadd.f32 0.0, %v8546
      %v8548 = vpop.f32.mrb[0].mxu0
      %v8549 = vpop.f32.mrb[0].mxu0
      %v8550 = vadd.f32 0.0, %v8549
      %v8551 = vpop.f32.mrb[0].mxu0
      %8552 = vmatprep.mubr.bf16.mxu0 0
      %8553 = vmatmul.mubr.bf16.gmra.mrb[0].mxu0 %v8422
      %v8554 = vpop.f32.mrb[0].mxu0
      %v8555 = vadd.f32 0.0, %v8554
      %v8556 = vpop.f32.mrb[0].mxu0
      %v8557 = vpop.f32.mrb[0].mxu0
      %v8558 = vadd.f32 0.0, %v8557
      %v8559 = vpop.f32.mrb[0].mxu0
      %8560 = vmatprep.mubr.bf16.mxu0 0
      %8561 = vmatmul.mubr.bf16.gmra.mrb[0].mxu0 %v8424
      %v8562 = vpop.f32.mrb[0].mxu0
      %v8563 = vadd.f32 0.0, %v8562
      %v8564 = vpop.f32.mrb[0].mxu0
      %v8565 = vpop.f32.mrb[0].mxu0
      %v8566 = vadd.f32 0.0, %v8565
      %v8567 = vpop.f32.mrb[0].mxu0
      %8568 = vmatprep.mubr.bf16.mxu0 0
      %8569 = vmatmul.mubr.bf16.gmra.mrb[0].mxu0 %v8426
      %v8570 = vpop.f32.mrb[0].mxu0
      %v8571 = vadd.f32 0.0, %v8570
      %v8572 = vpop.f32.mrb[0].mxu0
      %v8573 = vpop.f32.mrb[0].mxu0
      %v8574 = vadd.f32 0.0, %v8573
      %v8575 = vpop.f32.mrb[0].mxu0
      %8576 = vmatprep.mubr.bf16.mxu0 0
      %8577 = vmatmul.mubr.bf16.gmra.mrb[0].mxu0 %v8428
      %v8578 = vpop.f32.mrb[0].mxu0
      %v8579 = vadd.f32 0.0, %v8578
      %v8580 = vpop.f32.mrb[0].mxu0
      %v8581 = vpop.f32.mrb[0].mxu0
      %v8582 = vadd.f32 0.0, %v8581
      %v8583 = vpop.f32.mrb[0].mxu0
      %8584 = vmatprep.mubr.bf16.mxu0 0
      %8585 = vmatmul.mubr.bf16.gmra.mrb[0].mxu0 %v8430
      %v8586 = vpop.f32.mrb[0].mxu0
      %v8587 = vadd.f32 0.0, %v8586
      %v8588 = vpop.f32.mrb[0].mxu0
      %v8589 = vpop.f32.mrb[0].mxu0
      %v8590 = vadd.f32 0.0, %v8589
      %v8591 = vpop.f32.mrb[0].mxu0
      %8592 = vdwg.mxu0
      %v8593 = vadd.f32 %v7693, %v8467
      %v8594 = vadd.f32 %v7696, %v8470
      %v8595 = vadd.f32 %v7701, %v8475
      %v8596 = vadd.f32 %v7704, %v8478
      %v8597 = vadd.f32 %v7709, %v8483
      %v8598 = vadd.f32 %v7712, %v8486
      %v8599 = vadd.f32 %v7717, %v8491
      %v8600 = vadd.f32 %v7720, %v8494
      %v8601 = vadd.f32 %v7725, %v8499
      %v8602 = vadd.f32 %v7728, %v8502
      %v8603 = vadd.f32 %v7733, %v8507
      %v8604 = vadd.f32 %v7736, %v8510
      %v8605 = vadd.f32 %v7741, %v8515
      %v8606 = vadd.f32 %v7744, %v8518
      %v8607 = vadd.f32 %v7749, %v8523
      %v8608 = vadd.f32 %v7752, %v8526
      %v8609 = vadd.f32 %v7757, %v8531
      %v8610 = vadd.f32 %v7760, %v8534
      %v8611 = vadd.f32 %v7765, %v8539
      %v8612 = vadd.f32 %v7768, %v8542
      %v8613 = vadd.f32 %v7773, %v8547
      %v8614 = vadd.f32 %v7776, %v8550
      %v8615 = vadd.f32 %v7781, %v8555
      %v8616 = vadd.f32 %v7784, %v8558
      %v8617 = vadd.f32 %v7789, %v8563
      %v8618 = vadd.f32 %v7792, %v8566
      %v8619 = vadd.f32 %v7797, %v8571
      %v8620 = vadd.f32 %v7800, %v8574
      %v8621 = vadd.f32 %v7805, %v8579
      %v8622 = vadd.f32 %v7808, %v8582
      %v8623 = vadd.f32 %v7813, %v8587
      %v8624 = vadd.f32 %v7816, %v8590
      %v8626 = vlaneseq
      %v8627 = vshrl.u32 %v8626, 7
      %v8628 = vsub.s32 0, %v8627
      %v8629 = vrot.slane %v6267, %v8628
      %v8631 = vadd.f32 %v8593, %v8629
      %v8632 = vadd.f32 %v8594, %v8629
      %v8633 = vadd.f32 %v8595, %v8629
      %v8634 = vadd.f32 %v8596, %v8629
      %v8635 = vadd.f32 %v8597, %v8629
      %v8636 = vadd.f32 %v8598, %v8629
      %v8637 = vadd.f32 %v8599, %v8629
      %v8638 = vadd.f32 %v8600, %v8629
      %v8639 = vadd.f32 %v8601, %v8629
      %v8640 = vadd.f32 %v8602, %v8629
      %v8641 = vadd.f32 %v8603, %v8629
      %v8642 = vadd.f32 %v8604, %v8629
      %v8643 = vadd.f32 %v8605, %v8629
      %v8644 = vadd.f32 %v8606, %v8629
      %v8645 = vadd.f32 %v8607, %v8629
      %v8646 = vadd.f32 %v8608, %v8629
      %v8647 = vadd.f32 %v8609, %v8629
      %v8648 = vadd.f32 %v8610, %v8629
      %v8649 = vadd.f32 %v8611, %v8629
      %v8650 = vadd.f32 %v8612, %v8629
      %v8651 = vadd.f32 %v8613, %v8629
      %v8652 = vadd.f32 %v8614, %v8629
      %v8653 = vadd.f32 %v8615, %v8629
      %v8654 = vadd.f32 %v8616, %v8629
      %v8655 = vadd.f32 %v8617, %v8629
      %v8656 = vadd.f32 %v8618, %v8629
      %v8657 = vadd.f32 %v8619, %v8629
      %v8658 = vadd.f32 %v8620, %v8629
      %v8659 = vadd.f32 %v8621, %v8629
      %v8660 = vadd.f32 %v8622, %v8629
      %v8661 = vadd.f32 %v8623, %v8629
      %v8662 = vadd.f32 %v8624, %v8629
      %v8663 = vxor.u32 %v8631, 2147483648
      %v8664 = vxor.u32 %v8632, 2147483648
      %v8665 = vxor.u32 %v8633, 2147483648
      %v8666 = vxor.u32 %v8634, 2147483648
      %v8667 = vxor.u32 %v8635, 2147483648
      %v8668 = vxor.u32 %v8636, 2147483648
      %v8669 = vxor.u32 %v8637, 2147483648
      %v8670 = vxor.u32 %v8638, 2147483648
      %v8671 = vxor.u32 %v8639, 2147483648
      %v8672 = vxor.u32 %v8640, 2147483648
      %v8673 = vxor.u32 %v8641, 2147483648
      %v8674 = vxor.u32 %v8642, 2147483648
      %v8675 = vxor.u32 %v8643, 2147483648
      %v8676 = vxor.u32 %v8644, 2147483648
      %v8677 = vxor.u32 %v8645, 2147483648
      %v8678 = vxor.u32 %v8646, 2147483648
      %v8679 = vxor.u32 %v8647, 2147483648
      %v8680 = vxor.u32 %v8648, 2147483648
      %v8681 = vxor.u32 %v8649, 2147483648
      %v8682 = vxor.u32 %v8650, 2147483648
      %v8683 = vxor.u32 %v8651, 2147483648
      %v8684 = vxor.u32 %v8652, 2147483648
      %v8685 = vxor.u32 %v8653, 2147483648
      %v8686 = vxor.u32 %v8654, 2147483648
      %v8687 = vxor.u32 %v8655, 2147483648
      %v8688 = vxor.u32 %v8656, 2147483648
      %v8689 = vxor.u32 %v8657, 2147483648
      %v8690 = vxor.u32 %v8658, 2147483648
      %v8691 = vxor.u32 %v8659, 2147483648
      %v8692 = vxor.u32 %v8660, 2147483648
      %v8693 = vxor.u32 %v8661, 2147483648
      %v8694 = vxor.u32 %v8662, 2147483648
      %v8695 = vmul.f32 %v8663, 1.442695
      %v8696 = vpow.pop %v8695
      %v8697 = vmul.f32 %v8664, 1.442695
      %v8698 = vpow.pop %v8697
      %v8699 = vmul.f32 %v8665, 1.442695
      %v8700 = vpow.pop %v8699
      %v8701 = vmul.f32 %v8666, 1.442695
      %v8702 = vpow.pop %v8701
      %v8703 = vmul.f32 %v8667, 1.442695
      %v8704 = vpow.pop %v8703
      %v8705 = vmul.f32 %v8668, 1.442695
      %v8706 = vpow.pop %v8705
      %v8707 = vmul.f32 %v8669, 1.442695
      %v8708 = vpow.pop %v8707
      %v8709 = vmul.f32 %v8670, 1.442695
      %v8710 = vpow.pop %v8709
      %v8711 = vmul.f32 %v8671, 1.442695
      %v8712 = vpow.pop %v8711
      %v8713 = vmul.f32 %v8672, 1.442695
      %v8714 = vpow.pop %v8713
      %v8715 = vmul.f32 %v8673, 1.442695
      %v8716 = vpow.pop %v8715
      %v8717 = vmul.f32 %v8674, 1.442695
      %v8718 = vpow.pop %v8717
      %v8719 = vmul.f32 %v8675, 1.442695
      %v8720 = vpow.pop %v8719
      %v8721 = vmul.f32 %v8676, 1.442695
      %v8722 = vpow.pop %v8721
      %v8723 = vmul.f32 %v8677, 1.442695
      %v8724 = vpow.pop %v8723
      %v8725 = vmul.f32 %v8678, 1.442695
      %v8726 = vpow.pop %v8725
      %v8727 = vmul.f32 %v8679, 1.442695
      %v8728 = vpow.pop %v8727
      %v8729 = vmul.f32 %v8680, 1.442695
      %v8730 = vpow.pop %v8729
      %v8731 = vmul.f32 %v8681, 1.442695
      %v8732 = vpow.pop %v8731
      %v8733 = vmul.f32 %v8682, 1.442695
      %v8734 = vpow.pop %v8733
      %v8735 = vmul.f32 %v8683, 1.442695
      %v8736 = vpow.pop %v8735
      %v8737 = vmul.f32 %v8684, 1.442695
      %v8738 = vpow.pop %v8737
      %v8739 = vmul.f32 %v8685, 1.442695
      %v8740 = vpow.pop %v8739
      %v8741 = vmul.f32 %v8686, 1.442695
      %v8742 = vpow.pop %v8741
      %v8743 = vmul.f32 %v8687, 1.442695
      %v8744 = vpow.pop %v8743
      %v8745 = vmul.f32 %v8688, 1.442695
      %v8746 = vpow.pop %v8745
      %v8747 = vmul.f32 %v8689, 1.442695
      %v8748 = vpow.pop %v8747
      %v8749 = vmul.f32 %v8690, 1.442695
      %v8750 = vpow.pop %v8749
      %v8751 = vmul.f32 %v8691, 1.442695
      %v8752 = vpow.pop %v8751
      %v8753 = vmul.f32 %v8692, 1.442695
      %v8754 = vpow.pop %v8753
      %v8755 = vmul.f32 %v8693, 1.442695
      %v8756 = vpow.pop %v8755
      %v8757 = vmul.f32 %v8694, 1.442695
      %v8758 = vpow.pop %v8757
      %v8759 = vadd.f32 %v8696, 1.0
      %v8760 = vadd.f32 %v8698, 1.0
      %v8761 = vadd.f32 %v8700, 1.0
      %v8762 = vadd.f32 %v8702, 1.0
      %v8763 = vadd.f32 %v8704, 1.0
      %v8764 = vadd.f32 %v8706, 1.0
      %v8765 = vadd.f32 %v8708, 1.0
      %v8766 = vadd.f32 %v8710, 1.0
      %v8767 = vadd.f32 %v8712, 1.0
      %v8768 = vadd.f32 %v8714, 1.0
      %v8769 = vadd.f32 %v8716, 1.0
      %v8770 = vadd.f32 %v8718, 1.0
      %v8771 = vadd.f32 %v8720, 1.0
      %v8772 = vadd.f32 %v8722, 1.0
      %v8773 = vadd.f32 %v8724, 1.0
      %v8774 = vadd.f32 %v8726, 1.0
      %v8775 = vadd.f32 %v8728, 1.0
      %v8776 = vadd.f32 %v8730, 1.0
      %v8777 = vadd.f32 %v8732, 1.0
      %v8778 = vadd.f32 %v8734, 1.0
      %v8779 = vadd.f32 %v8736, 1.0
      %v8780 = vadd.f32 %v8738, 1.0
      %v8781 = vadd.f32 %v8740, 1.0
      %v8782 = vadd.f32 %v8742, 1.0
      %v8783 = vadd.f32 %v8744, 1.0
      %v8784 = vadd.f32 %v8746, 1.0
      %v8785 = vadd.f32 %v8748, 1.0
      %v8786 = vadd.f32 %v8750, 1.0
      %v8787 = vadd.f32 %v8752, 1.0
      %v8788 = vadd.f32 %v8754, 1.0
      %v8789 = vadd.f32 %v8756, 1.0
      %v8790 = vadd.f32 %v8758, 1.0
      %v8791 = vrcp.pop %v8759
      %v8792 = vmul.f32 1.0, %v8791
      %v8793 = vrcp.pop %v8760
      %v8794 = vmul.f32 1.0, %v8793
      %v8795 = vrcp.pop %v8761
      %v8796 = vmul.f32 1.0, %v8795
      %v8797 = vrcp.pop %v8762
      %v8798 = vmul.f32 1.0, %v8797
      %v8799 = vrcp.pop %v8763
      %v8800 = vmul.f32 1.0, %v8799
      %v8801 = vrcp.pop %v8764
      %v8802 = vmul.f32 1.0, %v8801
      %v8803 = vrcp.pop %v8765
      %v8804 = vmul.f32 1.0, %v8803
      %v8805 = vrcp.pop %v8766
      %v8806 = vmul.f32 1.0, %v8805
      %v8807 = vrcp.pop %v8767
      %v8808 = vmul.f32 1.0, %v8807
      %v8809 = vrcp.pop %v8768
      %v8810 = vmul.f32 1.0, %v8809
      %v8811 = vrcp.pop %v8769
      %v8812 = vmul.f32 1.0, %v8811
      %v8813 = vrcp.pop %v8770
      %v8814 = vmul.f32 1.0, %v8813
      %v8815 = vrcp.pop %v8771
      %v8816 = vmul.f32 1.0, %v8815
      %v8817 = vrcp.pop %v8772
      %v8818 = vmul.f32 1.0, %v8817
      %v8819 = vrcp.pop %v8773
      %v8820 = vmul.f32 1.0, %v8819
      %v8821 = vrcp.pop %v8774
      %v8822 = vmul.f32 1.0, %v8821
      %v8823 = vrcp.pop %v8775
      %v8824 = vmul.f32 1.0, %v8823
      %v8825 = vrcp.pop %v8776
      %v8826 = vmul.f32 1.0, %v8825
      %v8827 = vrcp.pop %v8777
      %v8828 = vmul.f32 1.0, %v8827
      %v8829 = vrcp.pop %v8778
      %v8830 = vmul.f32 1.0, %v8829
      %v8831 = vrcp.pop %v8779
      %v8832 = vmul.f32 1.0, %v8831
      %v8833 = vrcp.pop %v8780
      %v8834 = vmul.f32 1.0, %v8833
      %v8835 = vrcp.pop %v8781
      %v8836 = vmul.f32 1.0, %v8835
      %v8837 = vrcp.pop %v8782
      %v8838 = vmul.f32 1.0, %v8837
      %v8839 = vrcp.pop %v8783
      %v8840 = vmul.f32 1.0, %v8839
      %v8841 = vrcp.pop %v8784
      %v8842 = vmul.f32 1.0, %v8841
      %v8843 = vrcp.pop %v8785
      %v8844 = vmul.f32 1.0, %v8843
      %v8845 = vrcp.pop %v8786
      %v8846 = vmul.f32 1.0, %v8845
      %v8847 = vrcp.pop %v8787
      %v8848 = vmul.f32 1.0, %v8847
      %v8849 = vrcp.pop %v8788
      %v8850 = vmul.f32 1.0, %v8849
      %v8851 = vrcp.pop %v8789
      %v8852 = vmul.f32 1.0, %v8851
      %v8853 = vrcp.pop %v8790
      %v8854 = vmul.f32 1.0, %v8853
      %vm8855 = vcmask 7168
      %8856 = vst.msk [vmem:[%s280] sm:$0xff] %vm8855, %v8792
      %8857 = vst.msk [vmem:[%s280 + $0x8] sm:$0xff] %vm8855, %v8794
      %8858 = vst.msk [vmem:[%s280 + $0x10] sm:$0xff] %vm8855, %v8796
      %8859 = vst.msk [vmem:[%s280 + $0x18] sm:$0xff] %vm8855, %v8798
      %8860 = vst.msk [vmem:[%s280 + $0x20] sm:$0xff] %vm8855, %v8800
      %8861 = vst.msk [vmem:[%s280 + $0x28] sm:$0xff] %vm8855, %v8802
      %8862 = vst.msk [vmem:[%s280 + $0x30] sm:$0xff] %vm8855, %v8804
      %8863 = vst.msk [vmem:[%s280 + $0x38] sm:$0xff] %vm8855, %v8806
      %8864 = vst.msk [vmem:[%s280 + $0x40] sm:$0xff] %vm8855, %v8808
      %8865 = vst.msk [vmem:[%s280 + $0x48] sm:$0xff] %vm8855, %v8810
      %8866 = vst.msk [vmem:[%s280 + $0x50] sm:$0xff] %vm8855, %v8812
      %8867 = vst.msk [vmem:[%s280 + $0x58] sm:$0xff] %vm8855, %v8814
      %8868 = vst.msk [vmem:[%s280 + $0x60] sm:$0xff] %vm8855, %v8816
      %8869 = vst.msk [vmem:[%s280 + $0x68] sm:$0xff] %vm8855, %v8818
      %8870 = vst.msk [vmem:[%s280 + $0x70] sm:$0xff] %vm8855, %v8820
      %8871 = vst.msk [vmem:[%s280 + $0x78] sm:$0xff] %vm8855, %v8822
      %8872 = vst.msk [vmem:[%s280 + $0x80] sm:$0xff] %vm8855, %v8824
      %8873 = vst.msk [vmem:[%s280 + $0x88] sm:$0xff] %vm8855, %v8826
      %8874 = vst.msk [vmem:[%s280 + $0x90] sm:$0xff] %vm8855, %v8828
      %8875 = vst.msk [vmem:[%s280 + $0x98] sm:$0xff] %vm8855, %v8830
      %8876 = vst.msk [vmem:[%s280 + $0xa0] sm:$0xff] %vm8855, %v8832
      %8877 = vst.msk [vmem:[%s280 + $0xa8] sm:$0xff] %vm8855, %v8834
      %8878 = vst.msk [vmem:[%s280 + $0xb0] sm:$0xff] %vm8855, %v8836
      %8879 = vst.msk [vmem:[%s280 + $0xb8] sm:$0xff] %vm8855, %v8838
      %8880 = vst.msk [vmem:[%s280 + $0xc0] sm:$0xff] %vm8855, %v8840
      %8881 = vst.msk [vmem:[%s280 + $0xc8] sm:$0xff] %vm8855, %v8842
      %8882 = vst.msk [vmem:[%s280 + $0xd0] sm:$0xff] %vm8855, %v8844
      %8883 = vst.msk [vmem:[%s280 + $0xd8] sm:$0xff] %vm8855, %v8846
      %8884 = vst.msk [vmem:[%s280 + $0xe0] sm:$0xff] %vm8855, %v8848
      %8885 = vst.msk [vmem:[%s280 + $0xe8] sm:$0xff] %vm8855, %v8850
      %8886 = vst.msk [vmem:[%s280 + $0xf0] sm:$0xff] %vm8855, %v8852
      %8887 = vst.msk [vmem:[%s280 + $0xf8] sm:$0xff] %vm8855, %v8854
      %p8888 = scmp.lt.s32.totalorder %s20, 1
      %s8889 = scalar_select %p8888, %s20, 1
      %s8890 = smul.addr %s8889, 32
      %s8891 = smul.addr %s8890, 8
      %s8892 = scalar_lea.vmem %s7, %s8891
      // Predicated region
      $region56: #{tpu_custom_call.1} parent=47 // pred_check
        %p8893 = pneg %p190
      $region57: #{tpu_custom_call.1} parent=47 // pred_check_branch
        %8895 = sbr.rel (%p8893) target = $region59
      $region58: #{tpu_custom_call.1} parent=47 // pred_region
        _
      $region59: #{tpu_custom_call.1} parent=47 // pred_fallthru
        _
    $region48: #{tpu_custom_call.1} parent=5 // pred_fallthru
      _
    %p8896 = scmp.le.s32.totalorder 2, %s15
    // Predicated region
    $region60: #{tpu_custom_call.1} parent=5 // pred_check
      %p8897 = pneg %p8896
    $region61: #{tpu_custom_call.1} parent=5 // pred_check_branch
      %8899 = sbr.rel (%p8897) target = $region63
    $region62: #{tpu_custom_call.1} parent=5 // pred_region
      %s8900 = ssub.s32 %s15, 2
      // Predicated region
      $region64: #{tpu_custom_call.1} parent=62 // pred_check
        %p8901 = pneg %p196
      $region65: #{tpu_custom_call.1} parent=62 // pred_check_branch
        %8903 = sbr.rel (%p8901) target = $region67
      $region66: #{tpu_custom_call.1} parent=62 // pred_region
        %p8904 = scmp.lt.s32.totalorder %s21, 1
        %s8905 = scalar_select %p8904, %s21, 1
        %s8906 = smul.addr %s8905, 32
        %s8907 = smul.addr %s8906, 8
        %s8908 = scalar_lea.vmem %s7, %s8907
      $region67: #{tpu_custom_call.1} parent=62 // pred_fallthru
        _
    $region63: #{tpu_custom_call.1} parent=5 // pred_fallthru
      _
  $region6: #{tpu_custom_call.1} parent=0 // loop_footer
    %s19 = sadd.s32 1, %s15
  $region7: #{tpu_custom_call.1} parent=0 // loop_footer_branch
    %14 = sbr.rel target = $region3
  $region8: #{tpu_custom_call.1} parent=0 // loop_exit
    _

</llo_original>
